<compile_context>
chip_gen: v6e
topology: v6e:2x2x1
jax: 0.10.0
libtpu: 0.0.40
codegen_flags: <defaults>
</compile_context>

<pallas_src>
import functools

import jax
import jax.numpy as jnp
from jax import lax
from jax.experimental import pallas as pl
from jax.experimental.pallas import tpu as pltpu


# --------------------------- fused Pallas kernel ------------------------------
def _qnet_kernel(x_ref, w1_ref, b1_ref, w2_ref, b2_ref,
                 w3_ref, b3_ref, w4_ref, b4_ref, out_ref, *, batch):
    f32 = jnp.float32
    bf16 = jnp.bfloat16

    # conv1 (+bias +ReLU): ONE Toeplitz matmul covering both H phases (even
    # output rows first, odd second) -> single MXU weight push.
    # x rows are (phase, t, b) slabs of 8 padded input rows; w1 columns are
    # (wout=21, cout=16).
    y1 = jnp.maximum(
        jnp.dot(x_ref[...], w1_ref[...], preferred_element_type=f32)
        + b1_ref[...], 0.0)                                      # (21*Bp, 336) f32

    ne = 11 * batch                    # number of even-phase rows
    nb = 9 * batch                     # rows per conv2 output group
    ye = y1[0:ne]                      # conv1 rows hout = 2t,   order (t, b)
    yo = y1[ne:]                       # conv1 rows hout = 2t+1, order (t, b)

    # conv2 (+bias +ReLU): 4 H-tap matmuls on sublane-aligned contiguous row
    # slices (batch padded to a multiple of 8).  Slice in f32 (free), cast to
    # bf16 right at the MXU operand.
    #   hout2 = 2*i2 + kh2, kh2 = 0..3 -> ye[i2], yo[i2], ye[i2+1], yo[i2+1]
    acc2 = jnp.dot(ye[0:nb].astype(bf16), w2_ref[0],
                   preferred_element_type=f32)                            # kh2=0
    acc2 = acc2 + jnp.dot(yo[0:nb].astype(bf16), w2_ref[1],
                          preferred_element_type=f32)                     # kh2=1
    acc2 = acc2 + jnp.dot(ye[batch:batch + nb].astype(bf16), w2_ref[2],
                          preferred_element_type=f32)                     # kh2=2
    acc2 = acc2 + jnp.dot(yo[batch:batch + nb].astype(bf16), w2_ref[3],
                          preferred_element_type=f32)                     # kh2=3
    y2 = jnp.maximum(acc2 + b2_ref[...], 0.0)          # (9*Bp, 288) f32, rows (i2, b)

    # linear1 (+bias +ReLU): single batched contraction over the 9 conv2 output
    # rows (torch.flatten's NCHW permutation already folded into w3).  The
    # (9*Bp, 288) -> (9, Bp, 288) reshape happens in f32 exactly at (8,128)
    # tile boundaries, then the value is cast to bf16 for the MXU.
    y2r = y2.reshape(9, batch, 288).astype(bf16)
    acc3 = jnp.einsum('ibk,ikn->ibn', y2r, w3_ref[...],
                      preferred_element_type=f32)                 # (9, Bp, 256)
    h = jnp.maximum(jnp.sum(acc3, axis=0) + b3_ref[...], 0.0)     # (Bp, 256) f32

    # linear2: output channels zero-padded -> single lane-dense 128-wide store.
    out_ref[...] = (jnp.dot(h.astype(bf16), w4_ref[...],
                            preferred_element_type=f32) + b4_ref[...])


# ------------------------- one-time parameter prep ----------------------------
def prepare_params(params):
    """Fold all weight-side transposes / permutations / conv lowering / bf16
    casts into the parameters once; the per-call hot path has no weight work."""
    f32 = jnp.float32
    bf16 = jnp.bfloat16
    w1 = params["w1"].astype(f32)          # (16, 4, 8, 8)
    w2 = params["w2"].astype(f32)          # (32, 16, 4, 4)
    w3 = params["w3"].astype(f32)          # (256, 2592)
    w4 = params["w4"].astype(f32)          # (n_out, 256)
    n_out = w4.shape[0]
    n_pad = ((n_out + 127) // 128) * 128

    # conv1 Toeplitz weight: rows = (hi, wi, cin) of an 8x88x4 input slab,
    # cols = (wout=21, cout=16). Nonzero only where wi - 4*wout in [0, 8).
    w1_k = jnp.transpose(w1, (2, 3, 1, 0))                 # (kh, kw, cin, cout)
    w1_t = jnp.zeros((8, 88, 4, 21, 16), f32)
    for j in range(21):
        w1_t = w1_t.at[:, 4 * j:4 * j + 8, :, j, :].set(w1_k)
    w1_big = w1_t.reshape(8 * 88 * 4, 21 * 16)             # (2816, 336)
    b1_big = jnp.tile(params["b1"].astype(f32), 21).reshape(1, 21 * 16)

    # conv2 Toeplitz weights, one per H kernel tap:
    # rows = (wout1=21, cin=16), cols = (wout2=9, cout=32).
    w2_k = jnp.transpose(w2, (2, 3, 1, 0))                 # (kh2, kw2, cin, cout)
    taps = []
    for kh2 in range(4):
        wt = jnp.zeros((21, 16, 9, 32), f32)
        for j2 in range(9):
            wt = wt.at[2 * j2:2 * j2 + 4, :, j2, :].set(w2_k[kh2])
        taps.append(wt.reshape(21 * 16, 9 * 32))
    w2_big = jnp.stack(taps, axis=0)                       # (4, 336, 288)
    b2_big = jnp.tile(params["b2"].astype(f32), 9).reshape(1, 9 * 32)

    # linear1 weight with torch.flatten's NCHW (cout, i2, j2) order folded in:
    # w3_p[i2, j2*32 + o2, n] = w3[n, o2*81 + i2*9 + j2].
    w3_p = jnp.transpose(w3.reshape(256, 32, 9, 9), (2, 3, 1, 0)).reshape(9, 288, 256)
    b3_p = params["b3"].astype(f32).reshape(1, 256)

    # linear2 pre-transposed + zero-padded to a 128-lane multiple.
    w4_p = jnp.zeros((256, n_pad), f32).at[:, :n_out].set(w4.T)
    b4_p = jnp.zeros((1, n_pad), f32).at[0, :n_out].set(params["b4"].astype(f32))

    # Matmul weights in bf16 (halves the binding HBM stream); biases stay f32.
    return dict(w1=w1_big.astype(bf16), b1=b1_big,
                w2=w2_big.astype(bf16), b2=b2_big,
                w3=w3_p.astype(bf16), b3=b3_p,
                w4=w4_p.astype(bf16), b4=b4_p)


# ------------------------------ forward pass ----------------------------------
def qnet_forward(x_nchw, prep, *, n_outputs):
    """Pallas-backed QNet forward. x_nchw: (B, 4, 84, 84)."""
    B = x_nchw.shape[0]
    Bp = max(8, ((B + 7) // 8) * 8)            # sublane-aligned batch
    n_pad = prep["w4"].shape[1]

    # Cheap per-call glue (cast/pad/reshape/transpose only, no gather), all in
    # bf16: build even/odd 8-row input slabs ordered (row_phase_index, batch)
    # and concatenate into a single conv1 operand.
    x = x_nchw.astype(jnp.bfloat16)
    if Bp != B:
        x = jnp.pad(x, ((0, Bp - B), (0, 0), (0, 0), (0, 0)))
    x = jnp.transpose(x, (0, 2, 3, 1))                              # NHWC
    x_pad = jnp.pad(x, ((0, 0), (2, 2), (2, 2), (0, 0)))            # (Bp, 88, 88, 4)
    xe = jnp.transpose(x_pad.reshape(Bp, 11, 8 * 88 * 4),
                       (1, 0, 2)).reshape(11 * Bp, 2816)            # hout even
    xo = jnp.transpose(x_pad[:, 4:84].reshape(Bp, 10, 8 * 88 * 4),
                       (1, 0, 2)).reshape(10 * Bp, 2816)            # hout odd
    x_all = jnp.concatenate([xe, xo], axis=0)                       # (21*Bp, 2816)

    operands = (x_all, prep["w1"], prep["b1"], prep["w2"], prep["b2"],
                prep["w3"], prep["b3"], prep["w4"], prep["b4"])

    flops = 2 * Bp * (21 * 2816 * 336 + 4 * 9 * 336 * 288
                      + 9 * 288 * 256 + 256 * n_pad)
    bytes_accessed = (sum(int(a.size) * a.dtype.itemsize for a in operands)
                      + Bp * n_pad * 4)

    # No grid: every operand lives whole in VMEM (single-buffered weights).
    # TODO(synk): if batch grows past ~64, add a batch-blocked grid (constant
    # weight index_maps, "parallel" batch axis) instead of whole-array specs.
    out_pad = pl.pallas_call(
        functools.partial(_qnet_kernel, batch=Bp),
        out_shape=jax.ShapeDtypeStruct((Bp, n_pad), jnp.float32),
        in_specs=[pl.BlockSpec(memory_space=pltpu.MemorySpace.VMEM)
                  for _ in operands],
        out_specs=pl.BlockSpec(memory_space=pltpu.MemorySpace.VMEM),
        compiler_params=pltpu.CompilerParams(
            vmem_limit_bytes=16 * 1024 * 1024),
        cost_estimate=pl.CostEstimate(
            flops=flops, transcendentals=0, bytes_accessed=bytes_accessed),
    )(*operands)
    return out_pad[:B, :n_outputs]


# --------------------------- pure-JAX reference --------------------------------
def reference_forward(x, params):
    y1 = lax.conv_general_dilated(
        x, params["w1"], (4, 4), ((2, 2), (2, 2)),
        dimension_numbers=("NCHW", "OIHW", "NCHW"))
    y1 = jnp.maximum(y1 + params["b1"][None, :, None, None], 0.0)
    y2 = lax.conv_general_dilated(
        y1, params["w2"], (2, 2), ((0, 0), (0, 0)),
        dimension_numbers=("NCHW", "OIHW", "NCHW"))
    y2 = jnp.maximum(y2 + params["b2"][None, :, None, None], 0.0)
    flat = y2.reshape(y2.shape[0], -1)
    h = jnp.maximum(flat @ params["w3"].T + params["b3"], 0.0)
    return h @ params["w4"].T + params["b4"]


def init_params(key, n_outputs):
    ks = jax.random.split(key, 8)

    def u(k, shape, fan_in):
        bound = 1.0 / jnp.sqrt(jnp.float32(fan_in))
        return jax.random.uniform(k, shape, jnp.float32, -bound, bound)

    return dict(
        w1=u(ks[0], (16, 4, 8, 8), 4 * 8 * 8), b1=u(ks[1], (16,), 4 * 8 * 8),
        w2=u(ks[2], (32, 16, 4, 4), 16 * 4 * 4), b2=u(ks[3], (32,), 16 * 4 * 4),
        w3=u(ks[4], (256, 2592), 2592), b3=u(ks[5], (256,), 2592),
        w4=u(ks[6], (n_outputs, 256), 256), b4=u(ks[7], (n_outputs,), 256),
    )


if __name__ == "__main__":
    # Input spatial size is fixed at 84x84 by linear1's 2592 = 32*9*9 input dim.
    B, N_OUTPUTS = 2, 6
    key = jax.random.PRNGKey(0)
    kx, kp = jax.random.split(key)
    x = jax.random.normal(kx, (B, 4, 84, 84), dtype=jnp.float32)
    params = init_params(kp, N_OUTPUTS)

    prep = prepare_params(params)                       # one-time weight prep
    fwd = jax.jit(functools.partial(qnet_forward, n_outputs=N_OUTPUTS))

    out = jax.block_until_ready(fwd(x, prep))
    ref = jax.block_until_ready(reference_forward(x, params))

    assert out.shape == (B, N_OUTPUTS), out.shape
    # bf16 weights/activations -> looser tolerance than the pure-f32 version.
    assert jnp.allclose(out, ref, rtol=2e-2, atol=2e-2), (
        f"max abs diff = {jnp.max(jnp.abs(out - ref))}")
    print("KERNEL_OK")
</pallas_src>

<mosaic_0001>
module attributes {stable_mosaic.version = 11 : i64} {
  func.func @_qnet_kernel(%arg0: memref<168x2816xbf16, #tpu.memory_space<vmem>>, %arg1: memref<2816x336xbf16, #tpu.memory_space<vmem>>, %arg2: memref<1x336xf32, #tpu.memory_space<vmem>>, %arg3: memref<4x336x288xbf16, #tpu.memory_space<vmem>>, %arg4: memref<1x288xf32, #tpu.memory_space<vmem>>, %arg5: memref<9x288x256xbf16, #tpu.memory_space<vmem>>, %arg6: memref<1x256xf32, #tpu.memory_space<vmem>>, %arg7: memref<256x128xbf16, #tpu.memory_space<vmem>>, %arg8: memref<1x128xf32, #tpu.memory_space<vmem>>, %arg9: memref<8x128xf32, #tpu.memory_space<vmem>>) attributes {dimension_semantics = [], scalar_prefetch = 0 : i64, scratch_operands = 0 : i64, tpu.core_type = #tpu.core_type<tc>} {
    %c0 = arith.constant 0 : index
    %c0_0 = arith.constant 0 : index
    %0 = vector.load %arg0[%c0, %c0_0] : memref<168x2816xbf16, #tpu.memory_space<vmem>>, vector<168x2816xbf16>
    %c0_1 = arith.constant 0 : index
    %c0_2 = arith.constant 0 : index
    %1 = vector.load %arg1[%c0_1, %c0_2] : memref<2816x336xbf16, #tpu.memory_space<vmem>>, vector<2816x336xbf16>
    %cst = arith.constant dense<0.000000e+00> : vector<168x336xf32>
    %2 = tpu.matmul %0, %1, %cst {dimension_numbers = #tpu.dot_dimension_numbers<[1], [0], [0], [1], [0, 0, 1, 1], [], []>} : vector<168x2816xbf16>, vector<2816x336xbf16>, vector<168x336xf32> -> vector<168x336xf32>
    %c0_3 = arith.constant 0 : index
    %c0_4 = arith.constant 0 : index
    %3 = vector.load %arg2[%c0_3, %c0_4] : memref<1x336xf32, #tpu.memory_space<vmem>>, vector<1x336xf32>
    %4 = vector.broadcast %3 : vector<1x336xf32> to vector<168x336xf32>
    %5 = arith.addf %2, %4 : vector<168x336xf32>
    %cst_5 = arith.constant 0.000000e+00 : f32
    %6 = vector.broadcast %cst_5 : f32 to vector<168x336xf32>
    %7 = arith.maximumf %5, %6 : vector<168x336xf32>
    %8 = vector.extract_strided_slice %7 {offsets = [0, 0], sizes = [88, 336], strides = [1, 1]} : vector<168x336xf32> to vector<88x336xf32>
    %9 = vector.extract_strided_slice %7 {offsets = [88, 0], sizes = [80, 336], strides = [1, 1]} : vector<168x336xf32> to vector<80x336xf32>
    %10 = vector.extract_strided_slice %8 {offsets = [0, 0], sizes = [72, 336], strides = [1, 1]} : vector<88x336xf32> to vector<72x336xf32>
    %11 = arith.truncf %10 : vector<72x336xf32> to vector<72x336xbf16>
    %c0_6 = arith.constant 0 : index
    %c0_7 = arith.constant 0 : index
    %c0_8 = arith.constant 0 : index
    %12 = vector.load %arg3[%c0_6, %c0_7, %c0_8] : memref<4x336x288xbf16, #tpu.memory_space<vmem>>, vector<1x336x288xbf16>
    %13 = vector.shape_cast %12 : vector<1x336x288xbf16> to vector<336x288xbf16>
    %cst_9 = arith.constant dense<0.000000e+00> : vector<72x288xf32>
    %14 = tpu.matmul %11, %13, %cst_9 {dimension_numbers = #tpu.dot_dimension_numbers<[1], [0], [0], [1], [0, 0, 1, 1], [], []>} : vector<72x336xbf16>, vector<336x288xbf16>, vector<72x288xf32> -> vector<72x288xf32>
    %15 = vector.extract_strided_slice %9 {offsets = [0, 0], sizes = [72, 336], strides = [1, 1]} : vector<80x336xf32> to vector<72x336xf32>
    %16 = arith.truncf %15 : vector<72x336xf32> to vector<72x336xbf16>
    %c1 = arith.constant 1 : index
    %c0_10 = arith.constant 0 : index
    %c0_11 = arith.constant 0 : index
    %17 = vector.load %arg3[%c1, %c0_10, %c0_11] : memref<4x336x288xbf16, #tpu.memory_space<vmem>>, vector<1x336x288xbf16>
    %18 = vector.shape_cast %17 : vector<1x336x288xbf16> to vector<336x288xbf16>
    %cst_12 = arith.constant dense<0.000000e+00> : vector<72x288xf32>
    %19 = tpu.matmul %16, %18, %cst_12 {dimension_numbers = #tpu.dot_dimension_numbers<[1], [0], [0], [1], [0, 0, 1, 1], [], []>} : vector<72x336xbf16>, vector<336x288xbf16>, vector<72x288xf32> -> vector<72x288xf32>
    %20 = arith.addf %14, %19 : vector<72x288xf32>
    %21 = vector.extract_strided_slice %8 {offsets = [8, 0], sizes = [72, 336], strides = [1, 1]} : vector<88x336xf32> to vector<72x336xf32>
    %22 = arith.truncf %21 : vector<72x336xf32> to vector<72x336xbf16>
    %c2 = arith.constant 2 : index
    %c0_13 = arith.constant 0 : index
    %c0_14 = arith.constant 0 : index
    %23 = vector.load %arg3[%c2, %c0_13, %c0_14] : memref<4x336x288xbf16, #tpu.memory_space<vmem>>, vector<1x336x288xbf16>
    %24 = vector.shape_cast %23 : vector<1x336x288xbf16> to vector<336x288xbf16>
    %cst_15 = arith.constant dense<0.000000e+00> : vector<72x288xf32>
    %25 = tpu.matmul %22, %24, %cst_15 {dimension_numbers = #tpu.dot_dimension_numbers<[1], [0], [0], [1], [0, 0, 1, 1], [], []>} : vector<72x336xbf16>, vector<336x288xbf16>, vector<72x288xf32> -> vector<72x288xf32>
    %26 = arith.addf %20, %25 : vector<72x288xf32>
    %27 = vector.extract_strided_slice %9 {offsets = [8, 0], sizes = [72, 336], strides = [1, 1]} : vector<80x336xf32> to vector<72x336xf32>
    %28 = arith.truncf %27 : vector<72x336xf32> to vector<72x336xbf16>
    %c3 = arith.constant 3 : index
    %c0_16 = arith.constant 0 : index
    %c0_17 = arith.constant 0 : index
    %29 = vector.load %arg3[%c3, %c0_16, %c0_17] : memref<4x336x288xbf16, #tpu.memory_space<vmem>>, vector<1x336x288xbf16>
    %30 = vector.shape_cast %29 : vector<1x336x288xbf16> to vector<336x288xbf16>
    %cst_18 = arith.constant dense<0.000000e+00> : vector<72x288xf32>
    %31 = tpu.matmul %28, %30, %cst_18 {dimension_numbers = #tpu.dot_dimension_numbers<[1], [0], [0], [1], [0, 0, 1, 1], [], []>} : vector<72x336xbf16>, vector<336x288xbf16>, vector<72x288xf32> -> vector<72x288xf32>
    %32 = arith.addf %26, %31 : vector<72x288xf32>
    %c0_19 = arith.constant 0 : index
    %c0_20 = arith.constant 0 : index
    %33 = vector.load %arg4[%c0_19, %c0_20] : memref<1x288xf32, #tpu.memory_space<vmem>>, vector<1x288xf32>
    %34 = vector.broadcast %33 : vector<1x288xf32> to vector<72x288xf32>
    %35 = arith.addf %32, %34 : vector<72x288xf32>
    %cst_21 = arith.constant 0.000000e+00 : f32
    %36 = vector.broadcast %cst_21 : f32 to vector<72x288xf32>
    %37 = arith.maximumf %35, %36 : vector<72x288xf32>
    %38 = vector.shape_cast %37 : vector<72x288xf32> to vector<9x8x288xf32>
    %39 = arith.truncf %38 : vector<9x8x288xf32> to vector<9x8x288xbf16>
    %c0_22 = arith.constant 0 : index
    %c0_23 = arith.constant 0 : index
    %c0_24 = arith.constant 0 : index
    %40 = vector.load %arg5[%c0_22, %c0_23, %c0_24] : memref<9x288x256xbf16, #tpu.memory_space<vmem>>, vector<9x288x256xbf16>
    "tpu.trace_start"() <{level = 10 : i32, message = "ibk,ikn->ibn"}> : () -> ()
    %cst_25 = arith.constant dense<0.000000e+00> : vector<9x8x256xf32>
    %41 = tpu.matmul %39, %40, %cst_25 {dimension_numbers = #tpu.dot_dimension_numbers<[2], [1], [1], [2], [0, 0, 0, 1, 1, 2], [0], [0]>} : vector<9x8x288xbf16>, vector<9x288x256xbf16>, vector<9x8x256xf32> -> vector<9x8x256xf32>
    "tpu.trace_stop"() : () -> ()
    %cst_26 = arith.constant dense<0.000000e+00> : vector<8x256xf32>
    %42 = vector.multi_reduction <add>, %41, %cst_26 [0] : vector<9x8x256xf32> to vector<8x256xf32>
    %c0_27 = arith.constant 0 : index
    %c0_28 = arith.constant 0 : index
    %43 = vector.load %arg6[%c0_27, %c0_28] : memref<1x256xf32, #tpu.memory_space<vmem>>, vector<1x256xf32>
    %44 = vector.broadcast %43 : vector<1x256xf32> to vector<8x256xf32>
    %45 = arith.addf %42, %44 : vector<8x256xf32>
    %cst_29 = arith.constant 0.000000e+00 : f32
    %46 = vector.broadcast %cst_29 : f32 to vector<8x256xf32>
    %47 = arith.maximumf %45, %46 : vector<8x256xf32>
    %48 = arith.truncf %47 : vector<8x256xf32> to vector<8x256xbf16>
    %c0_30 = arith.constant 0 : index
    %c0_31 = arith.constant 0 : index
    %49 = vector.load %arg7[%c0_30, %c0_31] : memref<256x128xbf16, #tpu.memory_space<vmem>>, vector<256x128xbf16>
    %cst_32 = arith.constant dense<0.000000e+00> : vector<8x128xf32>
    %50 = tpu.matmul %48, %49, %cst_32 {dimension_numbers = #tpu.dot_dimension_numbers<[1], [0], [0], [1], [0, 0, 1, 1], [], []>} : vector<8x256xbf16>, vector<256x128xbf16>, vector<8x128xf32> -> vector<8x128xf32>
    %c0_33 = arith.constant 0 : index
    %c0_34 = arith.constant 0 : index
    %51 = vector.load %arg8[%c0_33, %c0_34] : memref<1x128xf32, #tpu.memory_space<vmem>>, vector<1x128xf32>
    %52 = vector.broadcast %51 : vector<1x128xf32> to vector<8x128xf32>
    %53 = arith.addf %50, %52 : vector<8x128xf32>
    %c0_35 = arith.constant 0 : index
    %c0_36 = arith.constant 0 : index
    %54 = vector.load %arg9[%c0_35, %c0_36] : memref<8x128xf32, #tpu.memory_space<vmem>>, vector<8x128xf32>
    tpu.vector_store %arg9[%c0_35, %c0_36], %53 {strides = array<i32>} : memref<8x128xf32, #tpu.memory_space<vmem>>, vector<8x128xf32>,
    return
  }
}

</mosaic_0001>

<llo_original>
// kernel: qnet_forward.1
$region0: #{qnet_forward.1}
  #allocation0 [shape = 'u32[]', space=smem, size = 0x4, offset = 0x4, fixed_abs, tag = 'smem constant byte address 0x4 - core index']
  #allocation1 [shape = 'u32[144,128]{1,0:T(1,128)}', space=vmem, size = 0x12000, scoped, tag = 'internal scratch']
  %s0 = inlined_call_operand.vmem [shape: bf16[168,2816], index: 0, kind: input, shape index: {}]
  %s1 = inlined_call_operand.vmem [shape: bf16[2816,336], index: 1, kind: input, shape index: {}]
  %s2 = inlined_call_operand.vmem [shape: f32[1,336], index: 2, kind: input, shape index: {}]
  %s3 = inlined_call_operand.vmem [shape: bf16[4,336,288], index: 3, kind: input, shape index: {}]
  %s4 = inlined_call_operand.vmem [shape: f32[1,288], index: 4, kind: input, shape index: {}]
  %s5 = inlined_call_operand.vmem [shape: bf16[9,288,256], index: 5, kind: input, shape index: {}]
  %s6 = inlined_call_operand.vmem [shape: f32[1,256], index: 6, kind: input, shape index: {}]
  %s7 = inlined_call_operand.vmem [shape: bf16[256,128], index: 7, kind: input, shape index: {}]
  %s8 = inlined_call_operand.vmem [shape: f32[1,128], index: 8, kind: input, shape index: {}]
  %s9 = inlined_call_operand.vmem [shape: f32[8,128], index: 9, kind: output, shape index: {}]
  %s10 = sld [smem:[#allocation0]]
  $region46: #{qnet_forward.1} parent=0
    _
  %s12 = ssub.s32 1, %s10
  %s13 = scalar_select 0, %s12, %s10
  // Predicated region
  $region2: #{qnet_forward.1} parent=0 // pred_check
    _
  $region3: #{qnet_forward.1} parent=0 // pred_check_branch
    %15 = sbr.rel (0) target = $region5
  $region4: #{qnet_forward.1} parent=0 // pred_region
    _
  $region5: #{qnet_forward.1} parent=0 // pred_fallthru
    _
  // Predicated region
  $region6: #{qnet_forward.1} parent=0 // pred_check
    _
  $region7: #{qnet_forward.1} parent=0 // pred_check_branch
    %17 = sbr.rel (0) target = $region9
  $region8: #{qnet_forward.1} parent=0 // pred_region
    _
  $region9: #{qnet_forward.1} parent=0 // pred_fallthru
    _
  // Predicated region
  $region10: #{qnet_forward.1} parent=0 // pred_check
    _
  $region11: #{qnet_forward.1} parent=0 // pred_check_branch
    %19 = sbr.rel (0) target = $region13
  $region12: #{qnet_forward.1} parent=0 // pred_region
    _
  $region13: #{qnet_forward.1} parent=0 // pred_fallthru
    _
  // Predicated region
  $region14: #{qnet_forward.1} parent=0 // pred_check
    _
  $region15: #{qnet_forward.1} parent=0 // pred_check_branch
    %21 = sbr.rel (0) target = $region17
  $region16: #{qnet_forward.1} parent=0 // pred_region
    _
  $region17: #{qnet_forward.1} parent=0 // pred_fallthru
    _
  // Predicated region
  $region18: #{qnet_forward.1} parent=0 // pred_check
    _
  $region19: #{qnet_forward.1} parent=0 // pred_check_branch
    %23 = sbr.rel (0) target = $region21
  $region20: #{qnet_forward.1} parent=0 // pred_region
    _
  $region21: #{qnet_forward.1} parent=0 // pred_fallthru
    _
  // Predicated region
  $region22: #{qnet_forward.1} parent=0 // pred_check
    _
  $region23: #{qnet_forward.1} parent=0 // pred_check_branch
    %25 = sbr.rel (0) target = $region25
  $region24: #{qnet_forward.1} parent=0 // pred_region
    _
  $region25: #{qnet_forward.1} parent=0 // pred_fallthru
    _
  // Predicated region
  $region26: #{qnet_forward.1} parent=0 // pred_check
    _
  $region27: #{qnet_forward.1} parent=0 // pred_check_branch
    %27 = sbr.rel (0) target = $region29
  $region28: #{qnet_forward.1} parent=0 // pred_region
    _
  $region29: #{qnet_forward.1} parent=0 // pred_fallthru
    _
  // Predicated region
  $region30: #{qnet_forward.1} parent=0 // pred_check
    _
  $region31: #{qnet_forward.1} parent=0 // pred_check_branch
    %29 = sbr.rel (0) target = $region33
  $region32: #{qnet_forward.1} parent=0 // pred_region
    _
  $region33: #{qnet_forward.1} parent=0 // pred_fallthru
    _
  // Predicated region
  $region34: #{qnet_forward.1} parent=0 // pred_check
    _
  $region35: #{qnet_forward.1} parent=0 // pred_check_branch
    %31 = sbr.rel (0) target = $region37
  $region36: #{qnet_forward.1} parent=0 // pred_region
    _
  $region37: #{qnet_forward.1} parent=0 // pred_fallthru
    _
  %v33 = vld [vmem:[%s0] sm:$0xff]
  %v34 = vld [vmem:[%s0 + $0x8] sm:$0xff]
  %v35 = vld [vmem:[%s0 + $0x10] sm:$0xff]
  %v36 = vld [vmem:[%s0 + $0x18] sm:$0xff]
  %v37 = vld [vmem:[%s0 + $0x20] sm:$0xff]
  %v38 = vld [vmem:[%s0 + $0x28] sm:$0xff]
  %v39 = vld [vmem:[%s0 + $0x30] sm:$0xff]
  %v40 = vld [vmem:[%s0 + $0x38] sm:$0xff]
  %v41 = vld [vmem:[%s0 + $0x40] sm:$0xff]
  %v42 = vld [vmem:[%s0 + $0x48] sm:$0xff]
  %v43 = vld [vmem:[%s0 + $0x50] sm:$0xff]
  %v44 = vld [vmem:[%s0 + $0x58] sm:$0xff]
  %v45 = vld [vmem:[%s0 + $0x60] sm:$0xff]
  %v46 = vld [vmem:[%s0 + $0x68] sm:$0xff]
  %v47 = vld [vmem:[%s0 + $0x70] sm:$0xff]
  %v48 = vld [vmem:[%s0 + $0x78] sm:$0xff]
  %v49 = vld [vmem:[%s0 + $0x80] sm:$0xff]
  %v50 = vld [vmem:[%s0 + $0x88] sm:$0xff]
  %v51 = vld [vmem:[%s0 + $0x90] sm:$0xff]
  %v52 = vld [vmem:[%s0 + $0x98] sm:$0xff]
  %v53 = vld [vmem:[%s0 + $0xa0] sm:$0xff]
  %v54 = vld [vmem:[%s0 + $0xa8] sm:$0xff]
  %v55 = vld [vmem:[%s0 + $0xb0] sm:$0xff]
  %v56 = vld [vmem:[%s0 + $0xb8] sm:$0xff]
  %v57 = vld [vmem:[%s0 + $0xc0] sm:$0xff]
  %v58 = vld [vmem:[%s0 + $0xc8] sm:$0xff]
  %v59 = vld [vmem:[%s0 + $0xd0] sm:$0xff]
  %v60 = vld [vmem:[%s0 + $0xd8] sm:$0xff]
  %v61 = vld [vmem:[%s0 + $0xe0] sm:$0xff]
  %v62 = vld [vmem:[%s0 + $0xe8] sm:$0xff]
  %v63 = vld [vmem:[%s0 + $0xf0] sm:$0xff]
  %v64 = vld [vmem:[%s0 + $0xf8] sm:$0xff]
  %v65 = vld [vmem:[%s0 + $0x100] sm:$0xff]
  %v66 = vld [vmem:[%s0 + $0x108] sm:$0xff]
  %v67 = vld [vmem:[%s0 + $0x110] sm:$0xff]
  %v68 = vld [vmem:[%s0 + $0x118] sm:$0xff]
  %v69 = vld [vmem:[%s0 + $0x120] sm:$0xff]
  %v70 = vld [vmem:[%s0 + $0x128] sm:$0xff]
  %v71 = vld [vmem:[%s0 + $0x130] sm:$0xff]
  %v72 = vld [vmem:[%s0 + $0x138] sm:$0xff]
  %v73 = vld [vmem:[%s0 + $0x140] sm:$0xff]
  %v74 = vld [vmem:[%s0 + $0x148] sm:$0xff]
  %v75 = vld [vmem:[%s0 + $0x150] sm:$0xff]
  %v76 = vld [vmem:[%s0 + $0x158] sm:$0xff]
  %v77 = vld [vmem:[%s0 + $0x160] sm:$0xff]
  %v78 = vld [vmem:[%s0 + $0x168] sm:$0xff]
  %v79 = vld [vmem:[%s0 + $0x170] sm:$0xff]
  %v80 = vld [vmem:[%s0 + $0x178] sm:$0xff]
  %v81 = vld [vmem:[%s0 + $0x180] sm:$0xff]
  %v82 = vld [vmem:[%s0 + $0x188] sm:$0xff]
  %v83 = vld [vmem:[%s0 + $0x190] sm:$0xff]
  %v84 = vld [vmem:[%s0 + $0x198] sm:$0xff]
  %v85 = vld [vmem:[%s0 + $0x1a0] sm:$0xff]
  %v86 = vld [vmem:[%s0 + $0x1a8] sm:$0xff]
  %v87 = vld [vmem:[%s0 + $0x1b0] sm:$0xff]
  %v88 = vld [vmem:[%s0 + $0x1b8] sm:$0xff]
  %v89 = vld [vmem:[%s0 + $0x1c0] sm:$0xff]
  %v90 = vld [vmem:[%s0 + $0x1c8] sm:$0xff]
  %v91 = vld [vmem:[%s0 + $0x1d0] sm:$0xff]
  %v92 = vld [vmem:[%s0 + $0x1d8] sm:$0xff]
  %v93 = vld [vmem:[%s0 + $0x1e0] sm:$0xff]
  %v94 = vld [vmem:[%s0 + $0x1e8] sm:$0xff]
  %v95 = vld [vmem:[%s0 + $0x1f0] sm:$0xff]
  %v96 = vld [vmem:[%s0 + $0x1f8] sm:$0xff]
  %v97 = vld [vmem:[%s0 + $0x200] sm:$0xff]
  %v98 = vld [vmem:[%s0 + $0x208] sm:$0xff]
  %v99 = vld [vmem:[%s0 + $0x210] sm:$0xff]
  %v100 = vld [vmem:[%s0 + $0x218] sm:$0xff]
  %v101 = vld [vmem:[%s0 + $0x220] sm:$0xff]
  %v102 = vld [vmem:[%s0 + $0x228] sm:$0xff]
  %v103 = vld [vmem:[%s0 + $0x230] sm:$0xff]
  %v104 = vld [vmem:[%s0 + $0x238] sm:$0xff]
  %v105 = vld [vmem:[%s0 + $0x240] sm:$0xff]
  %v106 = vld [vmem:[%s0 + $0x248] sm:$0xff]
  %v107 = vld [vmem:[%s0 + $0x250] sm:$0xff]
  %v108 = vld [vmem:[%s0 + $0x258] sm:$0xff]
  %v109 = vld [vmem:[%s0 + $0x260] sm:$0xff]
  %v110 = vld [vmem:[%s0 + $0x268] sm:$0xff]
  %v111 = vld [vmem:[%s0 + $0x270] sm:$0xff]
  %v112 = vld [vmem:[%s0 + $0x278] sm:$0xff]
  %v113 = vld [vmem:[%s0 + $0x280] sm:$0xff]
  %v114 = vld [vmem:[%s0 + $0x288] sm:$0xff]
  %v115 = vld [vmem:[%s0 + $0x290] sm:$0xff]
  %v116 = vld [vmem:[%s0 + $0x298] sm:$0xff]
  %v117 = vld [vmem:[%s0 + $0x2a0] sm:$0xff]
  %v118 = vld [vmem:[%s0 + $0x2a8] sm:$0xff]
  %v119 = vld [vmem:[%s0 + $0x2b0] sm:$0xff]
  %v120 = vld [vmem:[%s0 + $0x2b8] sm:$0xff]
  %v121 = vld [vmem:[%s0 + $0x2c0] sm:$0xff]
  %v122 = vld [vmem:[%s0 + $0x2c8] sm:$0xff]
  %v123 = vld [vmem:[%s0 + $0x2d0] sm:$0xff]
  %v124 = vld [vmem:[%s0 + $0x2d8] sm:$0xff]
  %v125 = vld [vmem:[%s0 + $0x2e0] sm:$0xff]
  %v126 = vld [vmem:[%s0 + $0x2e8] sm:$0xff]
  %v127 = vld [vmem:[%s0 + $0x2f0] sm:$0xff]
  %v128 = vld [vmem:[%s0 + $0x2f8] sm:$0xff]
  %v129 = vld [vmem:[%s0 + $0x300] sm:$0xff]
  %v130 = vld [vmem:[%s0 + $0x308] sm:$0xff]
  %v131 = vld [vmem:[%s0 + $0x310] sm:$0xff]
  %v132 = vld [vmem:[%s0 + $0x318] sm:$0xff]
  %v133 = vld [vmem:[%s0 + $0x320] sm:$0xff]
  %v134 = vld [vmem:[%s0 + $0x328] sm:$0xff]
  %v135 = vld [vmem:[%s0 + $0x330] sm:$0xff]
  %v136 = vld [vmem:[%s0 + $0x338] sm:$0xff]
  %v137 = vld [vmem:[%s0 + $0x340] sm:$0xff]
  %v138 = vld [vmem:[%s0 + $0x348] sm:$0xff]
  %v139 = vld [vmem:[%s0 + $0x350] sm:$0xff]
  %v140 = vld [vmem:[%s0 + $0x358] sm:$0xff]
  %v141 = vld [vmem:[%s0 + $0x360] sm:$0xff]
  %v142 = vld [vmem:[%s0 + $0x368] sm:$0xff]
  %v143 = vld [vmem:[%s0 + $0x370] sm:$0xff]
  %v144 = vld [vmem:[%s0 + $0x378] sm:$0xff]
  %v145 = vld [vmem:[%s0 + $0x380] sm:$0xff]
  %v146 = vld [vmem:[%s0 + $0x388] sm:$0xff]
  %v147 = vld [vmem:[%s0 + $0x390] sm:$0xff]
  %v148 = vld [vmem:[%s0 + $0x398] sm:$0xff]
  %v149 = vld [vmem:[%s0 + $0x3a0] sm:$0xff]
  %v150 = vld [vmem:[%s0 + $0x3a8] sm:$0xff]
  %v151 = vld [vmem:[%s0 + $0x3b0] sm:$0xff]
  %v152 = vld [vmem:[%s0 + $0x3b8] sm:$0xff]
  %v153 = vld [vmem:[%s0 + $0x3c0] sm:$0xff]
  %v154 = vld [vmem:[%s0 + $0x3c8] sm:$0xff]
  %v155 = vld [vmem:[%s0 + $0x3d0] sm:$0xff]
  %v156 = vld [vmem:[%s0 + $0x3d8] sm:$0xff]
  %v157 = vld [vmem:[%s0 + $0x3e0] sm:$0xff]
  %v158 = vld [vmem:[%s0 + $0x3e8] sm:$0xff]
  %v159 = vld [vmem:[%s0 + $0x3f0] sm:$0xff]
  %v160 = vld [vmem:[%s0 + $0x3f8] sm:$0xff]
  %v161 = vld [vmem:[%s0 + $0x400] sm:$0xff]
  %v162 = vld [vmem:[%s0 + $0x408] sm:$0xff]
  %v163 = vld [vmem:[%s0 + $0x410] sm:$0xff]
  %v164 = vld [vmem:[%s0 + $0x418] sm:$0xff]
  %v165 = vld [vmem:[%s0 + $0x420] sm:$0xff]
  %v166 = vld [vmem:[%s0 + $0x428] sm:$0xff]
  %v167 = vld [vmem:[%s0 + $0x430] sm:$0xff]
  %v168 = vld [vmem:[%s0 + $0x438] sm:$0xff]
  %v169 = vld [vmem:[%s0 + $0x440] sm:$0xff]
  %v170 = vld [vmem:[%s0 + $0x448] sm:$0xff]
  %v171 = vld [vmem:[%s0 + $0x450] sm:$0xff]
  %v172 = vld [vmem:[%s0 + $0x458] sm:$0xff]
  %v173 = vld [vmem:[%s0 + $0x460] sm:$0xff]
  %v174 = vld [vmem:[%s0 + $0x468] sm:$0xff]
  %v175 = vld [vmem:[%s0 + $0x470] sm:$0xff]
  %v176 = vld [vmem:[%s0 + $0x478] sm:$0xff]
  %v177 = vld [vmem:[%s0 + $0x480] sm:$0xff]
  %v178 = vld [vmem:[%s0 + $0x488] sm:$0xff]
  %v179 = vld [vmem:[%s0 + $0x490] sm:$0xff]
  %v180 = vld [vmem:[%s0 + $0x498] sm:$0xff]
  %v181 = vld [vmem:[%s0 + $0x4a0] sm:$0xff]
  %v182 = vld [vmem:[%s0 + $0x4a8] sm:$0xff]
  %v183 = vld [vmem:[%s0 + $0x4b0] sm:$0xff]
  %v184 = vld [vmem:[%s0 + $0x4b8] sm:$0xff]
  %v185 = vld [vmem:[%s0 + $0x4c0] sm:$0xff]
  %v186 = vld [vmem:[%s0 + $0x4c8] sm:$0xff]
  %v187 = vld [vmem:[%s0 + $0x4d0] sm:$0xff]
  %v188 = vld [vmem:[%s0 + $0x4d8] sm:$0xff]
  %v189 = vld [vmem:[%s0 + $0x4e0] sm:$0xff]
  %v190 = vld [vmem:[%s0 + $0x4e8] sm:$0xff]
  %v191 = vld [vmem:[%s0 + $0x4f0] sm:$0xff]
  %v192 = vld [vmem:[%s0 + $0x4f8] sm:$0xff]
  %v193 = vld [vmem:[%s0 + $0x500] sm:$0xff]
  %v194 = vld [vmem:[%s0 + $0x508] sm:$0xff]
  %v195 = vld [vmem:[%s0 + $0x510] sm:$0xff]
  %v196 = vld [vmem:[%s0 + $0x518] sm:$0xff]
  %v197 = vld [vmem:[%s0 + $0x520] sm:$0xff]
  %v198 = vld [vmem:[%s0 + $0x528] sm:$0xff]
  %v199 = vld [vmem:[%s0 + $0x530] sm:$0xff]
  %v200 = vld [vmem:[%s0 + $0x538] sm:$0xff]
  %v201 = vld [vmem:[%s0 + $0x540] sm:$0xff]
  %v202 = vld [vmem:[%s0 + $0x548] sm:$0xff]
  %v203 = vld [vmem:[%s0 + $0x550] sm:$0xff]
  %v204 = vld [vmem:[%s0 + $0x558] sm:$0xff]
  %v205 = vld [vmem:[%s0 + $0x560] sm:$0xff]
  %v206 = vld [vmem:[%s0 + $0x568] sm:$0xff]
  %v207 = vld [vmem:[%s0 + $0x570] sm:$0xff]
  %v208 = vld [vmem:[%s0 + $0x578] sm:$0xff]
  %v209 = vld [vmem:[%s0 + $0x580] sm:$0xff]
  %v210 = vld [vmem:[%s0 + $0x588] sm:$0xff]
  %v211 = vld [vmem:[%s0 + $0x590] sm:$0xff]
  %v212 = vld [vmem:[%s0 + $0x598] sm:$0xff]
  %v213 = vld [vmem:[%s0 + $0x5a0] sm:$0xff]
  %v214 = vld [vmem:[%s0 + $0x5a8] sm:$0xff]
  %v215 = vld [vmem:[%s0 + $0x5b0] sm:$0xff]
  %v216 = vld [vmem:[%s0 + $0x5b8] sm:$0xff]
  %v217 = vld [vmem:[%s0 + $0x5c0] sm:$0xff]
  %v218 = vld [vmem:[%s0 + $0x5c8] sm:$0xff]
  %v219 = vld [vmem:[%s0 + $0x5d0] sm:$0xff]
  %v220 = vld [vmem:[%s0 + $0x5d8] sm:$0xff]
  %v221 = vld [vmem:[%s0 + $0x5e0] sm:$0xff]
  %v222 = vld [vmem:[%s0 + $0x5e8] sm:$0xff]
  %v223 = vld [vmem:[%s0 + $0x5f0] sm:$0xff]
  %v224 = vld [vmem:[%s0 + $0x5f8] sm:$0xff]
  %v225 = vld [vmem:[%s0 + $0x600] sm:$0xff]
  %v226 = vld [vmem:[%s0 + $0x608] sm:$0xff]
  %v227 = vld [vmem:[%s0 + $0x610] sm:$0xff]
  %v228 = vld [vmem:[%s0 + $0x618] sm:$0xff]
  %v229 = vld [vmem:[%s0 + $0x620] sm:$0xff]
  %v230 = vld [vmem:[%s0 + $0x628] sm:$0xff]
  %v231 = vld [vmem:[%s0 + $0x630] sm:$0xff]
  %v232 = vld [vmem:[%s0 + $0x638] sm:$0xff]
  %v233 = vld [vmem:[%s0 + $0x640] sm:$0xff]
  %v234 = vld [vmem:[%s0 + $0x648] sm:$0xff]
  %v235 = vld [vmem:[%s0 + $0x650] sm:$0xff]
  %v236 = vld [vmem:[%s0 + $0x658] sm:$0xff]
  %v237 = vld [vmem:[%s0 + $0x660] sm:$0xff]
  %v238 = vld [vmem:[%s0 + $0x668] sm:$0xff]
  %v239 = vld [vmem:[%s0 + $0x670] sm:$0xff]
  %v240 = vld [vmem:[%s0 + $0x678] sm:$0xff]
  %v241 = vld [vmem:[%s0 + $0x680] sm:$0xff]
  %v242 = vld [vmem:[%s0 + $0x688] sm:$0xff]
  %v243 = vld [vmem:[%s0 + $0x690] sm:$0xff]
  %v244 = vld [vmem:[%s0 + $0x698] sm:$0xff]
  %v245 = vld [vmem:[%s0 + $0x6a0] sm:$0xff]
  %v246 = vld [vmem:[%s0 + $0x6a8] sm:$0xff]
  %v247 = vld [vmem:[%s0 + $0x6b0] sm:$0xff]
  %v248 = vld [vmem:[%s0 + $0x6b8] sm:$0xff]
  %v249 = vld [vmem:[%s0 + $0x6c0] sm:$0xff]
  %v250 = vld [vmem:[%s0 + $0x6c8] sm:$0xff]
  %v251 = vld [vmem:[%s0 + $0x6d0] sm:$0xff]
  %v252 = vld [vmem:[%s0 + $0x6d8] sm:$0xff]
  %v253 = vld [vmem:[%s0 + $0x6e0] sm:$0xff]
  %v254 = vld [vmem:[%s0 + $0x6e8] sm:$0xff]
  %v255 = vld [vmem:[%s0 + $0x6f0] sm:$0xff]
  %v256 = vld [vmem:[%s0 + $0x6f8] sm:$0xff]
  %v257 = vld [vmem:[%s0 + $0x700] sm:$0xff]
  %v258 = vld [vmem:[%s0 + $0x708] sm:$0xff]
  %v259 = vld [vmem:[%s0 + $0x710] sm:$0xff]
  %v260 = vld [vmem:[%s0 + $0x718] sm:$0xff]
  %v261 = vld [vmem:[%s0 + $0x720] sm:$0xff]
  %v262 = vld [vmem:[%s0 + $0x728] sm:$0xff]
  %v263 = vld [vmem:[%s0 + $0x730] sm:$0xff]
  %v264 = vld [vmem:[%s1] sm:$0xff]
  %v265 = vld [vmem:[%s1 + $0x8] sm:$0xf]
  %v266 = vld [vmem:[%s1 + $0xc] sm:$0xff]
  %v267 = vld [vmem:[%s1 + $0x14] sm:$0xf]
  %v268 = vld [vmem:[%s1 + $0x18] sm:$0xff]
  %v269 = vld [vmem:[%s1 + $0x20] sm:$0xf]
  %v270 = vld [vmem:[%s1 + $0x24] sm:$0xff]
  %v271 = vld [vmem:[%s1 + $0x2c] sm:$0xf]
  %v272 = vld [vmem:[%s1 + $0x30] sm:$0xff]
  %v273 = vld [vmem:[%s1 + $0x38] sm:$0xf]
  %v274 = vld [vmem:[%s1 + $0x3c] sm:$0xff]
  %v275 = vld [vmem:[%s1 + $0x44] sm:$0xf]
  %v276 = vld [vmem:[%s1 + $0x48] sm:$0xff]
  %v277 = vld [vmem:[%s1 + $0x50] sm:$0xf]
  %v278 = vld [vmem:[%s1 + $0x54] sm:$0xff]
  %v279 = vld [vmem:[%s1 + $0x5c] sm:$0xf]
  %v280 = vld [vmem:[%s1 + $0x60] sm:$0xff]
  %v281 = vld [vmem:[%s1 + $0x68] sm:$0xf]
  %v282 = vld [vmem:[%s1 + $0x6c] sm:$0xff]
  %v283 = vld [vmem:[%s1 + $0x74] sm:$0xf]
  %v284 = vld [vmem:[%s1 + $0x78] sm:$0xff]
  %v285 = vld [vmem:[%s1 + $0x80] sm:$0xf]
  %v286 = vld [vmem:[%s1 + $0x84] sm:$0xff]
  %v287 = vld [vmem:[%s1 + $0x8c] sm:$0xf]
  %v288 = vld [vmem:[%s1 + $0x90] sm:$0xff]
  %v289 = vld [vmem:[%s1 + $0x98] sm:$0xf]
  %v290 = vld [vmem:[%s1 + $0x9c] sm:$0xff]
  %v291 = vld [vmem:[%s1 + $0xa4] sm:$0xf]
  %v292 = vld [vmem:[%s1 + $0xa8] sm:$0xff]
  %v293 = vld [vmem:[%s1 + $0xb0] sm:$0xf]
  %v294 = vld [vmem:[%s1 + $0xb4] sm:$0xff]
  %v295 = vld [vmem:[%s1 + $0xbc] sm:$0xf]
  %v296 = vld [vmem:[%s1 + $0xc0] sm:$0xff]
  %v297 = vld [vmem:[%s1 + $0xc8] sm:$0xf]
  %v298 = vld [vmem:[%s1 + $0xcc] sm:$0xff]
  %v299 = vld [vmem:[%s1 + $0xd4] sm:$0xf]
  %v300 = vld [vmem:[%s1 + $0xd8] sm:$0xff]
  %v301 = vld [vmem:[%s1 + $0xe0] sm:$0xf]
  %v302 = vld [vmem:[%s1 + $0xe4] sm:$0xff]
  %v303 = vld [vmem:[%s1 + $0xec] sm:$0xf]
  %v304 = vld [vmem:[%s1 + $0xf0] sm:$0xff]
  %v305 = vld [vmem:[%s1 + $0xf8] sm:$0xf]
  %v306 = vld [vmem:[%s1 + $0xfc] sm:$0xff]
  %v307 = vld [vmem:[%s1 + $0x104] sm:$0xf]
  %v308 = vld [vmem:[%s1 + $0x108] sm:$0xff]
  %v309 = vld [vmem:[%s1 + $0x110] sm:$0xf]
  %v310 = vld [vmem:[%s1 + $0x114] sm:$0xff]
  %v311 = vld [vmem:[%s1 + $0x11c] sm:$0xf]
  %v312 = vld [vmem:[%s1 + $0x120] sm:$0xff]
  %v313 = vld [vmem:[%s1 + $0x128] sm:$0xf]
  %v314 = vld [vmem:[%s1 + $0x12c] sm:$0xff]
  %v315 = vld [vmem:[%s1 + $0x134] sm:$0xf]
  %v316 = vld [vmem:[%s1 + $0x138] sm:$0xff]
  %v317 = vld [vmem:[%s1 + $0x140] sm:$0xf]
  %v318 = vld [vmem:[%s1 + $0x144] sm:$0xff]
  %v319 = vld [vmem:[%s1 + $0x14c] sm:$0xf]
  %v320 = vld [vmem:[%s1 + $0x150] sm:$0xff]
  %v321 = vld [vmem:[%s1 + $0x158] sm:$0xf]
  %v322 = vld [vmem:[%s1 + $0x15c] sm:$0xff]
  %v323 = vld [vmem:[%s1 + $0x164] sm:$0xf]
  %v324 = vld [vmem:[%s1 + $0x168] sm:$0xff]
  %v325 = vld [vmem:[%s1 + $0x170] sm:$0xf]
  %v326 = vld [vmem:[%s1 + $0x174] sm:$0xff]
  %v327 = vld [vmem:[%s1 + $0x17c] sm:$0xf]
  %v328 = vld [vmem:[%s1 + $0x180] sm:$0xff]
  %v329 = vld [vmem:[%s1 + $0x188] sm:$0xf]
  %v330 = vld [vmem:[%s1 + $0x18c] sm:$0xff]
  %v331 = vld [vmem:[%s1 + $0x194] sm:$0xf]
  %v332 = vld [vmem:[%s1 + $0x198] sm:$0xff]
  %v333 = vld [vmem:[%s1 + $0x1a0] sm:$0xf]
  %v334 = vld [vmem:[%s1 + $0x1a4] sm:$0xff]
  %v335 = vld [vmem:[%s1 + $0x1ac] sm:$0xf]
  %v336 = vld [vmem:[%s1 + $0x1b0] sm:$0xff]
  %v337 = vld [vmem:[%s1 + $0x1b8] sm:$0xf]
  %v338 = vld [vmem:[%s1 + $0x1bc] sm:$0xff]
  %v339 = vld [vmem:[%s1 + $0x1c4] sm:$0xf]
  %v340 = vld [vmem:[%s1 + $0x1c8] sm:$0xff]
  %v341 = vld [vmem:[%s1 + $0x1d0] sm:$0xf]
  %v342 = vld [vmem:[%s1 + $0x1d4] sm:$0xff]
  %v343 = vld [vmem:[%s1 + $0x1dc] sm:$0xf]
  %v344 = vld [vmem:[%s1 + $0x1e0] sm:$0xff]
  %v345 = vld [vmem:[%s1 + $0x1e8] sm:$0xf]
  %v346 = vld [vmem:[%s1 + $0x1ec] sm:$0xff]
  %v347 = vld [vmem:[%s1 + $0x1f4] sm:$0xf]
  %v348 = vld [vmem:[%s1 + $0x1f8] sm:$0xff]
  %v349 = vld [vmem:[%s1 + $0x200] sm:$0xf]
  %v350 = vld [vmem:[%s1 + $0x204] sm:$0xff]
  %v351 = vld [vmem:[%s1 + $0x20c] sm:$0xf]
  %v352 = vld [vmem:[%s1 + $0x210] sm:$0xff]
  %v353 = vld [vmem:[%s1 + $0x218] sm:$0xf]
  %v354 = vld [vmem:[%s1 + $0x21c] sm:$0xff]
  %v355 = vld [vmem:[%s1 + $0x224] sm:$0xf]
  %v356 = vld [vmem:[%s1 + $0x228] sm:$0xff]
  %v357 = vld [vmem:[%s1 + $0x230] sm:$0xf]
  %v358 = vld [vmem:[%s1 + $0x234] sm:$0xff]
  %v359 = vld [vmem:[%s1 + $0x23c] sm:$0xf]
  %v360 = vld [vmem:[%s1 + $0x240] sm:$0xff]
  %v361 = vld [vmem:[%s1 + $0x248] sm:$0xf]
  %v362 = vld [vmem:[%s1 + $0x24c] sm:$0xff]
  %v363 = vld [vmem:[%s1 + $0x254] sm:$0xf]
  %v364 = vld [vmem:[%s1 + $0x258] sm:$0xff]
  %v365 = vld [vmem:[%s1 + $0x260] sm:$0xf]
  %v366 = vld [vmem:[%s1 + $0x264] sm:$0xff]
  %v367 = vld [vmem:[%s1 + $0x26c] sm:$0xf]
  %v368 = vld [vmem:[%s1 + $0x270] sm:$0xff]
  %v369 = vld [vmem:[%s1 + $0x278] sm:$0xf]
  %v370 = vld [vmem:[%s1 + $0x27c] sm:$0xff]
  %v371 = vld [vmem:[%s1 + $0x284] sm:$0xf]
  %v372 = vld [vmem:[%s1 + $0x288] sm:$0xff]
  %v373 = vld [vmem:[%s1 + $0x290] sm:$0xf]
  %v374 = vld [vmem:[%s1 + $0x294] sm:$0xff]
  %v375 = vld [vmem:[%s1 + $0x29c] sm:$0xf]
  %v376 = vld [vmem:[%s1 + $0x2a0] sm:$0xff]
  %v377 = vld [vmem:[%s1 + $0x2a8] sm:$0xf]
  %v378 = vld [vmem:[%s1 + $0x2ac] sm:$0xff]
  %v379 = vld [vmem:[%s1 + $0x2b4] sm:$0xf]
  %v380 = vld [vmem:[%s1 + $0x2b8] sm:$0xff]
  %v381 = vld [vmem:[%s1 + $0x2c0] sm:$0xf]
  %v382 = vld [vmem:[%s1 + $0x2c4] sm:$0xff]
  %v383 = vld [vmem:[%s1 + $0x2cc] sm:$0xf]
  %v384 = vld [vmem:[%s1 + $0x2d0] sm:$0xff]
  %v385 = vld [vmem:[%s1 + $0x2d8] sm:$0xf]
  %v386 = vld [vmem:[%s1 + $0x2dc] sm:$0xff]
  %v387 = vld [vmem:[%s1 + $0x2e4] sm:$0xf]
  %v388 = vld [vmem:[%s1 + $0x2e8] sm:$0xff]
  %v389 = vld [vmem:[%s1 + $0x2f0] sm:$0xf]
  %v390 = vld [vmem:[%s1 + $0x2f4] sm:$0xff]
  %v391 = vld [vmem:[%s1 + $0x2fc] sm:$0xf]
  %v392 = vld [vmem:[%s1 + $0x300] sm:$0xff]
  %v393 = vld [vmem:[%s1 + $0x308] sm:$0xf]
  %v394 = vld [vmem:[%s1 + $0x30c] sm:$0xff]
  %v395 = vld [vmem:[%s1 + $0x314] sm:$0xf]
  %v396 = vld [vmem:[%s1 + $0x318] sm:$0xff]
  %v397 = vld [vmem:[%s1 + $0x320] sm:$0xf]
  %v398 = vld [vmem:[%s1 + $0x324] sm:$0xff]
  %v399 = vld [vmem:[%s1 + $0x32c] sm:$0xf]
  %v400 = vld [vmem:[%s1 + $0x330] sm:$0xff]
  %v401 = vld [vmem:[%s1 + $0x338] sm:$0xf]
  %v402 = vld [vmem:[%s1 + $0x33c] sm:$0xff]
  %v403 = vld [vmem:[%s1 + $0x344] sm:$0xf]
  %v404 = vld [vmem:[%s1 + $0x348] sm:$0xff]
  %v405 = vld [vmem:[%s1 + $0x350] sm:$0xf]
  %v406 = vld [vmem:[%s1 + $0x354] sm:$0xff]
  %v407 = vld [vmem:[%s1 + $0x35c] sm:$0xf]
  %v408 = vld [vmem:[%s1 + $0x360] sm:$0xff]
  %v409 = vld [vmem:[%s1 + $0x368] sm:$0xf]
  %v410 = vld [vmem:[%s1 + $0x36c] sm:$0xff]
  %v411 = vld [vmem:[%s1 + $0x374] sm:$0xf]
  %v412 = vld [vmem:[%s1 + $0x378] sm:$0xff]
  %v413 = vld [vmem:[%s1 + $0x380] sm:$0xf]
  %v414 = vld [vmem:[%s1 + $0x384] sm:$0xff]
  %v415 = vld [vmem:[%s1 + $0x38c] sm:$0xf]
  %v416 = vld [vmem:[%s1 + $0x390] sm:$0xff]
  %v417 = vld [vmem:[%s1 + $0x398] sm:$0xf]
  %v418 = vld [vmem:[%s1 + $0x39c] sm:$0xff]
  %v419 = vld [vmem:[%s1 + $0x3a4] sm:$0xf]
  %v420 = vld [vmem:[%s1 + $0x3a8] sm:$0xff]
  %v421 = vld [vmem:[%s1 + $0x3b0] sm:$0xf]
  %v422 = vld [vmem:[%s1 + $0x3b4] sm:$0xff]
  %v423 = vld [vmem:[%s1 + $0x3bc] sm:$0xf]
  %v424 = vld [vmem:[%s1 + $0x3c0] sm:$0xff]
  %v425 = vld [vmem:[%s1 + $0x3c8] sm:$0xf]
  %v426 = vld [vmem:[%s1 + $0x3cc] sm:$0xff]
  %v427 = vld [vmem:[%s1 + $0x3d4] sm:$0xf]
  %v428 = vld [vmem:[%s1 + $0x3d8] sm:$0xff]
  %v429 = vld [vmem:[%s1 + $0x3e0] sm:$0xf]
  %v430 = vld [vmem:[%s1 + $0x3e4] sm:$0xff]
  %v431 = vld [vmem:[%s1 + $0x3ec] sm:$0xf]
  %v432 = vld [vmem:[%s1 + $0x3f0] sm:$0xff]
  %v433 = vld [vmem:[%s1 + $0x3f8] sm:$0xf]
  %v434 = vld [vmem:[%s1 + $0x3fc] sm:$0xff]
  %v435 = vld [vmem:[%s1 + $0x404] sm:$0xf]
  %v436 = vld [vmem:[%s1 + $0x408] sm:$0xff]
  %v437 = vld [vmem:[%s1 + $0x410] sm:$0xf]
  %v438 = vld [vmem:[%s1 + $0x414] sm:$0xff]
  %v439 = vld [vmem:[%s1 + $0x41c] sm:$0xf]
  %v440 = vld [vmem:[%s1 + $0x420] sm:$0xff]
  %v441 = vld [vmem:[%s1 + $0x428] sm:$0xf]
  %v442 = vld [vmem:[%s1 + $0x42c] sm:$0xff]
  %v443 = vld [vmem:[%s1 + $0x434] sm:$0xf]
  %v444 = vld [vmem:[%s1 + $0x438] sm:$0xff]
  %v445 = vld [vmem:[%s1 + $0x440] sm:$0xf]
  %v446 = vld [vmem:[%s1 + $0x444] sm:$0xff]
  %v447 = vld [vmem:[%s1 + $0x44c] sm:$0xf]
  %v448 = vld [vmem:[%s1 + $0x450] sm:$0xff]
  %v449 = vld [vmem:[%s1 + $0x458] sm:$0xf]
  %v450 = vld [vmem:[%s1 + $0x45c] sm:$0xff]
  %v451 = vld [vmem:[%s1 + $0x464] sm:$0xf]
  %v452 = vld [vmem:[%s1 + $0x468] sm:$0xff]
  %v453 = vld [vmem:[%s1 + $0x470] sm:$0xf]
  %v454 = vld [vmem:[%s1 + $0x474] sm:$0xff]
  %v455 = vld [vmem:[%s1 + $0x47c] sm:$0xf]
  %v456 = vld [vmem:[%s1 + $0x480] sm:$0xff]
  %v457 = vld [vmem:[%s1 + $0x488] sm:$0xf]
  %v458 = vld [vmem:[%s1 + $0x48c] sm:$0xff]
  %v459 = vld [vmem:[%s1 + $0x494] sm:$0xf]
  %v460 = vld [vmem:[%s1 + $0x498] sm:$0xff]
  %v461 = vld [vmem:[%s1 + $0x4a0] sm:$0xf]
  %v462 = vld [vmem:[%s1 + $0x4a4] sm:$0xff]
  %v463 = vld [vmem:[%s1 + $0x4ac] sm:$0xf]
  %v464 = vld [vmem:[%s1 + $0x4b0] sm:$0xff]
  %v465 = vld [vmem:[%s1 + $0x4b8] sm:$0xf]
  %v466 = vld [vmem:[%s1 + $0x4bc] sm:$0xff]
  %v467 = vld [vmem:[%s1 + $0x4c4] sm:$0xf]
  %v468 = vld [vmem:[%s1 + $0x4c8] sm:$0xff]
  %v469 = vld [vmem:[%s1 + $0x4d0] sm:$0xf]
  %v470 = vld [vmem:[%s1 + $0x4d4] sm:$0xff]
  %v471 = vld [vmem:[%s1 + $0x4dc] sm:$0xf]
  %v472 = vld [vmem:[%s1 + $0x4e0] sm:$0xff]
  %v473 = vld [vmem:[%s1 + $0x4e8] sm:$0xf]
  %v474 = vld [vmem:[%s1 + $0x4ec] sm:$0xff]
  %v475 = vld [vmem:[%s1 + $0x4f4] sm:$0xf]
  %v476 = vld [vmem:[%s1 + $0x4f8] sm:$0xff]
  %v477 = vld [vmem:[%s1 + $0x500] sm:$0xf]
  %v478 = vld [vmem:[%s1 + $0x504] sm:$0xff]
  %v479 = vld [vmem:[%s1 + $0x50c] sm:$0xf]
  %v480 = vld [vmem:[%s1 + $0x510] sm:$0xff]
  %v481 = vld [vmem:[%s1 + $0x518] sm:$0xf]
  %v482 = vld [vmem:[%s1 + $0x51c] sm:$0xff]
  %v483 = vld [vmem:[%s1 + $0x524] sm:$0xf]
  %v484 = vld [vmem:[%s1 + $0x528] sm:$0xff]
  %v485 = vld [vmem:[%s1 + $0x530] sm:$0xf]
  %v486 = vld [vmem:[%s1 + $0x534] sm:$0xff]
  %v487 = vld [vmem:[%s1 + $0x53c] sm:$0xf]
  %v488 = vld [vmem:[%s1 + $0x540] sm:$0xff]
  %v489 = vld [vmem:[%s1 + $0x548] sm:$0xf]
  %v490 = vld [vmem:[%s1 + $0x54c] sm:$0xff]
  %v491 = vld [vmem:[%s1 + $0x554] sm:$0xf]
  %v492 = vld [vmem:[%s1 + $0x558] sm:$0xff]
  %v493 = vld [vmem:[%s1 + $0x560] sm:$0xf]
  %v494 = vld [vmem:[%s1 + $0x564] sm:$0xff]
  %v495 = vld [vmem:[%s1 + $0x56c] sm:$0xf]
  %v496 = vld [vmem:[%s1 + $0x570] sm:$0xff]
  %v497 = vld [vmem:[%s1 + $0x578] sm:$0xf]
  %v498 = vld [vmem:[%s1 + $0x57c] sm:$0xff]
  %v499 = vld [vmem:[%s1 + $0x584] sm:$0xf]
  %v500 = vld [vmem:[%s1 + $0x588] sm:$0xff]
  %v501 = vld [vmem:[%s1 + $0x590] sm:$0xf]
  %v502 = vld [vmem:[%s1 + $0x594] sm:$0xff]
  %v503 = vld [vmem:[%s1 + $0x59c] sm:$0xf]
  %v504 = vld [vmem:[%s1 + $0x5a0] sm:$0xff]
  %v505 = vld [vmem:[%s1 + $0x5a8] sm:$0xf]
  %v506 = vld [vmem:[%s1 + $0x5ac] sm:$0xff]
  %v507 = vld [vmem:[%s1 + $0x5b4] sm:$0xf]
  %v508 = vld [vmem:[%s1 + $0x5b8] sm:$0xff]
  %v509 = vld [vmem:[%s1 + $0x5c0] sm:$0xf]
  %v510 = vld [vmem:[%s1 + $0x5c4] sm:$0xff]
  %v511 = vld [vmem:[%s1 + $0x5cc] sm:$0xf]
  %v512 = vld [vmem:[%s1 + $0x5d0] sm:$0xff]
  %v513 = vld [vmem:[%s1 + $0x5d8] sm:$0xf]
  %v514 = vld [vmem:[%s1 + $0x5dc] sm:$0xff]
  %v515 = vld [vmem:[%s1 + $0x5e4] sm:$0xf]
  %v516 = vld [vmem:[%s1 + $0x5e8] sm:$0xff]
  %v517 = vld [vmem:[%s1 + $0x5f0] sm:$0xf]
  %v518 = vld [vmem:[%s1 + $0x5f4] sm:$0xff]
  %v519 = vld [vmem:[%s1 + $0x5fc] sm:$0xf]
  %v520 = vld [vmem:[%s1 + $0x600] sm:$0xff]
  %v521 = vld [vmem:[%s1 + $0x608] sm:$0xf]
  %v522 = vld [vmem:[%s1 + $0x60c] sm:$0xff]
  %v523 = vld [vmem:[%s1 + $0x614] sm:$0xf]
  %v524 = vld [vmem:[%s1 + $0x618] sm:$0xff]
  %v525 = vld [vmem:[%s1 + $0x620] sm:$0xf]
  %v526 = vld [vmem:[%s1 + $0x624] sm:$0xff]
  %v527 = vld [vmem:[%s1 + $0x62c] sm:$0xf]
  %v528 = vld [vmem:[%s1 + $0x630] sm:$0xff]
  %v529 = vld [vmem:[%s1 + $0x638] sm:$0xf]
  %v530 = vld [vmem:[%s1 + $0x63c] sm:$0xff]
  %v531 = vld [vmem:[%s1 + $0x644] sm:$0xf]
  %v532 = vld [vmem:[%s1 + $0x648] sm:$0xff]
  %v533 = vld [vmem:[%s1 + $0x650] sm:$0xf]
  %v534 = vld [vmem:[%s1 + $0x654] sm:$0xff]
  %v535 = vld [vmem:[%s1 + $0x65c] sm:$0xf]
  %v536 = vld [vmem:[%s1 + $0x660] sm:$0xff]
  %v537 = vld [vmem:[%s1 + $0x668] sm:$0xf]
  %v538 = vld [vmem:[%s1 + $0x66c] sm:$0xff]
  %v539 = vld [vmem:[%s1 + $0x674] sm:$0xf]
  %v540 = vld [vmem:[%s1 + $0x678] sm:$0xff]
  %v541 = vld [vmem:[%s1 + $0x680] sm:$0xf]
  %v542 = vld [vmem:[%s1 + $0x684] sm:$0xff]
  %v543 = vld [vmem:[%s1 + $0x68c] sm:$0xf]
  %v544 = vld [vmem:[%s1 + $0x690] sm:$0xff]
  %v545 = vld [vmem:[%s1 + $0x698] sm:$0xf]
  %v546 = vld [vmem:[%s1 + $0x69c] sm:$0xff]
  %v547 = vld [vmem:[%s1 + $0x6a4] sm:$0xf]
  %v548 = vld [vmem:[%s1 + $0x6a8] sm:$0xff]
  %v549 = vld [vmem:[%s1 + $0x6b0] sm:$0xf]
  %v550 = vld [vmem:[%s1 + $0x6b4] sm:$0xff]
  %v551 = vld [vmem:[%s1 + $0x6bc] sm:$0xf]
  %v552 = vld [vmem:[%s1 + $0x6c0] sm:$0xff]
  %v553 = vld [vmem:[%s1 + $0x6c8] sm:$0xf]
  %v554 = vld [vmem:[%s1 + $0x6cc] sm:$0xff]
  %v555 = vld [vmem:[%s1 + $0x6d4] sm:$0xf]
  %v556 = vld [vmem:[%s1 + $0x6d8] sm:$0xff]
  %v557 = vld [vmem:[%s1 + $0x6e0] sm:$0xf]
  %v558 = vld [vmem:[%s1 + $0x6e4] sm:$0xff]
  %v559 = vld [vmem:[%s1 + $0x6ec] sm:$0xf]
  %v560 = vld [vmem:[%s1 + $0x6f0] sm:$0xff]
  %v561 = vld [vmem:[%s1 + $0x6f8] sm:$0xf]
  %v562 = vld [vmem:[%s1 + $0x6fc] sm:$0xff]
  %v563 = vld [vmem:[%s1 + $0x704] sm:$0xf]
  %v564 = vld [vmem:[%s1 + $0x708] sm:$0xff]
  %v565 = vld [vmem:[%s1 + $0x710] sm:$0xf]
  %v566 = vld [vmem:[%s1 + $0x714] sm:$0xff]
  %v567 = vld [vmem:[%s1 + $0x71c] sm:$0xf]
  %v568 = vld [vmem:[%s1 + $0x720] sm:$0xff]
  %v569 = vld [vmem:[%s1 + $0x728] sm:$0xf]
  %v570 = vld [vmem:[%s1 + $0x72c] sm:$0xff]
  %v571 = vld [vmem:[%s1 + $0x734] sm:$0xf]
  %v572 = vld [vmem:[%s1 + $0x738] sm:$0xff]
  %v573 = vld [vmem:[%s1 + $0x740] sm:$0xf]
  %v574 = vld [vmem:[%s1 + $0x744] sm:$0xff]
  %v575 = vld [vmem:[%s1 + $0x74c] sm:$0xf]
  %v576 = vld [vmem:[%s1 + $0x750] sm:$0xff]
  %v577 = vld [vmem:[%s1 + $0x758] sm:$0xf]
  %v578 = vld [vmem:[%s1 + $0x75c] sm:$0xff]
  %v579 = vld [vmem:[%s1 + $0x764] sm:$0xf]
  %v580 = vld [vmem:[%s1 + $0x768] sm:$0xff]
  %v581 = vld [vmem:[%s1 + $0x770] sm:$0xf]
  %v582 = vld [vmem:[%s1 + $0x774] sm:$0xff]
  %v583 = vld [vmem:[%s1 + $0x77c] sm:$0xf]
  %v584 = vld [vmem:[%s1 + $0x780] sm:$0xff]
  %v585 = vld [vmem:[%s1 + $0x788] sm:$0xf]
  %v586 = vld [vmem:[%s1 + $0x78c] sm:$0xff]
  %v587 = vld [vmem:[%s1 + $0x794] sm:$0xf]
  %v588 = vld [vmem:[%s1 + $0x798] sm:$0xff]
  %v589 = vld [vmem:[%s1 + $0x7a0] sm:$0xf]
  %v590 = vld [vmem:[%s1 + $0x7a4] sm:$0xff]
  %v591 = vld [vmem:[%s1 + $0x7ac] sm:$0xf]
  %v592 = vld [vmem:[%s1 + $0x7b0] sm:$0xff]
  %v593 = vld [vmem:[%s1 + $0x7b8] sm:$0xf]
  %v594 = vld [vmem:[%s1 + $0x7bc] sm:$0xff]
  %v595 = vld [vmem:[%s1 + $0x7c4] sm:$0xf]
  %v596 = vld [vmem:[%s1 + $0x7c8] sm:$0xff]
  %v597 = vld [vmem:[%s1 + $0x7d0] sm:$0xf]
  %v598 = vld [vmem:[%s1 + $0x7d4] sm:$0xff]
  %v599 = vld [vmem:[%s1 + $0x7dc] sm:$0xf]
  %v600 = vld [vmem:[%s1 + $0x7e0] sm:$0xff]
  %v601 = vld [vmem:[%s1 + $0x7e8] sm:$0xf]
  %v602 = vld [vmem:[%s1 + $0x7ec] sm:$0xff]
  %v603 = vld [vmem:[%s1 + $0x7f4] sm:$0xf]
  %v604 = vld [vmem:[%s1 + $0x7f8] sm:$0xff]
  %v605 = vld [vmem:[%s1 + $0x800] sm:$0xf]
  %v606 = vld [vmem:[%s1 + $0x804] sm:$0xff]
  %v607 = vld [vmem:[%s1 + $0x80c] sm:$0xf]
  %v608 = vld [vmem:[%s1 + $0x810] sm:$0xff]
  %v609 = vld [vmem:[%s1 + $0x818] sm:$0xf]
  %v610 = vld [vmem:[%s1 + $0x81c] sm:$0xff]
  %v611 = vld [vmem:[%s1 + $0x824] sm:$0xf]
  %v612 = vld [vmem:[%s1 + $0x828] sm:$0xff]
  %v613 = vld [vmem:[%s1 + $0x830] sm:$0xf]
  %v614 = vld [vmem:[%s1 + $0x834] sm:$0xff]
  %v615 = vld [vmem:[%s1 + $0x83c] sm:$0xf]
  %v616 = vld [vmem:[%s1 + $0x840] sm:$0xff]
  %v617 = vld [vmem:[%s1 + $0x848] sm:$0xf]
  %v618 = vld [vmem:[%s1 + $0x84c] sm:$0xff]
  %v619 = vld [vmem:[%s1 + $0x854] sm:$0xf]
  %v620 = vld [vmem:[%s1 + $0x858] sm:$0xff]
  %v621 = vld [vmem:[%s1 + $0x860] sm:$0xf]
  %v622 = vld [vmem:[%s1 + $0x864] sm:$0xff]
  %v623 = vld [vmem:[%s1 + $0x86c] sm:$0xf]
  %v624 = vld [vmem:[%s1 + $0x870] sm:$0xff]
  %v625 = vld [vmem:[%s1 + $0x878] sm:$0xf]
  %v626 = vld [vmem:[%s1 + $0x87c] sm:$0xff]
  %v627 = vld [vmem:[%s1 + $0x884] sm:$0xf]
  %v628 = vld [vmem:[%s1 + $0x888] sm:$0xff]
  %v629 = vld [vmem:[%s1 + $0x890] sm:$0xf]
  %v630 = vld [vmem:[%s1 + $0x894] sm:$0xff]
  %v631 = vld [vmem:[%s1 + $0x89c] sm:$0xf]
  %v632 = vld [vmem:[%s1 + $0x8a0] sm:$0xff]
  %v633 = vld [vmem:[%s1 + $0x8a8] sm:$0xf]
  %v634 = vld [vmem:[%s1 + $0x8ac] sm:$0xff]
  %v635 = vld [vmem:[%s1 + $0x8b4] sm:$0xf]
  %v636 = vld [vmem:[%s1 + $0x8b8] sm:$0xff]
  %v637 = vld [vmem:[%s1 + $0x8c0] sm:$0xf]
  %v638 = vld [vmem:[%s1 + $0x8c4] sm:$0xff]
  %v639 = vld [vmem:[%s1 + $0x8cc] sm:$0xf]
  %v640 = vld [vmem:[%s1 + $0x8d0] sm:$0xff]
  %v641 = vld [vmem:[%s1 + $0x8d8] sm:$0xf]
  %v642 = vld [vmem:[%s1 + $0x8dc] sm:$0xff]
  %v643 = vld [vmem:[%s1 + $0x8e4] sm:$0xf]
  %v644 = vld [vmem:[%s1 + $0x8e8] sm:$0xff]
  %v645 = vld [vmem:[%s1 + $0x8f0] sm:$0xf]
  %v646 = vld [vmem:[%s1 + $0x8f4] sm:$0xff]
  %v647 = vld [vmem:[%s1 + $0x8fc] sm:$0xf]
  %v648 = vld [vmem:[%s1 + $0x900] sm:$0xff]
  %v649 = vld [vmem:[%s1 + $0x908] sm:$0xf]
  %v650 = vld [vmem:[%s1 + $0x90c] sm:$0xff]
  %v651 = vld [vmem:[%s1 + $0x914] sm:$0xf]
  %v652 = vld [vmem:[%s1 + $0x918] sm:$0xff]
  %v653 = vld [vmem:[%s1 + $0x920] sm:$0xf]
  %v654 = vld [vmem:[%s1 + $0x924] sm:$0xff]
  %v655 = vld [vmem:[%s1 + $0x92c] sm:$0xf]
  %v656 = vld [vmem:[%s1 + $0x930] sm:$0xff]
  %v657 = vld [vmem:[%s1 + $0x938] sm:$0xf]
  %v658 = vld [vmem:[%s1 + $0x93c] sm:$0xff]
  %v659 = vld [vmem:[%s1 + $0x944] sm:$0xf]
  %v660 = vld [vmem:[%s1 + $0x948] sm:$0xff]
  %v661 = vld [vmem:[%s1 + $0x950] sm:$0xf]
  %v662 = vld [vmem:[%s1 + $0x954] sm:$0xff]
  %v663 = vld [vmem:[%s1 + $0x95c] sm:$0xf]
  %v664 = vld [vmem:[%s1 + $0x960] sm:$0xff]
  %v665 = vld [vmem:[%s1 + $0x968] sm:$0xf]
  %v666 = vld [vmem:[%s1 + $0x96c] sm:$0xff]
  %v667 = vld [vmem:[%s1 + $0x974] sm:$0xf]
  %v668 = vld [vmem:[%s1 + $0x978] sm:$0xff]
  %v669 = vld [vmem:[%s1 + $0x980] sm:$0xf]
  %v670 = vld [vmem:[%s1 + $0x984] sm:$0xff]
  %v671 = vld [vmem:[%s1 + $0x98c] sm:$0xf]
  %v672 = vld [vmem:[%s1 + $0x990] sm:$0xff]
  %v673 = vld [vmem:[%s1 + $0x998] sm:$0xf]
  %v674 = vld [vmem:[%s1 + $0x99c] sm:$0xff]
  %v675 = vld [vmem:[%s1 + $0x9a4] sm:$0xf]
  %v676 = vld [vmem:[%s1 + $0x9a8] sm:$0xff]
  %v677 = vld [vmem:[%s1 + $0x9b0] sm:$0xf]
  %v678 = vld [vmem:[%s1 + $0x9b4] sm:$0xff]
  %v679 = vld [vmem:[%s1 + $0x9bc] sm:$0xf]
  %v680 = vld [vmem:[%s1 + $0x9c0] sm:$0xff]
  %v681 = vld [vmem:[%s1 + $0x9c8] sm:$0xf]
  %v682 = vld [vmem:[%s1 + $0x9cc] sm:$0xff]
  %v683 = vld [vmem:[%s1 + $0x9d4] sm:$0xf]
  %v684 = vld [vmem:[%s1 + $0x9d8] sm:$0xff]
  %v685 = vld [vmem:[%s1 + $0x9e0] sm:$0xf]
  %v686 = vld [vmem:[%s1 + $0x9e4] sm:$0xff]
  %v687 = vld [vmem:[%s1 + $0x9ec] sm:$0xf]
  %v688 = vld [vmem:[%s1 + $0x9f0] sm:$0xff]
  %v689 = vld [vmem:[%s1 + $0x9f8] sm:$0xf]
  %v690 = vld [vmem:[%s1 + $0x9fc] sm:$0xff]
  %v691 = vld [vmem:[%s1 + $0xa04] sm:$0xf]
  %v692 = vld [vmem:[%s1 + $0xa08] sm:$0xff]
  %v693 = vld [vmem:[%s1 + $0xa10] sm:$0xf]
  %v694 = vld [vmem:[%s1 + $0xa14] sm:$0xff]
  %v695 = vld [vmem:[%s1 + $0xa1c] sm:$0xf]
  %v696 = vld [vmem:[%s1 + $0xa20] sm:$0xff]
  %v697 = vld [vmem:[%s1 + $0xa28] sm:$0xf]
  %v698 = vld [vmem:[%s1 + $0xa2c] sm:$0xff]
  %v699 = vld [vmem:[%s1 + $0xa34] sm:$0xf]
  %v700 = vld [vmem:[%s1 + $0xa38] sm:$0xff]
  %v701 = vld [vmem:[%s1 + $0xa40] sm:$0xf]
  %v702 = vld [vmem:[%s1 + $0xa44] sm:$0xff]
  %v703 = vld [vmem:[%s1 + $0xa4c] sm:$0xf]
  %v704 = vld [vmem:[%s1 + $0xa50] sm:$0xff]
  %v705 = vld [vmem:[%s1 + $0xa58] sm:$0xf]
  %v706 = vld [vmem:[%s1 + $0xa5c] sm:$0xff]
  %v707 = vld [vmem:[%s1 + $0xa64] sm:$0xf]
  %v708 = vld [vmem:[%s1 + $0xa68] sm:$0xff]
  %v709 = vld [vmem:[%s1 + $0xa70] sm:$0xf]
  %v710 = vld [vmem:[%s1 + $0xa74] sm:$0xff]
  %v711 = vld [vmem:[%s1 + $0xa7c] sm:$0xf]
  %v712 = vld [vmem:[%s1 + $0xa80] sm:$0xff]
  %v713 = vld [vmem:[%s1 + $0xa88] sm:$0xf]
  %v714 = vld [vmem:[%s1 + $0xa8c] sm:$0xff]
  %v715 = vld [vmem:[%s1 + $0xa94] sm:$0xf]
  %v716 = vld [vmem:[%s1 + $0xa98] sm:$0xff]
  %v717 = vld [vmem:[%s1 + $0xaa0] sm:$0xf]
  %v718 = vld [vmem:[%s1 + $0xaa4] sm:$0xff]
  %v719 = vld [vmem:[%s1 + $0xaac] sm:$0xf]
  %v720 = vld [vmem:[%s1 + $0xab0] sm:$0xff]
  %v721 = vld [vmem:[%s1 + $0xab8] sm:$0xf]
  %v722 = vld [vmem:[%s1 + $0xabc] sm:$0xff]
  %v723 = vld [vmem:[%s1 + $0xac4] sm:$0xf]
  %v724 = vld [vmem:[%s1 + $0xac8] sm:$0xff]
  %v725 = vld [vmem:[%s1 + $0xad0] sm:$0xf]
  %v726 = vld [vmem:[%s1 + $0xad4] sm:$0xff]
  %v727 = vld [vmem:[%s1 + $0xadc] sm:$0xf]
  %v728 = vld [vmem:[%s1 + $0xae0] sm:$0xff]
  %v729 = vld [vmem:[%s1 + $0xae8] sm:$0xf]
  %v730 = vld [vmem:[%s1 + $0xaec] sm:$0xff]
  %v731 = vld [vmem:[%s1 + $0xaf4] sm:$0xf]
  %v732 = vld [vmem:[%s1 + $0xaf8] sm:$0xff]
  %v733 = vld [vmem:[%s1 + $0xb00] sm:$0xf]
  %v734 = vld [vmem:[%s1 + $0xb04] sm:$0xff]
  %v735 = vld [vmem:[%s1 + $0xb0c] sm:$0xf]
  %v736 = vld [vmem:[%s1 + $0xb10] sm:$0xff]
  %v737 = vld [vmem:[%s1 + $0xb18] sm:$0xf]
  %v738 = vld [vmem:[%s1 + $0xb1c] sm:$0xff]
  %v739 = vld [vmem:[%s1 + $0xb24] sm:$0xf]
  %v740 = vld [vmem:[%s1 + $0xb28] sm:$0xff]
  %v741 = vld [vmem:[%s1 + $0xb30] sm:$0xf]
  %v742 = vld [vmem:[%s1 + $0xb34] sm:$0xff]
  %v743 = vld [vmem:[%s1 + $0xb3c] sm:$0xf]
  %v744 = vld [vmem:[%s1 + $0xb40] sm:$0xff]
  %v745 = vld [vmem:[%s1 + $0xb48] sm:$0xf]
  %v746 = vld [vmem:[%s1 + $0xb4c] sm:$0xff]
  %v747 = vld [vmem:[%s1 + $0xb54] sm:$0xf]
  %v748 = vld [vmem:[%s1 + $0xb58] sm:$0xff]
  %v749 = vld [vmem:[%s1 + $0xb60] sm:$0xf]
  %v750 = vld [vmem:[%s1 + $0xb64] sm:$0xff]
  %v751 = vld [vmem:[%s1 + $0xb6c] sm:$0xf]
  %v752 = vld [vmem:[%s1 + $0xb70] sm:$0xff]
  %v753 = vld [vmem:[%s1 + $0xb78] sm:$0xf]
  %v754 = vld [vmem:[%s1 + $0xb7c] sm:$0xff]
  %v755 = vld [vmem:[%s1 + $0xb84] sm:$0xf]
  %v756 = vld [vmem:[%s1 + $0xb88] sm:$0xff]
  %v757 = vld [vmem:[%s1 + $0xb90] sm:$0xf]
  %v758 = vld [vmem:[%s1 + $0xb94] sm:$0xff]
  %v759 = vld [vmem:[%s1 + $0xb9c] sm:$0xf]
  %v760 = vld [vmem:[%s1 + $0xba0] sm:$0xff]
  %v761 = vld [vmem:[%s1 + $0xba8] sm:$0xf]
  %v762 = vld [vmem:[%s1 + $0xbac] sm:$0xff]
  %v763 = vld [vmem:[%s1 + $0xbb4] sm:$0xf]
  %v764 = vld [vmem:[%s1 + $0xbb8] sm:$0xff]
  %v765 = vld [vmem:[%s1 + $0xbc0] sm:$0xf]
  %v766 = vld [vmem:[%s1 + $0xbc4] sm:$0xff]
  %v767 = vld [vmem:[%s1 + $0xbcc] sm:$0xf]
  %v768 = vld [vmem:[%s1 + $0xbd0] sm:$0xff]
  %v769 = vld [vmem:[%s1 + $0xbd8] sm:$0xf]
  %v770 = vld [vmem:[%s1 + $0xbdc] sm:$0xff]
  %v771 = vld [vmem:[%s1 + $0xbe4] sm:$0xf]
  %v772 = vld [vmem:[%s1 + $0xbe8] sm:$0xff]
  %v773 = vld [vmem:[%s1 + $0xbf0] sm:$0xf]
  %v774 = vld [vmem:[%s1 + $0xbf4] sm:$0xff]
  %v775 = vld [vmem:[%s1 + $0xbfc] sm:$0xf]
  %v776 = vld [vmem:[%s1 + $0xc00] sm:$0xff]
  %v777 = vld [vmem:[%s1 + $0xc08] sm:$0xf]
  %v778 = vld [vmem:[%s1 + $0xc0c] sm:$0xff]
  %v779 = vld [vmem:[%s1 + $0xc14] sm:$0xf]
  %v780 = vld [vmem:[%s1 + $0xc18] sm:$0xff]
  %v781 = vld [vmem:[%s1 + $0xc20] sm:$0xf]
  %v782 = vld [vmem:[%s1 + $0xc24] sm:$0xff]
  %v783 = vld [vmem:[%s1 + $0xc2c] sm:$0xf]
  %v784 = vld [vmem:[%s1 + $0xc30] sm:$0xff]
  %v785 = vld [vmem:[%s1 + $0xc38] sm:$0xf]
  %v786 = vld [vmem:[%s1 + $0xc3c] sm:$0xff]
  %v787 = vld [vmem:[%s1 + $0xc44] sm:$0xf]
  %v788 = vld [vmem:[%s1 + $0xc48] sm:$0xff]
  %v789 = vld [vmem:[%s1 + $0xc50] sm:$0xf]
  %v790 = vld [vmem:[%s1 + $0xc54] sm:$0xff]
  %v791 = vld [vmem:[%s1 + $0xc5c] sm:$0xf]
  %v792 = vld [vmem:[%s1 + $0xc60] sm:$0xff]
  %v793 = vld [vmem:[%s1 + $0xc68] sm:$0xf]
  %v794 = vld [vmem:[%s1 + $0xc6c] sm:$0xff]
  %v795 = vld [vmem:[%s1 + $0xc74] sm:$0xf]
  %v796 = vld [vmem:[%s1 + $0xc78] sm:$0xff]
  %v797 = vld [vmem:[%s1 + $0xc80] sm:$0xf]
  %v798 = vld [vmem:[%s1 + $0xc84] sm:$0xff]
  %v799 = vld [vmem:[%s1 + $0xc8c] sm:$0xf]
  %v800 = vld [vmem:[%s1 + $0xc90] sm:$0xff]
  %v801 = vld [vmem:[%s1 + $0xc98] sm:$0xf]
  %v802 = vld [vmem:[%s1 + $0xc9c] sm:$0xff]
  %v803 = vld [vmem:[%s1 + $0xca4] sm:$0xf]
  %v804 = vld [vmem:[%s1 + $0xca8] sm:$0xff]
  %v805 = vld [vmem:[%s1 + $0xcb0] sm:$0xf]
  %v806 = vld [vmem:[%s1 + $0xcb4] sm:$0xff]
  %v807 = vld [vmem:[%s1 + $0xcbc] sm:$0xf]
  %v808 = vld [vmem:[%s1 + $0xcc0] sm:$0xff]
  %v809 = vld [vmem:[%s1 + $0xcc8] sm:$0xf]
  %v810 = vld [vmem:[%s1 + $0xccc] sm:$0xff]
  %v811 = vld [vmem:[%s1 + $0xcd4] sm:$0xf]
  %v812 = vld [vmem:[%s1 + $0xcd8] sm:$0xff]
  %v813 = vld [vmem:[%s1 + $0xce0] sm:$0xf]
  %v814 = vld [vmem:[%s1 + $0xce4] sm:$0xff]
  %v815 = vld [vmem:[%s1 + $0xcec] sm:$0xf]
  %v816 = vld [vmem:[%s1 + $0xcf0] sm:$0xff]
  %v817 = vld [vmem:[%s1 + $0xcf8] sm:$0xf]
  %v818 = vld [vmem:[%s1 + $0xcfc] sm:$0xff]
  %v819 = vld [vmem:[%s1 + $0xd04] sm:$0xf]
  %v820 = vld [vmem:[%s1 + $0xd08] sm:$0xff]
  %v821 = vld [vmem:[%s1 + $0xd10] sm:$0xf]
  %v822 = vld [vmem:[%s1 + $0xd14] sm:$0xff]
  %v823 = vld [vmem:[%s1 + $0xd1c] sm:$0xf]
  %v824 = vld [vmem:[%s1 + $0xd20] sm:$0xff]
  %v825 = vld [vmem:[%s1 + $0xd28] sm:$0xf]
  %v826 = vld [vmem:[%s1 + $0xd2c] sm:$0xff]
  %v827 = vld [vmem:[%s1 + $0xd34] sm:$0xf]
  %v828 = vld [vmem:[%s1 + $0xd38] sm:$0xff]
  %v829 = vld [vmem:[%s1 + $0xd40] sm:$0xf]
  %v830 = vld [vmem:[%s1 + $0xd44] sm:$0xff]
  %v831 = vld [vmem:[%s1 + $0xd4c] sm:$0xf]
  %v832 = vld [vmem:[%s1 + $0xd50] sm:$0xff]
  %v833 = vld [vmem:[%s1 + $0xd58] sm:$0xf]
  %v834 = vld [vmem:[%s1 + $0xd5c] sm:$0xff]
  %v835 = vld [vmem:[%s1 + $0xd64] sm:$0xf]
  %v836 = vld [vmem:[%s1 + $0xd68] sm:$0xff]
  %v837 = vld [vmem:[%s1 + $0xd70] sm:$0xf]
  %v838 = vld [vmem:[%s1 + $0xd74] sm:$0xff]
  %v839 = vld [vmem:[%s1 + $0xd7c] sm:$0xf]
  %v840 = vld [vmem:[%s1 + $0xd80] sm:$0xff]
  %v841 = vld [vmem:[%s1 + $0xd88] sm:$0xf]
  %v842 = vld [vmem:[%s1 + $0xd8c] sm:$0xff]
  %v843 = vld [vmem:[%s1 + $0xd94] sm:$0xf]
  %v844 = vld [vmem:[%s1 + $0xd98] sm:$0xff]
  %v845 = vld [vmem:[%s1 + $0xda0] sm:$0xf]
  %v846 = vld [vmem:[%s1 + $0xda4] sm:$0xff]
  %v847 = vld [vmem:[%s1 + $0xdac] sm:$0xf]
  %v848 = vld [vmem:[%s1 + $0xdb0] sm:$0xff]
  %v849 = vld [vmem:[%s1 + $0xdb8] sm:$0xf]
  %v850 = vld [vmem:[%s1 + $0xdbc] sm:$0xff]
  %v851 = vld [vmem:[%s1 + $0xdc4] sm:$0xf]
  %v852 = vld [vmem:[%s1 + $0xdc8] sm:$0xff]
  %v853 = vld [vmem:[%s1 + $0xdd0] sm:$0xf]
  %v854 = vld [vmem:[%s1 + $0xdd4] sm:$0xff]
  %v855 = vld [vmem:[%s1 + $0xddc] sm:$0xf]
  %v856 = vld [vmem:[%s1 + $0xde0] sm:$0xff]
  %v857 = vld [vmem:[%s1 + $0xde8] sm:$0xf]
  %v858 = vld [vmem:[%s1 + $0xdec] sm:$0xff]
  %v859 = vld [vmem:[%s1 + $0xdf4] sm:$0xf]
  %v860 = vld [vmem:[%s1 + $0xdf8] sm:$0xff]
  %v861 = vld [vmem:[%s1 + $0xe00] sm:$0xf]
  %v862 = vld [vmem:[%s1 + $0xe04] sm:$0xff]
  %v863 = vld [vmem:[%s1 + $0xe0c] sm:$0xf]
  %v864 = vld [vmem:[%s1 + $0xe10] sm:$0xff]
  %v865 = vld [vmem:[%s1 + $0xe18] sm:$0xf]
  %v866 = vld [vmem:[%s1 + $0xe1c] sm:$0xff]
  %v867 = vld [vmem:[%s1 + $0xe24] sm:$0xf]
  %v868 = vld [vmem:[%s1 + $0xe28] sm:$0xff]
  %v869 = vld [vmem:[%s1 + $0xe30] sm:$0xf]
  %v870 = vld [vmem:[%s1 + $0xe34] sm:$0xff]
  %v871 = vld [vmem:[%s1 + $0xe3c] sm:$0xf]
  %v872 = vld [vmem:[%s1 + $0xe40] sm:$0xff]
  %v873 = vld [vmem:[%s1 + $0xe48] sm:$0xf]
  %v874 = vld [vmem:[%s1 + $0xe4c] sm:$0xff]
  %v875 = vld [vmem:[%s1 + $0xe54] sm:$0xf]
  %v876 = vld [vmem:[%s1 + $0xe58] sm:$0xff]
  %v877 = vld [vmem:[%s1 + $0xe60] sm:$0xf]
  %v878 = vld [vmem:[%s1 + $0xe64] sm:$0xff]
  %v879 = vld [vmem:[%s1 + $0xe6c] sm:$0xf]
  %v880 = vld [vmem:[%s1 + $0xe70] sm:$0xff]
  %v881 = vld [vmem:[%s1 + $0xe78] sm:$0xf]
  %v882 = vld [vmem:[%s1 + $0xe7c] sm:$0xff]
  %v883 = vld [vmem:[%s1 + $0xe84] sm:$0xf]
  %v884 = vld [vmem:[%s1 + $0xe88] sm:$0xff]
  %v885 = vld [vmem:[%s1 + $0xe90] sm:$0xf]
  %v886 = vld [vmem:[%s1 + $0xe94] sm:$0xff]
  %v887 = vld [vmem:[%s1 + $0xe9c] sm:$0xf]
  %v888 = vld [vmem:[%s1 + $0xea0] sm:$0xff]
  %v889 = vld [vmem:[%s1 + $0xea8] sm:$0xf]
  %v890 = vld [vmem:[%s1 + $0xeac] sm:$0xff]
  %v891 = vld [vmem:[%s1 + $0xeb4] sm:$0xf]
  %v892 = vld [vmem:[%s1 + $0xeb8] sm:$0xff]
  %v893 = vld [vmem:[%s1 + $0xec0] sm:$0xf]
  %v894 = vld [vmem:[%s1 + $0xec4] sm:$0xff]
  %v895 = vld [vmem:[%s1 + $0xecc] sm:$0xf]
  %v896 = vld [vmem:[%s1 + $0xed0] sm:$0xff]
  %v897 = vld [vmem:[%s1 + $0xed8] sm:$0xf]
  %v898 = vld [vmem:[%s1 + $0xedc] sm:$0xff]
  %v899 = vld [vmem:[%s1 + $0xee4] sm:$0xf]
  %v900 = vld [vmem:[%s1 + $0xee8] sm:$0xff]
  %v901 = vld [vmem:[%s1 + $0xef0] sm:$0xf]
  %v902 = vld [vmem:[%s1 + $0xef4] sm:$0xff]
  %v903 = vld [vmem:[%s1 + $0xefc] sm:$0xf]
  %v904 = vld [vmem:[%s1 + $0xf00] sm:$0xff]
  %v905 = vld [vmem:[%s1 + $0xf08] sm:$0xf]
  %v906 = vld [vmem:[%s1 + $0xf0c] sm:$0xff]
  %v907 = vld [vmem:[%s1 + $0xf14] sm:$0xf]
  %v908 = vld [vmem:[%s1 + $0xf18] sm:$0xff]
  %v909 = vld [vmem:[%s1 + $0xf20] sm:$0xf]
  %v910 = vld [vmem:[%s1 + $0xf24] sm:$0xff]
  %v911 = vld [vmem:[%s1 + $0xf2c] sm:$0xf]
  %v912 = vld [vmem:[%s1 + $0xf30] sm:$0xff]
  %v913 = vld [vmem:[%s1 + $0xf38] sm:$0xf]
  %v914 = vld [vmem:[%s1 + $0xf3c] sm:$0xff]
  %v915 = vld [vmem:[%s1 + $0xf44] sm:$0xf]
  %v916 = vld [vmem:[%s1 + $0xf48] sm:$0xff]
  %v917 = vld [vmem:[%s1 + $0xf50] sm:$0xf]
  %v918 = vld [vmem:[%s1 + $0xf54] sm:$0xff]
  %v919 = vld [vmem:[%s1 + $0xf5c] sm:$0xf]
  %v920 = vld [vmem:[%s1 + $0xf60] sm:$0xff]
  %v921 = vld [vmem:[%s1 + $0xf68] sm:$0xf]
  %v922 = vld [vmem:[%s1 + $0xf6c] sm:$0xff]
  %v923 = vld [vmem:[%s1 + $0xf74] sm:$0xf]
  %v924 = vld [vmem:[%s1 + $0xf78] sm:$0xff]
  %v925 = vld [vmem:[%s1 + $0xf80] sm:$0xf]
  %v926 = vld [vmem:[%s1 + $0xf84] sm:$0xff]
  %v927 = vld [vmem:[%s1 + $0xf8c] sm:$0xf]
  %v928 = vld [vmem:[%s1 + $0xf90] sm:$0xff]
  %v929 = vld [vmem:[%s1 + $0xf98] sm:$0xf]
  %v930 = vld [vmem:[%s1 + $0xf9c] sm:$0xff]
  %v931 = vld [vmem:[%s1 + $0xfa4] sm:$0xf]
  %v932 = vld [vmem:[%s1 + $0xfa8] sm:$0xff]
  %v933 = vld [vmem:[%s1 + $0xfb0] sm:$0xf]
  %v934 = vld [vmem:[%s1 + $0xfb4] sm:$0xff]
  %v935 = vld [vmem:[%s1 + $0xfbc] sm:$0xf]
  %v936 = vld [vmem:[%s1 + $0xfc0] sm:$0xff]
  %v937 = vld [vmem:[%s1 + $0xfc8] sm:$0xf]
  %v938 = vld [vmem:[%s1 + $0xfcc] sm:$0xff]
  %v939 = vld [vmem:[%s1 + $0xfd4] sm:$0xf]
  %v940 = vld [vmem:[%s1 + $0xfd8] sm:$0xff]
  %v941 = vld [vmem:[%s1 + $0xfe0] sm:$0xf]
  %v942 = vld [vmem:[%s1 + $0xfe4] sm:$0xff]
  %v943 = vld [vmem:[%s1 + $0xfec] sm:$0xf]
  %v944 = vld [vmem:[%s1 + $0xff0] sm:$0xff]
  %v945 = vld [vmem:[%s1 + $0xff8] sm:$0xf]
  %v946 = vld [vmem:[%s1 + $0xffc] sm:$0xff]
  %v947 = vld [vmem:[%s1 + $0x1004] sm:$0xf]
  %v948 = vld [vmem:[%s1 + $0x1008] sm:$0xff]
  %v949 = vld [vmem:[%s1 + $0x1010] sm:$0xf]
  %v950 = vld [vmem:[%s1 + $0x1014] sm:$0xff]
  %v951 = vld [vmem:[%s1 + $0x101c] sm:$0xf]
  %v952 = vld [vmem:[%s1 + $0x1020] sm:$0xff]
  %v953 = vld [vmem:[%s1 + $0x1028] sm:$0xf]
  %v954 = vld [vmem:[%s1 + $0x102c] sm:$0xff]
  %v955 = vld [vmem:[%s1 + $0x1034] sm:$0xf]
  %v956 = vld [vmem:[%s1 + $0x1038] sm:$0xff]
  %v957 = vld [vmem:[%s1 + $0x1040] sm:$0xf]
  %v958 = vld [vmem:[%s1 + $0x1044] sm:$0xff]
  %v959 = vld [vmem:[%s1 + $0x104c] sm:$0xf]
  %v960 = vld [vmem:[%s1 + $0x1050] sm:$0xff]
  %v961 = vld [vmem:[%s1 + $0x1058] sm:$0xf]
  %v962 = vld [vmem:[%s1 + $0x105c] sm:$0xff]
  %v963 = vld [vmem:[%s1 + $0x1064] sm:$0xf]
  %v964 = vld [vmem:[%s1 + $0x1068] sm:$0xff]
  %v965 = vld [vmem:[%s1 + $0x1070] sm:$0xf]
  %v966 = vld [vmem:[%s1 + $0x1074] sm:$0xff]
  %v967 = vld [vmem:[%s1 + $0x107c] sm:$0xf]
  %v968 = vld [vmem:[%s2] sm:$0x7]
  %v970 = vlaneseq
  %v971 = vshrl.u32 %v970, 7
  %v972 = vsub.s32 0, %v971
  %v973 = vrot.slane %v968, %v972
  %v974 = vlaneseq
  %v975 = vshrl.u32 %v974, 7
  %v976 = vsub.s32 1, %v975
  %v977 = vrot.slane %v968, %v976
  %v978 = vlaneseq
  %v979 = vshrl.u32 %v978, 7
  %v980 = vsub.s32 2, %v979
  %v981 = vrot.slane %v968, %v980
  %v1216 = vunpack.c.l.b16 %v33
  %v1217 = vunpack.c.h.b16 %v33
  %v1218 = vunpack.c.l.b16 %v34
  %v1219 = vunpack.c.h.b16 %v34
  %v1220 = vunpack.c.l.b16 %v35
  %v1221 = vunpack.c.h.b16 %v35
  %v1222 = vunpack.c.l.b16 %v36
  %v1223 = vunpack.c.h.b16 %v36
  %v1224 = vunpack.c.l.b16 %v37
  %v1225 = vunpack.c.h.b16 %v37
  %v1226 = vunpack.c.l.b16 %v38
  %v1227 = vunpack.c.h.b16 %v38
  %v1228 = vunpack.c.l.b16 %v39
  %v1229 = vunpack.c.h.b16 %v39
  %v1230 = vunpack.c.l.b16 %v40
  %v1231 = vunpack.c.h.b16 %v40
  %v1232 = vunpack.c.l.b16 %v41
  %v1233 = vunpack.c.h.b16 %v41
  %v1234 = vunpack.c.l.b16 %v42
  %v1235 = vunpack.c.h.b16 %v42
  %v1236 = vunpack.c.l.b16 %v43
  %v1237 = vunpack.c.h.b16 %v43
  %v1238 = vunpack.c.l.b16 %v44
  %v1239 = vunpack.c.h.b16 %v44
  %v1240 = vunpack.c.l.b16 %v45
  %v1241 = vunpack.c.h.b16 %v45
  %v1242 = vunpack.c.l.b16 %v46
  %v1243 = vunpack.c.h.b16 %v46
  %v1244 = vunpack.c.l.b16 %v47
  %v1245 = vunpack.c.h.b16 %v47
  %v1246 = vunpack.c.l.b16 %v48
  %v1247 = vunpack.c.h.b16 %v48
  %v1248 = vunpack.c.l.b16 %v49
  %v1249 = vunpack.c.h.b16 %v49
  %v1250 = vunpack.c.l.b16 %v50
  %v1251 = vunpack.c.h.b16 %v50
  %v1252 = vunpack.c.l.b16 %v51
  %v1253 = vunpack.c.h.b16 %v51
  %v1254 = vunpack.c.l.b16 %v52
  %v1255 = vunpack.c.h.b16 %v52
  %v1256 = vunpack.c.l.b16 %v53
  %v1257 = vunpack.c.h.b16 %v53
  %v1258 = vunpack.c.l.b16 %v54
  %v1259 = vunpack.c.h.b16 %v54
  %v1260 = vunpack.c.l.b16 %v55
  %v1261 = vunpack.c.h.b16 %v55
  %v1262 = vunpack.c.l.b16 %v56
  %v1263 = vunpack.c.h.b16 %v56
  %v1264 = vunpack.c.l.b16 %v57
  %v1265 = vunpack.c.h.b16 %v57
  %v1266 = vunpack.c.l.b16 %v58
  %v1267 = vunpack.c.h.b16 %v58
  %v1268 = vunpack.c.l.b16 %v59
  %v1269 = vunpack.c.h.b16 %v59
  %v1270 = vunpack.c.l.b16 %v60
  %v1271 = vunpack.c.h.b16 %v60
  %v1272 = vunpack.c.l.b16 %v61
  %v1273 = vunpack.c.h.b16 %v61
  %v1274 = vunpack.c.l.b16 %v62
  %v1275 = vunpack.c.h.b16 %v62
  %v1276 = vunpack.c.l.b16 %v63
  %v1277 = vunpack.c.h.b16 %v63
  %v1278 = vunpack.c.l.b16 %v64
  %v1279 = vunpack.c.h.b16 %v64
  %v1280 = vunpack.c.l.b16 %v65
  %v1281 = vunpack.c.h.b16 %v65
  %v1282 = vunpack.c.l.b16 %v66
  %v1283 = vunpack.c.h.b16 %v66
  %v1284 = vunpack.c.l.b16 %v67
  %v1285 = vunpack.c.h.b16 %v67
  %v1286 = vunpack.c.l.b16 %v68
  %v1287 = vunpack.c.h.b16 %v68
  %v1288 = vunpack.c.l.b16 %v69
  %v1289 = vunpack.c.h.b16 %v69
  %v1290 = vunpack.c.l.b16 %v70
  %v1291 = vunpack.c.h.b16 %v70
  %v1292 = vunpack.c.l.b16 %v71
  %v1293 = vunpack.c.h.b16 %v71
  %v1294 = vunpack.c.l.b16 %v72
  %v1295 = vunpack.c.h.b16 %v72
  %v1296 = vunpack.c.l.b16 %v73
  %v1297 = vunpack.c.h.b16 %v73
  %v1298 = vunpack.c.l.b16 %v74
  %v1299 = vunpack.c.h.b16 %v74
  %v1300 = vunpack.c.l.b16 %v75
  %v1301 = vunpack.c.h.b16 %v75
  %v1302 = vunpack.c.l.b16 %v76
  %v1303 = vunpack.c.h.b16 %v76
  %v1304 = vunpack.c.l.b16 %v77
  %v1305 = vunpack.c.h.b16 %v77
  %v1306 = vunpack.c.l.b16 %v78
  %v1307 = vunpack.c.h.b16 %v78
  %v1308 = vunpack.c.l.b16 %v79
  %v1309 = vunpack.c.h.b16 %v79
  %v1310 = vunpack.c.l.b16 %v80
  %v1311 = vunpack.c.h.b16 %v80
  %v1312 = vunpack.c.l.b16 %v81
  %v1313 = vunpack.c.h.b16 %v81
  %v1314 = vunpack.c.l.b16 %v82
  %v1315 = vunpack.c.h.b16 %v82
  %v1316 = vunpack.c.l.b16 %v83
  %v1317 = vunpack.c.h.b16 %v83
  %v1318 = vunpack.c.l.b16 %v84
  %v1319 = vunpack.c.h.b16 %v84
  %v1320 = vunpack.c.l.b16 %v85
  %v1321 = vunpack.c.h.b16 %v85
  %v1322 = vunpack.c.l.b16 %v86
  %v1323 = vunpack.c.h.b16 %v86
  %v1324 = vunpack.c.l.b16 %v87
  %v1325 = vunpack.c.h.b16 %v87
  %v1326 = vunpack.c.l.b16 %v88
  %v1327 = vunpack.c.h.b16 %v88
  %v1328 = vunpack.c.l.b16 %v89
  %v1329 = vunpack.c.h.b16 %v89
  %v1330 = vunpack.c.l.b16 %v90
  %v1331 = vunpack.c.h.b16 %v90
  %v1332 = vunpack.c.l.b16 %v91
  %v1333 = vunpack.c.h.b16 %v91
  %v1334 = vunpack.c.l.b16 %v92
  %v1335 = vunpack.c.h.b16 %v92
  %v1336 = vunpack.c.l.b16 %v93
  %v1337 = vunpack.c.h.b16 %v93
  %v1338 = vunpack.c.l.b16 %v94
  %v1339 = vunpack.c.h.b16 %v94
  %v1340 = vunpack.c.l.b16 %v95
  %v1341 = vunpack.c.h.b16 %v95
  %v1342 = vunpack.c.l.b16 %v96
  %v1343 = vunpack.c.h.b16 %v96
  %v1344 = vunpack.c.l.b16 %v97
  %v1345 = vunpack.c.h.b16 %v97
  %v1346 = vunpack.c.l.b16 %v98
  %v1347 = vunpack.c.h.b16 %v98
  %v1348 = vunpack.c.l.b16 %v99
  %v1349 = vunpack.c.h.b16 %v99
  %v1350 = vunpack.c.l.b16 %v100
  %v1351 = vunpack.c.h.b16 %v100
  %v1352 = vunpack.c.l.b16 %v101
  %v1353 = vunpack.c.h.b16 %v101
  %v1354 = vunpack.c.l.b16 %v102
  %v1355 = vunpack.c.h.b16 %v102
  %v1356 = vunpack.c.l.b16 %v103
  %v1357 = vunpack.c.h.b16 %v103
  %v1358 = vunpack.c.l.b16 %v104
  %v1359 = vunpack.c.h.b16 %v104
  %v1360 = vunpack.c.l.b16 %v105
  %v1361 = vunpack.c.h.b16 %v105
  %v1362 = vunpack.c.l.b16 %v106
  %v1363 = vunpack.c.h.b16 %v106
  %v1364 = vunpack.c.l.b16 %v107
  %v1365 = vunpack.c.h.b16 %v107
  %v1366 = vunpack.c.l.b16 %v108
  %v1367 = vunpack.c.h.b16 %v108
  %v1368 = vunpack.c.l.b16 %v109
  %v1369 = vunpack.c.h.b16 %v109
  %v1370 = vunpack.c.l.b16 %v110
  %v1371 = vunpack.c.h.b16 %v110
  %v1372 = vunpack.c.l.b16 %v111
  %v1373 = vunpack.c.h.b16 %v111
  %v1374 = vunpack.c.l.b16 %v112
  %v1375 = vunpack.c.h.b16 %v112
  %v1376 = vunpack.c.l.b16 %v113
  %v1377 = vunpack.c.h.b16 %v113
  %v1378 = vunpack.c.l.b16 %v114
  %v1379 = vunpack.c.h.b16 %v114
  %v1380 = vunpack.c.l.b16 %v115
  %v1381 = vunpack.c.h.b16 %v115
  %v1382 = vunpack.c.l.b16 %v116
  %v1383 = vunpack.c.h.b16 %v116
  %v1384 = vunpack.c.l.b16 %v117
  %v1385 = vunpack.c.h.b16 %v117
  %v1386 = vunpack.c.l.b16 %v118
  %v1387 = vunpack.c.h.b16 %v118
  %v1388 = vunpack.c.l.b16 %v119
  %v1389 = vunpack.c.h.b16 %v119
  %v1390 = vunpack.c.l.b16 %v120
  %v1391 = vunpack.c.h.b16 %v120
  %v1392 = vunpack.c.l.b16 %v121
  %v1393 = vunpack.c.h.b16 %v121
  %v1394 = vunpack.c.l.b16 %v122
  %v1395 = vunpack.c.h.b16 %v122
  %v1396 = vunpack.c.l.b16 %v123
  %v1397 = vunpack.c.h.b16 %v123
  %v1398 = vunpack.c.l.b16 %v124
  %v1399 = vunpack.c.h.b16 %v124
  %v1400 = vunpack.c.l.b16 %v125
  %v1401 = vunpack.c.h.b16 %v125
  %v1402 = vunpack.c.l.b16 %v126
  %v1403 = vunpack.c.h.b16 %v126
  %v1404 = vunpack.c.l.b16 %v127
  %v1405 = vunpack.c.h.b16 %v127
  %v1406 = vunpack.c.l.b16 %v128
  %v1407 = vunpack.c.h.b16 %v128
  %v1408 = vunpack.c.l.b16 %v129
  %v1409 = vunpack.c.h.b16 %v129
  %v1410 = vunpack.c.l.b16 %v130
  %v1411 = vunpack.c.h.b16 %v130
  %v1412 = vunpack.c.l.b16 %v131
  %v1413 = vunpack.c.h.b16 %v131
  %v1414 = vunpack.c.l.b16 %v132
  %v1415 = vunpack.c.h.b16 %v132
  %v1416 = vunpack.c.l.b16 %v133
  %v1417 = vunpack.c.h.b16 %v133
  %v1418 = vunpack.c.l.b16 %v134
  %v1419 = vunpack.c.h.b16 %v134
  %v1420 = vunpack.c.l.b16 %v135
  %v1421 = vunpack.c.h.b16 %v135
  %v1422 = vunpack.c.l.b16 %v136
  %v1423 = vunpack.c.h.b16 %v136
  %v1424 = vunpack.c.l.b16 %v137
  %v1425 = vunpack.c.h.b16 %v137
  %v1426 = vunpack.c.l.b16 %v138
  %v1427 = vunpack.c.h.b16 %v138
  %v1428 = vunpack.c.l.b16 %v139
  %v1429 = vunpack.c.h.b16 %v139
  %v1430 = vunpack.c.l.b16 %v140
  %v1431 = vunpack.c.h.b16 %v140
  %v1432 = vunpack.c.l.b16 %v141
  %v1433 = vunpack.c.h.b16 %v141
  %v1434 = vunpack.c.l.b16 %v142
  %v1435 = vunpack.c.h.b16 %v142
  %v1436 = vunpack.c.l.b16 %v143
  %v1437 = vunpack.c.h.b16 %v143
  %v1438 = vunpack.c.l.b16 %v144
  %v1439 = vunpack.c.h.b16 %v144
  %v1440 = vunpack.c.l.b16 %v145
  %v1441 = vunpack.c.h.b16 %v145
  %v1442 = vunpack.c.l.b16 %v146
  %v1443 = vunpack.c.h.b16 %v146
  %v1444 = vunpack.c.l.b16 %v147
  %v1445 = vunpack.c.h.b16 %v147
  %v1446 = vunpack.c.l.b16 %v148
  %v1447 = vunpack.c.h.b16 %v148
  %v1448 = vunpack.c.l.b16 %v149
  %v1449 = vunpack.c.h.b16 %v149
  %v1450 = vunpack.c.l.b16 %v150
  %v1451 = vunpack.c.h.b16 %v150
  %v1452 = vunpack.c.l.b16 %v151
  %v1453 = vunpack.c.h.b16 %v151
  %v1454 = vunpack.c.l.b16 %v152
  %v1455 = vunpack.c.h.b16 %v152
  %v1456 = vunpack.c.l.b16 %v153
  %v1457 = vunpack.c.h.b16 %v153
  %v1458 = vunpack.c.l.b16 %v154
  %v1459 = vunpack.c.h.b16 %v154
  %v1460 = vunpack.c.l.b16 %v155
  %v1461 = vunpack.c.h.b16 %v155
  %v1462 = vunpack.c.l.b16 %v156
  %v1463 = vunpack.c.h.b16 %v156
  %v1464 = vunpack.c.l.b16 %v157
  %v1465 = vunpack.c.h.b16 %v157
  %v1466 = vunpack.c.l.b16 %v158
  %v1467 = vunpack.c.h.b16 %v158
  %v1468 = vunpack.c.l.b16 %v159
  %v1469 = vunpack.c.h.b16 %v159
  %v1470 = vunpack.c.l.b16 %v160
  %v1471 = vunpack.c.h.b16 %v160
  %v1472 = vunpack.c.l.b16 %v161
  %v1473 = vunpack.c.h.b16 %v161
  %v1474 = vunpack.c.l.b16 %v162
  %v1475 = vunpack.c.h.b16 %v162
  %v1476 = vunpack.c.l.b16 %v163
  %v1477 = vunpack.c.h.b16 %v163
  %v1478 = vunpack.c.l.b16 %v164
  %v1479 = vunpack.c.h.b16 %v164
  %v1480 = vunpack.c.l.b16 %v165
  %v1481 = vunpack.c.h.b16 %v165
  %v1482 = vunpack.c.l.b16 %v166
  %v1483 = vunpack.c.h.b16 %v166
  %v1484 = vunpack.c.l.b16 %v167
  %v1485 = vunpack.c.h.b16 %v167
  %v1486 = vunpack.c.l.b16 %v168
  %v1487 = vunpack.c.h.b16 %v168
  %v1488 = vunpack.c.l.b16 %v169
  %v1489 = vunpack.c.h.b16 %v169
  %v1490 = vunpack.c.l.b16 %v170
  %v1491 = vunpack.c.h.b16 %v170
  %v1492 = vunpack.c.l.b16 %v171
  %v1493 = vunpack.c.h.b16 %v171
  %v1494 = vunpack.c.l.b16 %v172
  %v1495 = vunpack.c.h.b16 %v172
  %v1496 = vunpack.c.l.b16 %v173
  %v1497 = vunpack.c.h.b16 %v173
  %v1498 = vunpack.c.l.b16 %v174
  %v1499 = vunpack.c.h.b16 %v174
  %v1500 = vunpack.c.l.b16 %v175
  %v1501 = vunpack.c.h.b16 %v175
  %v1502 = vunpack.c.l.b16 %v176
  %v1503 = vunpack.c.h.b16 %v176
  %v1504 = vunpack.c.l.b16 %v177
  %v1505 = vunpack.c.h.b16 %v177
  %v1506 = vunpack.c.l.b16 %v178
  %v1507 = vunpack.c.h.b16 %v178
  %v1508 = vunpack.c.l.b16 %v179
  %v1509 = vunpack.c.h.b16 %v179
  %v1510 = vunpack.c.l.b16 %v180
  %v1511 = vunpack.c.h.b16 %v180
  %v1512 = vunpack.c.l.b16 %v181
  %v1513 = vunpack.c.h.b16 %v181
  %v1514 = vunpack.c.l.b16 %v182
  %v1515 = vunpack.c.h.b16 %v182
  %v1516 = vunpack.c.l.b16 %v183
  %v1517 = vunpack.c.h.b16 %v183
  %v1518 = vunpack.c.l.b16 %v184
  %v1519 = vunpack.c.h.b16 %v184
  %v1520 = vunpack.c.l.b16 %v185
  %v1521 = vunpack.c.h.b16 %v185
  %v1522 = vunpack.c.l.b16 %v186
  %v1523 = vunpack.c.h.b16 %v186
  %v1524 = vunpack.c.l.b16 %v187
  %v1525 = vunpack.c.h.b16 %v187
  %v1526 = vunpack.c.l.b16 %v188
  %v1527 = vunpack.c.h.b16 %v188
  %v1528 = vunpack.c.l.b16 %v189
  %v1529 = vunpack.c.h.b16 %v189
  %v1530 = vunpack.c.l.b16 %v190
  %v1531 = vunpack.c.h.b16 %v190
  %v1532 = vunpack.c.l.b16 %v191
  %v1533 = vunpack.c.h.b16 %v191
  %v1534 = vunpack.c.l.b16 %v192
  %v1535 = vunpack.c.h.b16 %v192
  %v1536 = vunpack.c.l.b16 %v193
  %v1537 = vunpack.c.h.b16 %v193
  %v1538 = vunpack.c.l.b16 %v194
  %v1539 = vunpack.c.h.b16 %v194
  %v1540 = vunpack.c.l.b16 %v195
  %v1541 = vunpack.c.h.b16 %v195
  %v1542 = vunpack.c.l.b16 %v196
  %v1543 = vunpack.c.h.b16 %v196
  %v1544 = vunpack.c.l.b16 %v197
  %v1545 = vunpack.c.h.b16 %v197
  %v1546 = vunpack.c.l.b16 %v198
  %v1547 = vunpack.c.h.b16 %v198
  %v1548 = vunpack.c.l.b16 %v199
  %v1549 = vunpack.c.h.b16 %v199
  %v1550 = vunpack.c.l.b16 %v200
  %v1551 = vunpack.c.h.b16 %v200
  %v1552 = vunpack.c.l.b16 %v201
  %v1553 = vunpack.c.h.b16 %v201
  %v1554 = vunpack.c.l.b16 %v202
  %v1555 = vunpack.c.h.b16 %v202
  %v1556 = vunpack.c.l.b16 %v203
  %v1557 = vunpack.c.h.b16 %v203
  %v1558 = vunpack.c.l.b16 %v204
  %v1559 = vunpack.c.h.b16 %v204
  %v1560 = vunpack.c.l.b16 %v205
  %v1561 = vunpack.c.h.b16 %v205
  %v1562 = vunpack.c.l.b16 %v206
  %v1563 = vunpack.c.h.b16 %v206
  %v1564 = vunpack.c.l.b16 %v207
  %v1565 = vunpack.c.h.b16 %v207
  %v1566 = vunpack.c.l.b16 %v208
  %v1567 = vunpack.c.h.b16 %v208
  %v1568 = vunpack.c.l.b16 %v209
  %v1569 = vunpack.c.h.b16 %v209
  %v1570 = vunpack.c.l.b16 %v210
  %v1571 = vunpack.c.h.b16 %v210
  %v1572 = vunpack.c.l.b16 %v211
  %v1573 = vunpack.c.h.b16 %v211
  %v1574 = vunpack.c.l.b16 %v212
  %v1575 = vunpack.c.h.b16 %v212
  %v1576 = vunpack.c.l.b16 %v213
  %v1577 = vunpack.c.h.b16 %v213
  %v1578 = vunpack.c.l.b16 %v214
  %v1579 = vunpack.c.h.b16 %v214
  %v1580 = vunpack.c.l.b16 %v215
  %v1581 = vunpack.c.h.b16 %v215
  %v1582 = vunpack.c.l.b16 %v216
  %v1583 = vunpack.c.h.b16 %v216
  %v1584 = vunpack.c.l.b16 %v217
  %v1585 = vunpack.c.h.b16 %v217
  %v1586 = vunpack.c.l.b16 %v218
  %v1587 = vunpack.c.h.b16 %v218
  %v1588 = vunpack.c.l.b16 %v219
  %v1589 = vunpack.c.h.b16 %v219
  %v1590 = vunpack.c.l.b16 %v220
  %v1591 = vunpack.c.h.b16 %v220
  %v1592 = vunpack.c.l.b16 %v221
  %v1593 = vunpack.c.h.b16 %v221
  %v1594 = vunpack.c.l.b16 %v222
  %v1595 = vunpack.c.h.b16 %v222
  %v1596 = vunpack.c.l.b16 %v223
  %v1597 = vunpack.c.h.b16 %v223
  %v1598 = vunpack.c.l.b16 %v224
  %v1599 = vunpack.c.h.b16 %v224
  %v1600 = vunpack.c.l.b16 %v225
  %v1601 = vunpack.c.h.b16 %v225
  %v1602 = vunpack.c.l.b16 %v226
  %v1603 = vunpack.c.h.b16 %v226
  %v1604 = vunpack.c.l.b16 %v227
  %v1605 = vunpack.c.h.b16 %v227
  %v1606 = vunpack.c.l.b16 %v228
  %v1607 = vunpack.c.h.b16 %v228
  %v1608 = vunpack.c.l.b16 %v229
  %v1609 = vunpack.c.h.b16 %v229
  %v1610 = vunpack.c.l.b16 %v230
  %v1611 = vunpack.c.h.b16 %v230
  %v1612 = vunpack.c.l.b16 %v231
  %v1613 = vunpack.c.h.b16 %v231
  %v1614 = vunpack.c.l.b16 %v232
  %v1615 = vunpack.c.h.b16 %v232
  %v1616 = vunpack.c.l.b16 %v233
  %v1617 = vunpack.c.h.b16 %v233
  %v1618 = vunpack.c.l.b16 %v234
  %v1619 = vunpack.c.h.b16 %v234
  %v1620 = vunpack.c.l.b16 %v235
  %v1621 = vunpack.c.h.b16 %v235
  %v1622 = vunpack.c.l.b16 %v236
  %v1623 = vunpack.c.h.b16 %v236
  %v1624 = vunpack.c.l.b16 %v237
  %v1625 = vunpack.c.h.b16 %v237
  %v1626 = vunpack.c.l.b16 %v238
  %v1627 = vunpack.c.h.b16 %v238
  %v1628 = vunpack.c.l.b16 %v239
  %v1629 = vunpack.c.h.b16 %v239
  %v1630 = vunpack.c.l.b16 %v240
  %v1631 = vunpack.c.h.b16 %v240
  %v1632 = vunpack.c.l.b16 %v241
  %v1633 = vunpack.c.h.b16 %v241
  %v1634 = vunpack.c.l.b16 %v242
  %v1635 = vunpack.c.h.b16 %v242
  %v1636 = vunpack.c.l.b16 %v243
  %v1637 = vunpack.c.h.b16 %v243
  %v1638 = vunpack.c.l.b16 %v244
  %v1639 = vunpack.c.h.b16 %v244
  %v1640 = vunpack.c.l.b16 %v245
  %v1641 = vunpack.c.h.b16 %v245
  %v1642 = vunpack.c.l.b16 %v246
  %v1643 = vunpack.c.h.b16 %v246
  %v1644 = vunpack.c.l.b16 %v247
  %v1645 = vunpack.c.h.b16 %v247
  %v1646 = vunpack.c.l.b16 %v248
  %v1647 = vunpack.c.h.b16 %v248
  %v1648 = vunpack.c.l.b16 %v249
  %v1649 = vunpack.c.h.b16 %v249
  %v1650 = vunpack.c.l.b16 %v250
  %v1651 = vunpack.c.h.b16 %v250
  %v1652 = vunpack.c.l.b16 %v251
  %v1653 = vunpack.c.h.b16 %v251
  %v1654 = vunpack.c.l.b16 %v252
  %v1655 = vunpack.c.h.b16 %v252
  %v1656 = vunpack.c.l.b16 %v253
  %v1657 = vunpack.c.h.b16 %v253
  %v1658 = vunpack.c.l.b16 %v254
  %v1659 = vunpack.c.h.b16 %v254
  %v1660 = vunpack.c.l.b16 %v255
  %v1661 = vunpack.c.h.b16 %v255
  %v1662 = vunpack.c.l.b16 %v256
  %v1663 = vunpack.c.h.b16 %v256
  %v1664 = vunpack.c.l.b16 %v257
  %v1665 = vunpack.c.h.b16 %v257
  %v1666 = vunpack.c.l.b16 %v258
  %v1667 = vunpack.c.h.b16 %v258
  %v1668 = vunpack.c.l.b16 %v259
  %v1669 = vunpack.c.h.b16 %v259
  %v1670 = vunpack.c.l.b16 %v260
  %v1671 = vunpack.c.h.b16 %v260
  %v1672 = vunpack.c.l.b16 %v261
  %v1673 = vunpack.c.h.b16 %v261
  %v1674 = vunpack.c.l.b16 %v262
  %v1675 = vunpack.c.h.b16 %v262
  %v1676 = vunpack.c.l.b16 %v263
  %v1677 = vunpack.c.h.b16 %v263
  %v1678 = vpack.c.b16 %v1238, %v1216
  %v1679 = vpack.c.b16 %v1239, %v1217
  %v1680 = vpack.c.b16 %v1240, %v1218
  %v1681 = vpack.c.b16 %v1241, %v1219
  %v1682 = vpack.c.b16 %v1242, %v1220
  %v1683 = vpack.c.b16 %v1243, %v1221
  %v1684 = vpack.c.b16 %v1244, %v1222
  %v1685 = vpack.c.b16 %v1245, %v1223
  %v1686 = vpack.c.b16 %v1246, %v1224
  %v1687 = vpack.c.b16 %v1247, %v1225
  %v1688 = vpack.c.b16 %v1248, %v1226
  %v1689 = vpack.c.b16 %v1249, %v1227
  %v1690 = vpack.c.b16 %v1250, %v1228
  %v1691 = vpack.c.b16 %v1251, %v1229
  %v1692 = vpack.c.b16 %v1252, %v1230
  %v1693 = vpack.c.b16 %v1253, %v1231
  %v1694 = vpack.c.b16 %v1254, %v1232
  %v1695 = vpack.c.b16 %v1255, %v1233
  %v1696 = vpack.c.b16 %v1256, %v1234
  %v1697 = vpack.c.b16 %v1257, %v1235
  %v1698 = vpack.c.b16 %v1258, %v1236
  %v1699 = vpack.c.b16 %v1259, %v1237
  %v1700 = vpack.c.b16 %v1282, %v1260
  %v1701 = vpack.c.b16 %v1283, %v1261
  %v1702 = vpack.c.b16 %v1284, %v1262
  %v1703 = vpack.c.b16 %v1285, %v1263
  %v1704 = vpack.c.b16 %v1286, %v1264
  %v1705 = vpack.c.b16 %v1287, %v1265
  %v1706 = vpack.c.b16 %v1288, %v1266
  %v1707 = vpack.c.b16 %v1289, %v1267
  %v1708 = vpack.c.b16 %v1290, %v1268
  %v1709 = vpack.c.b16 %v1291, %v1269
  %v1710 = vpack.c.b16 %v1292, %v1270
  %v1711 = vpack.c.b16 %v1293, %v1271
  %v1712 = vpack.c.b16 %v1294, %v1272
  %v1713 = vpack.c.b16 %v1295, %v1273
  %v1714 = vpack.c.b16 %v1296, %v1274
  %v1715 = vpack.c.b16 %v1297, %v1275
  %v1716 = vpack.c.b16 %v1298, %v1276
  %v1717 = vpack.c.b16 %v1299, %v1277
  %v1718 = vpack.c.b16 %v1300, %v1278
  %v1719 = vpack.c.b16 %v1301, %v1279
  %v1720 = vpack.c.b16 %v1302, %v1280
  %v1721 = vpack.c.b16 %v1303, %v1281
  %v1722 = vpack.c.b16 %v1326, %v1304
  %v1723 = vpack.c.b16 %v1327, %v1305
  %v1724 = vpack.c.b16 %v1328, %v1306
  %v1725 = vpack.c.b16 %v1329, %v1307
  %v1726 = vpack.c.b16 %v1330, %v1308
  %v1727 = vpack.c.b16 %v1331, %v1309
  %v1728 = vpack.c.b16 %v1332, %v1310
  %v1729 = vpack.c.b16 %v1333, %v1311
  %v1730 = vpack.c.b16 %v1334, %v1312
  %v1731 = vpack.c.b16 %v1335, %v1313
  %v1732 = vpack.c.b16 %v1336, %v1314
  %v1733 = vpack.c.b16 %v1337, %v1315
  %v1734 = vpack.c.b16 %v1338, %v1316
  %v1735 = vpack.c.b16 %v1339, %v1317
  %v1736 = vpack.c.b16 %v1340, %v1318
  %v1737 = vpack.c.b16 %v1341, %v1319
  %v1738 = vpack.c.b16 %v1342, %v1320
  %v1739 = vpack.c.b16 %v1343, %v1321
  %v1740 = vpack.c.b16 %v1344, %v1322
  %v1741 = vpack.c.b16 %v1345, %v1323
  %v1742 = vpack.c.b16 %v1346, %v1324
  %v1743 = vpack.c.b16 %v1347, %v1325
  %v1744 = vpack.c.b16 %v1370, %v1348
  %v1745 = vpack.c.b16 %v1371, %v1349
  %v1746 = vpack.c.b16 %v1372, %v1350
  %v1747 = vpack.c.b16 %v1373, %v1351
  %v1748 = vpack.c.b16 %v1374, %v1352
  %v1749 = vpack.c.b16 %v1375, %v1353
  %v1750 = vpack.c.b16 %v1376, %v1354
  %v1751 = vpack.c.b16 %v1377, %v1355
  %v1752 = vpack.c.b16 %v1378, %v1356
  %v1753 = vpack.c.b16 %v1379, %v1357
  %v1754 = vpack.c.b16 %v1380, %v1358
  %v1755 = vpack.c.b16 %v1381, %v1359
  %v1756 = vpack.c.b16 %v1382, %v1360
  %v1757 = vpack.c.b16 %v1383, %v1361
  %v1758 = vpack.c.b16 %v1384, %v1362
  %v1759 = vpack.c.b16 %v1385, %v1363
  %v1760 = vpack.c.b16 %v1386, %v1364
  %v1761 = vpack.c.b16 %v1387, %v1365
  %v1762 = vpack.c.b16 %v1388, %v1366
  %v1763 = vpack.c.b16 %v1389, %v1367
  %v1764 = vpack.c.b16 %v1390, %v1368
  %v1765 = vpack.c.b16 %v1391, %v1369
  %v1766 = vpack.c.b16 %v1414, %v1392
  %v1767 = vpack.c.b16 %v1415, %v1393
  %v1768 = vpack.c.b16 %v1416, %v1394
  %v1769 = vpack.c.b16 %v1417, %v1395
  %v1770 = vpack.c.b16 %v1418, %v1396
  %v1771 = vpack.c.b16 %v1419, %v1397
  %v1772 = vpack.c.b16 %v1420, %v1398
  %v1773 = vpack.c.b16 %v1421, %v1399
  %v1774 = vpack.c.b16 %v1422, %v1400
  %v1775 = vpack.c.b16 %v1423, %v1401
  %v1776 = vpack.c.b16 %v1424, %v1402
  %v1777 = vpack.c.b16 %v1425, %v1403
  %v1778 = vpack.c.b16 %v1426, %v1404
  %v1779 = vpack.c.b16 %v1427, %v1405
  %v1780 = vpack.c.b16 %v1428, %v1406
  %v1781 = vpack.c.b16 %v1429, %v1407
  %v1782 = vpack.c.b16 %v1430, %v1408
  %v1783 = vpack.c.b16 %v1431, %v1409
  %v1784 = vpack.c.b16 %v1432, %v1410
  %v1785 = vpack.c.b16 %v1433, %v1411
  %v1786 = vpack.c.b16 %v1434, %v1412
  %v1787 = vpack.c.b16 %v1435, %v1413
  %v1788 = vpack.c.b16 %v1458, %v1436
  %v1789 = vpack.c.b16 %v1459, %v1437
  %v1790 = vpack.c.b16 %v1460, %v1438
  %v1791 = vpack.c.b16 %v1461, %v1439
  %v1792 = vpack.c.b16 %v1462, %v1440
  %v1793 = vpack.c.b16 %v1463, %v1441
  %v1794 = vpack.c.b16 %v1464, %v1442
  %v1795 = vpack.c.b16 %v1465, %v1443
  %v1796 = vpack.c.b16 %v1466, %v1444
  %v1797 = vpack.c.b16 %v1467, %v1445
  %v1798 = vpack.c.b16 %v1468, %v1446
  %v1799 = vpack.c.b16 %v1469, %v1447
  %v1800 = vpack.c.b16 %v1470, %v1448
  %v1801 = vpack.c.b16 %v1471, %v1449
  %v1802 = vpack.c.b16 %v1472, %v1450
  %v1803 = vpack.c.b16 %v1473, %v1451
  %v1804 = vpack.c.b16 %v1474, %v1452
  %v1805 = vpack.c.b16 %v1475, %v1453
  %v1806 = vpack.c.b16 %v1476, %v1454
  %v1807 = vpack.c.b16 %v1477, %v1455
  %v1808 = vpack.c.b16 %v1478, %v1456
  %v1809 = vpack.c.b16 %v1479, %v1457
  %v1810 = vpack.c.b16 %v1502, %v1480
  %v1811 = vpack.c.b16 %v1503, %v1481
  %v1812 = vpack.c.b16 %v1504, %v1482
  %v1813 = vpack.c.b16 %v1505, %v1483
  %v1814 = vpack.c.b16 %v1506, %v1484
  %v1815 = vpack.c.b16 %v1507, %v1485
  %v1816 = vpack.c.b16 %v1508, %v1486
  %v1817 = vpack.c.b16 %v1509, %v1487
  %v1818 = vpack.c.b16 %v1510, %v1488
  %v1819 = vpack.c.b16 %v1511, %v1489
  %v1820 = vpack.c.b16 %v1512, %v1490
  %v1821 = vpack.c.b16 %v1513, %v1491
  %v1822 = vpack.c.b16 %v1514, %v1492
  %v1823 = vpack.c.b16 %v1515, %v1493
  %v1824 = vpack.c.b16 %v1516, %v1494
  %v1825 = vpack.c.b16 %v1517, %v1495
  %v1826 = vpack.c.b16 %v1518, %v1496
  %v1827 = vpack.c.b16 %v1519, %v1497
  %v1828 = vpack.c.b16 %v1520, %v1498
  %v1829 = vpack.c.b16 %v1521, %v1499
  %v1830 = vpack.c.b16 %v1522, %v1500
  %v1831 = vpack.c.b16 %v1523, %v1501
  %v1832 = vpack.c.b16 %v1546, %v1524
  %v1833 = vpack.c.b16 %v1547, %v1525
  %v1834 = vpack.c.b16 %v1548, %v1526
  %v1835 = vpack.c.b16 %v1549, %v1527
  %v1836 = vpack.c.b16 %v1550, %v1528
  %v1837 = vpack.c.b16 %v1551, %v1529
  %v1838 = vpack.c.b16 %v1552, %v1530
  %v1839 = vpack.c.b16 %v1553, %v1531
  %v1840 = vpack.c.b16 %v1554, %v1532
  %v1841 = vpack.c.b16 %v1555, %v1533
  %v1842 = vpack.c.b16 %v1556, %v1534
  %v1843 = vpack.c.b16 %v1557, %v1535
  %v1844 = vpack.c.b16 %v1558, %v1536
  %v1845 = vpack.c.b16 %v1559, %v1537
  %v1846 = vpack.c.b16 %v1560, %v1538
  %v1847 = vpack.c.b16 %v1561, %v1539
  %v1848 = vpack.c.b16 %v1562, %v1540
  %v1849 = vpack.c.b16 %v1563, %v1541
  %v1850 = vpack.c.b16 %v1564, %v1542
  %v1851 = vpack.c.b16 %v1565, %v1543
  %v1852 = vpack.c.b16 %v1566, %v1544
  %v1853 = vpack.c.b16 %v1567, %v1545
  %v1854 = vpack.c.b16 %v1590, %v1568
  %v1855 = vpack.c.b16 %v1591, %v1569
  %v1856 = vpack.c.b16 %v1592, %v1570
  %v1857 = vpack.c.b16 %v1593, %v1571
  %v1858 = vpack.c.b16 %v1594, %v1572
  %v1859 = vpack.c.b16 %v1595, %v1573
  %v1860 = vpack.c.b16 %v1596, %v1574
  %v1861 = vpack.c.b16 %v1597, %v1575
  %v1862 = vpack.c.b16 %v1598, %v1576
  %v1863 = vpack.c.b16 %v1599, %v1577
  %v1864 = vpack.c.b16 %v1600, %v1578
  %v1865 = vpack.c.b16 %v1601, %v1579
  %v1866 = vpack.c.b16 %v1602, %v1580
  %v1867 = vpack.c.b16 %v1603, %v1581
  %v1868 = vpack.c.b16 %v1604, %v1582
  %v1869 = vpack.c.b16 %v1605, %v1583
  %v1870 = vpack.c.b16 %v1606, %v1584
  %v1871 = vpack.c.b16 %v1607, %v1585
  %v1872 = vpack.c.b16 %v1608, %v1586
  %v1873 = vpack.c.b16 %v1609, %v1587
  %v1874 = vpack.c.b16 %v1610, %v1588
  %v1875 = vpack.c.b16 %v1611, %v1589
  %v1876 = vpack.c.b16 %v1634, %v1612
  %v1877 = vpack.c.b16 %v1635, %v1613
  %v1878 = vpack.c.b16 %v1636, %v1614
  %v1879 = vpack.c.b16 %v1637, %v1615
  %v1880 = vpack.c.b16 %v1638, %v1616
  %v1881 = vpack.c.b16 %v1639, %v1617
  %v1882 = vpack.c.b16 %v1640, %v1618
  %v1883 = vpack.c.b16 %v1641, %v1619
  %v1884 = vpack.c.b16 %v1642, %v1620
  %v1885 = vpack.c.b16 %v1643, %v1621
  %v1886 = vpack.c.b16 %v1644, %v1622
  %v1887 = vpack.c.b16 %v1645, %v1623
  %v1888 = vpack.c.b16 %v1646, %v1624
  %v1889 = vpack.c.b16 %v1647, %v1625
  %v1890 = vpack.c.b16 %v1648, %v1626
  %v1891 = vpack.c.b16 %v1649, %v1627
  %v1892 = vpack.c.b16 %v1650, %v1628
  %v1893 = vpack.c.b16 %v1651, %v1629
  %v1894 = vpack.c.b16 %v1652, %v1630
  %v1895 = vpack.c.b16 %v1653, %v1631
  %v1896 = vpack.c.b16 %v1654, %v1632
  %v1897 = vpack.c.b16 %v1655, %v1633
  %v1898 = vpack.c.b16 %v1656, %v1656
  %v1899 = vpack.c.b16 %v1657, %v1657
  %v1900 = vpack.c.b16 %v1658, %v1658
  %v1901 = vpack.c.b16 %v1659, %v1659
  %v1902 = vpack.c.b16 %v1660, %v1660
  %v1903 = vpack.c.b16 %v1661, %v1661
  %v1904 = vpack.c.b16 %v1662, %v1662
  %v1905 = vpack.c.b16 %v1663, %v1663
  %v1906 = vpack.c.b16 %v1664, %v1664
  %v1907 = vpack.c.b16 %v1665, %v1665
  %v1908 = vpack.c.b16 %v1666, %v1666
  %v1909 = vpack.c.b16 %v1667, %v1667
  %v1910 = vpack.c.b16 %v1668, %v1668
  %v1911 = vpack.c.b16 %v1669, %v1669
  %v1912 = vpack.c.b16 %v1670, %v1670
  %v1913 = vpack.c.b16 %v1671, %v1671
  %v1914 = vpack.c.b16 %v1672, %v1672
  %v1915 = vpack.c.b16 %v1673, %v1673
  %v1916 = vpack.c.b16 %v1674, %v1674
  %v1917 = vpack.c.b16 %v1675, %v1675
  %v1918 = vpack.c.b16 %v1676, %v1676
  %v1919 = vpack.c.b16 %v1677, %v1677
  %v2866 = vunpack.c.l.b16 %v264
  %v2867 = vunpack.c.h.b16 %v264
  %v2868 = vunpack.c.l.b16 %v265
  %v2869 = vunpack.c.l.b16 %v266
  %v2870 = vunpack.c.h.b16 %v266
  %v2871 = vunpack.c.l.b16 %v267
  %v2872 = vunpack.c.l.b16 %v268
  %v2873 = vunpack.c.h.b16 %v268
  %v2874 = vunpack.c.l.b16 %v269
  %v2875 = vunpack.c.l.b16 %v270
  %v2876 = vunpack.c.h.b16 %v270
  %v2877 = vunpack.c.l.b16 %v271
  %v2878 = vunpack.c.l.b16 %v272
  %v2879 = vunpack.c.h.b16 %v272
  %v2880 = vunpack.c.l.b16 %v273
  %v2881 = vunpack.c.l.b16 %v274
  %v2882 = vunpack.c.h.b16 %v274
  %v2883 = vunpack.c.l.b16 %v275
  %v2884 = vunpack.c.l.b16 %v276
  %v2885 = vunpack.c.h.b16 %v276
  %v2886 = vunpack.c.l.b16 %v277
  %v2887 = vunpack.c.l.b16 %v278
  %v2888 = vunpack.c.h.b16 %v278
  %v2889 = vunpack.c.l.b16 %v279
  %v2890 = vunpack.c.l.b16 %v280
  %v2891 = vunpack.c.h.b16 %v280
  %v2892 = vunpack.c.l.b16 %v281
  %v2893 = vunpack.c.l.b16 %v282
  %v2894 = vunpack.c.h.b16 %v282
  %v2895 = vunpack.c.l.b16 %v283
  %v2896 = vunpack.c.l.b16 %v284
  %v2897 = vunpack.c.h.b16 %v284
  %v2898 = vunpack.c.l.b16 %v285
  %v2899 = vunpack.c.l.b16 %v286
  %v2900 = vunpack.c.h.b16 %v286
  %v2901 = vunpack.c.l.b16 %v287
  %v2902 = vunpack.c.l.b16 %v288
  %v2903 = vunpack.c.h.b16 %v288
  %v2904 = vunpack.c.l.b16 %v289
  %v2905 = vunpack.c.l.b16 %v290
  %v2906 = vunpack.c.h.b16 %v290
  %v2907 = vunpack.c.l.b16 %v291
  %v2908 = vunpack.c.l.b16 %v292
  %v2909 = vunpack.c.h.b16 %v292
  %v2910 = vunpack.c.l.b16 %v293
  %v2911 = vunpack.c.l.b16 %v294
  %v2912 = vunpack.c.h.b16 %v294
  %v2913 = vunpack.c.l.b16 %v295
  %v2914 = vunpack.c.l.b16 %v296
  %v2915 = vunpack.c.h.b16 %v296
  %v2916 = vunpack.c.l.b16 %v297
  %v2917 = vunpack.c.l.b16 %v298
  %v2918 = vunpack.c.h.b16 %v298
  %v2919 = vunpack.c.l.b16 %v299
  %v2920 = vunpack.c.l.b16 %v300
  %v2921 = vunpack.c.h.b16 %v300
  %v2922 = vunpack.c.l.b16 %v301
  %v2923 = vunpack.c.l.b16 %v302
  %v2924 = vunpack.c.h.b16 %v302
  %v2925 = vunpack.c.l.b16 %v303
  %v2926 = vunpack.c.l.b16 %v304
  %v2927 = vunpack.c.h.b16 %v304
  %v2928 = vunpack.c.l.b16 %v305
  %v2929 = vunpack.c.l.b16 %v306
  %v2930 = vunpack.c.h.b16 %v306
  %v2931 = vunpack.c.l.b16 %v307
  %v2932 = vunpack.c.l.b16 %v308
  %v2933 = vunpack.c.h.b16 %v308
  %v2934 = vunpack.c.l.b16 %v309
  %v2935 = vunpack.c.l.b16 %v310
  %v2936 = vunpack.c.h.b16 %v310
  %v2937 = vunpack.c.l.b16 %v311
  %v2938 = vunpack.c.l.b16 %v312
  %v2939 = vunpack.c.h.b16 %v312
  %v2940 = vunpack.c.l.b16 %v313
  %v2941 = vunpack.c.l.b16 %v314
  %v2942 = vunpack.c.h.b16 %v314
  %v2943 = vunpack.c.l.b16 %v315
  %v2944 = vunpack.c.l.b16 %v316
  %v2945 = vunpack.c.h.b16 %v316
  %v2946 = vunpack.c.l.b16 %v317
  %v2947 = vunpack.c.l.b16 %v318
  %v2948 = vunpack.c.h.b16 %v318
  %v2949 = vunpack.c.l.b16 %v319
  %v2950 = vunpack.c.l.b16 %v320
  %v2951 = vunpack.c.h.b16 %v320
  %v2952 = vunpack.c.l.b16 %v321
  %v2953 = vunpack.c.l.b16 %v322
  %v2954 = vunpack.c.h.b16 %v322
  %v2955 = vunpack.c.l.b16 %v323
  %v2956 = vunpack.c.l.b16 %v324
  %v2957 = vunpack.c.h.b16 %v324
  %v2958 = vunpack.c.l.b16 %v325
  %v2959 = vunpack.c.l.b16 %v326
  %v2960 = vunpack.c.h.b16 %v326
  %v2961 = vunpack.c.l.b16 %v327
  %v2962 = vunpack.c.l.b16 %v328
  %v2963 = vunpack.c.h.b16 %v328
  %v2964 = vunpack.c.l.b16 %v329
  %v2965 = vunpack.c.l.b16 %v330
  %v2966 = vunpack.c.h.b16 %v330
  %v2967 = vunpack.c.l.b16 %v331
  %v2968 = vunpack.c.l.b16 %v332
  %v2969 = vunpack.c.h.b16 %v332
  %v2970 = vunpack.c.l.b16 %v333
  %v2971 = vunpack.c.l.b16 %v334
  %v2972 = vunpack.c.h.b16 %v334
  %v2973 = vunpack.c.l.b16 %v335
  %v2974 = vunpack.c.l.b16 %v336
  %v2975 = vunpack.c.h.b16 %v336
  %v2976 = vunpack.c.l.b16 %v337
  %v2977 = vunpack.c.l.b16 %v338
  %v2978 = vunpack.c.h.b16 %v338
  %v2979 = vunpack.c.l.b16 %v339
  %v2980 = vunpack.c.l.b16 %v340
  %v2981 = vunpack.c.h.b16 %v340
  %v2982 = vunpack.c.l.b16 %v341
  %v2983 = vunpack.c.l.b16 %v342
  %v2984 = vunpack.c.h.b16 %v342
  %v2985 = vunpack.c.l.b16 %v343
  %v2986 = vunpack.c.l.b16 %v344
  %v2987 = vunpack.c.h.b16 %v344
  %v2988 = vunpack.c.l.b16 %v345
  %v2989 = vunpack.c.l.b16 %v346
  %v2990 = vunpack.c.h.b16 %v346
  %v2991 = vunpack.c.l.b16 %v347
  %v2992 = vunpack.c.l.b16 %v348
  %v2993 = vunpack.c.h.b16 %v348
  %v2994 = vunpack.c.l.b16 %v349
  %v2995 = vunpack.c.l.b16 %v350
  %v2996 = vunpack.c.h.b16 %v350
  %v2997 = vunpack.c.l.b16 %v351
  %v2998 = vunpack.c.l.b16 %v352
  %v2999 = vunpack.c.h.b16 %v352
  %v3000 = vunpack.c.l.b16 %v353
  %v3001 = vunpack.c.l.b16 %v354
  %v3002 = vunpack.c.h.b16 %v354
  %v3003 = vunpack.c.l.b16 %v355
  %v3004 = vunpack.c.l.b16 %v356
  %v3005 = vunpack.c.h.b16 %v356
  %v3006 = vunpack.c.l.b16 %v357
  %v3007 = vunpack.c.l.b16 %v358
  %v3008 = vunpack.c.h.b16 %v358
  %v3009 = vunpack.c.l.b16 %v359
  %v3010 = vunpack.c.l.b16 %v360
  %v3011 = vunpack.c.h.b16 %v360
  %v3012 = vunpack.c.l.b16 %v361
  %v3013 = vunpack.c.l.b16 %v362
  %v3014 = vunpack.c.h.b16 %v362
  %v3015 = vunpack.c.l.b16 %v363
  %v3016 = vunpack.c.l.b16 %v364
  %v3017 = vunpack.c.h.b16 %v364
  %v3018 = vunpack.c.l.b16 %v365
  %v3019 = vunpack.c.l.b16 %v366
  %v3020 = vunpack.c.h.b16 %v366
  %v3021 = vunpack.c.l.b16 %v367
  %v3022 = vunpack.c.l.b16 %v368
  %v3023 = vunpack.c.h.b16 %v368
  %v3024 = vunpack.c.l.b16 %v369
  %v3025 = vunpack.c.l.b16 %v370
  %v3026 = vunpack.c.h.b16 %v370
  %v3027 = vunpack.c.l.b16 %v371
  %v3028 = vunpack.c.l.b16 %v372
  %v3029 = vunpack.c.h.b16 %v372
  %v3030 = vunpack.c.l.b16 %v373
  %v3031 = vunpack.c.l.b16 %v374
  %v3032 = vunpack.c.h.b16 %v374
  %v3033 = vunpack.c.l.b16 %v375
  %v3034 = vunpack.c.l.b16 %v376
  %v3035 = vunpack.c.h.b16 %v376
  %v3036 = vunpack.c.l.b16 %v377
  %v3037 = vunpack.c.l.b16 %v378
  %v3038 = vunpack.c.h.b16 %v378
  %v3039 = vunpack.c.l.b16 %v379
  %v3040 = vunpack.c.l.b16 %v380
  %v3041 = vunpack.c.h.b16 %v380
  %v3042 = vunpack.c.l.b16 %v381
  %v3043 = vunpack.c.l.b16 %v382
  %v3044 = vunpack.c.h.b16 %v382
  %v3045 = vunpack.c.l.b16 %v383
  %v3046 = vunpack.c.l.b16 %v384
  %v3047 = vunpack.c.h.b16 %v384
  %v3048 = vunpack.c.l.b16 %v385
  %v3049 = vunpack.c.l.b16 %v386
  %v3050 = vunpack.c.h.b16 %v386
  %v3051 = vunpack.c.l.b16 %v387
  %v3052 = vunpack.c.l.b16 %v388
  %v3053 = vunpack.c.h.b16 %v388
  %v3054 = vunpack.c.l.b16 %v389
  %v3055 = vunpack.c.l.b16 %v390
  %v3056 = vunpack.c.h.b16 %v390
  %v3057 = vunpack.c.l.b16 %v391
  %v3058 = vunpack.c.l.b16 %v392
  %v3059 = vunpack.c.h.b16 %v392
  %v3060 = vunpack.c.l.b16 %v393
  %v3061 = vunpack.c.l.b16 %v394
  %v3062 = vunpack.c.h.b16 %v394
  %v3063 = vunpack.c.l.b16 %v395
  %v3064 = vunpack.c.l.b16 %v396
  %v3065 = vunpack.c.h.b16 %v396
  %v3066 = vunpack.c.l.b16 %v397
  %v3067 = vunpack.c.l.b16 %v398
  %v3068 = vunpack.c.h.b16 %v398
  %v3069 = vunpack.c.l.b16 %v399
  %v3070 = vunpack.c.l.b16 %v400
  %v3071 = vunpack.c.h.b16 %v400
  %v3072 = vunpack.c.l.b16 %v401
  %v3073 = vunpack.c.l.b16 %v402
  %v3074 = vunpack.c.h.b16 %v402
  %v3075 = vunpack.c.l.b16 %v403
  %v3076 = vunpack.c.l.b16 %v404
  %v3077 = vunpack.c.h.b16 %v404
  %v3078 = vunpack.c.l.b16 %v405
  %v3079 = vunpack.c.l.b16 %v406
  %v3080 = vunpack.c.h.b16 %v406
  %v3081 = vunpack.c.l.b16 %v407
  %v3082 = vunpack.c.l.b16 %v408
  %v3083 = vunpack.c.h.b16 %v408
  %v3084 = vunpack.c.l.b16 %v409
  %v3085 = vunpack.c.l.b16 %v410
  %v3086 = vunpack.c.h.b16 %v410
  %v3087 = vunpack.c.l.b16 %v411
  %v3088 = vunpack.c.l.b16 %v412
  %v3089 = vunpack.c.h.b16 %v412
  %v3090 = vunpack.c.l.b16 %v413
  %v3091 = vunpack.c.l.b16 %v414
  %v3092 = vunpack.c.h.b16 %v414
  %v3093 = vunpack.c.l.b16 %v415
  %v3094 = vunpack.c.l.b16 %v416
  %v3095 = vunpack.c.h.b16 %v416
  %v3096 = vunpack.c.l.b16 %v417
  %v3097 = vunpack.c.l.b16 %v418
  %v3098 = vunpack.c.h.b16 %v418
  %v3099 = vunpack.c.l.b16 %v419
  %v3100 = vunpack.c.l.b16 %v420
  %v3101 = vunpack.c.h.b16 %v420
  %v3102 = vunpack.c.l.b16 %v421
  %v3103 = vunpack.c.l.b16 %v422
  %v3104 = vunpack.c.h.b16 %v422
  %v3105 = vunpack.c.l.b16 %v423
  %v3106 = vunpack.c.l.b16 %v424
  %v3107 = vunpack.c.h.b16 %v424
  %v3108 = vunpack.c.l.b16 %v425
  %v3109 = vunpack.c.l.b16 %v426
  %v3110 = vunpack.c.h.b16 %v426
  %v3111 = vunpack.c.l.b16 %v427
  %v3112 = vunpack.c.l.b16 %v428
  %v3113 = vunpack.c.h.b16 %v428
  %v3114 = vunpack.c.l.b16 %v429
  %v3115 = vunpack.c.l.b16 %v430
  %v3116 = vunpack.c.h.b16 %v430
  %v3117 = vunpack.c.l.b16 %v431
  %v3118 = vunpack.c.l.b16 %v432
  %v3119 = vunpack.c.h.b16 %v432
  %v3120 = vunpack.c.l.b16 %v433
  %v3121 = vunpack.c.l.b16 %v434
  %v3122 = vunpack.c.h.b16 %v434
  %v3123 = vunpack.c.l.b16 %v435
  %v3124 = vunpack.c.l.b16 %v436
  %v3125 = vunpack.c.h.b16 %v436
  %v3126 = vunpack.c.l.b16 %v437
  %v3127 = vunpack.c.l.b16 %v438
  %v3128 = vunpack.c.h.b16 %v438
  %v3129 = vunpack.c.l.b16 %v439
  %v3130 = vunpack.c.l.b16 %v440
  %v3131 = vunpack.c.h.b16 %v440
  %v3132 = vunpack.c.l.b16 %v441
  %v3133 = vunpack.c.l.b16 %v442
  %v3134 = vunpack.c.h.b16 %v442
  %v3135 = vunpack.c.l.b16 %v443
  %v3136 = vunpack.c.l.b16 %v444
  %v3137 = vunpack.c.h.b16 %v444
  %v3138 = vunpack.c.l.b16 %v445
  %v3139 = vunpack.c.l.b16 %v446
  %v3140 = vunpack.c.h.b16 %v446
  %v3141 = vunpack.c.l.b16 %v447
  %v3142 = vunpack.c.l.b16 %v448
  %v3143 = vunpack.c.h.b16 %v448
  %v3144 = vunpack.c.l.b16 %v449
  %v3145 = vunpack.c.l.b16 %v450
  %v3146 = vunpack.c.h.b16 %v450
  %v3147 = vunpack.c.l.b16 %v451
  %v3148 = vunpack.c.l.b16 %v452
  %v3149 = vunpack.c.h.b16 %v452
  %v3150 = vunpack.c.l.b16 %v453
  %v3151 = vunpack.c.l.b16 %v454
  %v3152 = vunpack.c.h.b16 %v454
  %v3153 = vunpack.c.l.b16 %v455
  %v3154 = vunpack.c.l.b16 %v456
  %v3155 = vunpack.c.h.b16 %v456
  %v3156 = vunpack.c.l.b16 %v457
  %v3157 = vunpack.c.l.b16 %v458
  %v3158 = vunpack.c.h.b16 %v458
  %v3159 = vunpack.c.l.b16 %v459
  %v3160 = vunpack.c.l.b16 %v460
  %v3161 = vunpack.c.h.b16 %v460
  %v3162 = vunpack.c.l.b16 %v461
  %v3163 = vunpack.c.l.b16 %v462
  %v3164 = vunpack.c.h.b16 %v462
  %v3165 = vunpack.c.l.b16 %v463
  %v3166 = vunpack.c.l.b16 %v464
  %v3167 = vunpack.c.h.b16 %v464
  %v3168 = vunpack.c.l.b16 %v465
  %v3169 = vunpack.c.l.b16 %v466
  %v3170 = vunpack.c.h.b16 %v466
  %v3171 = vunpack.c.l.b16 %v467
  %v3172 = vunpack.c.l.b16 %v468
  %v3173 = vunpack.c.h.b16 %v468
  %v3174 = vunpack.c.l.b16 %v469
  %v3175 = vunpack.c.l.b16 %v470
  %v3176 = vunpack.c.h.b16 %v470
  %v3177 = vunpack.c.l.b16 %v471
  %v3178 = vunpack.c.l.b16 %v472
  %v3179 = vunpack.c.h.b16 %v472
  %v3180 = vunpack.c.l.b16 %v473
  %v3181 = vunpack.c.l.b16 %v474
  %v3182 = vunpack.c.h.b16 %v474
  %v3183 = vunpack.c.l.b16 %v475
  %v3184 = vunpack.c.l.b16 %v476
  %v3185 = vunpack.c.h.b16 %v476
  %v3186 = vunpack.c.l.b16 %v477
  %v3187 = vunpack.c.l.b16 %v478
  %v3188 = vunpack.c.h.b16 %v478
  %v3189 = vunpack.c.l.b16 %v479
  %v3190 = vunpack.c.l.b16 %v480
  %v3191 = vunpack.c.h.b16 %v480
  %v3192 = vunpack.c.l.b16 %v481
  %v3193 = vunpack.c.l.b16 %v482
  %v3194 = vunpack.c.h.b16 %v482
  %v3195 = vunpack.c.l.b16 %v483
  %v3196 = vunpack.c.l.b16 %v484
  %v3197 = vunpack.c.h.b16 %v484
  %v3198 = vunpack.c.l.b16 %v485
  %v3199 = vunpack.c.l.b16 %v486
  %v3200 = vunpack.c.h.b16 %v486
  %v3201 = vunpack.c.l.b16 %v487
  %v3202 = vunpack.c.l.b16 %v488
  %v3203 = vunpack.c.h.b16 %v488
  %v3204 = vunpack.c.l.b16 %v489
  %v3205 = vunpack.c.l.b16 %v490
  %v3206 = vunpack.c.h.b16 %v490
  %v3207 = vunpack.c.l.b16 %v491
  %v3208 = vunpack.c.l.b16 %v492
  %v3209 = vunpack.c.h.b16 %v492
  %v3210 = vunpack.c.l.b16 %v493
  %v3211 = vunpack.c.l.b16 %v494
  %v3212 = vunpack.c.h.b16 %v494
  %v3213 = vunpack.c.l.b16 %v495
  %v3214 = vunpack.c.l.b16 %v496
  %v3215 = vunpack.c.h.b16 %v496
  %v3216 = vunpack.c.l.b16 %v497
  %v3217 = vunpack.c.l.b16 %v498
  %v3218 = vunpack.c.h.b16 %v498
  %v3219 = vunpack.c.l.b16 %v499
  %v3220 = vunpack.c.l.b16 %v500
  %v3221 = vunpack.c.h.b16 %v500
  %v3222 = vunpack.c.l.b16 %v501
  %v3223 = vunpack.c.l.b16 %v502
  %v3224 = vunpack.c.h.b16 %v502
  %v3225 = vunpack.c.l.b16 %v503
  %v3226 = vunpack.c.l.b16 %v504
  %v3227 = vunpack.c.h.b16 %v504
  %v3228 = vunpack.c.l.b16 %v505
  %v3229 = vunpack.c.l.b16 %v506
  %v3230 = vunpack.c.h.b16 %v506
  %v3231 = vunpack.c.l.b16 %v507
  %v3232 = vunpack.c.l.b16 %v508
  %v3233 = vunpack.c.h.b16 %v508
  %v3234 = vunpack.c.l.b16 %v509
  %v3235 = vunpack.c.l.b16 %v510
  %v3236 = vunpack.c.h.b16 %v510
  %v3237 = vunpack.c.l.b16 %v511
  %v3238 = vunpack.c.l.b16 %v512
  %v3239 = vunpack.c.h.b16 %v512
  %v3240 = vunpack.c.l.b16 %v513
  %v3241 = vunpack.c.l.b16 %v514
  %v3242 = vunpack.c.h.b16 %v514
  %v3243 = vunpack.c.l.b16 %v515
  %v3244 = vunpack.c.l.b16 %v516
  %v3245 = vunpack.c.h.b16 %v516
  %v3246 = vunpack.c.l.b16 %v517
  %v3247 = vunpack.c.l.b16 %v518
  %v3248 = vunpack.c.h.b16 %v518
  %v3249 = vunpack.c.l.b16 %v519
  %v3250 = vunpack.c.l.b16 %v520
  %v3251 = vunpack.c.h.b16 %v520
  %v3252 = vunpack.c.l.b16 %v521
  %v3253 = vunpack.c.l.b16 %v522
  %v3254 = vunpack.c.h.b16 %v522
  %v3255 = vunpack.c.l.b16 %v523
  %v3256 = vunpack.c.l.b16 %v524
  %v3257 = vunpack.c.h.b16 %v524
  %v3258 = vunpack.c.l.b16 %v525
  %v3259 = vunpack.c.l.b16 %v526
  %v3260 = vunpack.c.h.b16 %v526
  %v3261 = vunpack.c.l.b16 %v527
  %v3262 = vunpack.c.l.b16 %v528
  %v3263 = vunpack.c.h.b16 %v528
  %v3264 = vunpack.c.l.b16 %v529
  %v3265 = vunpack.c.l.b16 %v530
  %v3266 = vunpack.c.h.b16 %v530
  %v3267 = vunpack.c.l.b16 %v531
  %v3268 = vunpack.c.l.b16 %v532
  %v3269 = vunpack.c.h.b16 %v532
  %v3270 = vunpack.c.l.b16 %v533
  %v3271 = vunpack.c.l.b16 %v534
  %v3272 = vunpack.c.h.b16 %v534
  %v3273 = vunpack.c.l.b16 %v535
  %v3274 = vunpack.c.l.b16 %v536
  %v3275 = vunpack.c.h.b16 %v536
  %v3276 = vunpack.c.l.b16 %v537
  %v3277 = vunpack.c.l.b16 %v538
  %v3278 = vunpack.c.h.b16 %v538
  %v3279 = vunpack.c.l.b16 %v539
  %v3280 = vunpack.c.l.b16 %v540
  %v3281 = vunpack.c.h.b16 %v540
  %v3282 = vunpack.c.l.b16 %v541
  %v3283 = vunpack.c.l.b16 %v542
  %v3284 = vunpack.c.h.b16 %v542
  %v3285 = vunpack.c.l.b16 %v543
  %v3286 = vunpack.c.l.b16 %v544
  %v3287 = vunpack.c.h.b16 %v544
  %v3288 = vunpack.c.l.b16 %v545
  %v3289 = vunpack.c.l.b16 %v546
  %v3290 = vunpack.c.h.b16 %v546
  %v3291 = vunpack.c.l.b16 %v547
  %v3292 = vunpack.c.l.b16 %v548
  %v3293 = vunpack.c.h.b16 %v548
  %v3294 = vunpack.c.l.b16 %v549
  %v3295 = vunpack.c.l.b16 %v550
  %v3296 = vunpack.c.h.b16 %v550
  %v3297 = vunpack.c.l.b16 %v551
  %v3298 = vunpack.c.l.b16 %v552
  %v3299 = vunpack.c.h.b16 %v552
  %v3300 = vunpack.c.l.b16 %v553
  %v3301 = vunpack.c.l.b16 %v554
  %v3302 = vunpack.c.h.b16 %v554
  %v3303 = vunpack.c.l.b16 %v555
  %v3304 = vunpack.c.l.b16 %v556
  %v3305 = vunpack.c.h.b16 %v556
  %v3306 = vunpack.c.l.b16 %v557
  %v3307 = vunpack.c.l.b16 %v558
  %v3308 = vunpack.c.h.b16 %v558
  %v3309 = vunpack.c.l.b16 %v559
  %v3310 = vunpack.c.l.b16 %v560
  %v3311 = vunpack.c.h.b16 %v560
  %v3312 = vunpack.c.l.b16 %v561
  %v3313 = vunpack.c.l.b16 %v562
  %v3314 = vunpack.c.h.b16 %v562
  %v3315 = vunpack.c.l.b16 %v563
  %v3316 = vunpack.c.l.b16 %v564
  %v3317 = vunpack.c.h.b16 %v564
  %v3318 = vunpack.c.l.b16 %v565
  %v3319 = vunpack.c.l.b16 %v566
  %v3320 = vunpack.c.h.b16 %v566
  %v3321 = vunpack.c.l.b16 %v567
  %v3322 = vunpack.c.l.b16 %v568
  %v3323 = vunpack.c.h.b16 %v568
  %v3324 = vunpack.c.l.b16 %v569
  %v3325 = vunpack.c.l.b16 %v570
  %v3326 = vunpack.c.h.b16 %v570
  %v3327 = vunpack.c.l.b16 %v571
  %v3328 = vunpack.c.l.b16 %v572
  %v3329 = vunpack.c.h.b16 %v572
  %v3330 = vunpack.c.l.b16 %v573
  %v3331 = vunpack.c.l.b16 %v574
  %v3332 = vunpack.c.h.b16 %v574
  %v3333 = vunpack.c.l.b16 %v575
  %v3334 = vunpack.c.l.b16 %v576
  %v3335 = vunpack.c.h.b16 %v576
  %v3336 = vunpack.c.l.b16 %v577
  %v3337 = vunpack.c.l.b16 %v578
  %v3338 = vunpack.c.h.b16 %v578
  %v3339 = vunpack.c.l.b16 %v579
  %v3340 = vunpack.c.l.b16 %v580
  %v3341 = vunpack.c.h.b16 %v580
  %v3342 = vunpack.c.l.b16 %v581
  %v3343 = vunpack.c.l.b16 %v582
  %v3344 = vunpack.c.h.b16 %v582
  %v3345 = vunpack.c.l.b16 %v583
  %v3346 = vunpack.c.l.b16 %v584
  %v3347 = vunpack.c.h.b16 %v584
  %v3348 = vunpack.c.l.b16 %v585
  %v3349 = vunpack.c.l.b16 %v586
  %v3350 = vunpack.c.h.b16 %v586
  %v3351 = vunpack.c.l.b16 %v587
  %v3352 = vunpack.c.l.b16 %v588
  %v3353 = vunpack.c.h.b16 %v588
  %v3354 = vunpack.c.l.b16 %v589
  %v3355 = vunpack.c.l.b16 %v590
  %v3356 = vunpack.c.h.b16 %v590
  %v3357 = vunpack.c.l.b16 %v591
  %v3358 = vunpack.c.l.b16 %v592
  %v3359 = vunpack.c.h.b16 %v592
  %v3360 = vunpack.c.l.b16 %v593
  %v3361 = vunpack.c.l.b16 %v594
  %v3362 = vunpack.c.h.b16 %v594
  %v3363 = vunpack.c.l.b16 %v595
  %v3364 = vunpack.c.l.b16 %v596
  %v3365 = vunpack.c.h.b16 %v596
  %v3366 = vunpack.c.l.b16 %v597
  %v3367 = vunpack.c.l.b16 %v598
  %v3368 = vunpack.c.h.b16 %v598
  %v3369 = vunpack.c.l.b16 %v599
  %v3370 = vunpack.c.l.b16 %v600
  %v3371 = vunpack.c.h.b16 %v600
  %v3372 = vunpack.c.l.b16 %v601
  %v3373 = vunpack.c.l.b16 %v602
  %v3374 = vunpack.c.h.b16 %v602
  %v3375 = vunpack.c.l.b16 %v603
  %v3376 = vunpack.c.l.b16 %v604
  %v3377 = vunpack.c.h.b16 %v604
  %v3378 = vunpack.c.l.b16 %v605
  %v3379 = vunpack.c.l.b16 %v606
  %v3380 = vunpack.c.h.b16 %v606
  %v3381 = vunpack.c.l.b16 %v607
  %v3382 = vunpack.c.l.b16 %v608
  %v3383 = vunpack.c.h.b16 %v608
  %v3384 = vunpack.c.l.b16 %v609
  %v3385 = vunpack.c.l.b16 %v610
  %v3386 = vunpack.c.h.b16 %v610
  %v3387 = vunpack.c.l.b16 %v611
  %v3388 = vunpack.c.l.b16 %v612
  %v3389 = vunpack.c.h.b16 %v612
  %v3390 = vunpack.c.l.b16 %v613
  %v3391 = vunpack.c.l.b16 %v614
  %v3392 = vunpack.c.h.b16 %v614
  %v3393 = vunpack.c.l.b16 %v615
  %v3394 = vunpack.c.l.b16 %v616
  %v3395 = vunpack.c.h.b16 %v616
  %v3396 = vunpack.c.l.b16 %v617
  %v3397 = vunpack.c.l.b16 %v618
  %v3398 = vunpack.c.h.b16 %v618
  %v3399 = vunpack.c.l.b16 %v619
  %v3400 = vunpack.c.l.b16 %v620
  %v3401 = vunpack.c.h.b16 %v620
  %v3402 = vunpack.c.l.b16 %v621
  %v3403 = vunpack.c.l.b16 %v622
  %v3404 = vunpack.c.h.b16 %v622
  %v3405 = vunpack.c.l.b16 %v623
  %v3406 = vunpack.c.l.b16 %v624
  %v3407 = vunpack.c.h.b16 %v624
  %v3408 = vunpack.c.l.b16 %v625
  %v3409 = vunpack.c.l.b16 %v626
  %v3410 = vunpack.c.h.b16 %v626
  %v3411 = vunpack.c.l.b16 %v627
  %v3412 = vunpack.c.l.b16 %v628
  %v3413 = vunpack.c.h.b16 %v628
  %v3414 = vunpack.c.l.b16 %v629
  %v3415 = vunpack.c.l.b16 %v630
  %v3416 = vunpack.c.h.b16 %v630
  %v3417 = vunpack.c.l.b16 %v631
  %v3418 = vunpack.c.l.b16 %v632
  %v3419 = vunpack.c.h.b16 %v632
  %v3420 = vunpack.c.l.b16 %v633
  %v3421 = vunpack.c.l.b16 %v634
  %v3422 = vunpack.c.h.b16 %v634
  %v3423 = vunpack.c.l.b16 %v635
  %v3424 = vunpack.c.l.b16 %v636
  %v3425 = vunpack.c.h.b16 %v636
  %v3426 = vunpack.c.l.b16 %v637
  %v3427 = vunpack.c.l.b16 %v638
  %v3428 = vunpack.c.h.b16 %v638
  %v3429 = vunpack.c.l.b16 %v639
  %v3430 = vunpack.c.l.b16 %v640
  %v3431 = vunpack.c.h.b16 %v640
  %v3432 = vunpack.c.l.b16 %v641
  %v3433 = vunpack.c.l.b16 %v642
  %v3434 = vunpack.c.h.b16 %v642
  %v3435 = vunpack.c.l.b16 %v643
  %v3436 = vunpack.c.l.b16 %v644
  %v3437 = vunpack.c.h.b16 %v644
  %v3438 = vunpack.c.l.b16 %v645
  %v3439 = vunpack.c.l.b16 %v646
  %v3440 = vunpack.c.h.b16 %v646
  %v3441 = vunpack.c.l.b16 %v647
  %v3442 = vunpack.c.l.b16 %v648
  %v3443 = vunpack.c.h.b16 %v648
  %v3444 = vunpack.c.l.b16 %v649
  %v3445 = vunpack.c.l.b16 %v650
  %v3446 = vunpack.c.h.b16 %v650
  %v3447 = vunpack.c.l.b16 %v651
  %v3448 = vunpack.c.l.b16 %v652
  %v3449 = vunpack.c.h.b16 %v652
  %v3450 = vunpack.c.l.b16 %v653
  %v3451 = vunpack.c.l.b16 %v654
  %v3452 = vunpack.c.h.b16 %v654
  %v3453 = vunpack.c.l.b16 %v655
  %v3454 = vunpack.c.l.b16 %v656
  %v3455 = vunpack.c.h.b16 %v656
  %v3456 = vunpack.c.l.b16 %v657
  %v3457 = vunpack.c.l.b16 %v658
  %v3458 = vunpack.c.h.b16 %v658
  %v3459 = vunpack.c.l.b16 %v659
  %v3460 = vunpack.c.l.b16 %v660
  %v3461 = vunpack.c.h.b16 %v660
  %v3462 = vunpack.c.l.b16 %v661
  %v3463 = vunpack.c.l.b16 %v662
  %v3464 = vunpack.c.h.b16 %v662
  %v3465 = vunpack.c.l.b16 %v663
  %v3466 = vunpack.c.l.b16 %v664
  %v3467 = vunpack.c.h.b16 %v664
  %v3468 = vunpack.c.l.b16 %v665
  %v3469 = vunpack.c.l.b16 %v666
  %v3470 = vunpack.c.h.b16 %v666
  %v3471 = vunpack.c.l.b16 %v667
  %v3472 = vunpack.c.l.b16 %v668
  %v3473 = vunpack.c.h.b16 %v668
  %v3474 = vunpack.c.l.b16 %v669
  %v3475 = vunpack.c.l.b16 %v670
  %v3476 = vunpack.c.h.b16 %v670
  %v3477 = vunpack.c.l.b16 %v671
  %v3478 = vunpack.c.l.b16 %v672
  %v3479 = vunpack.c.h.b16 %v672
  %v3480 = vunpack.c.l.b16 %v673
  %v3481 = vunpack.c.l.b16 %v674
  %v3482 = vunpack.c.h.b16 %v674
  %v3483 = vunpack.c.l.b16 %v675
  %v3484 = vunpack.c.l.b16 %v676
  %v3485 = vunpack.c.h.b16 %v676
  %v3486 = vunpack.c.l.b16 %v677
  %v3487 = vunpack.c.l.b16 %v678
  %v3488 = vunpack.c.h.b16 %v678
  %v3489 = vunpack.c.l.b16 %v679
  %v3490 = vunpack.c.l.b16 %v680
  %v3491 = vunpack.c.h.b16 %v680
  %v3492 = vunpack.c.l.b16 %v681
  %v3493 = vunpack.c.l.b16 %v682
  %v3494 = vunpack.c.h.b16 %v682
  %v3495 = vunpack.c.l.b16 %v683
  %v3496 = vunpack.c.l.b16 %v684
  %v3497 = vunpack.c.h.b16 %v684
  %v3498 = vunpack.c.l.b16 %v685
  %v3499 = vunpack.c.l.b16 %v686
  %v3500 = vunpack.c.h.b16 %v686
  %v3501 = vunpack.c.l.b16 %v687
  %v3502 = vunpack.c.l.b16 %v688
  %v3503 = vunpack.c.h.b16 %v688
  %v3504 = vunpack.c.l.b16 %v689
  %v3505 = vunpack.c.l.b16 %v690
  %v3506 = vunpack.c.h.b16 %v690
  %v3507 = vunpack.c.l.b16 %v691
  %v3508 = vunpack.c.l.b16 %v692
  %v3509 = vunpack.c.h.b16 %v692
  %v3510 = vunpack.c.l.b16 %v693
  %v3511 = vunpack.c.l.b16 %v694
  %v3512 = vunpack.c.h.b16 %v694
  %v3513 = vunpack.c.l.b16 %v695
  %v3514 = vunpack.c.l.b16 %v696
  %v3515 = vunpack.c.h.b16 %v696
  %v3516 = vunpack.c.l.b16 %v697
  %v3517 = vunpack.c.l.b16 %v698
  %v3518 = vunpack.c.h.b16 %v698
  %v3519 = vunpack.c.l.b16 %v699
  %v3520 = vunpack.c.l.b16 %v700
  %v3521 = vunpack.c.h.b16 %v700
  %v3522 = vunpack.c.l.b16 %v701
  %v3523 = vunpack.c.l.b16 %v702
  %v3524 = vunpack.c.h.b16 %v702
  %v3525 = vunpack.c.l.b16 %v703
  %v3526 = vunpack.c.l.b16 %v704
  %v3527 = vunpack.c.h.b16 %v704
  %v3528 = vunpack.c.l.b16 %v705
  %v3529 = vunpack.c.l.b16 %v706
  %v3530 = vunpack.c.h.b16 %v706
  %v3531 = vunpack.c.l.b16 %v707
  %v3532 = vunpack.c.l.b16 %v708
  %v3533 = vunpack.c.h.b16 %v708
  %v3534 = vunpack.c.l.b16 %v709
  %v3535 = vunpack.c.l.b16 %v710
  %v3536 = vunpack.c.h.b16 %v710
  %v3537 = vunpack.c.l.b16 %v711
  %v3538 = vunpack.c.l.b16 %v712
  %v3539 = vunpack.c.h.b16 %v712
  %v3540 = vunpack.c.l.b16 %v713
  %v3541 = vunpack.c.l.b16 %v714
  %v3542 = vunpack.c.h.b16 %v714
  %v3543 = vunpack.c.l.b16 %v715
  %v3544 = vunpack.c.l.b16 %v716
  %v3545 = vunpack.c.h.b16 %v716
  %v3546 = vunpack.c.l.b16 %v717
  %v3547 = vunpack.c.l.b16 %v718
  %v3548 = vunpack.c.h.b16 %v718
  %v3549 = vunpack.c.l.b16 %v719
  %v3550 = vunpack.c.l.b16 %v720
  %v3551 = vunpack.c.h.b16 %v720
  %v3552 = vunpack.c.l.b16 %v721
  %v3553 = vunpack.c.l.b16 %v722
  %v3554 = vunpack.c.h.b16 %v722
  %v3555 = vunpack.c.l.b16 %v723
  %v3556 = vunpack.c.l.b16 %v724
  %v3557 = vunpack.c.h.b16 %v724
  %v3558 = vunpack.c.l.b16 %v725
  %v3559 = vunpack.c.l.b16 %v726
  %v3560 = vunpack.c.h.b16 %v726
  %v3561 = vunpack.c.l.b16 %v727
  %v3562 = vunpack.c.l.b16 %v728
  %v3563 = vunpack.c.h.b16 %v728
  %v3564 = vunpack.c.l.b16 %v729
  %v3565 = vunpack.c.l.b16 %v730
  %v3566 = vunpack.c.h.b16 %v730
  %v3567 = vunpack.c.l.b16 %v731
  %v3568 = vunpack.c.l.b16 %v732
  %v3569 = vunpack.c.h.b16 %v732
  %v3570 = vunpack.c.l.b16 %v733
  %v3571 = vunpack.c.l.b16 %v734
  %v3572 = vunpack.c.h.b16 %v734
  %v3573 = vunpack.c.l.b16 %v735
  %v3574 = vunpack.c.l.b16 %v736
  %v3575 = vunpack.c.h.b16 %v736
  %v3576 = vunpack.c.l.b16 %v737
  %v3577 = vunpack.c.l.b16 %v738
  %v3578 = vunpack.c.h.b16 %v738
  %v3579 = vunpack.c.l.b16 %v739
  %v3580 = vunpack.c.l.b16 %v740
  %v3581 = vunpack.c.h.b16 %v740
  %v3582 = vunpack.c.l.b16 %v741
  %v3583 = vunpack.c.l.b16 %v742
  %v3584 = vunpack.c.h.b16 %v742
  %v3585 = vunpack.c.l.b16 %v743
  %v3586 = vunpack.c.l.b16 %v744
  %v3587 = vunpack.c.h.b16 %v744
  %v3588 = vunpack.c.l.b16 %v745
  %v3589 = vunpack.c.l.b16 %v746
  %v3590 = vunpack.c.h.b16 %v746
  %v3591 = vunpack.c.l.b16 %v747
  %v3592 = vunpack.c.l.b16 %v748
  %v3593 = vunpack.c.h.b16 %v748
  %v3594 = vunpack.c.l.b16 %v749
  %v3595 = vunpack.c.l.b16 %v750
  %v3596 = vunpack.c.h.b16 %v750
  %v3597 = vunpack.c.l.b16 %v751
  %v3598 = vunpack.c.l.b16 %v752
  %v3599 = vunpack.c.h.b16 %v752
  %v3600 = vunpack.c.l.b16 %v753
  %v3601 = vunpack.c.l.b16 %v754
  %v3602 = vunpack.c.h.b16 %v754
  %v3603 = vunpack.c.l.b16 %v755
  %v3604 = vunpack.c.l.b16 %v756
  %v3605 = vunpack.c.h.b16 %v756
  %v3606 = vunpack.c.l.b16 %v757
  %v3607 = vunpack.c.l.b16 %v758
  %v3608 = vunpack.c.h.b16 %v758
  %v3609 = vunpack.c.l.b16 %v759
  %v3610 = vunpack.c.l.b16 %v760
  %v3611 = vunpack.c.h.b16 %v760
  %v3612 = vunpack.c.l.b16 %v761
  %v3613 = vunpack.c.l.b16 %v762
  %v3614 = vunpack.c.h.b16 %v762
  %v3615 = vunpack.c.l.b16 %v763
  %v3616 = vunpack.c.l.b16 %v764
  %v3617 = vunpack.c.h.b16 %v764
  %v3618 = vunpack.c.l.b16 %v765
  %v3619 = vunpack.c.l.b16 %v766
  %v3620 = vunpack.c.h.b16 %v766
  %v3621 = vunpack.c.l.b16 %v767
  %v3622 = vunpack.c.l.b16 %v768
  %v3623 = vunpack.c.h.b16 %v768
  %v3624 = vunpack.c.l.b16 %v769
  %v3625 = vunpack.c.l.b16 %v770
  %v3626 = vunpack.c.h.b16 %v770
  %v3627 = vunpack.c.l.b16 %v771
  %v3628 = vunpack.c.l.b16 %v772
  %v3629 = vunpack.c.h.b16 %v772
  %v3630 = vunpack.c.l.b16 %v773
  %v3631 = vunpack.c.l.b16 %v774
  %v3632 = vunpack.c.h.b16 %v774
  %v3633 = vunpack.c.l.b16 %v775
  %v3634 = vunpack.c.l.b16 %v776
  %v3635 = vunpack.c.h.b16 %v776
  %v3636 = vunpack.c.l.b16 %v777
  %v3637 = vunpack.c.l.b16 %v778
  %v3638 = vunpack.c.h.b16 %v778
  %v3639 = vunpack.c.l.b16 %v779
  %v3640 = vunpack.c.l.b16 %v780
  %v3641 = vunpack.c.h.b16 %v780
  %v3642 = vunpack.c.l.b16 %v781
  %v3643 = vunpack.c.l.b16 %v782
  %v3644 = vunpack.c.h.b16 %v782
  %v3645 = vunpack.c.l.b16 %v783
  %v3646 = vunpack.c.l.b16 %v784
  %v3647 = vunpack.c.h.b16 %v784
  %v3648 = vunpack.c.l.b16 %v785
  %v3649 = vunpack.c.l.b16 %v786
  %v3650 = vunpack.c.h.b16 %v786
  %v3651 = vunpack.c.l.b16 %v787
  %v3652 = vunpack.c.l.b16 %v788
  %v3653 = vunpack.c.h.b16 %v788
  %v3654 = vunpack.c.l.b16 %v789
  %v3655 = vunpack.c.l.b16 %v790
  %v3656 = vunpack.c.h.b16 %v790
  %v3657 = vunpack.c.l.b16 %v791
  %v3658 = vunpack.c.l.b16 %v792
  %v3659 = vunpack.c.h.b16 %v792
  %v3660 = vunpack.c.l.b16 %v793
  %v3661 = vunpack.c.l.b16 %v794
  %v3662 = vunpack.c.h.b16 %v794
  %v3663 = vunpack.c.l.b16 %v795
  %v3664 = vunpack.c.l.b16 %v796
  %v3665 = vunpack.c.h.b16 %v796
  %v3666 = vunpack.c.l.b16 %v797
  %v3667 = vunpack.c.l.b16 %v798
  %v3668 = vunpack.c.h.b16 %v798
  %v3669 = vunpack.c.l.b16 %v799
  %v3670 = vunpack.c.l.b16 %v800
  %v3671 = vunpack.c.h.b16 %v800
  %v3672 = vunpack.c.l.b16 %v801
  %v3673 = vunpack.c.l.b16 %v802
  %v3674 = vunpack.c.h.b16 %v802
  %v3675 = vunpack.c.l.b16 %v803
  %v3676 = vunpack.c.l.b16 %v804
  %v3677 = vunpack.c.h.b16 %v804
  %v3678 = vunpack.c.l.b16 %v805
  %v3679 = vunpack.c.l.b16 %v806
  %v3680 = vunpack.c.h.b16 %v806
  %v3681 = vunpack.c.l.b16 %v807
  %v3682 = vunpack.c.l.b16 %v808
  %v3683 = vunpack.c.h.b16 %v808
  %v3684 = vunpack.c.l.b16 %v809
  %v3685 = vunpack.c.l.b16 %v810
  %v3686 = vunpack.c.h.b16 %v810
  %v3687 = vunpack.c.l.b16 %v811
  %v3688 = vunpack.c.l.b16 %v812
  %v3689 = vunpack.c.h.b16 %v812
  %v3690 = vunpack.c.l.b16 %v813
  %v3691 = vunpack.c.l.b16 %v814
  %v3692 = vunpack.c.h.b16 %v814
  %v3693 = vunpack.c.l.b16 %v815
  %v3694 = vunpack.c.l.b16 %v816
  %v3695 = vunpack.c.h.b16 %v816
  %v3696 = vunpack.c.l.b16 %v817
  %v3697 = vunpack.c.l.b16 %v818
  %v3698 = vunpack.c.h.b16 %v818
  %v3699 = vunpack.c.l.b16 %v819
  %v3700 = vunpack.c.l.b16 %v820
  %v3701 = vunpack.c.h.b16 %v820
  %v3702 = vunpack.c.l.b16 %v821
  %v3703 = vunpack.c.l.b16 %v822
  %v3704 = vunpack.c.h.b16 %v822
  %v3705 = vunpack.c.l.b16 %v823
  %v3706 = vunpack.c.l.b16 %v824
  %v3707 = vunpack.c.h.b16 %v824
  %v3708 = vunpack.c.l.b16 %v825
  %v3709 = vunpack.c.l.b16 %v826
  %v3710 = vunpack.c.h.b16 %v826
  %v3711 = vunpack.c.l.b16 %v827
  %v3712 = vunpack.c.l.b16 %v828
  %v3713 = vunpack.c.h.b16 %v828
  %v3714 = vunpack.c.l.b16 %v829
  %v3715 = vunpack.c.l.b16 %v830
  %v3716 = vunpack.c.h.b16 %v830
  %v3717 = vunpack.c.l.b16 %v831
  %v3718 = vunpack.c.l.b16 %v832
  %v3719 = vunpack.c.h.b16 %v832
  %v3720 = vunpack.c.l.b16 %v833
  %v3721 = vunpack.c.l.b16 %v834
  %v3722 = vunpack.c.h.b16 %v834
  %v3723 = vunpack.c.l.b16 %v835
  %v3724 = vunpack.c.l.b16 %v836
  %v3725 = vunpack.c.h.b16 %v836
  %v3726 = vunpack.c.l.b16 %v837
  %v3727 = vunpack.c.l.b16 %v838
  %v3728 = vunpack.c.h.b16 %v838
  %v3729 = vunpack.c.l.b16 %v839
  %v3730 = vunpack.c.l.b16 %v840
  %v3731 = vunpack.c.h.b16 %v840
  %v3732 = vunpack.c.l.b16 %v841
  %v3733 = vunpack.c.l.b16 %v842
  %v3734 = vunpack.c.h.b16 %v842
  %v3735 = vunpack.c.l.b16 %v843
  %v3736 = vunpack.c.l.b16 %v844
  %v3737 = vunpack.c.h.b16 %v844
  %v3738 = vunpack.c.l.b16 %v845
  %v3739 = vunpack.c.l.b16 %v846
  %v3740 = vunpack.c.h.b16 %v846
  %v3741 = vunpack.c.l.b16 %v847
  %v3742 = vunpack.c.l.b16 %v848
  %v3743 = vunpack.c.h.b16 %v848
  %v3744 = vunpack.c.l.b16 %v849
  %v3745 = vunpack.c.l.b16 %v850
  %v3746 = vunpack.c.h.b16 %v850
  %v3747 = vunpack.c.l.b16 %v851
  %v3748 = vunpack.c.l.b16 %v852
  %v3749 = vunpack.c.h.b16 %v852
  %v3750 = vunpack.c.l.b16 %v853
  %v3751 = vunpack.c.l.b16 %v854
  %v3752 = vunpack.c.h.b16 %v854
  %v3753 = vunpack.c.l.b16 %v855
  %v3754 = vunpack.c.l.b16 %v856
  %v3755 = vunpack.c.h.b16 %v856
  %v3756 = vunpack.c.l.b16 %v857
  %v3757 = vunpack.c.l.b16 %v858
  %v3758 = vunpack.c.h.b16 %v858
  %v3759 = vunpack.c.l.b16 %v859
  %v3760 = vunpack.c.l.b16 %v860
  %v3761 = vunpack.c.h.b16 %v860
  %v3762 = vunpack.c.l.b16 %v861
  %v3763 = vunpack.c.l.b16 %v862
  %v3764 = vunpack.c.h.b16 %v862
  %v3765 = vunpack.c.l.b16 %v863
  %v3766 = vunpack.c.l.b16 %v864
  %v3767 = vunpack.c.h.b16 %v864
  %v3768 = vunpack.c.l.b16 %v865
  %v3769 = vunpack.c.l.b16 %v866
  %v3770 = vunpack.c.h.b16 %v866
  %v3771 = vunpack.c.l.b16 %v867
  %v3772 = vunpack.c.l.b16 %v868
  %v3773 = vunpack.c.h.b16 %v868
  %v3774 = vunpack.c.l.b16 %v869
  %v3775 = vunpack.c.l.b16 %v870
  %v3776 = vunpack.c.h.b16 %v870
  %v3777 = vunpack.c.l.b16 %v871
  %v3778 = vunpack.c.l.b16 %v872
  %v3779 = vunpack.c.h.b16 %v872
  %v3780 = vunpack.c.l.b16 %v873
  %v3781 = vunpack.c.l.b16 %v874
  %v3782 = vunpack.c.h.b16 %v874
  %v3783 = vunpack.c.l.b16 %v875
  %v3784 = vunpack.c.l.b16 %v876
  %v3785 = vunpack.c.h.b16 %v876
  %v3786 = vunpack.c.l.b16 %v877
  %v3787 = vunpack.c.l.b16 %v878
  %v3788 = vunpack.c.h.b16 %v878
  %v3789 = vunpack.c.l.b16 %v879
  %v3790 = vunpack.c.l.b16 %v880
  %v3791 = vunpack.c.h.b16 %v880
  %v3792 = vunpack.c.l.b16 %v881
  %v3793 = vunpack.c.l.b16 %v882
  %v3794 = vunpack.c.h.b16 %v882
  %v3795 = vunpack.c.l.b16 %v883
  %v3796 = vunpack.c.l.b16 %v884
  %v3797 = vunpack.c.h.b16 %v884
  %v3798 = vunpack.c.l.b16 %v885
  %v3799 = vunpack.c.l.b16 %v886
  %v3800 = vunpack.c.h.b16 %v886
  %v3801 = vunpack.c.l.b16 %v887
  %v3802 = vunpack.c.l.b16 %v888
  %v3803 = vunpack.c.h.b16 %v888
  %v3804 = vunpack.c.l.b16 %v889
  %v3805 = vunpack.c.l.b16 %v890
  %v3806 = vunpack.c.h.b16 %v890
  %v3807 = vunpack.c.l.b16 %v891
  %v3808 = vunpack.c.l.b16 %v892
  %v3809 = vunpack.c.h.b16 %v892
  %v3810 = vunpack.c.l.b16 %v893
  %v3811 = vunpack.c.l.b16 %v894
  %v3812 = vunpack.c.h.b16 %v894
  %v3813 = vunpack.c.l.b16 %v895
  %v3814 = vunpack.c.l.b16 %v896
  %v3815 = vunpack.c.h.b16 %v896
  %v3816 = vunpack.c.l.b16 %v897
  %v3817 = vunpack.c.l.b16 %v898
  %v3818 = vunpack.c.h.b16 %v898
  %v3819 = vunpack.c.l.b16 %v899
  %v3820 = vunpack.c.l.b16 %v900
  %v3821 = vunpack.c.h.b16 %v900
  %v3822 = vunpack.c.l.b16 %v901
  %v3823 = vunpack.c.l.b16 %v902
  %v3824 = vunpack.c.h.b16 %v902
  %v3825 = vunpack.c.l.b16 %v903
  %v3826 = vunpack.c.l.b16 %v904
  %v3827 = vunpack.c.h.b16 %v904
  %v3828 = vunpack.c.l.b16 %v905
  %v3829 = vunpack.c.l.b16 %v906
  %v3830 = vunpack.c.h.b16 %v906
  %v3831 = vunpack.c.l.b16 %v907
  %v3832 = vunpack.c.l.b16 %v908
  %v3833 = vunpack.c.h.b16 %v908
  %v3834 = vunpack.c.l.b16 %v909
  %v3835 = vunpack.c.l.b16 %v910
  %v3836 = vunpack.c.h.b16 %v910
  %v3837 = vunpack.c.l.b16 %v911
  %v3838 = vunpack.c.l.b16 %v912
  %v3839 = vunpack.c.h.b16 %v912
  %v3840 = vunpack.c.l.b16 %v913
  %v3841 = vunpack.c.l.b16 %v914
  %v3842 = vunpack.c.h.b16 %v914
  %v3843 = vunpack.c.l.b16 %v915
  %v3844 = vunpack.c.l.b16 %v916
  %v3845 = vunpack.c.h.b16 %v916
  %v3846 = vunpack.c.l.b16 %v917
  %v3847 = vunpack.c.l.b16 %v918
  %v3848 = vunpack.c.h.b16 %v918
  %v3849 = vunpack.c.l.b16 %v919
  %v3850 = vunpack.c.l.b16 %v920
  %v3851 = vunpack.c.h.b16 %v920
  %v3852 = vunpack.c.l.b16 %v921
  %v3853 = vunpack.c.l.b16 %v922
  %v3854 = vunpack.c.h.b16 %v922
  %v3855 = vunpack.c.l.b16 %v923
  %v3856 = vunpack.c.l.b16 %v924
  %v3857 = vunpack.c.h.b16 %v924
  %v3858 = vunpack.c.l.b16 %v925
  %v3859 = vunpack.c.l.b16 %v926
  %v3860 = vunpack.c.h.b16 %v926
  %v3861 = vunpack.c.l.b16 %v927
  %v3862 = vunpack.c.l.b16 %v928
  %v3863 = vunpack.c.h.b16 %v928
  %v3864 = vunpack.c.l.b16 %v929
  %v3865 = vunpack.c.l.b16 %v930
  %v3866 = vunpack.c.h.b16 %v930
  %v3867 = vunpack.c.l.b16 %v931
  %v3868 = vunpack.c.l.b16 %v932
  %v3869 = vunpack.c.h.b16 %v932
  %v3870 = vunpack.c.l.b16 %v933
  %v3871 = vunpack.c.l.b16 %v934
  %v3872 = vunpack.c.h.b16 %v934
  %v3873 = vunpack.c.l.b16 %v935
  %v3874 = vunpack.c.l.b16 %v936
  %v3875 = vunpack.c.h.b16 %v936
  %v3876 = vunpack.c.l.b16 %v937
  %v3877 = vunpack.c.l.b16 %v938
  %v3878 = vunpack.c.h.b16 %v938
  %v3879 = vunpack.c.l.b16 %v939
  %v3880 = vunpack.c.l.b16 %v940
  %v3881 = vunpack.c.h.b16 %v940
  %v3882 = vunpack.c.l.b16 %v941
  %v3883 = vunpack.c.l.b16 %v942
  %v3884 = vunpack.c.h.b16 %v942
  %v3885 = vunpack.c.l.b16 %v943
  %v3886 = vunpack.c.l.b16 %v944
  %v3887 = vunpack.c.h.b16 %v944
  %v3888 = vunpack.c.l.b16 %v945
  %v3889 = vunpack.c.l.b16 %v946
  %v3890 = vunpack.c.h.b16 %v946
  %v3891 = vunpack.c.l.b16 %v947
  %v3892 = vunpack.c.l.b16 %v948
  %v3893 = vunpack.c.h.b16 %v948
  %v3894 = vunpack.c.l.b16 %v949
  %v3895 = vunpack.c.l.b16 %v950
  %v3896 = vunpack.c.h.b16 %v950
  %v3897 = vunpack.c.l.b16 %v951
  %v3898 = vunpack.c.l.b16 %v952
  %v3899 = vunpack.c.h.b16 %v952
  %v3900 = vunpack.c.l.b16 %v953
  %v3901 = vunpack.c.l.b16 %v954
  %v3902 = vunpack.c.h.b16 %v954
  %v3903 = vunpack.c.l.b16 %v955
  %v3904 = vunpack.c.l.b16 %v956
  %v3905 = vunpack.c.h.b16 %v956
  %v3906 = vunpack.c.l.b16 %v957
  %v3907 = vunpack.c.l.b16 %v958
  %v3908 = vunpack.c.h.b16 %v958
  %v3909 = vunpack.c.l.b16 %v959
  %v3910 = vunpack.c.l.b16 %v960
  %v3911 = vunpack.c.h.b16 %v960
  %v3912 = vunpack.c.l.b16 %v961
  %v3913 = vunpack.c.l.b16 %v962
  %v3914 = vunpack.c.h.b16 %v962
  %v3915 = vunpack.c.l.b16 %v963
  %v3916 = vunpack.c.l.b16 %v964
  %v3917 = vunpack.c.h.b16 %v964
  %v3918 = vunpack.c.l.b16 %v965
  %v3919 = vunpack.c.l.b16 %v966
  %v3920 = vunpack.c.h.b16 %v966
  %v3921 = vunpack.c.l.b16 %v967
  %v3922 = vpack.c.b16 %v2869, %v2866
  %v3923 = vpack.c.b16 %v2870, %v2867
  %v3924 = vpack.c.b16 %v2871, %v2868
  %v3925 = vpack.c.b16 %v2875, %v2872
  %v3926 = vpack.c.b16 %v2876, %v2873
  %v3927 = vpack.c.b16 %v2877, %v2874
  %v3928 = vpack.c.b16 %v2881, %v2878
  %v3929 = vpack.c.b16 %v2882, %v2879
  %v3930 = vpack.c.b16 %v2883, %v2880
  %v3931 = vpack.c.b16 %v2887, %v2884
  %v3932 = vpack.c.b16 %v2888, %v2885
  %v3933 = vpack.c.b16 %v2889, %v2886
  %v3934 = vpack.c.b16 %v2893, %v2890
  %v3935 = vpack.c.b16 %v2894, %v2891
  %v3936 = vpack.c.b16 %v2895, %v2892
  %v3937 = vpack.c.b16 %v2899, %v2896
  %v3938 = vpack.c.b16 %v2900, %v2897
  %v3939 = vpack.c.b16 %v2901, %v2898
  %v3940 = vpack.c.b16 %v2905, %v2902
  %v3941 = vpack.c.b16 %v2906, %v2903
  %v3942 = vpack.c.b16 %v2907, %v2904
  %v3943 = vpack.c.b16 %v2911, %v2908
  %v3944 = vpack.c.b16 %v2912, %v2909
  %v3945 = vpack.c.b16 %v2913, %v2910
  %v3946 = vpack.c.b16 %v2917, %v2914
  %v3947 = vpack.c.b16 %v2918, %v2915
  %v3948 = vpack.c.b16 %v2919, %v2916
  %v3949 = vpack.c.b16 %v2923, %v2920
  %v3950 = vpack.c.b16 %v2924, %v2921
  %v3951 = vpack.c.b16 %v2925, %v2922
  %v3952 = vpack.c.b16 %v2929, %v2926
  %v3953 = vpack.c.b16 %v2930, %v2927
  %v3954 = vpack.c.b16 %v2931, %v2928
  %v3955 = vpack.c.b16 %v2935, %v2932
  %v3956 = vpack.c.b16 %v2936, %v2933
  %v3957 = vpack.c.b16 %v2937, %v2934
  %v3958 = vpack.c.b16 %v2941, %v2938
  %v3959 = vpack.c.b16 %v2942, %v2939
  %v3960 = vpack.c.b16 %v2943, %v2940
  %v3961 = vpack.c.b16 %v2947, %v2944
  %v3962 = vpack.c.b16 %v2948, %v2945
  %v3963 = vpack.c.b16 %v2949, %v2946
  %v3964 = vpack.c.b16 %v2953, %v2950
  %v3965 = vpack.c.b16 %v2954, %v2951
  %v3966 = vpack.c.b16 %v2955, %v2952
  %v3967 = vpack.c.b16 %v2959, %v2956
  %v3968 = vpack.c.b16 %v2960, %v2957
  %v3969 = vpack.c.b16 %v2961, %v2958
  %v3970 = vpack.c.b16 %v2965, %v2962
  %v3971 = vpack.c.b16 %v2966, %v2963
  %v3972 = vpack.c.b16 %v2967, %v2964
  %v3973 = vpack.c.b16 %v2971, %v2968
  %v3974 = vpack.c.b16 %v2972, %v2969
  %v3975 = vpack.c.b16 %v2973, %v2970
  %v3976 = vpack.c.b16 %v2977, %v2974
  %v3977 = vpack.c.b16 %v2978, %v2975
  %v3978 = vpack.c.b16 %v2979, %v2976
  %v3979 = vpack.c.b16 %v2983, %v2980
  %v3980 = vpack.c.b16 %v2984, %v2981
  %v3981 = vpack.c.b16 %v2985, %v2982
  %v3982 = vpack.c.b16 %v2989, %v2986
  %v3983 = vpack.c.b16 %v2990, %v2987
  %v3984 = vpack.c.b16 %v2991, %v2988
  %v3985 = vpack.c.b16 %v2995, %v2992
  %v3986 = vpack.c.b16 %v2996, %v2993
  %v3987 = vpack.c.b16 %v2997, %v2994
  %v3988 = vpack.c.b16 %v3001, %v2998
  %v3989 = vpack.c.b16 %v3002, %v2999
  %v3990 = vpack.c.b16 %v3003, %v3000
  %v3991 = vpack.c.b16 %v3007, %v3004
  %v3992 = vpack.c.b16 %v3008, %v3005
  %v3993 = vpack.c.b16 %v3009, %v3006
  %v3994 = vpack.c.b16 %v3013, %v3010
  %v3995 = vpack.c.b16 %v3014, %v3011
  %v3996 = vpack.c.b16 %v3015, %v3012
  %v3997 = vpack.c.b16 %v3019, %v3016
  %v3998 = vpack.c.b16 %v3020, %v3017
  %v3999 = vpack.c.b16 %v3021, %v3018
  %v4000 = vpack.c.b16 %v3025, %v3022
  %v4001 = vpack.c.b16 %v3026, %v3023
  %v4002 = vpack.c.b16 %v3027, %v3024
  %v4003 = vpack.c.b16 %v3031, %v3028
  %v4004 = vpack.c.b16 %v3032, %v3029
  %v4005 = vpack.c.b16 %v3033, %v3030
  %v4006 = vpack.c.b16 %v3037, %v3034
  %v4007 = vpack.c.b16 %v3038, %v3035
  %v4008 = vpack.c.b16 %v3039, %v3036
  %v4009 = vpack.c.b16 %v3043, %v3040
  %v4010 = vpack.c.b16 %v3044, %v3041
  %v4011 = vpack.c.b16 %v3045, %v3042
  %v4012 = vpack.c.b16 %v3049, %v3046
  %v4013 = vpack.c.b16 %v3050, %v3047
  %v4014 = vpack.c.b16 %v3051, %v3048
  %v4015 = vpack.c.b16 %v3055, %v3052
  %v4016 = vpack.c.b16 %v3056, %v3053
  %v4017 = vpack.c.b16 %v3057, %v3054
  %v4018 = vpack.c.b16 %v3061, %v3058
  %v4019 = vpack.c.b16 %v3062, %v3059
  %v4020 = vpack.c.b16 %v3063, %v3060
  %v4021 = vpack.c.b16 %v3067, %v3064
  %v4022 = vpack.c.b16 %v3068, %v3065
  %v4023 = vpack.c.b16 %v3069, %v3066
  %v4024 = vpack.c.b16 %v3073, %v3070
  %v4025 = vpack.c.b16 %v3074, %v3071
  %v4026 = vpack.c.b16 %v3075, %v3072
  %v4027 = vpack.c.b16 %v3079, %v3076
  %v4028 = vpack.c.b16 %v3080, %v3077
  %v4029 = vpack.c.b16 %v3081, %v3078
  %v4030 = vpack.c.b16 %v3085, %v3082
  %v4031 = vpack.c.b16 %v3086, %v3083
  %v4032 = vpack.c.b16 %v3087, %v3084
  %v4033 = vpack.c.b16 %v3091, %v3088
  %v4034 = vpack.c.b16 %v3092, %v3089
  %v4035 = vpack.c.b16 %v3093, %v3090
  %v4036 = vpack.c.b16 %v3097, %v3094
  %v4037 = vpack.c.b16 %v3098, %v3095
  %v4038 = vpack.c.b16 %v3099, %v3096
  %v4039 = vpack.c.b16 %v3103, %v3100
  %v4040 = vpack.c.b16 %v3104, %v3101
  %v4041 = vpack.c.b16 %v3105, %v3102
  %v4042 = vpack.c.b16 %v3109, %v3106
  %v4043 = vpack.c.b16 %v3110, %v3107
  %v4044 = vpack.c.b16 %v3111, %v3108
  %v4045 = vpack.c.b16 %v3115, %v3112
  %v4046 = vpack.c.b16 %v3116, %v3113
  %v4047 = vpack.c.b16 %v3117, %v3114
  %v4048 = vpack.c.b16 %v3121, %v3118
  %v4049 = vpack.c.b16 %v3122, %v3119
  %v4050 = vpack.c.b16 %v3123, %v3120
  %v4051 = vpack.c.b16 %v3127, %v3124
  %v4052 = vpack.c.b16 %v3128, %v3125
  %v4053 = vpack.c.b16 %v3129, %v3126
  %v4054 = vpack.c.b16 %v3133, %v3130
  %v4055 = vpack.c.b16 %v3134, %v3131
  %v4056 = vpack.c.b16 %v3135, %v3132
  %v4057 = vpack.c.b16 %v3139, %v3136
  %v4058 = vpack.c.b16 %v3140, %v3137
  %v4059 = vpack.c.b16 %v3141, %v3138
  %v4060 = vpack.c.b16 %v3145, %v3142
  %v4061 = vpack.c.b16 %v3146, %v3143
  %v4062 = vpack.c.b16 %v3147, %v3144
  %v4063 = vpack.c.b16 %v3151, %v3148
  %v4064 = vpack.c.b16 %v3152, %v3149
  %v4065 = vpack.c.b16 %v3153, %v3150
  %v4066 = vpack.c.b16 %v3157, %v3154
  %v4067 = vpack.c.b16 %v3158, %v3155
  %v4068 = vpack.c.b16 %v3159, %v3156
  %v4069 = vpack.c.b16 %v3163, %v3160
  %v4070 = vpack.c.b16 %v3164, %v3161
  %v4071 = vpack.c.b16 %v3165, %v3162
  %v4072 = vpack.c.b16 %v3169, %v3166
  %v4073 = vpack.c.b16 %v3170, %v3167
  %v4074 = vpack.c.b16 %v3171, %v3168
  %v4075 = vpack.c.b16 %v3175, %v3172
  %v4076 = vpack.c.b16 %v3176, %v3173
  %v4077 = vpack.c.b16 %v3177, %v3174
  %v4078 = vpack.c.b16 %v3181, %v3178
  %v4079 = vpack.c.b16 %v3182, %v3179
  %v4080 = vpack.c.b16 %v3183, %v3180
  %v4081 = vpack.c.b16 %v3187, %v3184
  %v4082 = vpack.c.b16 %v3188, %v3185
  %v4083 = vpack.c.b16 %v3189, %v3186
  %v4084 = vpack.c.b16 %v3193, %v3190
  %v4085 = vpack.c.b16 %v3194, %v3191
  %v4086 = vpack.c.b16 %v3195, %v3192
  %v4087 = vpack.c.b16 %v3199, %v3196
  %v4088 = vpack.c.b16 %v3200, %v3197
  %v4089 = vpack.c.b16 %v3201, %v3198
  %v4090 = vpack.c.b16 %v3205, %v3202
  %v4091 = vpack.c.b16 %v3206, %v3203
  %v4092 = vpack.c.b16 %v3207, %v3204
  %v4093 = vpack.c.b16 %v3211, %v3208
  %v4094 = vpack.c.b16 %v3212, %v3209
  %v4095 = vpack.c.b16 %v3213, %v3210
  %v4096 = vpack.c.b16 %v3217, %v3214
  %v4097 = vpack.c.b16 %v3218, %v3215
  %v4098 = vpack.c.b16 %v3219, %v3216
  %v4099 = vpack.c.b16 %v3223, %v3220
  %v4100 = vpack.c.b16 %v3224, %v3221
  %v4101 = vpack.c.b16 %v3225, %v3222
  %v4102 = vpack.c.b16 %v3229, %v3226
  %v4103 = vpack.c.b16 %v3230, %v3227
  %v4104 = vpack.c.b16 %v3231, %v3228
  %v4105 = vpack.c.b16 %v3235, %v3232
  %v4106 = vpack.c.b16 %v3236, %v3233
  %v4107 = vpack.c.b16 %v3237, %v3234
  %v4108 = vpack.c.b16 %v3241, %v3238
  %v4109 = vpack.c.b16 %v3242, %v3239
  %v4110 = vpack.c.b16 %v3243, %v3240
  %v4111 = vpack.c.b16 %v3247, %v3244
  %v4112 = vpack.c.b16 %v3248, %v3245
  %v4113 = vpack.c.b16 %v3249, %v3246
  %v4114 = vpack.c.b16 %v3253, %v3250
  %v4115 = vpack.c.b16 %v3254, %v3251
  %v4116 = vpack.c.b16 %v3255, %v3252
  %v4117 = vpack.c.b16 %v3259, %v3256
  %v4118 = vpack.c.b16 %v3260, %v3257
  %v4119 = vpack.c.b16 %v3261, %v3258
  %v4120 = vpack.c.b16 %v3265, %v3262
  %v4121 = vpack.c.b16 %v3266, %v3263
  %v4122 = vpack.c.b16 %v3267, %v3264
  %v4123 = vpack.c.b16 %v3271, %v3268
  %v4124 = vpack.c.b16 %v3272, %v3269
  %v4125 = vpack.c.b16 %v3273, %v3270
  %v4126 = vpack.c.b16 %v3277, %v3274
  %v4127 = vpack.c.b16 %v3278, %v3275
  %v4128 = vpack.c.b16 %v3279, %v3276
  %v4129 = vpack.c.b16 %v3283, %v3280
  %v4130 = vpack.c.b16 %v3284, %v3281
  %v4131 = vpack.c.b16 %v3285, %v3282
  %v4132 = vpack.c.b16 %v3289, %v3286
  %v4133 = vpack.c.b16 %v3290, %v3287
  %v4134 = vpack.c.b16 %v3291, %v3288
  %v4135 = vpack.c.b16 %v3295, %v3292
  %v4136 = vpack.c.b16 %v3296, %v3293
  %v4137 = vpack.c.b16 %v3297, %v3294
  %v4138 = vpack.c.b16 %v3301, %v3298
  %v4139 = vpack.c.b16 %v3302, %v3299
  %v4140 = vpack.c.b16 %v3303, %v3300
  %v4141 = vpack.c.b16 %v3307, %v3304
  %v4142 = vpack.c.b16 %v3308, %v3305
  %v4143 = vpack.c.b16 %v3309, %v3306
  %v4144 = vpack.c.b16 %v3313, %v3310
  %v4145 = vpack.c.b16 %v3314, %v3311
  %v4146 = vpack.c.b16 %v3315, %v3312
  %v4147 = vpack.c.b16 %v3319, %v3316
  %v4148 = vpack.c.b16 %v3320, %v3317
  %v4149 = vpack.c.b16 %v3321, %v3318
  %v4150 = vpack.c.b16 %v3325, %v3322
  %v4151 = vpack.c.b16 %v3326, %v3323
  %v4152 = vpack.c.b16 %v3327, %v3324
  %v4153 = vpack.c.b16 %v3331, %v3328
  %v4154 = vpack.c.b16 %v3332, %v3329
  %v4155 = vpack.c.b16 %v3333, %v3330
  %v4156 = vpack.c.b16 %v3337, %v3334
  %v4157 = vpack.c.b16 %v3338, %v3335
  %v4158 = vpack.c.b16 %v3339, %v3336
  %v4159 = vpack.c.b16 %v3343, %v3340
  %v4160 = vpack.c.b16 %v3344, %v3341
  %v4161 = vpack.c.b16 %v3345, %v3342
  %v4162 = vpack.c.b16 %v3349, %v3346
  %v4163 = vpack.c.b16 %v3350, %v3347
  %v4164 = vpack.c.b16 %v3351, %v3348
  %v4165 = vpack.c.b16 %v3355, %v3352
  %v4166 = vpack.c.b16 %v3356, %v3353
  %v4167 = vpack.c.b16 %v3357, %v3354
  %v4168 = vpack.c.b16 %v3361, %v3358
  %v4169 = vpack.c.b16 %v3362, %v3359
  %v4170 = vpack.c.b16 %v3363, %v3360
  %v4171 = vpack.c.b16 %v3367, %v3364
  %v4172 = vpack.c.b16 %v3368, %v3365
  %v4173 = vpack.c.b16 %v3369, %v3366
  %v4174 = vpack.c.b16 %v3373, %v3370
  %v4175 = vpack.c.b16 %v3374, %v3371
  %v4176 = vpack.c.b16 %v3375, %v3372
  %v4177 = vpack.c.b16 %v3379, %v3376
  %v4178 = vpack.c.b16 %v3380, %v3377
  %v4179 = vpack.c.b16 %v3381, %v3378
  %v4180 = vpack.c.b16 %v3385, %v3382
  %v4181 = vpack.c.b16 %v3386, %v3383
  %v4182 = vpack.c.b16 %v3387, %v3384
  %v4183 = vpack.c.b16 %v3391, %v3388
  %v4184 = vpack.c.b16 %v3392, %v3389
  %v4185 = vpack.c.b16 %v3393, %v3390
  %v4186 = vpack.c.b16 %v3397, %v3394
  %v4187 = vpack.c.b16 %v3398, %v3395
  %v4188 = vpack.c.b16 %v3399, %v3396
  %v4189 = vpack.c.b16 %v3403, %v3400
  %v4190 = vpack.c.b16 %v3404, %v3401
  %v4191 = vpack.c.b16 %v3405, %v3402
  %v4192 = vpack.c.b16 %v3409, %v3406
  %v4193 = vpack.c.b16 %v3410, %v3407
  %v4194 = vpack.c.b16 %v3411, %v3408
  %v4195 = vpack.c.b16 %v3415, %v3412
  %v4196 = vpack.c.b16 %v3416, %v3413
  %v4197 = vpack.c.b16 %v3417, %v3414
  %v4198 = vpack.c.b16 %v3421, %v3418
  %v4199 = vpack.c.b16 %v3422, %v3419
  %v4200 = vpack.c.b16 %v3423, %v3420
  %v4201 = vpack.c.b16 %v3427, %v3424
  %v4202 = vpack.c.b16 %v3428, %v3425
  %v4203 = vpack.c.b16 %v3429, %v3426
  %v4204 = vpack.c.b16 %v3433, %v3430
  %v4205 = vpack.c.b16 %v3434, %v3431
  %v4206 = vpack.c.b16 %v3435, %v3432
  %v4207 = vpack.c.b16 %v3439, %v3436
  %v4208 = vpack.c.b16 %v3440, %v3437
  %v4209 = vpack.c.b16 %v3441, %v3438
  %v4210 = vpack.c.b16 %v3445, %v3442
  %v4211 = vpack.c.b16 %v3446, %v3443
  %v4212 = vpack.c.b16 %v3447, %v3444
  %v4213 = vpack.c.b16 %v3451, %v3448
  %v4214 = vpack.c.b16 %v3452, %v3449
  %v4215 = vpack.c.b16 %v3453, %v3450
  %v4216 = vpack.c.b16 %v3457, %v3454
  %v4217 = vpack.c.b16 %v3458, %v3455
  %v4218 = vpack.c.b16 %v3459, %v3456
  %v4219 = vpack.c.b16 %v3463, %v3460
  %v4220 = vpack.c.b16 %v3464, %v3461
  %v4221 = vpack.c.b16 %v3465, %v3462
  %v4222 = vpack.c.b16 %v3469, %v3466
  %v4223 = vpack.c.b16 %v3470, %v3467
  %v4224 = vpack.c.b16 %v3471, %v3468
  %v4225 = vpack.c.b16 %v3475, %v3472
  %v4226 = vpack.c.b16 %v3476, %v3473
  %v4227 = vpack.c.b16 %v3477, %v3474
  %v4228 = vpack.c.b16 %v3481, %v3478
  %v4229 = vpack.c.b16 %v3482, %v3479
  %v4230 = vpack.c.b16 %v3483, %v3480
  %v4231 = vpack.c.b16 %v3487, %v3484
  %v4232 = vpack.c.b16 %v3488, %v3485
  %v4233 = vpack.c.b16 %v3489, %v3486
  %v4234 = vpack.c.b16 %v3493, %v3490
  %v4235 = vpack.c.b16 %v3494, %v3491
  %v4236 = vpack.c.b16 %v3495, %v3492
  %v4237 = vpack.c.b16 %v3499, %v3496
  %v4238 = vpack.c.b16 %v3500, %v3497
  %v4239 = vpack.c.b16 %v3501, %v3498
  %v4240 = vpack.c.b16 %v3505, %v3502
  %v4241 = vpack.c.b16 %v3506, %v3503
  %v4242 = vpack.c.b16 %v3507, %v3504
  %v4243 = vpack.c.b16 %v3511, %v3508
  %v4244 = vpack.c.b16 %v3512, %v3509
  %v4245 = vpack.c.b16 %v3513, %v3510
  %v4246 = vpack.c.b16 %v3517, %v3514
  %v4247 = vpack.c.b16 %v3518, %v3515
  %v4248 = vpack.c.b16 %v3519, %v3516
  %v4249 = vpack.c.b16 %v3523, %v3520
  %v4250 = vpack.c.b16 %v3524, %v3521
  %v4251 = vpack.c.b16 %v3525, %v3522
  %v4252 = vpack.c.b16 %v3529, %v3526
  %v4253 = vpack.c.b16 %v3530, %v3527
  %v4254 = vpack.c.b16 %v3531, %v3528
  %v4255 = vpack.c.b16 %v3535, %v3532
  %v4256 = vpack.c.b16 %v3536, %v3533
  %v4257 = vpack.c.b16 %v3537, %v3534
  %v4258 = vpack.c.b16 %v3541, %v3538
  %v4259 = vpack.c.b16 %v3542, %v3539
  %v4260 = vpack.c.b16 %v3543, %v3540
  %v4261 = vpack.c.b16 %v3547, %v3544
  %v4262 = vpack.c.b16 %v3548, %v3545
  %v4263 = vpack.c.b16 %v3549, %v3546
  %v4264 = vpack.c.b16 %v3553, %v3550
  %v4265 = vpack.c.b16 %v3554, %v3551
  %v4266 = vpack.c.b16 %v3555, %v3552
  %v4267 = vpack.c.b16 %v3559, %v3556
  %v4268 = vpack.c.b16 %v3560, %v3557
  %v4269 = vpack.c.b16 %v3561, %v3558
  %v4270 = vpack.c.b16 %v3565, %v3562
  %v4271 = vpack.c.b16 %v3566, %v3563
  %v4272 = vpack.c.b16 %v3567, %v3564
  %v4273 = vpack.c.b16 %v3571, %v3568
  %v4274 = vpack.c.b16 %v3572, %v3569
  %v4275 = vpack.c.b16 %v3573, %v3570
  %v4276 = vpack.c.b16 %v3577, %v3574
  %v4277 = vpack.c.b16 %v3578, %v3575
  %v4278 = vpack.c.b16 %v3579, %v3576
  %v4279 = vpack.c.b16 %v3583, %v3580
  %v4280 = vpack.c.b16 %v3584, %v3581
  %v4281 = vpack.c.b16 %v3585, %v3582
  %v4282 = vpack.c.b16 %v3589, %v3586
  %v4283 = vpack.c.b16 %v3590, %v3587
  %v4284 = vpack.c.b16 %v3591, %v3588
  %v4285 = vpack.c.b16 %v3595, %v3592
  %v4286 = vpack.c.b16 %v3596, %v3593
  %v4287 = vpack.c.b16 %v3597, %v3594
  %v4288 = vpack.c.b16 %v3601, %v3598
  %v4289 = vpack.c.b16 %v3602, %v3599
  %v4290 = vpack.c.b16 %v3603, %v3600
  %v4291 = vpack.c.b16 %v3607, %v3604
  %v4292 = vpack.c.b16 %v3608, %v3605
  %v4293 = vpack.c.b16 %v3609, %v3606
  %v4294 = vpack.c.b16 %v3613, %v3610
  %v4295 = vpack.c.b16 %v3614, %v3611
  %v4296 = vpack.c.b16 %v3615, %v3612
  %v4297 = vpack.c.b16 %v3619, %v3616
  %v4298 = vpack.c.b16 %v3620, %v3617
  %v4299 = vpack.c.b16 %v3621, %v3618
  %v4300 = vpack.c.b16 %v3625, %v3622
  %v4301 = vpack.c.b16 %v3626, %v3623
  %v4302 = vpack.c.b16 %v3627, %v3624
  %v4303 = vpack.c.b16 %v3631, %v3628
  %v4304 = vpack.c.b16 %v3632, %v3629
  %v4305 = vpack.c.b16 %v3633, %v3630
  %v4306 = vpack.c.b16 %v3637, %v3634
  %v4307 = vpack.c.b16 %v3638, %v3635
  %v4308 = vpack.c.b16 %v3639, %v3636
  %v4309 = vpack.c.b16 %v3643, %v3640
  %v4310 = vpack.c.b16 %v3644, %v3641
  %v4311 = vpack.c.b16 %v3645, %v3642
  %v4312 = vpack.c.b16 %v3649, %v3646
  %v4313 = vpack.c.b16 %v3650, %v3647
  %v4314 = vpack.c.b16 %v3651, %v3648
  %v4315 = vpack.c.b16 %v3655, %v3652
  %v4316 = vpack.c.b16 %v3656, %v3653
  %v4317 = vpack.c.b16 %v3657, %v3654
  %v4318 = vpack.c.b16 %v3661, %v3658
  %v4319 = vpack.c.b16 %v3662, %v3659
  %v4320 = vpack.c.b16 %v3663, %v3660
  %v4321 = vpack.c.b16 %v3667, %v3664
  %v4322 = vpack.c.b16 %v3668, %v3665
  %v4323 = vpack.c.b16 %v3669, %v3666
  %v4324 = vpack.c.b16 %v3673, %v3670
  %v4325 = vpack.c.b16 %v3674, %v3671
  %v4326 = vpack.c.b16 %v3675, %v3672
  %v4327 = vpack.c.b16 %v3679, %v3676
  %v4328 = vpack.c.b16 %v3680, %v3677
  %v4329 = vpack.c.b16 %v3681, %v3678
  %v4330 = vpack.c.b16 %v3685, %v3682
  %v4331 = vpack.c.b16 %v3686, %v3683
  %v4332 = vpack.c.b16 %v3687, %v3684
  %v4333 = vpack.c.b16 %v3691, %v3688
  %v4334 = vpack.c.b16 %v3692, %v3689
  %v4335 = vpack.c.b16 %v3693, %v3690
  %v4336 = vpack.c.b16 %v3697, %v3694
  %v4337 = vpack.c.b16 %v3698, %v3695
  %v4338 = vpack.c.b16 %v3699, %v3696
  %v4339 = vpack.c.b16 %v3703, %v3700
  %v4340 = vpack.c.b16 %v3704, %v3701
  %v4341 = vpack.c.b16 %v3705, %v3702
  %v4342 = vpack.c.b16 %v3709, %v3706
  %v4343 = vpack.c.b16 %v3710, %v3707
  %v4344 = vpack.c.b16 %v3711, %v3708
  %v4345 = vpack.c.b16 %v3715, %v3712
  %v4346 = vpack.c.b16 %v3716, %v3713
  %v4347 = vpack.c.b16 %v3717, %v3714
  %v4348 = vpack.c.b16 %v3721, %v3718
  %v4349 = vpack.c.b16 %v3722, %v3719
  %v4350 = vpack.c.b16 %v3723, %v3720
  %v4351 = vpack.c.b16 %v3727, %v3724
  %v4352 = vpack.c.b16 %v3728, %v3725
  %v4353 = vpack.c.b16 %v3729, %v3726
  %v4354 = vpack.c.b16 %v3733, %v3730
  %v4355 = vpack.c.b16 %v3734, %v3731
  %v4356 = vpack.c.b16 %v3735, %v3732
  %v4357 = vpack.c.b16 %v3739, %v3736
  %v4358 = vpack.c.b16 %v3740, %v3737
  %v4359 = vpack.c.b16 %v3741, %v3738
  %v4360 = vpack.c.b16 %v3745, %v3742
  %v4361 = vpack.c.b16 %v3746, %v3743
  %v4362 = vpack.c.b16 %v3747, %v3744
  %v4363 = vpack.c.b16 %v3751, %v3748
  %v4364 = vpack.c.b16 %v3752, %v3749
  %v4365 = vpack.c.b16 %v3753, %v3750
  %v4366 = vpack.c.b16 %v3757, %v3754
  %v4367 = vpack.c.b16 %v3758, %v3755
  %v4368 = vpack.c.b16 %v3759, %v3756
  %v4369 = vpack.c.b16 %v3763, %v3760
  %v4370 = vpack.c.b16 %v3764, %v3761
  %v4371 = vpack.c.b16 %v3765, %v3762
  %v4372 = vpack.c.b16 %v3769, %v3766
  %v4373 = vpack.c.b16 %v3770, %v3767
  %v4374 = vpack.c.b16 %v3771, %v3768
  %v4375 = vpack.c.b16 %v3775, %v3772
  %v4376 = vpack.c.b16 %v3776, %v3773
  %v4377 = vpack.c.b16 %v3777, %v3774
  %v4378 = vpack.c.b16 %v3781, %v3778
  %v4379 = vpack.c.b16 %v3782, %v3779
  %v4380 = vpack.c.b16 %v3783, %v3780
  %v4381 = vpack.c.b16 %v3787, %v3784
  %v4382 = vpack.c.b16 %v3788, %v3785
  %v4383 = vpack.c.b16 %v3789, %v3786
  %v4384 = vpack.c.b16 %v3793, %v3790
  %v4385 = vpack.c.b16 %v3794, %v3791
  %v4386 = vpack.c.b16 %v3795, %v3792
  %v4387 = vpack.c.b16 %v3799, %v3796
  %v4388 = vpack.c.b16 %v3800, %v3797
  %v4389 = vpack.c.b16 %v3801, %v3798
  %v4390 = vpack.c.b16 %v3805, %v3802
  %v4391 = vpack.c.b16 %v3806, %v3803
  %v4392 = vpack.c.b16 %v3807, %v3804
  %v4393 = vpack.c.b16 %v3811, %v3808
  %v4394 = vpack.c.b16 %v3812, %v3809
  %v4395 = vpack.c.b16 %v3813, %v3810
  %v4396 = vpack.c.b16 %v3817, %v3814
  %v4397 = vpack.c.b16 %v3818, %v3815
  %v4398 = vpack.c.b16 %v3819, %v3816
  %v4399 = vpack.c.b16 %v3823, %v3820
  %v4400 = vpack.c.b16 %v3824, %v3821
  %v4401 = vpack.c.b16 %v3825, %v3822
  %v4402 = vpack.c.b16 %v3829, %v3826
  %v4403 = vpack.c.b16 %v3830, %v3827
  %v4404 = vpack.c.b16 %v3831, %v3828
  %v4405 = vpack.c.b16 %v3835, %v3832
  %v4406 = vpack.c.b16 %v3836, %v3833
  %v4407 = vpack.c.b16 %v3837, %v3834
  %v4408 = vpack.c.b16 %v3841, %v3838
  %v4409 = vpack.c.b16 %v3842, %v3839
  %v4410 = vpack.c.b16 %v3843, %v3840
  %v4411 = vpack.c.b16 %v3847, %v3844
  %v4412 = vpack.c.b16 %v3848, %v3845
  %v4413 = vpack.c.b16 %v3849, %v3846
  %v4414 = vpack.c.b16 %v3853, %v3850
  %v4415 = vpack.c.b16 %v3854, %v3851
  %v4416 = vpack.c.b16 %v3855, %v3852
  %v4417 = vpack.c.b16 %v3859, %v3856
  %v4418 = vpack.c.b16 %v3860, %v3857
  %v4419 = vpack.c.b16 %v3861, %v3858
  %v4420 = vpack.c.b16 %v3865, %v3862
  %v4421 = vpack.c.b16 %v3866, %v3863
  %v4422 = vpack.c.b16 %v3867, %v3864
  %v4423 = vpack.c.b16 %v3871, %v3868
  %v4424 = vpack.c.b16 %v3872, %v3869
  %v4425 = vpack.c.b16 %v3873, %v3870
  %v4426 = vpack.c.b16 %v3877, %v3874
  %v4427 = vpack.c.b16 %v3878, %v3875
  %v4428 = vpack.c.b16 %v3879, %v3876
  %v4429 = vpack.c.b16 %v3883, %v3880
  %v4430 = vpack.c.b16 %v3884, %v3881
  %v4431 = vpack.c.b16 %v3885, %v3882
  %v4432 = vpack.c.b16 %v3889, %v3886
  %v4433 = vpack.c.b16 %v3890, %v3887
  %v4434 = vpack.c.b16 %v3891, %v3888
  %v4435 = vpack.c.b16 %v3895, %v3892
  %v4436 = vpack.c.b16 %v3896, %v3893
  %v4437 = vpack.c.b16 %v3897, %v3894
  %v4438 = vpack.c.b16 %v3901, %v3898
  %v4439 = vpack.c.b16 %v3902, %v3899
  %v4440 = vpack.c.b16 %v3903, %v3900
  %v4441 = vpack.c.b16 %v3907, %v3904
  %v4442 = vpack.c.b16 %v3908, %v3905
  %v4443 = vpack.c.b16 %v3909, %v3906
  %v4444 = vpack.c.b16 %v3913, %v3910
  %v4445 = vpack.c.b16 %v3914, %v3911
  %v4446 = vpack.c.b16 %v3915, %v3912
  %v4447 = vpack.c.b16 %v3919, %v3916
  %v4448 = vpack.c.b16 %v3920, %v3917
  %v4449 = vpack.c.b16 %v3921, %v3918
  %4978 = vmatprep.subr.bf16.mxu0 %v3944
  %4979 = vmatpush1.bf16.msra.mxu0 %v3943
  %4980 = vmatprep.subr.bf16.mxu0 %v3941
  %4981 = vmatpush1.bf16.msra.mxu0 %v3940
  %4982 = vmatprep.subr.bf16.mxu0 %v3938
  %4983 = vmatpush1.bf16.msra.mxu0 %v3937
  %4984 = vmatprep.subr.bf16.mxu0 %v3935
  %4985 = vmatpush1.bf16.msra.mxu0 %v3934
  %4986 = vmatprep.subr.bf16.mxu0 %v3932
  %4987 = vmatpush1.bf16.msra.mxu0 %v3931
  %4988 = vmatprep.subr.bf16.mxu0 %v3929
  %4989 = vmatpush1.bf16.msra.mxu0 %v3928
  %4990 = vmatprep.subr.bf16.mxu0 %v3926
  %4991 = vmatpush1.bf16.msra.mxu0 %v3925
  %4992 = vmatprep.subr.bf16.mxu0 %v3923
  %4993 = vmatpush1.bf16.msra.mxu0 %v3922
  %4994 = vmatprep.subr.bf16.mxu0 %v3968
  %4995 = vmatpush2.bf16.msra.mxu0 %v3967
  %4996 = vmatprep.subr.bf16.mxu0 %v3965
  %4997 = vmatpush2.bf16.msra.mxu0 %v3964
  %4998 = vmatprep.subr.bf16.mxu0 %v3962
  %4999 = vmatpush2.bf16.msra.mxu0 %v3961
  %5000 = vmatprep.subr.bf16.mxu0 %v3959
  %5001 = vmatpush2.bf16.msra.mxu0 %v3958
  %5002 = vmatprep.subr.bf16.mxu0 %v3956
  %5003 = vmatpush2.bf16.msra.mxu0 %v3955
  %5004 = vmatprep.subr.bf16.mxu0 %v3953
  %5005 = vmatpush2.bf16.msra.mxu0 %v3952
  %5006 = vmatprep.subr.bf16.mxu0 %v3950
  %5007 = vmatpush2.bf16.msra.mxu0 %v3949
  %5008 = vmatprep.subr.bf16.mxu0 %v3947
  %5009 = vmatpush2.bf16.msra.mxu0 %v3946
  %5010 = vmatprep.mubr.bf16.mxu0 %v1679
  %5011 = vmatmul.mubr.bf16.gmra.mxu0 %v1678
  %v5012 = vpop.f32.mrf.mxu0
  %v5013 = vadd.f32 %v973, %v5012
  %v5014 = vpop.f32.mrf.mxu0
  %v5015 = vadd.f32 %v977, %v5014
  %v5016 = vpop.f32.mrf.mxu0
  %v5017 = vadd.f32 %v973, %v5016
  %v5018 = vpop.f32.mrf.mxu0
  %v5019 = vadd.f32 %v977, %v5018
  %5020 = vmatprep.mubr.bf16.mxu0 %v1701
  %5021 = vmatmul.mubr.bf16.gmra.mxu0 %v1700
  %v5022 = vpop.f32.mrf.mxu0
  %v5023 = vadd.f32 %v973, %v5022
  %v5024 = vpop.f32.mrf.mxu0
  %v5025 = vadd.f32 %v977, %v5024
  %v5026 = vpop.f32.mrf.mxu0
  %v5027 = vadd.f32 %v973, %v5026
  %v5028 = vpop.f32.mrf.mxu0
  %v5029 = vadd.f32 %v977, %v5028
  %5030 = vmatprep.mubr.bf16.mxu0 %v1723
  %5031 = vmatmul.mubr.bf16.gmra.mxu0 %v1722
  %v5032 = vpop.f32.mrf.mxu0
  %v5033 = vadd.f32 %v973, %v5032
  %v5034 = vpop.f32.mrf.mxu0
  %v5035 = vadd.f32 %v977, %v5034
  %v5036 = vpop.f32.mrf.mxu0
  %v5037 = vadd.f32 %v973, %v5036
  %v5038 = vpop.f32.mrf.mxu0
  %v5039 = vadd.f32 %v977, %v5038
  %5040 = vmatprep.mubr.bf16.mxu0 %v1745
  %5041 = vmatmul.mubr.bf16.gmra.mxu0 %v1744
  %v5042 = vpop.f32.mrf.mxu0
  %v5043 = vadd.f32 %v973, %v5042
  %v5044 = vpop.f32.mrf.mxu0
  %v5045 = vadd.f32 %v977, %v5044
  %v5046 = vpop.f32.mrf.mxu0
  %v5047 = vadd.f32 %v973, %v5046
  %v5048 = vpop.f32.mrf.mxu0
  %v5049 = vadd.f32 %v977, %v5048
  %5050 = vmatprep.mubr.bf16.mxu0 %v1767
  %5051 = vmatmul.mubr.bf16.gmra.mxu0 %v1766
  %v5052 = vpop.f32.mrf.mxu0
  %v5053 = vadd.f32 %v973, %v5052
  %v5054 = vpop.f32.mrf.mxu0
  %v5055 = vadd.f32 %v977, %v5054
  %v5056 = vpop.f32.mrf.mxu0
  %v5057 = vadd.f32 %v973, %v5056
  %v5058 = vpop.f32.mrf.mxu0
  %v5059 = vadd.f32 %v977, %v5058
  %5060 = vmatprep.mubr.bf16.mxu0 %v1789
  %5061 = vmatmul.mubr.bf16.gmra.mxu0 %v1788
  %v5062 = vpop.f32.mrf.mxu0
  %v5063 = vpop.f32.mrf.mxu0
  %v5064 = vpop.f32.mrf.mxu0
  %v5065 = vadd.f32 %v973, %v5064
  %v5066 = vpop.f32.mrf.mxu0
  %v5067 = vadd.f32 %v977, %v5066
  %5068 = vmatprep.mubr.bf16.mxu0 %v1811
  %5069 = vmatmul.mubr.bf16.gmra.mxu0 %v1810
  %v5070 = vpop.f32.mrf.mxu0
  %v5071 = vadd.f32 %v973, %v5070
  %v5072 = vpop.f32.mrf.mxu0
  %v5073 = vadd.f32 %v977, %v5072
  %v5074 = vpop.f32.mrf.mxu0
  %v5075 = vadd.f32 %v973, %v5074
  %v5076 = vpop.f32.mrf.mxu0
  %v5077 = vadd.f32 %v977, %v5076
  %5078 = vmatprep.mubr.bf16.mxu0 %v1833
  %5079 = vmatmul.mubr.bf16.gmra.mxu0 %v1832
  %v5080 = vpop.f32.mrf.mxu0
  %v5081 = vadd.f32 %v973, %v5080
  %v5082 = vpop.f32.mrf.mxu0
  %v5083 = vadd.f32 %v977, %v5082
  %v5084 = vpop.f32.mrf.mxu0
  %v5085 = vadd.f32 %v973, %v5084
  %v5086 = vpop.f32.mrf.mxu0
  %v5087 = vadd.f32 %v977, %v5086
  %5088 = vmatprep.mubr.bf16.mxu0 %v1855
  %5089 = vmatmul.mubr.bf16.gmra.mxu0 %v1854
  %v5090 = vpop.f32.mrf.mxu0
  %v5091 = vadd.f32 %v973, %v5090
  %v5092 = vpop.f32.mrf.mxu0
  %v5093 = vadd.f32 %v977, %v5092
  %v5094 = vpop.f32.mrf.mxu0
  %v5095 = vadd.f32 %v973, %v5094
  %v5096 = vpop.f32.mrf.mxu0
  %v5097 = vadd.f32 %v977, %v5096
  %5098 = vmatprep.mubr.bf16.mxu0 %v1877
  %5099 = vmatmul.mubr.bf16.gmra.mxu0 %v1876
  %v5100 = vpop.f32.mrf.mxu0
  %v5101 = vadd.f32 %v973, %v5100
  %v5102 = vpop.f32.mrf.mxu0
  %v5103 = vadd.f32 %v977, %v5102
  %v5104 = vpop.f32.mrf.mxu0
  %v5105 = vadd.f32 %v973, %v5104
  %v5106 = vpop.f32.mrf.mxu0
  %v5107 = vadd.f32 %v977, %v5106
  %5108 = vmatprep.mubr.bf16.mxu0 %v1899
  %5109 = vmatmul.mubr.bf16.gmra.mxu0 %v1898
  %v5110 = vpop.f32.mrf.mxu0
  %v5111 = vadd.f32 %v973, %v5110
  %v5112 = vpop.f32.mrf.mxu0
  %v5113 = vadd.f32 %v977, %v5112
  %v5114 = vpop.f32.mrf.mxu0
  %v5115 = vpop.f32.mrf.mxu0
  %5116 = vdwg.mxu0
  %5117 = vmatprep.subr.bf16.mxu0 %v3992
  %5118 = vmatpush1.bf16.msra.mxu0 %v3991
  %5119 = vmatprep.subr.bf16.mxu0 %v3989
  %5120 = vmatpush1.bf16.msra.mxu0 %v3988
  %5121 = vmatprep.subr.bf16.mxu0 %v3986
  %5122 = vmatpush1.bf16.msra.mxu0 %v3985
  %5123 = vmatprep.subr.bf16.mxu0 %v3983
  %5124 = vmatpush1.bf16.msra.mxu0 %v3982
  %5125 = vmatprep.subr.bf16.mxu0 %v3980
  %5126 = vmatpush1.bf16.msra.mxu0 %v3979
  %5127 = vmatprep.subr.bf16.mxu0 %v3977
  %5128 = vmatpush1.bf16.msra.mxu0 %v3976
  %5129 = vmatprep.subr.bf16.mxu0 %v3974
  %5130 = vmatpush1.bf16.msra.mxu0 %v3973
  %5131 = vmatprep.subr.bf16.mxu0 %v3971
  %5132 = vmatpush1.bf16.msra.mxu0 %v3970
  %5133 = vmatprep.subr.bf16.mxu0 %v4016
  %5134 = vmatpush2.bf16.msra.mxu0 %v4015
  %5135 = vmatprep.subr.bf16.mxu0 %v4013
  %5136 = vmatpush2.bf16.msra.mxu0 %v4012
  %5137 = vmatprep.subr.bf16.mxu0 %v4010
  %5138 = vmatpush2.bf16.msra.mxu0 %v4009
  %5139 = vmatprep.subr.bf16.mxu0 %v4007
  %5140 = vmatpush2.bf16.msra.mxu0 %v4006
  %5141 = vmatprep.subr.bf16.mxu0 %v4004
  %5142 = vmatpush2.bf16.msra.mxu0 %v4003
  %5143 = vmatprep.subr.bf16.mxu0 %v4001
  %5144 = vmatpush2.bf16.msra.mxu0 %v4000
  %5145 = vmatprep.subr.bf16.mxu0 %v3998
  %5146 = vmatpush2.bf16.msra.mxu0 %v3997
  %5147 = vmatprep.subr.bf16.mxu0 %v3995
  %5148 = vmatpush2.bf16.msra.mxu0 %v3994
  %5149 = vmatprep.mubr.bf16.mxu0 %v1681
  %5150 = vmatmul.mubr.bf16.gmra.mxu0 %v1680
  %v5151 = vpop.f32.mrf.mxu0
  %v5152 = vadd.f32 %v5013, %v5151
  %v5153 = vpop.f32.mrf.mxu0
  %v5154 = vadd.f32 %v5015, %v5153
  %v5155 = vpop.f32.mrf.mxu0
  %v5156 = vadd.f32 %v5017, %v5155
  %v5157 = vpop.f32.mrf.mxu0
  %v5158 = vadd.f32 %v5019, %v5157
  %5159 = vmatprep.mubr.bf16.mxu0 %v1703
  %5160 = vmatmul.mubr.bf16.gmra.mxu0 %v1702
  %v5161 = vpop.f32.mrf.mxu0
  %v5162 = vadd.f32 %v5023, %v5161
  %v5163 = vpop.f32.mrf.mxu0
  %v5164 = vadd.f32 %v5025, %v5163
  %v5165 = vpop.f32.mrf.mxu0
  %v5166 = vadd.f32 %v5027, %v5165
  %v5167 = vpop.f32.mrf.mxu0
  %v5168 = vadd.f32 %v5029, %v5167
  %5169 = vmatprep.mubr.bf16.mxu0 %v1725
  %5170 = vmatmul.mubr.bf16.gmra.mxu0 %v1724
  %v5171 = vpop.f32.mrf.mxu0
  %v5172 = vadd.f32 %v5033, %v5171
  %v5173 = vpop.f32.mrf.mxu0
  %v5174 = vadd.f32 %v5035, %v5173
  %v5175 = vpop.f32.mrf.mxu0
  %v5176 = vadd.f32 %v5037, %v5175
  %v5177 = vpop.f32.mrf.mxu0
  %v5178 = vadd.f32 %v5039, %v5177
  %5179 = vmatprep.mubr.bf16.mxu0 %v1747
  %5180 = vmatmul.mubr.bf16.gmra.mxu0 %v1746
  %v5181 = vpop.f32.mrf.mxu0
  %v5182 = vadd.f32 %v5043, %v5181
  %v5183 = vpop.f32.mrf.mxu0
  %v5184 = vadd.f32 %v5045, %v5183
  %v5185 = vpop.f32.mrf.mxu0
  %v5186 = vadd.f32 %v5047, %v5185
  %v5187 = vpop.f32.mrf.mxu0
  %v5188 = vadd.f32 %v5049, %v5187
  %5189 = vmatprep.mubr.bf16.mxu0 %v1769
  %5190 = vmatmul.mubr.bf16.gmra.mxu0 %v1768
  %v5191 = vpop.f32.mrf.mxu0
  %v5192 = vadd.f32 %v5053, %v5191
  %v5193 = vpop.f32.mrf.mxu0
  %v5194 = vadd.f32 %v5055, %v5193
  %v5195 = vpop.f32.mrf.mxu0
  %v5196 = vadd.f32 %v5057, %v5195
  %v5197 = vpop.f32.mrf.mxu0
  %v5198 = vadd.f32 %v5059, %v5197
  %5199 = vmatprep.mubr.bf16.mxu0 %v1791
  %5200 = vmatmul.mubr.bf16.gmra.mxu0 %v1790
  %v5201 = vpop.f32.mrf.mxu0
  %v5202 = vpop.f32.mrf.mxu0
  %v5203 = vpop.f32.mrf.mxu0
  %v5204 = vadd.f32 %v5065, %v5203
  %v5205 = vpop.f32.mrf.mxu0
  %v5206 = vadd.f32 %v5067, %v5205
  %5207 = vmatprep.mubr.bf16.mxu0 %v1813
  %5208 = vmatmul.mubr.bf16.gmra.mxu0 %v1812
  %v5209 = vpop.f32.mrf.mxu0
  %v5210 = vadd.f32 %v5071, %v5209
  %v5211 = vpop.f32.mrf.mxu0
  %v5212 = vadd.f32 %v5073, %v5211
  %v5213 = vpop.f32.mrf.mxu0
  %v5214 = vadd.f32 %v5075, %v5213
  %v5215 = vpop.f32.mrf.mxu0
  %v5216 = vadd.f32 %v5077, %v5215
  %5217 = vmatprep.mubr.bf16.mxu0 %v1835
  %5218 = vmatmul.mubr.bf16.gmra.mxu0 %v1834
  %v5219 = vpop.f32.mrf.mxu0
  %v5220 = vadd.f32 %v5081, %v5219
  %v5221 = vpop.f32.mrf.mxu0
  %v5222 = vadd.f32 %v5083, %v5221
  %v5223 = vpop.f32.mrf.mxu0
  %v5224 = vadd.f32 %v5085, %v5223
  %v5225 = vpop.f32.mrf.mxu0
  %v5226 = vadd.f32 %v5087, %v5225
  %5227 = vmatprep.mubr.bf16.mxu0 %v1857
  %5228 = vmatmul.mubr.bf16.gmra.mxu0 %v1856
  %v5229 = vpop.f32.mrf.mxu0
  %v5230 = vadd.f32 %v5091, %v5229
  %v5231 = vpop.f32.mrf.mxu0
  %v5232 = vadd.f32 %v5093, %v5231
  %v5233 = vpop.f32.mrf.mxu0
  %v5234 = vadd.f32 %v5095, %v5233
  %v5235 = vpop.f32.mrf.mxu0
  %v5236 = vadd.f32 %v5097, %v5235
  %5237 = vmatprep.mubr.bf16.mxu0 %v1879
  %5238 = vmatmul.mubr.bf16.gmra.mxu0 %v1878
  %v5239 = vpop.f32.mrf.mxu0
  %v5240 = vadd.f32 %v5101, %v5239
  %v5241 = vpop.f32.mrf.mxu0
  %v5242 = vadd.f32 %v5103, %v5241
  %v5243 = vpop.f32.mrf.mxu0
  %v5244 = vadd.f32 %v5105, %v5243
  %v5245 = vpop.f32.mrf.mxu0
  %v5246 = vadd.f32 %v5107, %v5245
  %5247 = vmatprep.mubr.bf16.mxu0 %v1901
  %5248 = vmatmul.mubr.bf16.gmra.mxu0 %v1900
  %v5249 = vpop.f32.mrf.mxu0
  %v5250 = vadd.f32 %v5111, %v5249
  %v5251 = vpop.f32.mrf.mxu0
  %v5252 = vadd.f32 %v5113, %v5251
  %v5253 = vpop.f32.mrf.mxu0
  %v5254 = vpop.f32.mrf.mxu0
  %5255 = vdwg.mxu0
  %5256 = vmatprep.subr.bf16.mxu0 %v4040
  %5257 = vmatpush1.bf16.msra.mxu0 %v4039
  %5258 = vmatprep.subr.bf16.mxu0 %v4037
  %5259 = vmatpush1.bf16.msra.mxu0 %v4036
  %5260 = vmatprep.subr.bf16.mxu0 %v4034
  %5261 = vmatpush1.bf16.msra.mxu0 %v4033
  %5262 = vmatprep.subr.bf16.mxu0 %v4031
  %5263 = vmatpush1.bf16.msra.mxu0 %v4030
  %5264 = vmatprep.subr.bf16.mxu0 %v4028
  %5265 = vmatpush1.bf16.msra.mxu0 %v4027
  %5266 = vmatprep.subr.bf16.mxu0 %v4025
  %5267 = vmatpush1.bf16.msra.mxu0 %v4024
  %5268 = vmatprep.subr.bf16.mxu0 %v4022
  %5269 = vmatpush1.bf16.msra.mxu0 %v4021
  %5270 = vmatprep.subr.bf16.mxu0 %v4019
  %5271 = vmatpush1.bf16.msra.mxu0 %v4018
  %5272 = vmatprep.subr.bf16.mxu0 %v4064
  %5273 = vmatpush2.bf16.msra.mxu0 %v4063
  %5274 = vmatprep.subr.bf16.mxu0 %v4061
  %5275 = vmatpush2.bf16.msra.mxu0 %v4060
  %5276 = vmatprep.subr.bf16.mxu0 %v4058
  %5277 = vmatpush2.bf16.msra.mxu0 %v4057
  %5278 = vmatprep.subr.bf16.mxu0 %v4055
  %5279 = vmatpush2.bf16.msra.mxu0 %v4054
  %5280 = vmatprep.subr.bf16.mxu0 %v4052
  %5281 = vmatpush2.bf16.msra.mxu0 %v4051
  %5282 = vmatprep.subr.bf16.mxu0 %v4049
  %5283 = vmatpush2.bf16.msra.mxu0 %v4048
  %5284 = vmatprep.subr.bf16.mxu0 %v4046
  %5285 = vmatpush2.bf16.msra.mxu0 %v4045
  %5286 = vmatprep.subr.bf16.mxu0 %v4043
  %5287 = vmatpush2.bf16.msra.mxu0 %v4042
  %5288 = vmatprep.mubr.bf16.mxu0 %v1683
  %5289 = vmatmul.mubr.bf16.gmra.mxu0 %v1682
  %v5290 = vpop.f32.mrf.mxu0
  %v5291 = vadd.f32 %v5152, %v5290
  %v5292 = vpop.f32.mrf.mxu0
  %v5293 = vadd.f32 %v5154, %v5292
  %v5294 = vpop.f32.mrf.mxu0
  %v5295 = vadd.f32 %v5156, %v5294
  %v5296 = vpop.f32.mrf.mxu0
  %v5297 = vadd.f32 %v5158, %v5296
  %5298 = vmatprep.mubr.bf16.mxu0 %v1705
  %5299 = vmatmul.mubr.bf16.gmra.mxu0 %v1704
  %v5300 = vpop.f32.mrf.mxu0
  %v5301 = vadd.f32 %v5162, %v5300
  %v5302 = vpop.f32.mrf.mxu0
  %v5303 = vadd.f32 %v5164, %v5302
  %v5304 = vpop.f32.mrf.mxu0
  %v5305 = vadd.f32 %v5166, %v5304
  %v5306 = vpop.f32.mrf.mxu0
  %v5307 = vadd.f32 %v5168, %v5306
  %5308 = vmatprep.mubr.bf16.mxu0 %v1727
  %5309 = vmatmul.mubr.bf16.gmra.mxu0 %v1726
  %v5310 = vpop.f32.mrf.mxu0
  %v5311 = vadd.f32 %v5172, %v5310
  %v5312 = vpop.f32.mrf.mxu0
  %v5313 = vadd.f32 %v5174, %v5312
  %v5314 = vpop.f32.mrf.mxu0
  %v5315 = vadd.f32 %v5176, %v5314
  %v5316 = vpop.f32.mrf.mxu0
  %v5317 = vadd.f32 %v5178, %v5316
  %5318 = vmatprep.mubr.bf16.mxu0 %v1749
  %5319 = vmatmul.mubr.bf16.gmra.mxu0 %v1748
  %v5320 = vpop.f32.mrf.mxu0
  %v5321 = vadd.f32 %v5182, %v5320
  %v5322 = vpop.f32.mrf.mxu0
  %v5323 = vadd.f32 %v5184, %v5322
  %v5324 = vpop.f32.mrf.mxu0
  %v5325 = vadd.f32 %v5186, %v5324
  %v5326 = vpop.f32.mrf.mxu0
  %v5327 = vadd.f32 %v5188, %v5326
  %5328 = vmatprep.mubr.bf16.mxu0 %v1771
  %5329 = vmatmul.mubr.bf16.gmra.mxu0 %v1770
  %v5330 = vpop.f32.mrf.mxu0
  %v5331 = vadd.f32 %v5192, %v5330
  %v5332 = vpop.f32.mrf.mxu0
  %v5333 = vadd.f32 %v5194, %v5332
  %v5334 = vpop.f32.mrf.mxu0
  %v5335 = vadd.f32 %v5196, %v5334
  %v5336 = vpop.f32.mrf.mxu0
  %v5337 = vadd.f32 %v5198, %v5336
  %5338 = vmatprep.mubr.bf16.mxu0 %v1793
  %5339 = vmatmul.mubr.bf16.gmra.mxu0 %v1792
  %v5340 = vpop.f32.mrf.mxu0
  %v5341 = vpop.f32.mrf.mxu0
  %v5342 = vpop.f32.mrf.mxu0
  %v5343 = vadd.f32 %v5204, %v5342
  %v5344 = vpop.f32.mrf.mxu0
  %v5345 = vadd.f32 %v5206, %v5344
  %5346 = vmatprep.mubr.bf16.mxu0 %v1815
  %5347 = vmatmul.mubr.bf16.gmra.mxu0 %v1814
  %v5348 = vpop.f32.mrf.mxu0
  %v5349 = vadd.f32 %v5210, %v5348
  %v5350 = vpop.f32.mrf.mxu0
  %v5351 = vadd.f32 %v5212, %v5350
  %v5352 = vpop.f32.mrf.mxu0
  %v5353 = vadd.f32 %v5214, %v5352
  %v5354 = vpop.f32.mrf.mxu0
  %v5355 = vadd.f32 %v5216, %v5354
  %5356 = vmatprep.mubr.bf16.mxu0 %v1837
  %5357 = vmatmul.mubr.bf16.gmra.mxu0 %v1836
  %v5358 = vpop.f32.mrf.mxu0
  %v5359 = vadd.f32 %v5220, %v5358
  %v5360 = vpop.f32.mrf.mxu0
  %v5361 = vadd.f32 %v5222, %v5360
  %v5362 = vpop.f32.mrf.mxu0
  %v5363 = vadd.f32 %v5224, %v5362
  %v5364 = vpop.f32.mrf.mxu0
  %v5365 = vadd.f32 %v5226, %v5364
  %5366 = vmatprep.mubr.bf16.mxu0 %v1859
  %5367 = vmatmul.mubr.bf16.gmra.mxu0 %v1858
  %v5368 = vpop.f32.mrf.mxu0
  %v5369 = vadd.f32 %v5230, %v5368
  %v5370 = vpop.f32.mrf.mxu0
  %v5371 = vadd.f32 %v5232, %v5370
  %v5372 = vpop.f32.mrf.mxu0
  %v5373 = vadd.f32 %v5234, %v5372
  %v5374 = vpop.f32.mrf.mxu0
  %v5375 = vadd.f32 %v5236, %v5374
  %5376 = vmatprep.mubr.bf16.mxu0 %v1881
  %5377 = vmatmul.mubr.bf16.gmra.mxu0 %v1880
  %v5378 = vpop.f32.mrf.mxu0
  %v5379 = vadd.f32 %v5240, %v5378
  %v5380 = vpop.f32.mrf.mxu0
  %v5381 = vadd.f32 %v5242, %v5380
  %v5382 = vpop.f32.mrf.mxu0
  %v5383 = vadd.f32 %v5244, %v5382
  %v5384 = vpop.f32.mrf.mxu0
  %v5385 = vadd.f32 %v5246, %v5384
  %5386 = vmatprep.mubr.bf16.mxu0 %v1903
  %5387 = vmatmul.mubr.bf16.gmra.mxu0 %v1902
  %v5388 = vpop.f32.mrf.mxu0
  %v5389 = vadd.f32 %v5250, %v5388
  %v5390 = vpop.f32.mrf.mxu0
  %v5391 = vadd.f32 %v5252, %v5390
  %v5392 = vpop.f32.mrf.mxu0
  %v5393 = vpop.f32.mrf.mxu0
  %5394 = vdwg.mxu0
  %5395 = vmatprep.subr.bf16.mxu0 %v4088
  %5396 = vmatpush1.bf16.msra.mxu0 %v4087
  %5397 = vmatprep.subr.bf16.mxu0 %v4085
  %5398 = vmatpush1.bf16.msra.mxu0 %v4084
  %5399 = vmatprep.subr.bf16.mxu0 %v4082
  %5400 = vmatpush1.bf16.msra.mxu0 %v4081
  %5401 = vmatprep.subr.bf16.mxu0 %v4079
  %5402 = vmatpush1.bf16.msra.mxu0 %v4078
  %5403 = vmatprep.subr.bf16.mxu0 %v4076
  %5404 = vmatpush1.bf16.msra.mxu0 %v4075
  %5405 = vmatprep.subr.bf16.mxu0 %v4073
  %5406 = vmatpush1.bf16.msra.mxu0 %v4072
  %5407 = vmatprep.subr.bf16.mxu0 %v4070
  %5408 = vmatpush1.bf16.msra.mxu0 %v4069
  %5409 = vmatprep.subr.bf16.mxu0 %v4067
  %5410 = vmatpush1.bf16.msra.mxu0 %v4066
  %5411 = vmatprep.subr.bf16.mxu0 %v4112
  %5412 = vmatpush2.bf16.msra.mxu0 %v4111
  %5413 = vmatprep.subr.bf16.mxu0 %v4109
  %5414 = vmatpush2.bf16.msra.mxu0 %v4108
  %5415 = vmatprep.subr.bf16.mxu0 %v4106
  %5416 = vmatpush2.bf16.msra.mxu0 %v4105
  %5417 = vmatprep.subr.bf16.mxu0 %v4103
  %5418 = vmatpush2.bf16.msra.mxu0 %v4102
  %5419 = vmatprep.subr.bf16.mxu0 %v4100
  %5420 = vmatpush2.bf16.msra.mxu0 %v4099
  %5421 = vmatprep.subr.bf16.mxu0 %v4097
  %5422 = vmatpush2.bf16.msra.mxu0 %v4096
  %5423 = vmatprep.subr.bf16.mxu0 %v4094
  %5424 = vmatpush2.bf16.msra.mxu0 %v4093
  %5425 = vmatprep.subr.bf16.mxu0 %v4091
  %5426 = vmatpush2.bf16.msra.mxu0 %v4090
  %5427 = vmatprep.mubr.bf16.mxu0 %v1685
  %5428 = vmatmul.mubr.bf16.gmra.mxu0 %v1684
  %v5429 = vpop.f32.mrf.mxu0
  %v5430 = vadd.f32 %v5291, %v5429
  %v5431 = vpop.f32.mrf.mxu0
  %v5432 = vadd.f32 %v5293, %v5431
  %v5433 = vpop.f32.mrf.mxu0
  %v5434 = vadd.f32 %v5295, %v5433
  %v5435 = vpop.f32.mrf.mxu0
  %v5436 = vadd.f32 %v5297, %v5435
  %5437 = vmatprep.mubr.bf16.mxu0 %v1707
  %5438 = vmatmul.mubr.bf16.gmra.mxu0 %v1706
  %v5439 = vpop.f32.mrf.mxu0
  %v5440 = vadd.f32 %v5301, %v5439
  %v5441 = vpop.f32.mrf.mxu0
  %v5442 = vadd.f32 %v5303, %v5441
  %v5443 = vpop.f32.mrf.mxu0
  %v5444 = vadd.f32 %v5305, %v5443
  %v5445 = vpop.f32.mrf.mxu0
  %v5446 = vadd.f32 %v5307, %v5445
  %5447 = vmatprep.mubr.bf16.mxu0 %v1729
  %5448 = vmatmul.mubr.bf16.gmra.mxu0 %v1728
  %v5449 = vpop.f32.mrf.mxu0
  %v5450 = vadd.f32 %v5311, %v5449
  %v5451 = vpop.f32.mrf.mxu0
  %v5452 = vadd.f32 %v5313, %v5451
  %v5453 = vpop.f32.mrf.mxu0
  %v5454 = vadd.f32 %v5315, %v5453
  %v5455 = vpop.f32.mrf.mxu0
  %v5456 = vadd.f32 %v5317, %v5455
  %5457 = vmatprep.mubr.bf16.mxu0 %v1751
  %5458 = vmatmul.mubr.bf16.gmra.mxu0 %v1750
  %v5459 = vpop.f32.mrf.mxu0
  %v5460 = vadd.f32 %v5321, %v5459
  %v5461 = vpop.f32.mrf.mxu0
  %v5462 = vadd.f32 %v5323, %v5461
  %v5463 = vpop.f32.mrf.mxu0
  %v5464 = vadd.f32 %v5325, %v5463
  %v5465 = vpop.f32.mrf.mxu0
  %v5466 = vadd.f32 %v5327, %v5465
  %5467 = vmatprep.mubr.bf16.mxu0 %v1773
  %5468 = vmatmul.mubr.bf16.gmra.mxu0 %v1772
  %v5469 = vpop.f32.mrf.mxu0
  %v5470 = vadd.f32 %v5331, %v5469
  %v5471 = vpop.f32.mrf.mxu0
  %v5472 = vadd.f32 %v5333, %v5471
  %v5473 = vpop.f32.mrf.mxu0
  %v5474 = vadd.f32 %v5335, %v5473
  %v5475 = vpop.f32.mrf.mxu0
  %v5476 = vadd.f32 %v5337, %v5475
  %5477 = vmatprep.mubr.bf16.mxu0 %v1795
  %5478 = vmatmul.mubr.bf16.gmra.mxu0 %v1794
  %v5479 = vpop.f32.mrf.mxu0
  %v5480 = vpop.f32.mrf.mxu0
  %v5481 = vpop.f32.mrf.mxu0
  %v5482 = vadd.f32 %v5343, %v5481
  %v5483 = vpop.f32.mrf.mxu0
  %v5484 = vadd.f32 %v5345, %v5483
  %5485 = vmatprep.mubr.bf16.mxu0 %v1817
  %5486 = vmatmul.mubr.bf16.gmra.mxu0 %v1816
  %v5487 = vpop.f32.mrf.mxu0
  %v5488 = vadd.f32 %v5349, %v5487
  %v5489 = vpop.f32.mrf.mxu0
  %v5490 = vadd.f32 %v5351, %v5489
  %v5491 = vpop.f32.mrf.mxu0
  %v5492 = vadd.f32 %v5353, %v5491
  %v5493 = vpop.f32.mrf.mxu0
  %v5494 = vadd.f32 %v5355, %v5493
  %5495 = vmatprep.mubr.bf16.mxu0 %v1839
  %5496 = vmatmul.mubr.bf16.gmra.mxu0 %v1838
  %v5497 = vpop.f32.mrf.mxu0
  %v5498 = vadd.f32 %v5359, %v5497
  %v5499 = vpop.f32.mrf.mxu0
  %v5500 = vadd.f32 %v5361, %v5499
  %v5501 = vpop.f32.mrf.mxu0
  %v5502 = vadd.f32 %v5363, %v5501
  %v5503 = vpop.f32.mrf.mxu0
  %v5504 = vadd.f32 %v5365, %v5503
  %5505 = vmatprep.mubr.bf16.mxu0 %v1861
  %5506 = vmatmul.mubr.bf16.gmra.mxu0 %v1860
  %v5507 = vpop.f32.mrf.mxu0
  %v5508 = vadd.f32 %v5369, %v5507
  %v5509 = vpop.f32.mrf.mxu0
  %v5510 = vadd.f32 %v5371, %v5509
  %v5511 = vpop.f32.mrf.mxu0
  %v5512 = vadd.f32 %v5373, %v5511
  %v5513 = vpop.f32.mrf.mxu0
  %v5514 = vadd.f32 %v5375, %v5513
  %5515 = vmatprep.mubr.bf16.mxu0 %v1883
  %5516 = vmatmul.mubr.bf16.gmra.mxu0 %v1882
  %v5517 = vpop.f32.mrf.mxu0
  %v5518 = vadd.f32 %v5379, %v5517
  %v5519 = vpop.f32.mrf.mxu0
  %v5520 = vadd.f32 %v5381, %v5519
  %v5521 = vpop.f32.mrf.mxu0
  %v5522 = vadd.f32 %v5383, %v5521
  %v5523 = vpop.f32.mrf.mxu0
  %v5524 = vadd.f32 %v5385, %v5523
  %5525 = vmatprep.mubr.bf16.mxu0 %v1905
  %5526 = vmatmul.mubr.bf16.gmra.mxu0 %v1904
  %v5527 = vpop.f32.mrf.mxu0
  %v5528 = vadd.f32 %v5389, %v5527
  %v5529 = vpop.f32.mrf.mxu0
  %v5530 = vadd.f32 %v5391, %v5529
  %v5531 = vpop.f32.mrf.mxu0
  %v5532 = vpop.f32.mrf.mxu0
  %5533 = vdwg.mxu0
  %5534 = vmatprep.subr.bf16.mxu0 %v4136
  %5535 = vmatpush1.bf16.msra.mxu0 %v4135
  %5536 = vmatprep.subr.bf16.mxu0 %v4133
  %5537 = vmatpush1.bf16.msra.mxu0 %v4132
  %5538 = vmatprep.subr.bf16.mxu0 %v4130
  %5539 = vmatpush1.bf16.msra.mxu0 %v4129
  %5540 = vmatprep.subr.bf16.mxu0 %v4127
  %5541 = vmatpush1.bf16.msra.mxu0 %v4126
  %5542 = vmatprep.subr.bf16.mxu0 %v4124
  %5543 = vmatpush1.bf16.msra.mxu0 %v4123
  %5544 = vmatprep.subr.bf16.mxu0 %v4121
  %5545 = vmatpush1.bf16.msra.mxu0 %v4120
  %5546 = vmatprep.subr.bf16.mxu0 %v4118
  %5547 = vmatpush1.bf16.msra.mxu0 %v4117
  %5548 = vmatprep.subr.bf16.mxu0 %v4115
  %5549 = vmatpush1.bf16.msra.mxu0 %v4114
  %5550 = vmatprep.subr.bf16.mxu0 %v4160
  %5551 = vmatpush2.bf16.msra.mxu0 %v4159
  %5552 = vmatprep.subr.bf16.mxu0 %v4157
  %5553 = vmatpush2.bf16.msra.mxu0 %v4156
  %5554 = vmatprep.subr.bf16.mxu0 %v4154
  %5555 = vmatpush2.bf16.msra.mxu0 %v4153
  %5556 = vmatprep.subr.bf16.mxu0 %v4151
  %5557 = vmatpush2.bf16.msra.mxu0 %v4150
  %5558 = vmatprep.subr.bf16.mxu0 %v4148
  %5559 = vmatpush2.bf16.msra.mxu0 %v4147
  %5560 = vmatprep.subr.bf16.mxu0 %v4145
  %5561 = vmatpush2.bf16.msra.mxu0 %v4144
  %5562 = vmatprep.subr.bf16.mxu0 %v4142
  %5563 = vmatpush2.bf16.msra.mxu0 %v4141
  %5564 = vmatprep.subr.bf16.mxu0 %v4139
  %5565 = vmatpush2.bf16.msra.mxu0 %v4138
  %5566 = vmatprep.mubr.bf16.mxu0 %v1687
  %5567 = vmatmul.mubr.bf16.gmra.mxu0 %v1686
  %v5568 = vpop.f32.mrf.mxu0
  %v5569 = vadd.f32 %v5430, %v5568
  %v5570 = vpop.f32.mrf.mxu0
  %v5571 = vadd.f32 %v5432, %v5570
  %v5572 = vpop.f32.mrf.mxu0
  %v5573 = vadd.f32 %v5434, %v5572
  %v5574 = vpop.f32.mrf.mxu0
  %v5575 = vadd.f32 %v5436, %v5574
  %5576 = vmatprep.mubr.bf16.mxu0 %v1709
  %5577 = vmatmul.mubr.bf16.gmra.mxu0 %v1708
  %v5578 = vpop.f32.mrf.mxu0
  %v5579 = vadd.f32 %v5440, %v5578
  %v5580 = vpop.f32.mrf.mxu0
  %v5581 = vadd.f32 %v5442, %v5580
  %v5582 = vpop.f32.mrf.mxu0
  %v5583 = vadd.f32 %v5444, %v5582
  %v5584 = vpop.f32.mrf.mxu0
  %v5585 = vadd.f32 %v5446, %v5584
  %5586 = vmatprep.mubr.bf16.mxu0 %v1731
  %5587 = vmatmul.mubr.bf16.gmra.mxu0 %v1730
  %v5588 = vpop.f32.mrf.mxu0
  %v5589 = vadd.f32 %v5450, %v5588
  %v5590 = vpop.f32.mrf.mxu0
  %v5591 = vadd.f32 %v5452, %v5590
  %v5592 = vpop.f32.mrf.mxu0
  %v5593 = vadd.f32 %v5454, %v5592
  %v5594 = vpop.f32.mrf.mxu0
  %v5595 = vadd.f32 %v5456, %v5594
  %5596 = vmatprep.mubr.bf16.mxu0 %v1753
  %5597 = vmatmul.mubr.bf16.gmra.mxu0 %v1752
  %v5598 = vpop.f32.mrf.mxu0
  %v5599 = vadd.f32 %v5460, %v5598
  %v5600 = vpop.f32.mrf.mxu0
  %v5601 = vadd.f32 %v5462, %v5600
  %v5602 = vpop.f32.mrf.mxu0
  %v5603 = vadd.f32 %v5464, %v5602
  %v5604 = vpop.f32.mrf.mxu0
  %v5605 = vadd.f32 %v5466, %v5604
  %5606 = vmatprep.mubr.bf16.mxu0 %v1775
  %5607 = vmatmul.mubr.bf16.gmra.mxu0 %v1774
  %v5608 = vpop.f32.mrf.mxu0
  %v5609 = vadd.f32 %v5470, %v5608
  %v5610 = vpop.f32.mrf.mxu0
  %v5611 = vadd.f32 %v5472, %v5610
  %v5612 = vpop.f32.mrf.mxu0
  %v5613 = vadd.f32 %v5474, %v5612
  %v5614 = vpop.f32.mrf.mxu0
  %v5615 = vadd.f32 %v5476, %v5614
  %5616 = vmatprep.mubr.bf16.mxu0 %v1797
  %5617 = vmatmul.mubr.bf16.gmra.mxu0 %v1796
  %v5618 = vpop.f32.mrf.mxu0
  %v5619 = vpop.f32.mrf.mxu0
  %v5620 = vpop.f32.mrf.mxu0
  %v5621 = vadd.f32 %v5482, %v5620
  %v5622 = vpop.f32.mrf.mxu0
  %v5623 = vadd.f32 %v5484, %v5622
  %5624 = vmatprep.mubr.bf16.mxu0 %v1819
  %5625 = vmatmul.mubr.bf16.gmra.mxu0 %v1818
  %v5626 = vpop.f32.mrf.mxu0
  %v5627 = vadd.f32 %v5488, %v5626
  %v5628 = vpop.f32.mrf.mxu0
  %v5629 = vadd.f32 %v5490, %v5628
  %v5630 = vpop.f32.mrf.mxu0
  %v5631 = vadd.f32 %v5492, %v5630
  %v5632 = vpop.f32.mrf.mxu0
  %v5633 = vadd.f32 %v5494, %v5632
  %5634 = vmatprep.mubr.bf16.mxu0 %v1841
  %5635 = vmatmul.mubr.bf16.gmra.mxu0 %v1840
  %v5636 = vpop.f32.mrf.mxu0
  %v5637 = vadd.f32 %v5498, %v5636
  %v5638 = vpop.f32.mrf.mxu0
  %v5639 = vadd.f32 %v5500, %v5638
  %v5640 = vpop.f32.mrf.mxu0
  %v5641 = vadd.f32 %v5502, %v5640
  %v5642 = vpop.f32.mrf.mxu0
  %v5643 = vadd.f32 %v5504, %v5642
  %5644 = vmatprep.mubr.bf16.mxu0 %v1863
  %5645 = vmatmul.mubr.bf16.gmra.mxu0 %v1862
  %v5646 = vpop.f32.mrf.mxu0
  %v5647 = vadd.f32 %v5508, %v5646
  %v5648 = vpop.f32.mrf.mxu0
  %v5649 = vadd.f32 %v5510, %v5648
  %v5650 = vpop.f32.mrf.mxu0
  %v5651 = vadd.f32 %v5512, %v5650
  %v5652 = vpop.f32.mrf.mxu0
  %v5653 = vadd.f32 %v5514, %v5652
  %5654 = vmatprep.mubr.bf16.mxu0 %v1885
  %5655 = vmatmul.mubr.bf16.gmra.mxu0 %v1884
  %v5656 = vpop.f32.mrf.mxu0
  %v5657 = vadd.f32 %v5518, %v5656
  %v5658 = vpop.f32.mrf.mxu0
  %v5659 = vadd.f32 %v5520, %v5658
  %v5660 = vpop.f32.mrf.mxu0
  %v5661 = vadd.f32 %v5522, %v5660
  %v5662 = vpop.f32.mrf.mxu0
  %v5663 = vadd.f32 %v5524, %v5662
  %5664 = vmatprep.mubr.bf16.mxu0 %v1907
  %5665 = vmatmul.mubr.bf16.gmra.mxu0 %v1906
  %v5666 = vpop.f32.mrf.mxu0
  %v5667 = vadd.f32 %v5528, %v5666
  %v5668 = vpop.f32.mrf.mxu0
  %v5669 = vadd.f32 %v5530, %v5668
  %v5670 = vpop.f32.mrf.mxu0
  %v5671 = vpop.f32.mrf.mxu0
  %5672 = vdwg.mxu0
  %5673 = vmatprep.subr.bf16.mxu0 %v4184
  %5674 = vmatpush1.bf16.msra.mxu0 %v4183
  %5675 = vmatprep.subr.bf16.mxu0 %v4181
  %5676 = vmatpush1.bf16.msra.mxu0 %v4180
  %5677 = vmatprep.subr.bf16.mxu0 %v4178
  %5678 = vmatpush1.bf16.msra.mxu0 %v4177
  %5679 = vmatprep.subr.bf16.mxu0 %v4175
  %5680 = vmatpush1.bf16.msra.mxu0 %v4174
  %5681 = vmatprep.subr.bf16.mxu0 %v4172
  %5682 = vmatpush1.bf16.msra.mxu0 %v4171
  %5683 = vmatprep.subr.bf16.mxu0 %v4169
  %5684 = vmatpush1.bf16.msra.mxu0 %v4168
  %5685 = vmatprep.subr.bf16.mxu0 %v4166
  %5686 = vmatpush1.bf16.msra.mxu0 %v4165
  %5687 = vmatprep.subr.bf16.mxu0 %v4163
  %5688 = vmatpush1.bf16.msra.mxu0 %v4162
  %5689 = vmatprep.subr.bf16.mxu0 %v4208
  %5690 = vmatpush2.bf16.msra.mxu0 %v4207
  %5691 = vmatprep.subr.bf16.mxu0 %v4205
  %5692 = vmatpush2.bf16.msra.mxu0 %v4204
  %5693 = vmatprep.subr.bf16.mxu0 %v4202
  %5694 = vmatpush2.bf16.msra.mxu0 %v4201
  %5695 = vmatprep.subr.bf16.mxu0 %v4199
  %5696 = vmatpush2.bf16.msra.mxu0 %v4198
  %5697 = vmatprep.subr.bf16.mxu0 %v4196
  %5698 = vmatpush2.bf16.msra.mxu0 %v4195
  %5699 = vmatprep.subr.bf16.mxu0 %v4193
  %5700 = vmatpush2.bf16.msra.mxu0 %v4192
  %5701 = vmatprep.subr.bf16.mxu0 %v4190
  %5702 = vmatpush2.bf16.msra.mxu0 %v4189
  %5703 = vmatprep.subr.bf16.mxu0 %v4187
  %5704 = vmatpush2.bf16.msra.mxu0 %v4186
  %5705 = vmatprep.mubr.bf16.mxu0 %v1689
  %5706 = vmatmul.mubr.bf16.gmra.mxu0 %v1688
  %v5707 = vpop.f32.mrf.mxu0
  %v5708 = vadd.f32 %v5569, %v5707
  %v5709 = vpop.f32.mrf.mxu0
  %v5710 = vadd.f32 %v5571, %v5709
  %v5711 = vpop.f32.mrf.mxu0
  %v5712 = vadd.f32 %v5573, %v5711
  %v5713 = vpop.f32.mrf.mxu0
  %v5714 = vadd.f32 %v5575, %v5713
  %5715 = vmatprep.mubr.bf16.mxu0 %v1711
  %5716 = vmatmul.mubr.bf16.gmra.mxu0 %v1710
  %v5717 = vpop.f32.mrf.mxu0
  %v5718 = vadd.f32 %v5579, %v5717
  %v5719 = vpop.f32.mrf.mxu0
  %v5720 = vadd.f32 %v5581, %v5719
  %v5721 = vpop.f32.mrf.mxu0
  %v5722 = vadd.f32 %v5583, %v5721
  %v5723 = vpop.f32.mrf.mxu0
  %v5724 = vadd.f32 %v5585, %v5723
  %5725 = vmatprep.mubr.bf16.mxu0 %v1733
  %5726 = vmatmul.mubr.bf16.gmra.mxu0 %v1732
  %v5727 = vpop.f32.mrf.mxu0
  %v5728 = vadd.f32 %v5589, %v5727
  %v5729 = vpop.f32.mrf.mxu0
  %v5730 = vadd.f32 %v5591, %v5729
  %v5731 = vpop.f32.mrf.mxu0
  %v5732 = vadd.f32 %v5593, %v5731
  %v5733 = vpop.f32.mrf.mxu0
  %v5734 = vadd.f32 %v5595, %v5733
  %5735 = vmatprep.mubr.bf16.mxu0 %v1755
  %5736 = vmatmul.mubr.bf16.gmra.mxu0 %v1754
  %v5737 = vpop.f32.mrf.mxu0
  %v5738 = vadd.f32 %v5599, %v5737
  %v5739 = vpop.f32.mrf.mxu0
  %v5740 = vadd.f32 %v5601, %v5739
  %v5741 = vpop.f32.mrf.mxu0
  %v5742 = vadd.f32 %v5603, %v5741
  %v5743 = vpop.f32.mrf.mxu0
  %v5744 = vadd.f32 %v5605, %v5743
  %5745 = vmatprep.mubr.bf16.mxu0 %v1777
  %5746 = vmatmul.mubr.bf16.gmra.mxu0 %v1776
  %v5747 = vpop.f32.mrf.mxu0
  %v5748 = vadd.f32 %v5609, %v5747
  %v5749 = vpop.f32.mrf.mxu0
  %v5750 = vadd.f32 %v5611, %v5749
  %v5751 = vpop.f32.mrf.mxu0
  %v5752 = vadd.f32 %v5613, %v5751
  %v5753 = vpop.f32.mrf.mxu0
  %v5754 = vadd.f32 %v5615, %v5753
  %5755 = vmatprep.mubr.bf16.mxu0 %v1799
  %5756 = vmatmul.mubr.bf16.gmra.mxu0 %v1798
  %v5757 = vpop.f32.mrf.mxu0
  %v5758 = vpop.f32.mrf.mxu0
  %v5759 = vpop.f32.mrf.mxu0
  %v5760 = vadd.f32 %v5621, %v5759
  %v5761 = vpop.f32.mrf.mxu0
  %v5762 = vadd.f32 %v5623, %v5761
  %5763 = vmatprep.mubr.bf16.mxu0 %v1821
  %5764 = vmatmul.mubr.bf16.gmra.mxu0 %v1820
  %v5765 = vpop.f32.mrf.mxu0
  %v5766 = vadd.f32 %v5627, %v5765
  %v5767 = vpop.f32.mrf.mxu0
  %v5768 = vadd.f32 %v5629, %v5767
  %v5769 = vpop.f32.mrf.mxu0
  %v5770 = vadd.f32 %v5631, %v5769
  %v5771 = vpop.f32.mrf.mxu0
  %v5772 = vadd.f32 %v5633, %v5771
  %5773 = vmatprep.mubr.bf16.mxu0 %v1843
  %5774 = vmatmul.mubr.bf16.gmra.mxu0 %v1842
  %v5775 = vpop.f32.mrf.mxu0
  %v5776 = vadd.f32 %v5637, %v5775
  %v5777 = vpop.f32.mrf.mxu0
  %v5778 = vadd.f32 %v5639, %v5777
  %v5779 = vpop.f32.mrf.mxu0
  %v5780 = vadd.f32 %v5641, %v5779
  %v5781 = vpop.f32.mrf.mxu0
  %v5782 = vadd.f32 %v5643, %v5781
  %5783 = vmatprep.mubr.bf16.mxu0 %v1865
  %5784 = vmatmul.mubr.bf16.gmra.mxu0 %v1864
  %v5785 = vpop.f32.mrf.mxu0
  %v5786 = vadd.f32 %v5647, %v5785
  %v5787 = vpop.f32.mrf.mxu0
  %v5788 = vadd.f32 %v5649, %v5787
  %v5789 = vpop.f32.mrf.mxu0
  %v5790 = vadd.f32 %v5651, %v5789
  %v5791 = vpop.f32.mrf.mxu0
  %v5792 = vadd.f32 %v5653, %v5791
  %5793 = vmatprep.mubr.bf16.mxu0 %v1887
  %5794 = vmatmul.mubr.bf16.gmra.mxu0 %v1886
  %v5795 = vpop.f32.mrf.mxu0
  %v5796 = vadd.f32 %v5657, %v5795
  %v5797 = vpop.f32.mrf.mxu0
  %v5798 = vadd.f32 %v5659, %v5797
  %v5799 = vpop.f32.mrf.mxu0
  %v5800 = vadd.f32 %v5661, %v5799
  %v5801 = vpop.f32.mrf.mxu0
  %v5802 = vadd.f32 %v5663, %v5801
  %5803 = vmatprep.mubr.bf16.mxu0 %v1909
  %5804 = vmatmul.mubr.bf16.gmra.mxu0 %v1908
  %v5805 = vpop.f32.mrf.mxu0
  %v5806 = vadd.f32 %v5667, %v5805
  %v5807 = vpop.f32.mrf.mxu0
  %v5808 = vadd.f32 %v5669, %v5807
  %v5809 = vpop.f32.mrf.mxu0
  %v5810 = vpop.f32.mrf.mxu0
  %5811 = vdwg.mxu0
  %5812 = vmatprep.subr.bf16.mxu0 %v4232
  %5813 = vmatpush1.bf16.msra.mxu0 %v4231
  %5814 = vmatprep.subr.bf16.mxu0 %v4229
  %5815 = vmatpush1.bf16.msra.mxu0 %v4228
  %5816 = vmatprep.subr.bf16.mxu0 %v4226
  %5817 = vmatpush1.bf16.msra.mxu0 %v4225
  %5818 = vmatprep.subr.bf16.mxu0 %v4223
  %5819 = vmatpush1.bf16.msra.mxu0 %v4222
  %5820 = vmatprep.subr.bf16.mxu0 %v4220
  %5821 = vmatpush1.bf16.msra.mxu0 %v4219
  %5822 = vmatprep.subr.bf16.mxu0 %v4217
  %5823 = vmatpush1.bf16.msra.mxu0 %v4216
  %5824 = vmatprep.subr.bf16.mxu0 %v4214
  %5825 = vmatpush1.bf16.msra.mxu0 %v4213
  %5826 = vmatprep.subr.bf16.mxu0 %v4211
  %5827 = vmatpush1.bf16.msra.mxu0 %v4210
  %5828 = vmatprep.subr.bf16.mxu0 %v4256
  %5829 = vmatpush2.bf16.msra.mxu0 %v4255
  %5830 = vmatprep.subr.bf16.mxu0 %v4253
  %5831 = vmatpush2.bf16.msra.mxu0 %v4252
  %5832 = vmatprep.subr.bf16.mxu0 %v4250
  %5833 = vmatpush2.bf16.msra.mxu0 %v4249
  %5834 = vmatprep.subr.bf16.mxu0 %v4247
  %5835 = vmatpush2.bf16.msra.mxu0 %v4246
  %5836 = vmatprep.subr.bf16.mxu0 %v4244
  %5837 = vmatpush2.bf16.msra.mxu0 %v4243
  %5838 = vmatprep.subr.bf16.mxu0 %v4241
  %5839 = vmatpush2.bf16.msra.mxu0 %v4240
  %5840 = vmatprep.subr.bf16.mxu0 %v4238
  %5841 = vmatpush2.bf16.msra.mxu0 %v4237
  %5842 = vmatprep.subr.bf16.mxu0 %v4235
  %5843 = vmatpush2.bf16.msra.mxu0 %v4234
  %5844 = vmatprep.mubr.bf16.mxu0 %v1691
  %5845 = vmatmul.mubr.bf16.gmra.mxu0 %v1690
  %v5846 = vpop.f32.mrf.mxu0
  %v5847 = vadd.f32 %v5708, %v5846
  %v5848 = vpop.f32.mrf.mxu0
  %v5849 = vadd.f32 %v5710, %v5848
  %v5850 = vpop.f32.mrf.mxu0
  %v5851 = vadd.f32 %v5712, %v5850
  %v5852 = vpop.f32.mrf.mxu0
  %v5853 = vadd.f32 %v5714, %v5852
  %5854 = vmatprep.mubr.bf16.mxu0 %v1713
  %5855 = vmatmul.mubr.bf16.gmra.mxu0 %v1712
  %v5856 = vpop.f32.mrf.mxu0
  %v5857 = vadd.f32 %v5718, %v5856
  %v5858 = vpop.f32.mrf.mxu0
  %v5859 = vadd.f32 %v5720, %v5858
  %v5860 = vpop.f32.mrf.mxu0
  %v5861 = vadd.f32 %v5722, %v5860
  %v5862 = vpop.f32.mrf.mxu0
  %v5863 = vadd.f32 %v5724, %v5862
  %5864 = vmatprep.mubr.bf16.mxu0 %v1735
  %5865 = vmatmul.mubr.bf16.gmra.mxu0 %v1734
  %v5866 = vpop.f32.mrf.mxu0
  %v5867 = vadd.f32 %v5728, %v5866
  %v5868 = vpop.f32.mrf.mxu0
  %v5869 = vadd.f32 %v5730, %v5868
  %v5870 = vpop.f32.mrf.mxu0
  %v5871 = vadd.f32 %v5732, %v5870
  %v5872 = vpop.f32.mrf.mxu0
  %v5873 = vadd.f32 %v5734, %v5872
  %5874 = vmatprep.mubr.bf16.mxu0 %v1757
  %5875 = vmatmul.mubr.bf16.gmra.mxu0 %v1756
  %v5876 = vpop.f32.mrf.mxu0
  %v5877 = vadd.f32 %v5738, %v5876
  %v5878 = vpop.f32.mrf.mxu0
  %v5879 = vadd.f32 %v5740, %v5878
  %v5880 = vpop.f32.mrf.mxu0
  %v5881 = vadd.f32 %v5742, %v5880
  %v5882 = vpop.f32.mrf.mxu0
  %v5883 = vadd.f32 %v5744, %v5882
  %5884 = vmatprep.mubr.bf16.mxu0 %v1779
  %5885 = vmatmul.mubr.bf16.gmra.mxu0 %v1778
  %v5886 = vpop.f32.mrf.mxu0
  %v5887 = vadd.f32 %v5748, %v5886
  %v5888 = vpop.f32.mrf.mxu0
  %v5889 = vadd.f32 %v5750, %v5888
  %v5890 = vpop.f32.mrf.mxu0
  %v5891 = vadd.f32 %v5752, %v5890
  %v5892 = vpop.f32.mrf.mxu0
  %v5893 = vadd.f32 %v5754, %v5892
  %5894 = vmatprep.mubr.bf16.mxu0 %v1801
  %5895 = vmatmul.mubr.bf16.gmra.mxu0 %v1800
  %v5896 = vpop.f32.mrf.mxu0
  %v5897 = vpop.f32.mrf.mxu0
  %v5898 = vpop.f32.mrf.mxu0
  %v5899 = vadd.f32 %v5760, %v5898
  %v5900 = vpop.f32.mrf.mxu0
  %v5901 = vadd.f32 %v5762, %v5900
  %5902 = vmatprep.mubr.bf16.mxu0 %v1823
  %5903 = vmatmul.mubr.bf16.gmra.mxu0 %v1822
  %v5904 = vpop.f32.mrf.mxu0
  %v5905 = vadd.f32 %v5766, %v5904
  %v5906 = vpop.f32.mrf.mxu0
  %v5907 = vadd.f32 %v5768, %v5906
  %v5908 = vpop.f32.mrf.mxu0
  %v5909 = vadd.f32 %v5770, %v5908
  %v5910 = vpop.f32.mrf.mxu0
  %v5911 = vadd.f32 %v5772, %v5910
  %5912 = vmatprep.mubr.bf16.mxu0 %v1845
  %5913 = vmatmul.mubr.bf16.gmra.mxu0 %v1844
  %v5914 = vpop.f32.mrf.mxu0
  %v5915 = vadd.f32 %v5776, %v5914
  %v5916 = vpop.f32.mrf.mxu0
  %v5917 = vadd.f32 %v5778, %v5916
  %v5918 = vpop.f32.mrf.mxu0
  %v5919 = vadd.f32 %v5780, %v5918
  %v5920 = vpop.f32.mrf.mxu0
  %v5921 = vadd.f32 %v5782, %v5920
  %5922 = vmatprep.mubr.bf16.mxu0 %v1867
  %5923 = vmatmul.mubr.bf16.gmra.mxu0 %v1866
  %v5924 = vpop.f32.mrf.mxu0
  %v5925 = vadd.f32 %v5786, %v5924
  %v5926 = vpop.f32.mrf.mxu0
  %v5927 = vadd.f32 %v5788, %v5926
  %v5928 = vpop.f32.mrf.mxu0
  %v5929 = vadd.f32 %v5790, %v5928
  %v5930 = vpop.f32.mrf.mxu0
  %v5931 = vadd.f32 %v5792, %v5930
  %5932 = vmatprep.mubr.bf16.mxu0 %v1889
  %5933 = vmatmul.mubr.bf16.gmra.mxu0 %v1888
  %v5934 = vpop.f32.mrf.mxu0
  %v5935 = vadd.f32 %v5796, %v5934
  %v5936 = vpop.f32.mrf.mxu0
  %v5937 = vadd.f32 %v5798, %v5936
  %v5938 = vpop.f32.mrf.mxu0
  %v5939 = vadd.f32 %v5800, %v5938
  %v5940 = vpop.f32.mrf.mxu0
  %v5941 = vadd.f32 %v5802, %v5940
  %5942 = vmatprep.mubr.bf16.mxu0 %v1911
  %5943 = vmatmul.mubr.bf16.gmra.mxu0 %v1910
  %v5944 = vpop.f32.mrf.mxu0
  %v5945 = vadd.f32 %v5806, %v5944
  %v5946 = vpop.f32.mrf.mxu0
  %v5947 = vadd.f32 %v5808, %v5946
  %v5948 = vpop.f32.mrf.mxu0
  %v5949 = vpop.f32.mrf.mxu0
  %5950 = vdwg.mxu0
  %5951 = vmatprep.subr.bf16.mxu0 %v4280
  %5952 = vmatpush1.bf16.msra.mxu0 %v4279
  %5953 = vmatprep.subr.bf16.mxu0 %v4277
  %5954 = vmatpush1.bf16.msra.mxu0 %v4276
  %5955 = vmatprep.subr.bf16.mxu0 %v4274
  %5956 = vmatpush1.bf16.msra.mxu0 %v4273
  %5957 = vmatprep.subr.bf16.mxu0 %v4271
  %5958 = vmatpush1.bf16.msra.mxu0 %v4270
  %5959 = vmatprep.subr.bf16.mxu0 %v4268
  %5960 = vmatpush1.bf16.msra.mxu0 %v4267
  %5961 = vmatprep.subr.bf16.mxu0 %v4265
  %5962 = vmatpush1.bf16.msra.mxu0 %v4264
  %5963 = vmatprep.subr.bf16.mxu0 %v4262
  %5964 = vmatpush1.bf16.msra.mxu0 %v4261
  %5965 = vmatprep.subr.bf16.mxu0 %v4259
  %5966 = vmatpush1.bf16.msra.mxu0 %v4258
  %5967 = vmatprep.subr.bf16.mxu0 %v4304
  %5968 = vmatpush2.bf16.msra.mxu0 %v4303
  %5969 = vmatprep.subr.bf16.mxu0 %v4301
  %5970 = vmatpush2.bf16.msra.mxu0 %v4300
  %5971 = vmatprep.subr.bf16.mxu0 %v4298
  %5972 = vmatpush2.bf16.msra.mxu0 %v4297
  %5973 = vmatprep.subr.bf16.mxu0 %v4295
  %5974 = vmatpush2.bf16.msra.mxu0 %v4294
  %5975 = vmatprep.subr.bf16.mxu0 %v4292
  %5976 = vmatpush2.bf16.msra.mxu0 %v4291
  %5977 = vmatprep.subr.bf16.mxu0 %v4289
  %5978 = vmatpush2.bf16.msra.mxu0 %v4288
  %5979 = vmatprep.subr.bf16.mxu0 %v4286
  %5980 = vmatpush2.bf16.msra.mxu0 %v4285
  %5981 = vmatprep.subr.bf16.mxu0 %v4283
  %5982 = vmatpush2.bf16.msra.mxu0 %v4282
  %5983 = vmatprep.mubr.bf16.mxu0 %v1693
  %5984 = vmatmul.mubr.bf16.gmra.mxu0 %v1692
  %v5985 = vpop.f32.mrf.mxu0
  %v5986 = vadd.f32 %v5847, %v5985
  %v5987 = vpop.f32.mrf.mxu0
  %v5988 = vadd.f32 %v5849, %v5987
  %v5989 = vpop.f32.mrf.mxu0
  %v5990 = vadd.f32 %v5851, %v5989
  %v5991 = vpop.f32.mrf.mxu0
  %v5992 = vadd.f32 %v5853, %v5991
  %5993 = vmatprep.mubr.bf16.mxu0 %v1715
  %5994 = vmatmul.mubr.bf16.gmra.mxu0 %v1714
  %v5995 = vpop.f32.mrf.mxu0
  %v5996 = vadd.f32 %v5857, %v5995
  %v5997 = vpop.f32.mrf.mxu0
  %v5998 = vadd.f32 %v5859, %v5997
  %v5999 = vpop.f32.mrf.mxu0
  %v6000 = vadd.f32 %v5861, %v5999
  %v6001 = vpop.f32.mrf.mxu0
  %v6002 = vadd.f32 %v5863, %v6001
  %6003 = vmatprep.mubr.bf16.mxu0 %v1737
  %6004 = vmatmul.mubr.bf16.gmra.mxu0 %v1736
  %v6005 = vpop.f32.mrf.mxu0
  %v6006 = vadd.f32 %v5867, %v6005
  %v6007 = vpop.f32.mrf.mxu0
  %v6008 = vadd.f32 %v5869, %v6007
  %v6009 = vpop.f32.mrf.mxu0
  %v6010 = vadd.f32 %v5871, %v6009
  %v6011 = vpop.f32.mrf.mxu0
  %v6012 = vadd.f32 %v5873, %v6011
  %6013 = vmatprep.mubr.bf16.mxu0 %v1759
  %6014 = vmatmul.mubr.bf16.gmra.mxu0 %v1758
  %v6015 = vpop.f32.mrf.mxu0
  %v6016 = vadd.f32 %v5877, %v6015
  %v6017 = vpop.f32.mrf.mxu0
  %v6018 = vadd.f32 %v5879, %v6017
  %v6019 = vpop.f32.mrf.mxu0
  %v6020 = vadd.f32 %v5881, %v6019
  %v6021 = vpop.f32.mrf.mxu0
  %v6022 = vadd.f32 %v5883, %v6021
  %6023 = vmatprep.mubr.bf16.mxu0 %v1781
  %6024 = vmatmul.mubr.bf16.gmra.mxu0 %v1780
  %v6025 = vpop.f32.mrf.mxu0
  %v6026 = vadd.f32 %v5887, %v6025
  %v6027 = vpop.f32.mrf.mxu0
  %v6028 = vadd.f32 %v5889, %v6027
  %v6029 = vpop.f32.mrf.mxu0
  %v6030 = vadd.f32 %v5891, %v6029
  %v6031 = vpop.f32.mrf.mxu0
  %v6032 = vadd.f32 %v5893, %v6031
  %6033 = vmatprep.mubr.bf16.mxu0 %v1803
  %6034 = vmatmul.mubr.bf16.gmra.mxu0 %v1802
  %v6035 = vpop.f32.mrf.mxu0
  %v6036 = vpop.f32.mrf.mxu0
  %v6037 = vpop.f32.mrf.mxu0
  %v6038 = vadd.f32 %v5899, %v6037
  %v6039 = vpop.f32.mrf.mxu0
  %v6040 = vadd.f32 %v5901, %v6039
  %6041 = vmatprep.mubr.bf16.mxu0 %v1825
  %6042 = vmatmul.mubr.bf16.gmra.mxu0 %v1824
  %v6043 = vpop.f32.mrf.mxu0
  %v6044 = vadd.f32 %v5905, %v6043
  %v6045 = vpop.f32.mrf.mxu0
  %v6046 = vadd.f32 %v5907, %v6045
  %v6047 = vpop.f32.mrf.mxu0
  %v6048 = vadd.f32 %v5909, %v6047
  %v6049 = vpop.f32.mrf.mxu0
  %v6050 = vadd.f32 %v5911, %v6049
  %6051 = vmatprep.mubr.bf16.mxu0 %v1847
  %6052 = vmatmul.mubr.bf16.gmra.mxu0 %v1846
  %v6053 = vpop.f32.mrf.mxu0
  %v6054 = vadd.f32 %v5915, %v6053
  %v6055 = vpop.f32.mrf.mxu0
  %v6056 = vadd.f32 %v5917, %v6055
  %v6057 = vpop.f32.mrf.mxu0
  %v6058 = vadd.f32 %v5919, %v6057
  %v6059 = vpop.f32.mrf.mxu0
  %v6060 = vadd.f32 %v5921, %v6059
  %6061 = vmatprep.mubr.bf16.mxu0 %v1869
  %6062 = vmatmul.mubr.bf16.gmra.mxu0 %v1868
  %v6063 = vpop.f32.mrf.mxu0
  %v6064 = vadd.f32 %v5925, %v6063
  %v6065 = vpop.f32.mrf.mxu0
  %v6066 = vadd.f32 %v5927, %v6065
  %v6067 = vpop.f32.mrf.mxu0
  %v6068 = vadd.f32 %v5929, %v6067
  %v6069 = vpop.f32.mrf.mxu0
  %v6070 = vadd.f32 %v5931, %v6069
  %6071 = vmatprep.mubr.bf16.mxu0 %v1891
  %6072 = vmatmul.mubr.bf16.gmra.mxu0 %v1890
  %v6073 = vpop.f32.mrf.mxu0
  %v6074 = vadd.f32 %v5935, %v6073
  %v6075 = vpop.f32.mrf.mxu0
  %v6076 = vadd.f32 %v5937, %v6075
  %v6077 = vpop.f32.mrf.mxu0
  %v6078 = vadd.f32 %v5939, %v6077
  %v6079 = vpop.f32.mrf.mxu0
  %v6080 = vadd.f32 %v5941, %v6079
  %6081 = vmatprep.mubr.bf16.mxu0 %v1913
  %6082 = vmatmul.mubr.bf16.gmra.mxu0 %v1912
  %v6083 = vpop.f32.mrf.mxu0
  %v6084 = vadd.f32 %v5945, %v6083
  %v6085 = vpop.f32.mrf.mxu0
  %v6086 = vadd.f32 %v5947, %v6085
  %v6087 = vpop.f32.mrf.mxu0
  %v6088 = vpop.f32.mrf.mxu0
  %6089 = vdwg.mxu0
  %6090 = vmatprep.subr.bf16.mxu0 %v4328
  %6091 = vmatpush1.bf16.msra.mxu0 %v4327
  %6092 = vmatprep.subr.bf16.mxu0 %v4325
  %6093 = vmatpush1.bf16.msra.mxu0 %v4324
  %6094 = vmatprep.subr.bf16.mxu0 %v4322
  %6095 = vmatpush1.bf16.msra.mxu0 %v4321
  %6096 = vmatprep.subr.bf16.mxu0 %v4319
  %6097 = vmatpush1.bf16.msra.mxu0 %v4318
  %6098 = vmatprep.subr.bf16.mxu0 %v4316
  %6099 = vmatpush1.bf16.msra.mxu0 %v4315
  %6100 = vmatprep.subr.bf16.mxu0 %v4313
  %6101 = vmatpush1.bf16.msra.mxu0 %v4312
  %6102 = vmatprep.subr.bf16.mxu0 %v4310
  %6103 = vmatpush1.bf16.msra.mxu0 %v4309
  %6104 = vmatprep.subr.bf16.mxu0 %v4307
  %6105 = vmatpush1.bf16.msra.mxu0 %v4306
  %6106 = vmatprep.subr.bf16.mxu0 %v4352
  %6107 = vmatpush2.bf16.msra.mxu0 %v4351
  %6108 = vmatprep.subr.bf16.mxu0 %v4349
  %6109 = vmatpush2.bf16.msra.mxu0 %v4348
  %6110 = vmatprep.subr.bf16.mxu0 %v4346
  %6111 = vmatpush2.bf16.msra.mxu0 %v4345
  %6112 = vmatprep.subr.bf16.mxu0 %v4343
  %6113 = vmatpush2.bf16.msra.mxu0 %v4342
  %6114 = vmatprep.subr.bf16.mxu0 %v4340
  %6115 = vmatpush2.bf16.msra.mxu0 %v4339
  %6116 = vmatprep.subr.bf16.mxu0 %v4337
  %6117 = vmatpush2.bf16.msra.mxu0 %v4336
  %6118 = vmatprep.subr.bf16.mxu0 %v4334
  %6119 = vmatpush2.bf16.msra.mxu0 %v4333
  %6120 = vmatprep.subr.bf16.mxu0 %v4331
  %6121 = vmatpush2.bf16.msra.mxu0 %v4330
  %6122 = vmatprep.mubr.bf16.mxu0 %v1695
  %6123 = vmatmul.mubr.bf16.gmra.mxu0 %v1694
  %v6124 = vpop.f32.mrf.mxu0
  %v6125 = vadd.f32 %v5986, %v6124
  %v6126 = vpop.f32.mrf.mxu0
  %v6127 = vadd.f32 %v5988, %v6126
  %v6128 = vpop.f32.mrf.mxu0
  %v6129 = vadd.f32 %v5990, %v6128
  %v6130 = vpop.f32.mrf.mxu0
  %v6131 = vadd.f32 %v5992, %v6130
  %6132 = vmatprep.mubr.bf16.mxu0 %v1717
  %6133 = vmatmul.mubr.bf16.gmra.mxu0 %v1716
  %v6134 = vpop.f32.mrf.mxu0
  %v6135 = vadd.f32 %v5996, %v6134
  %v6136 = vpop.f32.mrf.mxu0
  %v6137 = vadd.f32 %v5998, %v6136
  %v6138 = vpop.f32.mrf.mxu0
  %v6139 = vadd.f32 %v6000, %v6138
  %v6140 = vpop.f32.mrf.mxu0
  %v6141 = vadd.f32 %v6002, %v6140
  %6142 = vmatprep.mubr.bf16.mxu0 %v1739
  %6143 = vmatmul.mubr.bf16.gmra.mxu0 %v1738
  %v6144 = vpop.f32.mrf.mxu0
  %v6145 = vadd.f32 %v6006, %v6144
  %v6146 = vpop.f32.mrf.mxu0
  %v6147 = vadd.f32 %v6008, %v6146
  %v6148 = vpop.f32.mrf.mxu0
  %v6149 = vadd.f32 %v6010, %v6148
  %v6150 = vpop.f32.mrf.mxu0
  %v6151 = vadd.f32 %v6012, %v6150
  %6152 = vmatprep.mubr.bf16.mxu0 %v1761
  %6153 = vmatmul.mubr.bf16.gmra.mxu0 %v1760
  %v6154 = vpop.f32.mrf.mxu0
  %v6155 = vadd.f32 %v6016, %v6154
  %v6156 = vpop.f32.mrf.mxu0
  %v6157 = vadd.f32 %v6018, %v6156
  %v6158 = vpop.f32.mrf.mxu0
  %v6159 = vadd.f32 %v6020, %v6158
  %v6160 = vpop.f32.mrf.mxu0
  %v6161 = vadd.f32 %v6022, %v6160
  %6162 = vmatprep.mubr.bf16.mxu0 %v1783
  %6163 = vmatmul.mubr.bf16.gmra.mxu0 %v1782
  %v6164 = vpop.f32.mrf.mxu0
  %v6165 = vadd.f32 %v6026, %v6164
  %v6166 = vpop.f32.mrf.mxu0
  %v6167 = vadd.f32 %v6028, %v6166
  %v6168 = vpop.f32.mrf.mxu0
  %v6169 = vadd.f32 %v6030, %v6168
  %v6170 = vpop.f32.mrf.mxu0
  %v6171 = vadd.f32 %v6032, %v6170
  %6172 = vmatprep.mubr.bf16.mxu0 %v1805
  %6173 = vmatmul.mubr.bf16.gmra.mxu0 %v1804
  %v6174 = vpop.f32.mrf.mxu0
  %v6175 = vpop.f32.mrf.mxu0
  %v6176 = vpop.f32.mrf.mxu0
  %v6177 = vadd.f32 %v6038, %v6176
  %v6178 = vpop.f32.mrf.mxu0
  %v6179 = vadd.f32 %v6040, %v6178
  %6180 = vmatprep.mubr.bf16.mxu0 %v1827
  %6181 = vmatmul.mubr.bf16.gmra.mxu0 %v1826
  %v6182 = vpop.f32.mrf.mxu0
  %v6183 = vadd.f32 %v6044, %v6182
  %v6184 = vpop.f32.mrf.mxu0
  %v6185 = vadd.f32 %v6046, %v6184
  %v6186 = vpop.f32.mrf.mxu0
  %v6187 = vadd.f32 %v6048, %v6186
  %v6188 = vpop.f32.mrf.mxu0
  %v6189 = vadd.f32 %v6050, %v6188
  %6190 = vmatprep.mubr.bf16.mxu0 %v1849
  %6191 = vmatmul.mubr.bf16.gmra.mxu0 %v1848
  %v6192 = vpop.f32.mrf.mxu0
  %v6193 = vadd.f32 %v6054, %v6192
  %v6194 = vpop.f32.mrf.mxu0
  %v6195 = vadd.f32 %v6056, %v6194
  %v6196 = vpop.f32.mrf.mxu0
  %v6197 = vadd.f32 %v6058, %v6196
  %v6198 = vpop.f32.mrf.mxu0
  %v6199 = vadd.f32 %v6060, %v6198
  %6200 = vmatprep.mubr.bf16.mxu0 %v1871
  %6201 = vmatmul.mubr.bf16.gmra.mxu0 %v1870
  %v6202 = vpop.f32.mrf.mxu0
  %v6203 = vadd.f32 %v6064, %v6202
  %v6204 = vpop.f32.mrf.mxu0
  %v6205 = vadd.f32 %v6066, %v6204
  %v6206 = vpop.f32.mrf.mxu0
  %v6207 = vadd.f32 %v6068, %v6206
  %v6208 = vpop.f32.mrf.mxu0
  %v6209 = vadd.f32 %v6070, %v6208
  %6210 = vmatprep.mubr.bf16.mxu0 %v1893
  %6211 = vmatmul.mubr.bf16.gmra.mxu0 %v1892
  %v6212 = vpop.f32.mrf.mxu0
  %v6213 = vadd.f32 %v6074, %v6212
  %v6214 = vpop.f32.mrf.mxu0
  %v6215 = vadd.f32 %v6076, %v6214
  %v6216 = vpop.f32.mrf.mxu0
  %v6217 = vadd.f32 %v6078, %v6216
  %v6218 = vpop.f32.mrf.mxu0
  %v6219 = vadd.f32 %v6080, %v6218
  %6220 = vmatprep.mubr.bf16.mxu0 %v1915
  %6221 = vmatmul.mubr.bf16.gmra.mxu0 %v1914
  %v6222 = vpop.f32.mrf.mxu0
  %v6223 = vadd.f32 %v6084, %v6222
  %v6224 = vpop.f32.mrf.mxu0
  %v6225 = vadd.f32 %v6086, %v6224
  %v6226 = vpop.f32.mrf.mxu0
  %v6227 = vpop.f32.mrf.mxu0
  %6228 = vdwg.mxu0
  %6229 = vmatprep.subr.bf16.mxu0 %v4376
  %6230 = vmatpush1.bf16.msra.mxu0 %v4375
  %6231 = vmatprep.subr.bf16.mxu0 %v4373
  %6232 = vmatpush1.bf16.msra.mxu0 %v4372
  %6233 = vmatprep.subr.bf16.mxu0 %v4370
  %6234 = vmatpush1.bf16.msra.mxu0 %v4369
  %6235 = vmatprep.subr.bf16.mxu0 %v4367
  %6236 = vmatpush1.bf16.msra.mxu0 %v4366
  %6237 = vmatprep.subr.bf16.mxu0 %v4364
  %6238 = vmatpush1.bf16.msra.mxu0 %v4363
  %6239 = vmatprep.subr.bf16.mxu0 %v4361
  %6240 = vmatpush1.bf16.msra.mxu0 %v4360
  %6241 = vmatprep.subr.bf16.mxu0 %v4358
  %6242 = vmatpush1.bf16.msra.mxu0 %v4357
  %6243 = vmatprep.subr.bf16.mxu0 %v4355
  %6244 = vmatpush1.bf16.msra.mxu0 %v4354
  %6245 = vmatprep.subr.bf16.mxu0 %v4400
  %6246 = vmatpush2.bf16.msra.mxu0 %v4399
  %6247 = vmatprep.subr.bf16.mxu0 %v4397
  %6248 = vmatpush2.bf16.msra.mxu0 %v4396
  %6249 = vmatprep.subr.bf16.mxu0 %v4394
  %6250 = vmatpush2.bf16.msra.mxu0 %v4393
  %6251 = vmatprep.subr.bf16.mxu0 %v4391
  %6252 = vmatpush2.bf16.msra.mxu0 %v4390
  %6253 = vmatprep.subr.bf16.mxu0 %v4388
  %6254 = vmatpush2.bf16.msra.mxu0 %v4387
  %6255 = vmatprep.subr.bf16.mxu0 %v4385
  %6256 = vmatpush2.bf16.msra.mxu0 %v4384
  %6257 = vmatprep.subr.bf16.mxu0 %v4382
  %6258 = vmatpush2.bf16.msra.mxu0 %v4381
  %6259 = vmatprep.subr.bf16.mxu0 %v4379
  %6260 = vmatpush2.bf16.msra.mxu0 %v4378
  %6261 = vmatprep.mubr.bf16.mxu0 %v1697
  %6262 = vmatmul.mubr.bf16.gmra.mxu0 %v1696
  %v6263 = vpop.f32.mrf.mxu0
  %v6264 = vadd.f32 %v6125, %v6263
  %v6265 = vpop.f32.mrf.mxu0
  %v6266 = vadd.f32 %v6127, %v6265
  %v6267 = vpop.f32.mrf.mxu0
  %v6268 = vadd.f32 %v6129, %v6267
  %v6269 = vpop.f32.mrf.mxu0
  %v6270 = vadd.f32 %v6131, %v6269
  %6271 = vmatprep.mubr.bf16.mxu0 %v1719
  %6272 = vmatmul.mubr.bf16.gmra.mxu0 %v1718
  %v6273 = vpop.f32.mrf.mxu0
  %v6274 = vadd.f32 %v6135, %v6273
  %v6275 = vpop.f32.mrf.mxu0
  %v6276 = vadd.f32 %v6137, %v6275
  %v6277 = vpop.f32.mrf.mxu0
  %v6278 = vadd.f32 %v6139, %v6277
  %v6279 = vpop.f32.mrf.mxu0
  %v6280 = vadd.f32 %v6141, %v6279
  %6281 = vmatprep.mubr.bf16.mxu0 %v1741
  %6282 = vmatmul.mubr.bf16.gmra.mxu0 %v1740
  %v6283 = vpop.f32.mrf.mxu0
  %v6284 = vadd.f32 %v6145, %v6283
  %v6285 = vpop.f32.mrf.mxu0
  %v6286 = vadd.f32 %v6147, %v6285
  %v6287 = vpop.f32.mrf.mxu0
  %v6288 = vadd.f32 %v6149, %v6287
  %v6289 = vpop.f32.mrf.mxu0
  %v6290 = vadd.f32 %v6151, %v6289
  %6291 = vmatprep.mubr.bf16.mxu0 %v1763
  %6292 = vmatmul.mubr.bf16.gmra.mxu0 %v1762
  %v6293 = vpop.f32.mrf.mxu0
  %v6294 = vadd.f32 %v6155, %v6293
  %v6295 = vpop.f32.mrf.mxu0
  %v6296 = vadd.f32 %v6157, %v6295
  %v6297 = vpop.f32.mrf.mxu0
  %v6298 = vadd.f32 %v6159, %v6297
  %v6299 = vpop.f32.mrf.mxu0
  %v6300 = vadd.f32 %v6161, %v6299
  %6301 = vmatprep.mubr.bf16.mxu0 %v1785
  %6302 = vmatmul.mubr.bf16.gmra.mxu0 %v1784
  %v6303 = vpop.f32.mrf.mxu0
  %v6304 = vadd.f32 %v6165, %v6303
  %v6305 = vpop.f32.mrf.mxu0
  %v6306 = vadd.f32 %v6167, %v6305
  %v6307 = vpop.f32.mrf.mxu0
  %v6308 = vadd.f32 %v6169, %v6307
  %v6309 = vpop.f32.mrf.mxu0
  %v6310 = vadd.f32 %v6171, %v6309
  %6311 = vmatprep.mubr.bf16.mxu0 %v1807
  %6312 = vmatmul.mubr.bf16.gmra.mxu0 %v1806
  %v6313 = vpop.f32.mrf.mxu0
  %v6314 = vpop.f32.mrf.mxu0
  %v6315 = vpop.f32.mrf.mxu0
  %v6316 = vadd.f32 %v6177, %v6315
  %v6317 = vpop.f32.mrf.mxu0
  %v6318 = vadd.f32 %v6179, %v6317
  %6319 = vmatprep.mubr.bf16.mxu0 %v1829
  %6320 = vmatmul.mubr.bf16.gmra.mxu0 %v1828
  %v6321 = vpop.f32.mrf.mxu0
  %v6322 = vadd.f32 %v6183, %v6321
  %v6323 = vpop.f32.mrf.mxu0
  %v6324 = vadd.f32 %v6185, %v6323
  %v6325 = vpop.f32.mrf.mxu0
  %v6326 = vadd.f32 %v6187, %v6325
  %v6327 = vpop.f32.mrf.mxu0
  %v6328 = vadd.f32 %v6189, %v6327
  %6329 = vmatprep.mubr.bf16.mxu0 %v1851
  %6330 = vmatmul.mubr.bf16.gmra.mxu0 %v1850
  %v6331 = vpop.f32.mrf.mxu0
  %v6332 = vadd.f32 %v6193, %v6331
  %v6333 = vpop.f32.mrf.mxu0
  %v6334 = vadd.f32 %v6195, %v6333
  %v6335 = vpop.f32.mrf.mxu0
  %v6336 = vadd.f32 %v6197, %v6335
  %v6337 = vpop.f32.mrf.mxu0
  %v6338 = vadd.f32 %v6199, %v6337
  %6339 = vmatprep.mubr.bf16.mxu0 %v1873
  %6340 = vmatmul.mubr.bf16.gmra.mxu0 %v1872
  %v6341 = vpop.f32.mrf.mxu0
  %v6342 = vadd.f32 %v6203, %v6341
  %v6343 = vpop.f32.mrf.mxu0
  %v6344 = vadd.f32 %v6205, %v6343
  %v6345 = vpop.f32.mrf.mxu0
  %v6346 = vadd.f32 %v6207, %v6345
  %v6347 = vpop.f32.mrf.mxu0
  %v6348 = vadd.f32 %v6209, %v6347
  %6349 = vmatprep.mubr.bf16.mxu0 %v1895
  %6350 = vmatmul.mubr.bf16.gmra.mxu0 %v1894
  %v6351 = vpop.f32.mrf.mxu0
  %v6352 = vadd.f32 %v6213, %v6351
  %v6353 = vpop.f32.mrf.mxu0
  %v6354 = vadd.f32 %v6215, %v6353
  %v6355 = vpop.f32.mrf.mxu0
  %v6356 = vadd.f32 %v6217, %v6355
  %v6357 = vpop.f32.mrf.mxu0
  %v6358 = vadd.f32 %v6219, %v6357
  %6359 = vmatprep.mubr.bf16.mxu0 %v1917
  %6360 = vmatmul.mubr.bf16.gmra.mxu0 %v1916
  %v6361 = vpop.f32.mrf.mxu0
  %v6362 = vadd.f32 %v6223, %v6361
  %v6363 = vpop.f32.mrf.mxu0
  %v6364 = vadd.f32 %v6225, %v6363
  %v6365 = vpop.f32.mrf.mxu0
  %v6366 = vpop.f32.mrf.mxu0
  %6367 = vdwg.mxu0
  %6368 = vmatprep.subr.bf16.mxu0 %v4424
  %6369 = vmatpush1.bf16.msra.mxu0 %v4423
  %6370 = vmatprep.subr.bf16.mxu0 %v4421
  %6371 = vmatpush1.bf16.msra.mxu0 %v4420
  %6372 = vmatprep.subr.bf16.mxu0 %v4418
  %6373 = vmatpush1.bf16.msra.mxu0 %v4417
  %6374 = vmatprep.subr.bf16.mxu0 %v4415
  %6375 = vmatpush1.bf16.msra.mxu0 %v4414
  %6376 = vmatprep.subr.bf16.mxu0 %v4412
  %6377 = vmatpush1.bf16.msra.mxu0 %v4411
  %6378 = vmatprep.subr.bf16.mxu0 %v4409
  %6379 = vmatpush1.bf16.msra.mxu0 %v4408
  %6380 = vmatprep.subr.bf16.mxu0 %v4406
  %6381 = vmatpush1.bf16.msra.mxu0 %v4405
  %6382 = vmatprep.subr.bf16.mxu0 %v4403
  %6383 = vmatpush1.bf16.msra.mxu0 %v4402
  %6384 = vmatprep.subr.bf16.mxu0 %v4448
  %6385 = vmatpush2.bf16.msra.mxu0 %v4447
  %6386 = vmatprep.subr.bf16.mxu0 %v4445
  %6387 = vmatpush2.bf16.msra.mxu0 %v4444
  %6388 = vmatprep.subr.bf16.mxu0 %v4442
  %6389 = vmatpush2.bf16.msra.mxu0 %v4441
  %6390 = vmatprep.subr.bf16.mxu0 %v4439
  %6391 = vmatpush2.bf16.msra.mxu0 %v4438
  %6392 = vmatprep.subr.bf16.mxu0 %v4436
  %6393 = vmatpush2.bf16.msra.mxu0 %v4435
  %6394 = vmatprep.subr.bf16.mxu0 %v4433
  %6395 = vmatpush2.bf16.msra.mxu0 %v4432
  %6396 = vmatprep.subr.bf16.mxu0 %v4430
  %6397 = vmatpush2.bf16.msra.mxu0 %v4429
  %6398 = vmatprep.subr.bf16.mxu0 %v4427
  %6399 = vmatpush2.bf16.msra.mxu0 %v4426
  %6400 = vmatprep.mubr.bf16.mxu0 %v1699
  %6401 = vmatmul.mubr.bf16.gmra.mxu0 %v1698
  %v6402 = vpop.f32.mrf.mxu0
  %v6403 = vadd.f32 %v6264, %v6402
  %v6404 = vpop.f32.mrf.mxu0
  %v6405 = vadd.f32 %v6266, %v6404
  %v6406 = vpop.f32.mrf.mxu0
  %v6407 = vadd.f32 %v6268, %v6406
  %v6408 = vpop.f32.mrf.mxu0
  %v6409 = vadd.f32 %v6270, %v6408
  %6410 = vmatprep.mubr.bf16.mxu0 %v1721
  %6411 = vmatmul.mubr.bf16.gmra.mxu0 %v1720
  %v6412 = vpop.f32.mrf.mxu0
  %v6413 = vadd.f32 %v6274, %v6412
  %v6414 = vpop.f32.mrf.mxu0
  %v6415 = vadd.f32 %v6276, %v6414
  %v6416 = vpop.f32.mrf.mxu0
  %v6417 = vadd.f32 %v6278, %v6416
  %v6418 = vpop.f32.mrf.mxu0
  %v6419 = vadd.f32 %v6280, %v6418
  %6420 = vmatprep.mubr.bf16.mxu0 %v1743
  %6421 = vmatmul.mubr.bf16.gmra.mxu0 %v1742
  %v6422 = vpop.f32.mrf.mxu0
  %v6423 = vadd.f32 %v6284, %v6422
  %v6424 = vpop.f32.mrf.mxu0
  %v6425 = vadd.f32 %v6286, %v6424
  %v6426 = vpop.f32.mrf.mxu0
  %v6427 = vadd.f32 %v6288, %v6426
  %v6428 = vpop.f32.mrf.mxu0
  %v6429 = vadd.f32 %v6290, %v6428
  %6430 = vmatprep.mubr.bf16.mxu0 %v1765
  %6431 = vmatmul.mubr.bf16.gmra.mxu0 %v1764
  %v6432 = vpop.f32.mrf.mxu0
  %v6433 = vadd.f32 %v6294, %v6432
  %v6434 = vpop.f32.mrf.mxu0
  %v6435 = vadd.f32 %v6296, %v6434
  %v6436 = vpop.f32.mrf.mxu0
  %v6437 = vadd.f32 %v6298, %v6436
  %v6438 = vpop.f32.mrf.mxu0
  %v6439 = vadd.f32 %v6300, %v6438
  %6440 = vmatprep.mubr.bf16.mxu0 %v1787
  %6441 = vmatmul.mubr.bf16.gmra.mxu0 %v1786
  %v6442 = vpop.f32.mrf.mxu0
  %v6443 = vadd.f32 %v6304, %v6442
  %v6444 = vpop.f32.mrf.mxu0
  %v6445 = vadd.f32 %v6306, %v6444
  %v6446 = vpop.f32.mrf.mxu0
  %v6447 = vadd.f32 %v6308, %v6446
  %v6448 = vpop.f32.mrf.mxu0
  %v6449 = vadd.f32 %v6310, %v6448
  %6450 = vmatprep.mubr.bf16.mxu0 %v1809
  %6451 = vmatmul.mubr.bf16.gmra.mxu0 %v1808
  %v6452 = vpop.f32.mrf.mxu0
  %v6453 = vpop.f32.mrf.mxu0
  %v6454 = vpop.f32.mrf.mxu0
  %v6455 = vadd.f32 %v6316, %v6454
  %v6456 = vpop.f32.mrf.mxu0
  %v6457 = vadd.f32 %v6318, %v6456
  %6458 = vmatprep.mubr.bf16.mxu0 %v1831
  %6459 = vmatmul.mubr.bf16.gmra.mxu0 %v1830
  %v6460 = vpop.f32.mrf.mxu0
  %v6461 = vadd.f32 %v6322, %v6460
  %v6462 = vpop.f32.mrf.mxu0
  %v6463 = vadd.f32 %v6324, %v6462
  %v6464 = vpop.f32.mrf.mxu0
  %v6465 = vadd.f32 %v6326, %v6464
  %v6466 = vpop.f32.mrf.mxu0
  %v6467 = vadd.f32 %v6328, %v6466
  %6468 = vmatprep.mubr.bf16.mxu0 %v1853
  %6469 = vmatmul.mubr.bf16.gmra.mxu0 %v1852
  %v6470 = vpop.f32.mrf.mxu0
  %v6471 = vadd.f32 %v6332, %v6470
  %v6472 = vpop.f32.mrf.mxu0
  %v6473 = vadd.f32 %v6334, %v6472
  %v6474 = vpop.f32.mrf.mxu0
  %v6475 = vadd.f32 %v6336, %v6474
  %v6476 = vpop.f32.mrf.mxu0
  %v6477 = vadd.f32 %v6338, %v6476
  %6478 = vmatprep.mubr.bf16.mxu0 %v1875
  %6479 = vmatmul.mubr.bf16.gmra.mxu0 %v1874
  %v6480 = vpop.f32.mrf.mxu0
  %v6481 = vadd.f32 %v6342, %v6480
  %v6482 = vpop.f32.mrf.mxu0
  %v6483 = vadd.f32 %v6344, %v6482
  %v6484 = vpop.f32.mrf.mxu0
  %v6485 = vadd.f32 %v6346, %v6484
  %v6486 = vpop.f32.mrf.mxu0
  %v6487 = vadd.f32 %v6348, %v6486
  %6488 = vmatprep.mubr.bf16.mxu0 %v1897
  %6489 = vmatmul.mubr.bf16.gmra.mxu0 %v1896
  %v6490 = vpop.f32.mrf.mxu0
  %v6491 = vadd.f32 %v6352, %v6490
  %v6492 = vpop.f32.mrf.mxu0
  %v6493 = vadd.f32 %v6354, %v6492
  %v6494 = vpop.f32.mrf.mxu0
  %v6495 = vadd.f32 %v6356, %v6494
  %v6496 = vpop.f32.mrf.mxu0
  %v6497 = vadd.f32 %v6358, %v6496
  %6498 = vmatprep.mubr.bf16.mxu0 %v1919
  %6499 = vmatmul.mubr.bf16.gmra.mxu0 %v1918
  %v6500 = vpop.f32.mrf.mxu0
  %v6501 = vadd.f32 %v6362, %v6500
  %v6502 = vpop.f32.mrf.mxu0
  %v6503 = vadd.f32 %v6364, %v6502
  %v6504 = vpop.f32.mrf.mxu0
  %v6505 = vpop.f32.mrf.mxu0
  %6506 = vdwg.mxu0
  %6507 = vmatprep.subr.bf16.mxu0 0
  %6508 = vmatpush1.bf16.msra.mxu0 %v3945
  %6509 = vmatprep.subr.bf16.mxu0 0
  %6510 = vmatpush1.bf16.msra.mxu0 %v3942
  %6511 = vmatprep.subr.bf16.mxu0 0
  %6512 = vmatpush1.bf16.msra.mxu0 %v3939
  %6513 = vmatprep.subr.bf16.mxu0 0
  %6514 = vmatpush1.bf16.msra.mxu0 %v3936
  %6515 = vmatprep.subr.bf16.mxu0 0
  %6516 = vmatpush1.bf16.msra.mxu0 %v3933
  %6517 = vmatprep.subr.bf16.mxu0 0
  %6518 = vmatpush1.bf16.msra.mxu0 %v3930
  %6519 = vmatprep.subr.bf16.mxu0 0
  %6520 = vmatpush1.bf16.msra.mxu0 %v3927
  %6521 = vmatprep.subr.bf16.mxu0 0
  %6522 = vmatpush1.bf16.msra.mxu0 %v3924
  %6523 = vmatprep.subr.bf16.mxu0 0
  %6524 = vmatpush2.bf16.msra.mxu0 %v3969
  %6525 = vmatprep.subr.bf16.mxu0 0
  %6526 = vmatpush2.bf16.msra.mxu0 %v3966
  %6527 = vmatprep.subr.bf16.mxu0 0
  %6528 = vmatpush2.bf16.msra.mxu0 %v3963
  %6529 = vmatprep.subr.bf16.mxu0 0
  %6530 = vmatpush2.bf16.msra.mxu0 %v3960
  %6531 = vmatprep.subr.bf16.mxu0 0
  %6532 = vmatpush2.bf16.msra.mxu0 %v3957
  %6533 = vmatprep.subr.bf16.mxu0 0
  %6534 = vmatpush2.bf16.msra.mxu0 %v3954
  %6535 = vmatprep.subr.bf16.mxu0 0
  %6536 = vmatpush2.bf16.msra.mxu0 %v3951
  %6537 = vmatprep.subr.bf16.mxu0 0
  %6538 = vmatpush2.bf16.msra.mxu0 %v3948
  %6539 = vmatprep.mubr.bf16.mxu0 %v1679
  %6540 = vmatmul.mubr.bf16.gmra.mxu0 %v1678
  %v6541 = vpop.f32.mrf.mxu0
  %v6542 = vadd.f32 %v981, %v6541
  %v6543 = vpop.f32.mrf.mxu0
  %v6544 = vpop.f32.mrf.mxu0
  %v6545 = vadd.f32 %v981, %v6544
  %v6546 = vpop.f32.mrf.mxu0
  %6547 = vmatprep.mubr.bf16.mxu0 %v1701
  %6548 = vmatmul.mubr.bf16.gmra.mxu0 %v1700
  %v6549 = vpop.f32.mrf.mxu0
  %v6550 = vadd.f32 %v981, %v6549
  %v6551 = vpop.f32.mrf.mxu0
  %v6552 = vpop.f32.mrf.mxu0
  %v6553 = vadd.f32 %v981, %v6552
  %v6554 = vpop.f32.mrf.mxu0
  %6555 = vmatprep.mubr.bf16.mxu0 %v1723
  %6556 = vmatmul.mubr.bf16.gmra.mxu0 %v1722
  %v6557 = vpop.f32.mrf.mxu0
  %v6558 = vadd.f32 %v981, %v6557
  %v6559 = vpop.f32.mrf.mxu0
  %v6560 = vpop.f32.mrf.mxu0
  %v6561 = vadd.f32 %v981, %v6560
  %v6562 = vpop.f32.mrf.mxu0
  %6563 = vmatprep.mubr.bf16.mxu0 %v1745
  %6564 = vmatmul.mubr.bf16.gmra.mxu0 %v1744
  %v6565 = vpop.f32.mrf.mxu0
  %v6566 = vadd.f32 %v981, %v6565
  %v6567 = vpop.f32.mrf.mxu0
  %v6568 = vpop.f32.mrf.mxu0
  %v6569 = vadd.f32 %v981, %v6568
  %v6570 = vpop.f32.mrf.mxu0
  %6571 = vmatprep.mubr.bf16.mxu0 %v1767
  %6572 = vmatmul.mubr.bf16.gmra.mxu0 %v1766
  %v6573 = vpop.f32.mrf.mxu0
  %v6574 = vadd.f32 %v981, %v6573
  %v6575 = vpop.f32.mrf.mxu0
  %v6576 = vpop.f32.mrf.mxu0
  %v6577 = vadd.f32 %v981, %v6576
  %v6578 = vpop.f32.mrf.mxu0
  %6579 = vmatprep.mubr.bf16.mxu0 %v1789
  %6580 = vmatmul.mubr.bf16.gmra.mxu0 %v1788
  %v6581 = vpop.f32.mrf.mxu0
  %v6582 = vpop.f32.mrf.mxu0
  %v6583 = vpop.f32.mrf.mxu0
  %v6584 = vadd.f32 %v981, %v6583
  %v6585 = vpop.f32.mrf.mxu0
  %6586 = vmatprep.mubr.bf16.mxu0 %v1811
  %6587 = vmatmul.mubr.bf16.gmra.mxu0 %v1810
  %v6588 = vpop.f32.mrf.mxu0
  %v6589 = vadd.f32 %v981, %v6588
  %v6590 = vpop.f32.mrf.mxu0
  %v6591 = vpop.f32.mrf.mxu0
  %v6592 = vadd.f32 %v981, %v6591
  %v6593 = vpop.f32.mrf.mxu0
  %6594 = vmatprep.mubr.bf16.mxu0 %v1833
  %6595 = vmatmul.mubr.bf16.gmra.mxu0 %v1832
  %v6596 = vpop.f32.mrf.mxu0
  %v6597 = vadd.f32 %v981, %v6596
  %v6598 = vpop.f32.mrf.mxu0
  %v6599 = vpop.f32.mrf.mxu0
  %v6600 = vadd.f32 %v981, %v6599
  %v6601 = vpop.f32.mrf.mxu0
  %6602 = vmatprep.mubr.bf16.mxu0 %v1855
  %6603 = vmatmul.mubr.bf16.gmra.mxu0 %v1854
  %v6604 = vpop.f32.mrf.mxu0
  %v6605 = vadd.f32 %v981, %v6604
  %v6606 = vpop.f32.mrf.mxu0
  %v6607 = vpop.f32.mrf.mxu0
  %v6608 = vadd.f32 %v981, %v6607
  %v6609 = vpop.f32.mrf.mxu0
  %6610 = vmatprep.mubr.bf16.mxu0 %v1877
  %6611 = vmatmul.mubr.bf16.gmra.mxu0 %v1876
  %v6612 = vpop.f32.mrf.mxu0
  %v6613 = vadd.f32 %v981, %v6612
  %v6614 = vpop.f32.mrf.mxu0
  %v6615 = vpop.f32.mrf.mxu0
  %v6616 = vadd.f32 %v981, %v6615
  %v6617 = vpop.f32.mrf.mxu0
  %6618 = vmatprep.mubr.bf16.mxu0 %v1899
  %6619 = vmatmul.mubr.bf16.gmra.mxu0 %v1898
  %v6620 = vpop.f32.mrf.mxu0
  %v6621 = vadd.f32 %v981, %v6620
  %v6622 = vpop.f32.mrf.mxu0
  %v6623 = vpop.f32.mrf.mxu0
  %v6624 = vpop.f32.mrf.mxu0
  %6625 = vdwg.mxu0
  %6626 = vmatprep.subr.bf16.mxu0 0
  %6627 = vmatpush1.bf16.msra.mxu0 %v3993
  %6628 = vmatprep.subr.bf16.mxu0 0
  %6629 = vmatpush1.bf16.msra.mxu0 %v3990
  %6630 = vmatprep.subr.bf16.mxu0 0
  %6631 = vmatpush1.bf16.msra.mxu0 %v3987
  %6632 = vmatprep.subr.bf16.mxu0 0
  %6633 = vmatpush1.bf16.msra.mxu0 %v3984
  %6634 = vmatprep.subr.bf16.mxu0 0
  %6635 = vmatpush1.bf16.msra.mxu0 %v3981
  %6636 = vmatprep.subr.bf16.mxu0 0
  %6637 = vmatpush1.bf16.msra.mxu0 %v3978
  %6638 = vmatprep.subr.bf16.mxu0 0
  %6639 = vmatpush1.bf16.msra.mxu0 %v3975
  %6640 = vmatprep.subr.bf16.mxu0 0
  %6641 = vmatpush1.bf16.msra.mxu0 %v3972
  %6642 = vmatprep.subr.bf16.mxu0 0
  %6643 = vmatpush2.bf16.msra.mxu0 %v4017
  %6644 = vmatprep.subr.bf16.mxu0 0
  %6645 = vmatpush2.bf16.msra.mxu0 %v4014
  %6646 = vmatprep.subr.bf16.mxu0 0
  %6647 = vmatpush2.bf16.msra.mxu0 %v4011
  %6648 = vmatprep.subr.bf16.mxu0 0
  %6649 = vmatpush2.bf16.msra.mxu0 %v4008
  %6650 = vmatprep.subr.bf16.mxu0 0
  %6651 = vmatpush2.bf16.msra.mxu0 %v4005
  %6652 = vmatprep.subr.bf16.mxu0 0
  %6653 = vmatpush2.bf16.msra.mxu0 %v4002
  %6654 = vmatprep.subr.bf16.mxu0 0
  %6655 = vmatpush2.bf16.msra.mxu0 %v3999
  %6656 = vmatprep.subr.bf16.mxu0 0
  %6657 = vmatpush2.bf16.msra.mxu0 %v3996
  %6658 = vmatprep.mubr.bf16.mxu0 %v1681
  %6659 = vmatmul.mubr.bf16.gmra.mxu0 %v1680
  %v6660 = vpop.f32.mrf.mxu0
  %v6661 = vadd.f32 %v6542, %v6660
  %v6662 = vpop.f32.mrf.mxu0
  %v6663 = vpop.f32.mrf.mxu0
  %v6664 = vadd.f32 %v6545, %v6663
  %v6665 = vpop.f32.mrf.mxu0
  %6666 = vmatprep.mubr.bf16.mxu0 %v1703
  %6667 = vmatmul.mubr.bf16.gmra.mxu0 %v1702
  %v6668 = vpop.f32.mrf.mxu0
  %v6669 = vadd.f32 %v6550, %v6668
  %v6670 = vpop.f32.mrf.mxu0
  %v6671 = vpop.f32.mrf.mxu0
  %v6672 = vadd.f32 %v6553, %v6671
  %v6673 = vpop.f32.mrf.mxu0
  %6674 = vmatprep.mubr.bf16.mxu0 %v1725
  %6675 = vmatmul.mubr.bf16.gmra.mxu0 %v1724
  %v6676 = vpop.f32.mrf.mxu0
  %v6677 = vadd.f32 %v6558, %v6676
  %v6678 = vpop.f32.mrf.mxu0
  %v6679 = vpop.f32.mrf.mxu0
  %v6680 = vadd.f32 %v6561, %v6679
  %v6681 = vpop.f32.mrf.mxu0
  %6682 = vmatprep.mubr.bf16.mxu0 %v1747
  %6683 = vmatmul.mubr.bf16.gmra.mxu0 %v1746
  %v6684 = vpop.f32.mrf.mxu0
  %v6685 = vadd.f32 %v6566, %v6684
  %v6686 = vpop.f32.mrf.mxu0
  %v6687 = vpop.f32.mrf.mxu0
  %v6688 = vadd.f32 %v6569, %v6687
  %v6689 = vpop.f32.mrf.mxu0
  %6690 = vmatprep.mubr.bf16.mxu0 %v1769
  %6691 = vmatmul.mubr.bf16.gmra.mxu0 %v1768
  %v6692 = vpop.f32.mrf.mxu0
  %v6693 = vadd.f32 %v6574, %v6692
  %v6694 = vpop.f32.mrf.mxu0
  %v6695 = vpop.f32.mrf.mxu0
  %v6696 = vadd.f32 %v6577, %v6695
  %v6697 = vpop.f32.mrf.mxu0
  %6698 = vmatprep.mubr.bf16.mxu0 %v1791
  %6699 = vmatmul.mubr.bf16.gmra.mxu0 %v1790
  %v6700 = vpop.f32.mrf.mxu0
  %v6701 = vpop.f32.mrf.mxu0
  %v6702 = vpop.f32.mrf.mxu0
  %v6703 = vadd.f32 %v6584, %v6702
  %v6704 = vpop.f32.mrf.mxu0
  %6705 = vmatprep.mubr.bf16.mxu0 %v1813
  %6706 = vmatmul.mubr.bf16.gmra.mxu0 %v1812
  %v6707 = vpop.f32.mrf.mxu0
  %v6708 = vadd.f32 %v6589, %v6707
  %v6709 = vpop.f32.mrf.mxu0
  %v6710 = vpop.f32.mrf.mxu0
  %v6711 = vadd.f32 %v6592, %v6710
  %v6712 = vpop.f32.mrf.mxu0
  %6713 = vmatprep.mubr.bf16.mxu0 %v1835
  %6714 = vmatmul.mubr.bf16.gmra.mxu0 %v1834
  %v6715 = vpop.f32.mrf.mxu0
  %v6716 = vadd.f32 %v6597, %v6715
  %v6717 = vpop.f32.mrf.mxu0
  %v6718 = vpop.f32.mrf.mxu0
  %v6719 = vadd.f32 %v6600, %v6718
  %v6720 = vpop.f32.mrf.mxu0
  %6721 = vmatprep.mubr.bf16.mxu0 %v1857
  %6722 = vmatmul.mubr.bf16.gmra.mxu0 %v1856
  %v6723 = vpop.f32.mrf.mxu0
  %v6724 = vadd.f32 %v6605, %v6723
  %v6725 = vpop.f32.mrf.mxu0
  %v6726 = vpop.f32.mrf.mxu0
  %v6727 = vadd.f32 %v6608, %v6726
  %v6728 = vpop.f32.mrf.mxu0
  %6729 = vmatprep.mubr.bf16.mxu0 %v1879
  %6730 = vmatmul.mubr.bf16.gmra.mxu0 %v1878
  %v6731 = vpop.f32.mrf.mxu0
  %v6732 = vadd.f32 %v6613, %v6731
  %v6733 = vpop.f32.mrf.mxu0
  %v6734 = vpop.f32.mrf.mxu0
  %v6735 = vadd.f32 %v6616, %v6734
  %v6736 = vpop.f32.mrf.mxu0
  %6737 = vmatprep.mubr.bf16.mxu0 %v1901
  %6738 = vmatmul.mubr.bf16.gmra.mxu0 %v1900
  %v6739 = vpop.f32.mrf.mxu0
  %v6740 = vadd.f32 %v6621, %v6739
  %v6741 = vpop.f32.mrf.mxu0
  %v6742 = vpop.f32.mrf.mxu0
  %v6743 = vpop.f32.mrf.mxu0
  %6744 = vdwg.mxu0
  %6745 = vmatprep.subr.bf16.mxu0 0
  %6746 = vmatpush1.bf16.msra.mxu0 %v4041
  %6747 = vmatprep.subr.bf16.mxu0 0
  %6748 = vmatpush1.bf16.msra.mxu0 %v4038
  %6749 = vmatprep.subr.bf16.mxu0 0
  %6750 = vmatpush1.bf16.msra.mxu0 %v4035
  %6751 = vmatprep.subr.bf16.mxu0 0
  %6752 = vmatpush1.bf16.msra.mxu0 %v4032
  %6753 = vmatprep.subr.bf16.mxu0 0
  %6754 = vmatpush1.bf16.msra.mxu0 %v4029
  %6755 = vmatprep.subr.bf16.mxu0 0
  %6756 = vmatpush1.bf16.msra.mxu0 %v4026
  %6757 = vmatprep.subr.bf16.mxu0 0
  %6758 = vmatpush1.bf16.msra.mxu0 %v4023
  %6759 = vmatprep.subr.bf16.mxu0 0
  %6760 = vmatpush1.bf16.msra.mxu0 %v4020
  %6761 = vmatprep.subr.bf16.mxu0 0
  %6762 = vmatpush2.bf16.msra.mxu0 %v4065
  %6763 = vmatprep.subr.bf16.mxu0 0
  %6764 = vmatpush2.bf16.msra.mxu0 %v4062
  %6765 = vmatprep.subr.bf16.mxu0 0
  %6766 = vmatpush2.bf16.msra.mxu0 %v4059
  %6767 = vmatprep.subr.bf16.mxu0 0
  %6768 = vmatpush2.bf16.msra.mxu0 %v4056
  %6769 = vmatprep.subr.bf16.mxu0 0
  %6770 = vmatpush2.bf16.msra.mxu0 %v4053
  %6771 = vmatprep.subr.bf16.mxu0 0
  %6772 = vmatpush2.bf16.msra.mxu0 %v4050
  %6773 = vmatprep.subr.bf16.mxu0 0
  %6774 = vmatpush2.bf16.msra.mxu0 %v4047
  %6775 = vmatprep.subr.bf16.mxu0 0
  %6776 = vmatpush2.bf16.msra.mxu0 %v4044
  %6777 = vmatprep.mubr.bf16.mxu0 %v1683
  %6778 = vmatmul.mubr.bf16.gmra.mxu0 %v1682
  %v6779 = vpop.f32.mrf.mxu0
  %v6780 = vadd.f32 %v6661, %v6779
  %v6781 = vpop.f32.mrf.mxu0
  %v6782 = vpop.f32.mrf.mxu0
  %v6783 = vadd.f32 %v6664, %v6782
  %v6784 = vpop.f32.mrf.mxu0
  %6785 = vmatprep.mubr.bf16.mxu0 %v1705
  %6786 = vmatmul.mubr.bf16.gmra.mxu0 %v1704
  %v6787 = vpop.f32.mrf.mxu0
  %v6788 = vadd.f32 %v6669, %v6787
  %v6789 = vpop.f32.mrf.mxu0
  %v6790 = vpop.f32.mrf.mxu0
  %v6791 = vadd.f32 %v6672, %v6790
  %v6792 = vpop.f32.mrf.mxu0
  %6793 = vmatprep.mubr.bf16.mxu0 %v1727
  %6794 = vmatmul.mubr.bf16.gmra.mxu0 %v1726
  %v6795 = vpop.f32.mrf.mxu0
  %v6796 = vadd.f32 %v6677, %v6795
  %v6797 = vpop.f32.mrf.mxu0
  %v6798 = vpop.f32.mrf.mxu0
  %v6799 = vadd.f32 %v6680, %v6798
  %v6800 = vpop.f32.mrf.mxu0
  %6801 = vmatprep.mubr.bf16.mxu0 %v1749
  %6802 = vmatmul.mubr.bf16.gmra.mxu0 %v1748
  %v6803 = vpop.f32.mrf.mxu0
  %v6804 = vadd.f32 %v6685, %v6803
  %v6805 = vpop.f32.mrf.mxu0
  %v6806 = vpop.f32.mrf.mxu0
  %v6807 = vadd.f32 %v6688, %v6806
  %v6808 = vpop.f32.mrf.mxu0
  %6809 = vmatprep.mubr.bf16.mxu0 %v1771
  %6810 = vmatmul.mubr.bf16.gmra.mxu0 %v1770
  %v6811 = vpop.f32.mrf.mxu0
  %v6812 = vadd.f32 %v6693, %v6811
  %v6813 = vpop.f32.mrf.mxu0
  %v6814 = vpop.f32.mrf.mxu0
  %v6815 = vadd.f32 %v6696, %v6814
  %v6816 = vpop.f32.mrf.mxu0
  %6817 = vmatprep.mubr.bf16.mxu0 %v1793
  %6818 = vmatmul.mubr.bf16.gmra.mxu0 %v1792
  %v6819 = vpop.f32.mrf.mxu0
  %v6820 = vpop.f32.mrf.mxu0
  %v6821 = vpop.f32.mrf.mxu0
  %v6822 = vadd.f32 %v6703, %v6821
  %v6823 = vpop.f32.mrf.mxu0
  %6824 = vmatprep.mubr.bf16.mxu0 %v1815
  %6825 = vmatmul.mubr.bf16.gmra.mxu0 %v1814
  %v6826 = vpop.f32.mrf.mxu0
  %v6827 = vadd.f32 %v6708, %v6826
  %v6828 = vpop.f32.mrf.mxu0
  %v6829 = vpop.f32.mrf.mxu0
  %v6830 = vadd.f32 %v6711, %v6829
  %v6831 = vpop.f32.mrf.mxu0
  %6832 = vmatprep.mubr.bf16.mxu0 %v1837
  %6833 = vmatmul.mubr.bf16.gmra.mxu0 %v1836
  %v6834 = vpop.f32.mrf.mxu0
  %v6835 = vadd.f32 %v6716, %v6834
  %v6836 = vpop.f32.mrf.mxu0
  %v6837 = vpop.f32.mrf.mxu0
  %v6838 = vadd.f32 %v6719, %v6837
  %v6839 = vpop.f32.mrf.mxu0
  %6840 = vmatprep.mubr.bf16.mxu0 %v1859
  %6841 = vmatmul.mubr.bf16.gmra.mxu0 %v1858
  %v6842 = vpop.f32.mrf.mxu0
  %v6843 = vadd.f32 %v6724, %v6842
  %v6844 = vpop.f32.mrf.mxu0
  %v6845 = vpop.f32.mrf.mxu0
  %v6846 = vadd.f32 %v6727, %v6845
  %v6847 = vpop.f32.mrf.mxu0
  %6848 = vmatprep.mubr.bf16.mxu0 %v1881
  %6849 = vmatmul.mubr.bf16.gmra.mxu0 %v1880
  %v6850 = vpop.f32.mrf.mxu0
  %v6851 = vadd.f32 %v6732, %v6850
  %v6852 = vpop.f32.mrf.mxu0
  %v6853 = vpop.f32.mrf.mxu0
  %v6854 = vadd.f32 %v6735, %v6853
  %v6855 = vpop.f32.mrf.mxu0
  %6856 = vmatprep.mubr.bf16.mxu0 %v1903
  %6857 = vmatmul.mubr.bf16.gmra.mxu0 %v1902
  %v6858 = vpop.f32.mrf.mxu0
  %v6859 = vadd.f32 %v6740, %v6858
  %v6860 = vpop.f32.mrf.mxu0
  %v6861 = vpop.f32.mrf.mxu0
  %v6862 = vpop.f32.mrf.mxu0
  %6863 = vdwg.mxu0
  %6864 = vmatprep.subr.bf16.mxu0 0
  %6865 = vmatpush1.bf16.msra.mxu0 %v4089
  %6866 = vmatprep.subr.bf16.mxu0 0
  %6867 = vmatpush1.bf16.msra.mxu0 %v4086
  %6868 = vmatprep.subr.bf16.mxu0 0
  %6869 = vmatpush1.bf16.msra.mxu0 %v4083
  %6870 = vmatprep.subr.bf16.mxu0 0
  %6871 = vmatpush1.bf16.msra.mxu0 %v4080
  %6872 = vmatprep.subr.bf16.mxu0 0
  %6873 = vmatpush1.bf16.msra.mxu0 %v4077
  %6874 = vmatprep.subr.bf16.mxu0 0
  %6875 = vmatpush1.bf16.msra.mxu0 %v4074
  %6876 = vmatprep.subr.bf16.mxu0 0
  %6877 = vmatpush1.bf16.msra.mxu0 %v4071
  %6878 = vmatprep.subr.bf16.mxu0 0
  %6879 = vmatpush1.bf16.msra.mxu0 %v4068
  %6880 = vmatprep.subr.bf16.mxu0 0
  %6881 = vmatpush2.bf16.msra.mxu0 %v4113
  %6882 = vmatprep.subr.bf16.mxu0 0
  %6883 = vmatpush2.bf16.msra.mxu0 %v4110
  %6884 = vmatprep.subr.bf16.mxu0 0
  %6885 = vmatpush2.bf16.msra.mxu0 %v4107
  %6886 = vmatprep.subr.bf16.mxu0 0
  %6887 = vmatpush2.bf16.msra.mxu0 %v4104
  %6888 = vmatprep.subr.bf16.mxu0 0
  %6889 = vmatpush2.bf16.msra.mxu0 %v4101
  %6890 = vmatprep.subr.bf16.mxu0 0
  %6891 = vmatpush2.bf16.msra.mxu0 %v4098
  %6892 = vmatprep.subr.bf16.mxu0 0
  %6893 = vmatpush2.bf16.msra.mxu0 %v4095
  %6894 = vmatprep.subr.bf16.mxu0 0
  %6895 = vmatpush2.bf16.msra.mxu0 %v4092
  %6896 = vmatprep.mubr.bf16.mxu0 %v1685
  %6897 = vmatmul.mubr.bf16.gmra.mxu0 %v1684
  %v6898 = vpop.f32.mrf.mxu0
  %v6899 = vadd.f32 %v6780, %v6898
  %v6900 = vpop.f32.mrf.mxu0
  %v6901 = vpop.f32.mrf.mxu0
  %v6902 = vadd.f32 %v6783, %v6901
  %v6903 = vpop.f32.mrf.mxu0
  %6904 = vmatprep.mubr.bf16.mxu0 %v1707
  %6905 = vmatmul.mubr.bf16.gmra.mxu0 %v1706
  %v6906 = vpop.f32.mrf.mxu0
  %v6907 = vadd.f32 %v6788, %v6906
  %v6908 = vpop.f32.mrf.mxu0
  %v6909 = vpop.f32.mrf.mxu0
  %v6910 = vadd.f32 %v6791, %v6909
  %v6911 = vpop.f32.mrf.mxu0
  %6912 = vmatprep.mubr.bf16.mxu0 %v1729
  %6913 = vmatmul.mubr.bf16.gmra.mxu0 %v1728
  %v6914 = vpop.f32.mrf.mxu0
  %v6915 = vadd.f32 %v6796, %v6914
  %v6916 = vpop.f32.mrf.mxu0
  %v6917 = vpop.f32.mrf.mxu0
  %v6918 = vadd.f32 %v6799, %v6917
  %v6919 = vpop.f32.mrf.mxu0
  %6920 = vmatprep.mubr.bf16.mxu0 %v1751
  %6921 = vmatmul.mubr.bf16.gmra.mxu0 %v1750
  %v6922 = vpop.f32.mrf.mxu0
  %v6923 = vadd.f32 %v6804, %v6922
  %v6924 = vpop.f32.mrf.mxu0
  %v6925 = vpop.f32.mrf.mxu0
  %v6926 = vadd.f32 %v6807, %v6925
  %v6927 = vpop.f32.mrf.mxu0
  %6928 = vmatprep.mubr.bf16.mxu0 %v1773
  %6929 = vmatmul.mubr.bf16.gmra.mxu0 %v1772
  %v6930 = vpop.f32.mrf.mxu0
  %v6931 = vadd.f32 %v6812, %v6930
  %v6932 = vpop.f32.mrf.mxu0
  %v6933 = vpop.f32.mrf.mxu0
  %v6934 = vadd.f32 %v6815, %v6933
  %v6935 = vpop.f32.mrf.mxu0
  %6936 = vmatprep.mubr.bf16.mxu0 %v1795
  %6937 = vmatmul.mubr.bf16.gmra.mxu0 %v1794
  %v6938 = vpop.f32.mrf.mxu0
  %v6939 = vpop.f32.mrf.mxu0
  %v6940 = vpop.f32.mrf.mxu0
  %v6941 = vadd.f32 %v6822, %v6940
  %v6942 = vpop.f32.mrf.mxu0
  %6943 = vmatprep.mubr.bf16.mxu0 %v1817
  %6944 = vmatmul.mubr.bf16.gmra.mxu0 %v1816
  %v6945 = vpop.f32.mrf.mxu0
  %v6946 = vadd.f32 %v6827, %v6945
  %v6947 = vpop.f32.mrf.mxu0
  %v6948 = vpop.f32.mrf.mxu0
  %v6949 = vadd.f32 %v6830, %v6948
  %v6950 = vpop.f32.mrf.mxu0
  %6951 = vmatprep.mubr.bf16.mxu0 %v1839
  %6952 = vmatmul.mubr.bf16.gmra.mxu0 %v1838
  %v6953 = vpop.f32.mrf.mxu0
  %v6954 = vadd.f32 %v6835, %v6953
  %v6955 = vpop.f32.mrf.mxu0
  %v6956 = vpop.f32.mrf.mxu0
  %v6957 = vadd.f32 %v6838, %v6956
  %v6958 = vpop.f32.mrf.mxu0
  %6959 = vmatprep.mubr.bf16.mxu0 %v1861
  %6960 = vmatmul.mubr.bf16.gmra.mxu0 %v1860
  %v6961 = vpop.f32.mrf.mxu0
  %v6962 = vadd.f32 %v6843, %v6961
  %v6963 = vpop.f32.mrf.mxu0
  %v6964 = vpop.f32.mrf.mxu0
  %v6965 = vadd.f32 %v6846, %v6964
  %v6966 = vpop.f32.mrf.mxu0
  %6967 = vmatprep.mubr.bf16.mxu0 %v1883
  %6968 = vmatmul.mubr.bf16.gmra.mxu0 %v1882
  %v6969 = vpop.f32.mrf.mxu0
  %v6970 = vadd.f32 %v6851, %v6969
  %v6971 = vpop.f32.mrf.mxu0
  %v6972 = vpop.f32.mrf.mxu0
  %v6973 = vadd.f32 %v6854, %v6972
  %v6974 = vpop.f32.mrf.mxu0
  %6975 = vmatprep.mubr.bf16.mxu0 %v1905
  %6976 = vmatmul.mubr.bf16.gmra.mxu0 %v1904
  %v6977 = vpop.f32.mrf.mxu0
  %v6978 = vadd.f32 %v6859, %v6977
  %v6979 = vpop.f32.mrf.mxu0
  %v6980 = vpop.f32.mrf.mxu0
  %v6981 = vpop.f32.mrf.mxu0
  %6982 = vdwg.mxu0
  %6983 = vmatprep.subr.bf16.mxu0 0
  %6984 = vmatpush1.bf16.msra.mxu0 %v4137
  %6985 = vmatprep.subr.bf16.mxu0 0
  %6986 = vmatpush1.bf16.msra.mxu0 %v4134
  %6987 = vmatprep.subr.bf16.mxu0 0
  %6988 = vmatpush1.bf16.msra.mxu0 %v4131
  %6989 = vmatprep.subr.bf16.mxu0 0
  %6990 = vmatpush1.bf16.msra.mxu0 %v4128
  %6991 = vmatprep.subr.bf16.mxu0 0
  %6992 = vmatpush1.bf16.msra.mxu0 %v4125
  %6993 = vmatprep.subr.bf16.mxu0 0
  %6994 = vmatpush1.bf16.msra.mxu0 %v4122
  %6995 = vmatprep.subr.bf16.mxu0 0
  %6996 = vmatpush1.bf16.msra.mxu0 %v4119
  %6997 = vmatprep.subr.bf16.mxu0 0
  %6998 = vmatpush1.bf16.msra.mxu0 %v4116
  %6999 = vmatprep.subr.bf16.mxu0 0
  %7000 = vmatpush2.bf16.msra.mxu0 %v4161
  %7001 = vmatprep.subr.bf16.mxu0 0
  %7002 = vmatpush2.bf16.msra.mxu0 %v4158
  %7003 = vmatprep.subr.bf16.mxu0 0
  %7004 = vmatpush2.bf16.msra.mxu0 %v4155
  %7005 = vmatprep.subr.bf16.mxu0 0
  %7006 = vmatpush2.bf16.msra.mxu0 %v4152
  %7007 = vmatprep.subr.bf16.mxu0 0
  %7008 = vmatpush2.bf16.msra.mxu0 %v4149
  %7009 = vmatprep.subr.bf16.mxu0 0
  %7010 = vmatpush2.bf16.msra.mxu0 %v4146
  %7011 = vmatprep.subr.bf16.mxu0 0
  %7012 = vmatpush2.bf16.msra.mxu0 %v4143
  %7013 = vmatprep.subr.bf16.mxu0 0
  %7014 = vmatpush2.bf16.msra.mxu0 %v4140
  %7015 = vmatprep.mubr.bf16.mxu0 %v1687
  %7016 = vmatmul.mubr.bf16.gmra.mxu0 %v1686
  %v7017 = vpop.f32.mrf.mxu0
  %v7018 = vadd.f32 %v6899, %v7017
  %v7019 = vpop.f32.mrf.mxu0
  %v7020 = vpop.f32.mrf.mxu0
  %v7021 = vadd.f32 %v6902, %v7020
  %v7022 = vpop.f32.mrf.mxu0
  %7023 = vmatprep.mubr.bf16.mxu0 %v1709
  %7024 = vmatmul.mubr.bf16.gmra.mxu0 %v1708
  %v7025 = vpop.f32.mrf.mxu0
  %v7026 = vadd.f32 %v6907, %v7025
  %v7027 = vpop.f32.mrf.mxu0
  %v7028 = vpop.f32.mrf.mxu0
  %v7029 = vadd.f32 %v6910, %v7028
  %v7030 = vpop.f32.mrf.mxu0
  %7031 = vmatprep.mubr.bf16.mxu0 %v1731
  %7032 = vmatmul.mubr.bf16.gmra.mxu0 %v1730
  %v7033 = vpop.f32.mrf.mxu0
  %v7034 = vadd.f32 %v6915, %v7033
  %v7035 = vpop.f32.mrf.mxu0
  %v7036 = vpop.f32.mrf.mxu0
  %v7037 = vadd.f32 %v6918, %v7036
  %v7038 = vpop.f32.mrf.mxu0
  %7039 = vmatprep.mubr.bf16.mxu0 %v1753
  %7040 = vmatmul.mubr.bf16.gmra.mxu0 %v1752
  %v7041 = vpop.f32.mrf.mxu0
  %v7042 = vadd.f32 %v6923, %v7041
  %v7043 = vpop.f32.mrf.mxu0
  %v7044 = vpop.f32.mrf.mxu0
  %v7045 = vadd.f32 %v6926, %v7044
  %v7046 = vpop.f32.mrf.mxu0
  %7047 = vmatprep.mubr.bf16.mxu0 %v1775
  %7048 = vmatmul.mubr.bf16.gmra.mxu0 %v1774
  %v7049 = vpop.f32.mrf.mxu0
  %v7050 = vadd.f32 %v6931, %v7049
  %v7051 = vpop.f32.mrf.mxu0
  %v7052 = vpop.f32.mrf.mxu0
  %v7053 = vadd.f32 %v6934, %v7052
  %v7054 = vpop.f32.mrf.mxu0
  %7055 = vmatprep.mubr.bf16.mxu0 %v1797
  %7056 = vmatmul.mubr.bf16.gmra.mxu0 %v1796
  %v7057 = vpop.f32.mrf.mxu0
  %v7058 = vpop.f32.mrf.mxu0
  %v7059 = vpop.f32.mrf.mxu0
  %v7060 = vadd.f32 %v6941, %v7059
  %v7061 = vpop.f32.mrf.mxu0
  %7062 = vmatprep.mubr.bf16.mxu0 %v1819
  %7063 = vmatmul.mubr.bf16.gmra.mxu0 %v1818
  %v7064 = vpop.f32.mrf.mxu0
  %v7065 = vadd.f32 %v6946, %v7064
  %v7066 = vpop.f32.mrf.mxu0
  %v7067 = vpop.f32.mrf.mxu0
  %v7068 = vadd.f32 %v6949, %v7067
  %v7069 = vpop.f32.mrf.mxu0
  %7070 = vmatprep.mubr.bf16.mxu0 %v1841
  %7071 = vmatmul.mubr.bf16.gmra.mxu0 %v1840
  %v7072 = vpop.f32.mrf.mxu0
  %v7073 = vadd.f32 %v6954, %v7072
  %v7074 = vpop.f32.mrf.mxu0
  %v7075 = vpop.f32.mrf.mxu0
  %v7076 = vadd.f32 %v6957, %v7075
  %v7077 = vpop.f32.mrf.mxu0
  %7078 = vmatprep.mubr.bf16.mxu0 %v1863
  %7079 = vmatmul.mubr.bf16.gmra.mxu0 %v1862
  %v7080 = vpop.f32.mrf.mxu0
  %v7081 = vadd.f32 %v6962, %v7080
  %v7082 = vpop.f32.mrf.mxu0
  %v7083 = vpop.f32.mrf.mxu0
  %v7084 = vadd.f32 %v6965, %v7083
  %v7085 = vpop.f32.mrf.mxu0
  %7086 = vmatprep.mubr.bf16.mxu0 %v1885
  %7087 = vmatmul.mubr.bf16.gmra.mxu0 %v1884
  %v7088 = vpop.f32.mrf.mxu0
  %v7089 = vadd.f32 %v6970, %v7088
  %v7090 = vpop.f32.mrf.mxu0
  %v7091 = vpop.f32.mrf.mxu0
  %v7092 = vadd.f32 %v6973, %v7091
  %v7093 = vpop.f32.mrf.mxu0
  %7094 = vmatprep.mubr.bf16.mxu0 %v1907
  %7095 = vmatmul.mubr.bf16.gmra.mxu0 %v1906
  %v7096 = vpop.f32.mrf.mxu0
  %v7097 = vadd.f32 %v6978, %v7096
  %v7098 = vpop.f32.mrf.mxu0
  %v7099 = vpop.f32.mrf.mxu0
  %v7100 = vpop.f32.mrf.mxu0
  %7101 = vdwg.mxu0
  %7102 = vmatprep.subr.bf16.mxu0 0
  %7103 = vmatpush1.bf16.msra.mxu0 %v4185
  %7104 = vmatprep.subr.bf16.mxu0 0
  %7105 = vmatpush1.bf16.msra.mxu0 %v4182
  %7106 = vmatprep.subr.bf16.mxu0 0
  %7107 = vmatpush1.bf16.msra.mxu0 %v4179
  %7108 = vmatprep.subr.bf16.mxu0 0
  %7109 = vmatpush1.bf16.msra.mxu0 %v4176
  %7110 = vmatprep.subr.bf16.mxu0 0
  %7111 = vmatpush1.bf16.msra.mxu0 %v4173
  %7112 = vmatprep.subr.bf16.mxu0 0
  %7113 = vmatpush1.bf16.msra.mxu0 %v4170
  %7114 = vmatprep.subr.bf16.mxu0 0
  %7115 = vmatpush1.bf16.msra.mxu0 %v4167
  %7116 = vmatprep.subr.bf16.mxu0 0
  %7117 = vmatpush1.bf16.msra.mxu0 %v4164
  %7118 = vmatprep.subr.bf16.mxu0 0
  %7119 = vmatpush2.bf16.msra.mxu0 %v4209
  %7120 = vmatprep.subr.bf16.mxu0 0
  %7121 = vmatpush2.bf16.msra.mxu0 %v4206
  %7122 = vmatprep.subr.bf16.mxu0 0
  %7123 = vmatpush2.bf16.msra.mxu0 %v4203
  %7124 = vmatprep.subr.bf16.mxu0 0
  %7125 = vmatpush2.bf16.msra.mxu0 %v4200
  %7126 = vmatprep.subr.bf16.mxu0 0
  %7127 = vmatpush2.bf16.msra.mxu0 %v4197
  %7128 = vmatprep.subr.bf16.mxu0 0
  %7129 = vmatpush2.bf16.msra.mxu0 %v4194
  %7130 = vmatprep.subr.bf16.mxu0 0
  %7131 = vmatpush2.bf16.msra.mxu0 %v4191
  %7132 = vmatprep.subr.bf16.mxu0 0
  %7133 = vmatpush2.bf16.msra.mxu0 %v4188
  %7134 = vmatprep.mubr.bf16.mxu0 %v1689
  %7135 = vmatmul.mubr.bf16.gmra.mxu0 %v1688
  %v7136 = vpop.f32.mrf.mxu0
  %v7137 = vadd.f32 %v7018, %v7136
  %v7138 = vpop.f32.mrf.mxu0
  %v7139 = vpop.f32.mrf.mxu0
  %v7140 = vadd.f32 %v7021, %v7139
  %v7141 = vpop.f32.mrf.mxu0
  %7142 = vmatprep.mubr.bf16.mxu0 %v1711
  %7143 = vmatmul.mubr.bf16.gmra.mxu0 %v1710
  %v7144 = vpop.f32.mrf.mxu0
  %v7145 = vadd.f32 %v7026, %v7144
  %v7146 = vpop.f32.mrf.mxu0
  %v7147 = vpop.f32.mrf.mxu0
  %v7148 = vadd.f32 %v7029, %v7147
  %v7149 = vpop.f32.mrf.mxu0
  %7150 = vmatprep.mubr.bf16.mxu0 %v1733
  %7151 = vmatmul.mubr.bf16.gmra.mxu0 %v1732
  %v7152 = vpop.f32.mrf.mxu0
  %v7153 = vadd.f32 %v7034, %v7152
  %v7154 = vpop.f32.mrf.mxu0
  %v7155 = vpop.f32.mrf.mxu0
  %v7156 = vadd.f32 %v7037, %v7155
  %v7157 = vpop.f32.mrf.mxu0
  %7158 = vmatprep.mubr.bf16.mxu0 %v1755
  %7159 = vmatmul.mubr.bf16.gmra.mxu0 %v1754
  %v7160 = vpop.f32.mrf.mxu0
  %v7161 = vadd.f32 %v7042, %v7160
  %v7162 = vpop.f32.mrf.mxu0
  %v7163 = vpop.f32.mrf.mxu0
  %v7164 = vadd.f32 %v7045, %v7163
  %v7165 = vpop.f32.mrf.mxu0
  %7166 = vmatprep.mubr.bf16.mxu0 %v1777
  %7167 = vmatmul.mubr.bf16.gmra.mxu0 %v1776
  %v7168 = vpop.f32.mrf.mxu0
  %v7169 = vadd.f32 %v7050, %v7168
  %v7170 = vpop.f32.mrf.mxu0
  %v7171 = vpop.f32.mrf.mxu0
  %v7172 = vadd.f32 %v7053, %v7171
  %v7173 = vpop.f32.mrf.mxu0
  %7174 = vmatprep.mubr.bf16.mxu0 %v1799
  %7175 = vmatmul.mubr.bf16.gmra.mxu0 %v1798
  %v7176 = vpop.f32.mrf.mxu0
  %v7177 = vpop.f32.mrf.mxu0
  %v7178 = vpop.f32.mrf.mxu0
  %v7179 = vadd.f32 %v7060, %v7178
  %v7180 = vpop.f32.mrf.mxu0
  %7181 = vmatprep.mubr.bf16.mxu0 %v1821
  %7182 = vmatmul.mubr.bf16.gmra.mxu0 %v1820
  %v7183 = vpop.f32.mrf.mxu0
  %v7184 = vadd.f32 %v7065, %v7183
  %v7185 = vpop.f32.mrf.mxu0
  %v7186 = vpop.f32.mrf.mxu0
  %v7187 = vadd.f32 %v7068, %v7186
  %v7188 = vpop.f32.mrf.mxu0
  %7189 = vmatprep.mubr.bf16.mxu0 %v1843
  %7190 = vmatmul.mubr.bf16.gmra.mxu0 %v1842
  %v7191 = vpop.f32.mrf.mxu0
  %v7192 = vadd.f32 %v7073, %v7191
  %v7193 = vpop.f32.mrf.mxu0
  %v7194 = vpop.f32.mrf.mxu0
  %v7195 = vadd.f32 %v7076, %v7194
  %v7196 = vpop.f32.mrf.mxu0
  %7197 = vmatprep.mubr.bf16.mxu0 %v1865
  %7198 = vmatmul.mubr.bf16.gmra.mxu0 %v1864
  %v7199 = vpop.f32.mrf.mxu0
  %v7200 = vadd.f32 %v7081, %v7199
  %v7201 = vpop.f32.mrf.mxu0
  %v7202 = vpop.f32.mrf.mxu0
  %v7203 = vadd.f32 %v7084, %v7202
  %v7204 = vpop.f32.mrf.mxu0
  %7205 = vmatprep.mubr.bf16.mxu0 %v1887
  %7206 = vmatmul.mubr.bf16.gmra.mxu0 %v1886
  %v7207 = vpop.f32.mrf.mxu0
  %v7208 = vadd.f32 %v7089, %v7207
  %v7209 = vpop.f32.mrf.mxu0
  %v7210 = vpop.f32.mrf.mxu0
  %v7211 = vadd.f32 %v7092, %v7210
  %v7212 = vpop.f32.mrf.mxu0
  %7213 = vmatprep.mubr.bf16.mxu0 %v1909
  %7214 = vmatmul.mubr.bf16.gmra.mxu0 %v1908
  %v7215 = vpop.f32.mrf.mxu0
  %v7216 = vadd.f32 %v7097, %v7215
  %v7217 = vpop.f32.mrf.mxu0
  %v7218 = vpop.f32.mrf.mxu0
  %v7219 = vpop.f32.mrf.mxu0
  %7220 = vdwg.mxu0
  %7221 = vmatprep.subr.bf16.mxu0 0
  %7222 = vmatpush1.bf16.msra.mxu0 %v4233
  %7223 = vmatprep.subr.bf16.mxu0 0
  %7224 = vmatpush1.bf16.msra.mxu0 %v4230
  %7225 = vmatprep.subr.bf16.mxu0 0
  %7226 = vmatpush1.bf16.msra.mxu0 %v4227
  %7227 = vmatprep.subr.bf16.mxu0 0
  %7228 = vmatpush1.bf16.msra.mxu0 %v4224
  %7229 = vmatprep.subr.bf16.mxu0 0
  %7230 = vmatpush1.bf16.msra.mxu0 %v4221
  %7231 = vmatprep.subr.bf16.mxu0 0
  %7232 = vmatpush1.bf16.msra.mxu0 %v4218
  %7233 = vmatprep.subr.bf16.mxu0 0
  %7234 = vmatpush1.bf16.msra.mxu0 %v4215
  %7235 = vmatprep.subr.bf16.mxu0 0
  %7236 = vmatpush1.bf16.msra.mxu0 %v4212
  %7237 = vmatprep.subr.bf16.mxu0 0
  %7238 = vmatpush2.bf16.msra.mxu0 %v4257
  %7239 = vmatprep.subr.bf16.mxu0 0
  %7240 = vmatpush2.bf16.msra.mxu0 %v4254
  %7241 = vmatprep.subr.bf16.mxu0 0
  %7242 = vmatpush2.bf16.msra.mxu0 %v4251
  %7243 = vmatprep.subr.bf16.mxu0 0
  %7244 = vmatpush2.bf16.msra.mxu0 %v4248
  %7245 = vmatprep.subr.bf16.mxu0 0
  %7246 = vmatpush2.bf16.msra.mxu0 %v4245
  %7247 = vmatprep.subr.bf16.mxu0 0
  %7248 = vmatpush2.bf16.msra.mxu0 %v4242
  %7249 = vmatprep.subr.bf16.mxu0 0
  %7250 = vmatpush2.bf16.msra.mxu0 %v4239
  %7251 = vmatprep.subr.bf16.mxu0 0
  %7252 = vmatpush2.bf16.msra.mxu0 %v4236
  %7253 = vmatprep.mubr.bf16.mxu0 %v1691
  %7254 = vmatmul.mubr.bf16.gmra.mxu0 %v1690
  %v7255 = vpop.f32.mrf.mxu0
  %v7256 = vadd.f32 %v7137, %v7255
  %v7257 = vpop.f32.mrf.mxu0
  %v7258 = vpop.f32.mrf.mxu0
  %v7259 = vadd.f32 %v7140, %v7258
  %v7260 = vpop.f32.mrf.mxu0
  %7261 = vmatprep.mubr.bf16.mxu0 %v1713
  %7262 = vmatmul.mubr.bf16.gmra.mxu0 %v1712
  %v7263 = vpop.f32.mrf.mxu0
  %v7264 = vadd.f32 %v7145, %v7263
  %v7265 = vpop.f32.mrf.mxu0
  %v7266 = vpop.f32.mrf.mxu0
  %v7267 = vadd.f32 %v7148, %v7266
  %v7268 = vpop.f32.mrf.mxu0
  %7269 = vmatprep.mubr.bf16.mxu0 %v1735
  %7270 = vmatmul.mubr.bf16.gmra.mxu0 %v1734
  %v7271 = vpop.f32.mrf.mxu0
  %v7272 = vadd.f32 %v7153, %v7271
  %v7273 = vpop.f32.mrf.mxu0
  %v7274 = vpop.f32.mrf.mxu0
  %v7275 = vadd.f32 %v7156, %v7274
  %v7276 = vpop.f32.mrf.mxu0
  %7277 = vmatprep.mubr.bf16.mxu0 %v1757
  %7278 = vmatmul.mubr.bf16.gmra.mxu0 %v1756
  %v7279 = vpop.f32.mrf.mxu0
  %v7280 = vadd.f32 %v7161, %v7279
  %v7281 = vpop.f32.mrf.mxu0
  %v7282 = vpop.f32.mrf.mxu0
  %v7283 = vadd.f32 %v7164, %v7282
  %v7284 = vpop.f32.mrf.mxu0
  %7285 = vmatprep.mubr.bf16.mxu0 %v1779
  %7286 = vmatmul.mubr.bf16.gmra.mxu0 %v1778
  %v7287 = vpop.f32.mrf.mxu0
  %v7288 = vadd.f32 %v7169, %v7287
  %v7289 = vpop.f32.mrf.mxu0
  %v7290 = vpop.f32.mrf.mxu0
  %v7291 = vadd.f32 %v7172, %v7290
  %v7292 = vpop.f32.mrf.mxu0
  %7293 = vmatprep.mubr.bf16.mxu0 %v1801
  %7294 = vmatmul.mubr.bf16.gmra.mxu0 %v1800
  %v7295 = vpop.f32.mrf.mxu0
  %v7296 = vpop.f32.mrf.mxu0
  %v7297 = vpop.f32.mrf.mxu0
  %v7298 = vadd.f32 %v7179, %v7297
  %v7299 = vpop.f32.mrf.mxu0
  %7300 = vmatprep.mubr.bf16.mxu0 %v1823
  %7301 = vmatmul.mubr.bf16.gmra.mxu0 %v1822
  %v7302 = vpop.f32.mrf.mxu0
  %v7303 = vadd.f32 %v7184, %v7302
  %v7304 = vpop.f32.mrf.mxu0
  %v7305 = vpop.f32.mrf.mxu0
  %v7306 = vadd.f32 %v7187, %v7305
  %v7307 = vpop.f32.mrf.mxu0
  %7308 = vmatprep.mubr.bf16.mxu0 %v1845
  %7309 = vmatmul.mubr.bf16.gmra.mxu0 %v1844
  %v7310 = vpop.f32.mrf.mxu0
  %v7311 = vadd.f32 %v7192, %v7310
  %v7312 = vpop.f32.mrf.mxu0
  %v7313 = vpop.f32.mrf.mxu0
  %v7314 = vadd.f32 %v7195, %v7313
  %v7315 = vpop.f32.mrf.mxu0
  %7316 = vmatprep.mubr.bf16.mxu0 %v1867
  %7317 = vmatmul.mubr.bf16.gmra.mxu0 %v1866
  %v7318 = vpop.f32.mrf.mxu0
  %v7319 = vadd.f32 %v7200, %v7318
  %v7320 = vpop.f32.mrf.mxu0
  %v7321 = vpop.f32.mrf.mxu0
  %v7322 = vadd.f32 %v7203, %v7321
  %v7323 = vpop.f32.mrf.mxu0
  %7324 = vmatprep.mubr.bf16.mxu0 %v1889
  %7325 = vmatmul.mubr.bf16.gmra.mxu0 %v1888
  %v7326 = vpop.f32.mrf.mxu0
  %v7327 = vadd.f32 %v7208, %v7326
  %v7328 = vpop.f32.mrf.mxu0
  %v7329 = vpop.f32.mrf.mxu0
  %v7330 = vadd.f32 %v7211, %v7329
  %v7331 = vpop.f32.mrf.mxu0
  %7332 = vmatprep.mubr.bf16.mxu0 %v1911
  %7333 = vmatmul.mubr.bf16.gmra.mxu0 %v1910
  %v7334 = vpop.f32.mrf.mxu0
  %v7335 = vadd.f32 %v7216, %v7334
  %v7336 = vpop.f32.mrf.mxu0
  %v7337 = vpop.f32.mrf.mxu0
  %v7338 = vpop.f32.mrf.mxu0
  %7339 = vdwg.mxu0
  %7340 = vmatprep.subr.bf16.mxu0 0
  %7341 = vmatpush1.bf16.msra.mxu0 %v4281
  %7342 = vmatprep.subr.bf16.mxu0 0
  %7343 = vmatpush1.bf16.msra.mxu0 %v4278
  %7344 = vmatprep.subr.bf16.mxu0 0
  %7345 = vmatpush1.bf16.msra.mxu0 %v4275
  %7346 = vmatprep.subr.bf16.mxu0 0
  %7347 = vmatpush1.bf16.msra.mxu0 %v4272
  %7348 = vmatprep.subr.bf16.mxu0 0
  %7349 = vmatpush1.bf16.msra.mxu0 %v4269
  %7350 = vmatprep.subr.bf16.mxu0 0
  %7351 = vmatpush1.bf16.msra.mxu0 %v4266
  %7352 = vmatprep.subr.bf16.mxu0 0
  %7353 = vmatpush1.bf16.msra.mxu0 %v4263
  %7354 = vmatprep.subr.bf16.mxu0 0
  %7355 = vmatpush1.bf16.msra.mxu0 %v4260
  %7356 = vmatprep.subr.bf16.mxu0 0
  %7357 = vmatpush2.bf16.msra.mxu0 %v4305
  %7358 = vmatprep.subr.bf16.mxu0 0
  %7359 = vmatpush2.bf16.msra.mxu0 %v4302
  %7360 = vmatprep.subr.bf16.mxu0 0
  %7361 = vmatpush2.bf16.msra.mxu0 %v4299
  %7362 = vmatprep.subr.bf16.mxu0 0
  %7363 = vmatpush2.bf16.msra.mxu0 %v4296
  %7364 = vmatprep.subr.bf16.mxu0 0
  %7365 = vmatpush2.bf16.msra.mxu0 %v4293
  %7366 = vmatprep.subr.bf16.mxu0 0
  %7367 = vmatpush2.bf16.msra.mxu0 %v4290
  %7368 = vmatprep.subr.bf16.mxu0 0
  %7369 = vmatpush2.bf16.msra.mxu0 %v4287
  %7370 = vmatprep.subr.bf16.mxu0 0
  %7371 = vmatpush2.bf16.msra.mxu0 %v4284
  %7372 = vmatprep.mubr.bf16.mxu0 %v1693
  %7373 = vmatmul.mubr.bf16.gmra.mxu0 %v1692
  %v7374 = vpop.f32.mrf.mxu0
  %v7375 = vadd.f32 %v7256, %v7374
  %v7376 = vpop.f32.mrf.mxu0
  %v7377 = vpop.f32.mrf.mxu0
  %v7378 = vadd.f32 %v7259, %v7377
  %v7379 = vpop.f32.mrf.mxu0
  %7380 = vmatprep.mubr.bf16.mxu0 %v1715
  %7381 = vmatmul.mubr.bf16.gmra.mxu0 %v1714
  %v7382 = vpop.f32.mrf.mxu0
  %v7383 = vadd.f32 %v7264, %v7382
  %v7384 = vpop.f32.mrf.mxu0
  %v7385 = vpop.f32.mrf.mxu0
  %v7386 = vadd.f32 %v7267, %v7385
  %v7387 = vpop.f32.mrf.mxu0
  %7388 = vmatprep.mubr.bf16.mxu0 %v1737
  %7389 = vmatmul.mubr.bf16.gmra.mxu0 %v1736
  %v7390 = vpop.f32.mrf.mxu0
  %v7391 = vadd.f32 %v7272, %v7390
  %v7392 = vpop.f32.mrf.mxu0
  %v7393 = vpop.f32.mrf.mxu0
  %v7394 = vadd.f32 %v7275, %v7393
  %v7395 = vpop.f32.mrf.mxu0
  %7396 = vmatprep.mubr.bf16.mxu0 %v1759
  %7397 = vmatmul.mubr.bf16.gmra.mxu0 %v1758
  %v7398 = vpop.f32.mrf.mxu0
  %v7399 = vadd.f32 %v7280, %v7398
  %v7400 = vpop.f32.mrf.mxu0
  %v7401 = vpop.f32.mrf.mxu0
  %v7402 = vadd.f32 %v7283, %v7401
  %v7403 = vpop.f32.mrf.mxu0
  %7404 = vmatprep.mubr.bf16.mxu0 %v1781
  %7405 = vmatmul.mubr.bf16.gmra.mxu0 %v1780
  %v7406 = vpop.f32.mrf.mxu0
  %v7407 = vadd.f32 %v7288, %v7406
  %v7408 = vpop.f32.mrf.mxu0
  %v7409 = vpop.f32.mrf.mxu0
  %v7410 = vadd.f32 %v7291, %v7409
  %v7411 = vpop.f32.mrf.mxu0
  %7412 = vmatprep.mubr.bf16.mxu0 %v1803
  %7413 = vmatmul.mubr.bf16.gmra.mxu0 %v1802
  %v7414 = vpop.f32.mrf.mxu0
  %v7415 = vpop.f32.mrf.mxu0
  %v7416 = vpop.f32.mrf.mxu0
  %v7417 = vadd.f32 %v7298, %v7416
  %v7418 = vpop.f32.mrf.mxu0
  %7419 = vmatprep.mubr.bf16.mxu0 %v1825
  %7420 = vmatmul.mubr.bf16.gmra.mxu0 %v1824
  %v7421 = vpop.f32.mrf.mxu0
  %v7422 = vadd.f32 %v7303, %v7421
  %v7423 = vpop.f32.mrf.mxu0
  %v7424 = vpop.f32.mrf.mxu0
  %v7425 = vadd.f32 %v7306, %v7424
  %v7426 = vpop.f32.mrf.mxu0
  %7427 = vmatprep.mubr.bf16.mxu0 %v1847
  %7428 = vmatmul.mubr.bf16.gmra.mxu0 %v1846
  %v7429 = vpop.f32.mrf.mxu0
  %v7430 = vadd.f32 %v7311, %v7429
  %v7431 = vpop.f32.mrf.mxu0
  %v7432 = vpop.f32.mrf.mxu0
  %v7433 = vadd.f32 %v7314, %v7432
  %v7434 = vpop.f32.mrf.mxu0
  %7435 = vmatprep.mubr.bf16.mxu0 %v1869
  %7436 = vmatmul.mubr.bf16.gmra.mxu0 %v1868
  %v7437 = vpop.f32.mrf.mxu0
  %v7438 = vadd.f32 %v7319, %v7437
  %v7439 = vpop.f32.mrf.mxu0
  %v7440 = vpop.f32.mrf.mxu0
  %v7441 = vadd.f32 %v7322, %v7440
  %v7442 = vpop.f32.mrf.mxu0
  %7443 = vmatprep.mubr.bf16.mxu0 %v1891
  %7444 = vmatmul.mubr.bf16.gmra.mxu0 %v1890
  %v7445 = vpop.f32.mrf.mxu0
  %v7446 = vadd.f32 %v7327, %v7445
  %v7447 = vpop.f32.mrf.mxu0
  %v7448 = vpop.f32.mrf.mxu0
  %v7449 = vadd.f32 %v7330, %v7448
  %v7450 = vpop.f32.mrf.mxu0
  %7451 = vmatprep.mubr.bf16.mxu0 %v1913
  %7452 = vmatmul.mubr.bf16.gmra.mxu0 %v1912
  %v7453 = vpop.f32.mrf.mxu0
  %v7454 = vadd.f32 %v7335, %v7453
  %v7455 = vpop.f32.mrf.mxu0
  %v7456 = vpop.f32.mrf.mxu0
  %v7457 = vpop.f32.mrf.mxu0
  %7458 = vdwg.mxu0
  %7459 = vmatprep.subr.bf16.mxu0 0
  %7460 = vmatpush1.bf16.msra.mxu0 %v4329
  %7461 = vmatprep.subr.bf16.mxu0 0
  %7462 = vmatpush1.bf16.msra.mxu0 %v4326
  %7463 = vmatprep.subr.bf16.mxu0 0
  %7464 = vmatpush1.bf16.msra.mxu0 %v4323
  %7465 = vmatprep.subr.bf16.mxu0 0
  %7466 = vmatpush1.bf16.msra.mxu0 %v4320
  %7467 = vmatprep.subr.bf16.mxu0 0
  %7468 = vmatpush1.bf16.msra.mxu0 %v4317
  %7469 = vmatprep.subr.bf16.mxu0 0
  %7470 = vmatpush1.bf16.msra.mxu0 %v4314
  %7471 = vmatprep.subr.bf16.mxu0 0
  %7472 = vmatpush1.bf16.msra.mxu0 %v4311
  %7473 = vmatprep.subr.bf16.mxu0 0
  %7474 = vmatpush1.bf16.msra.mxu0 %v4308
  %7475 = vmatprep.subr.bf16.mxu0 0
  %7476 = vmatpush2.bf16.msra.mxu0 %v4353
  %7477 = vmatprep.subr.bf16.mxu0 0
  %7478 = vmatpush2.bf16.msra.mxu0 %v4350
  %7479 = vmatprep.subr.bf16.mxu0 0
  %7480 = vmatpush2.bf16.msra.mxu0 %v4347
  %7481 = vmatprep.subr.bf16.mxu0 0
  %7482 = vmatpush2.bf16.msra.mxu0 %v4344
  %7483 = vmatprep.subr.bf16.mxu0 0
  %7484 = vmatpush2.bf16.msra.mxu0 %v4341
  %7485 = vmatprep.subr.bf16.mxu0 0
  %7486 = vmatpush2.bf16.msra.mxu0 %v4338
  %7487 = vmatprep.subr.bf16.mxu0 0
  %7488 = vmatpush2.bf16.msra.mxu0 %v4335
  %7489 = vmatprep.subr.bf16.mxu0 0
  %7490 = vmatpush2.bf16.msra.mxu0 %v4332
  %7491 = vmatprep.mubr.bf16.mxu0 %v1695
  %7492 = vmatmul.mubr.bf16.gmra.mxu0 %v1694
  %v7493 = vpop.f32.mrf.mxu0
  %v7494 = vadd.f32 %v7375, %v7493
  %v7495 = vpop.f32.mrf.mxu0
  %v7496 = vpop.f32.mrf.mxu0
  %v7497 = vadd.f32 %v7378, %v7496
  %v7498 = vpop.f32.mrf.mxu0
  %7499 = vmatprep.mubr.bf16.mxu0 %v1717
  %7500 = vmatmul.mubr.bf16.gmra.mxu0 %v1716
  %v7501 = vpop.f32.mrf.mxu0
  %v7502 = vadd.f32 %v7383, %v7501
  %v7503 = vpop.f32.mrf.mxu0
  %v7504 = vpop.f32.mrf.mxu0
  %v7505 = vadd.f32 %v7386, %v7504
  %v7506 = vpop.f32.mrf.mxu0
  %7507 = vmatprep.mubr.bf16.mxu0 %v1739
  %7508 = vmatmul.mubr.bf16.gmra.mxu0 %v1738
  %v7509 = vpop.f32.mrf.mxu0
  %v7510 = vadd.f32 %v7391, %v7509
  %v7511 = vpop.f32.mrf.mxu0
  %v7512 = vpop.f32.mrf.mxu0
  %v7513 = vadd.f32 %v7394, %v7512
  %v7514 = vpop.f32.mrf.mxu0
  %7515 = vmatprep.mubr.bf16.mxu0 %v1761
  %7516 = vmatmul.mubr.bf16.gmra.mxu0 %v1760
  %v7517 = vpop.f32.mrf.mxu0
  %v7518 = vadd.f32 %v7399, %v7517
  %v7519 = vpop.f32.mrf.mxu0
  %v7520 = vpop.f32.mrf.mxu0
  %v7521 = vadd.f32 %v7402, %v7520
  %v7522 = vpop.f32.mrf.mxu0
  %7523 = vmatprep.mubr.bf16.mxu0 %v1783
  %7524 = vmatmul.mubr.bf16.gmra.mxu0 %v1782
  %v7525 = vpop.f32.mrf.mxu0
  %v7526 = vadd.f32 %v7407, %v7525
  %v7527 = vpop.f32.mrf.mxu0
  %v7528 = vpop.f32.mrf.mxu0
  %v7529 = vadd.f32 %v7410, %v7528
  %v7530 = vpop.f32.mrf.mxu0
  %7531 = vmatprep.mubr.bf16.mxu0 %v1805
  %7532 = vmatmul.mubr.bf16.gmra.mxu0 %v1804
  %v7533 = vpop.f32.mrf.mxu0
  %v7534 = vpop.f32.mrf.mxu0
  %v7535 = vpop.f32.mrf.mxu0
  %v7536 = vadd.f32 %v7417, %v7535
  %v7537 = vpop.f32.mrf.mxu0
  %7538 = vmatprep.mubr.bf16.mxu0 %v1827
  %7539 = vmatmul.mubr.bf16.gmra.mxu0 %v1826
  %v7540 = vpop.f32.mrf.mxu0
  %v7541 = vadd.f32 %v7422, %v7540
  %v7542 = vpop.f32.mrf.mxu0
  %v7543 = vpop.f32.mrf.mxu0
  %v7544 = vadd.f32 %v7425, %v7543
  %v7545 = vpop.f32.mrf.mxu0
  %7546 = vmatprep.mubr.bf16.mxu0 %v1849
  %7547 = vmatmul.mubr.bf16.gmra.mxu0 %v1848
  %v7548 = vpop.f32.mrf.mxu0
  %v7549 = vadd.f32 %v7430, %v7548
  %v7550 = vpop.f32.mrf.mxu0
  %v7551 = vpop.f32.mrf.mxu0
  %v7552 = vadd.f32 %v7433, %v7551
  %v7553 = vpop.f32.mrf.mxu0
  %7554 = vmatprep.mubr.bf16.mxu0 %v1871
  %7555 = vmatmul.mubr.bf16.gmra.mxu0 %v1870
  %v7556 = vpop.f32.mrf.mxu0
  %v7557 = vadd.f32 %v7438, %v7556
  %v7558 = vpop.f32.mrf.mxu0
  %v7559 = vpop.f32.mrf.mxu0
  %v7560 = vadd.f32 %v7441, %v7559
  %v7561 = vpop.f32.mrf.mxu0
  %7562 = vmatprep.mubr.bf16.mxu0 %v1893
  %7563 = vmatmul.mubr.bf16.gmra.mxu0 %v1892
  %v7564 = vpop.f32.mrf.mxu0
  %v7565 = vadd.f32 %v7446, %v7564
  %v7566 = vpop.f32.mrf.mxu0
  %v7567 = vpop.f32.mrf.mxu0
  %v7568 = vadd.f32 %v7449, %v7567
  %v7569 = vpop.f32.mrf.mxu0
  %7570 = vmatprep.mubr.bf16.mxu0 %v1915
  %7571 = vmatmul.mubr.bf16.gmra.mxu0 %v1914
  %v7572 = vpop.f32.mrf.mxu0
  %v7573 = vadd.f32 %v7454, %v7572
  %v7574 = vpop.f32.mrf.mxu0
  %v7575 = vpop.f32.mrf.mxu0
  %v7576 = vpop.f32.mrf.mxu0
  %7577 = vdwg.mxu0
  %7578 = vmatprep.subr.bf16.mxu0 0
  %7579 = vmatpush1.bf16.msra.mxu0 %v4377
  %7580 = vmatprep.subr.bf16.mxu0 0
  %7581 = vmatpush1.bf16.msra.mxu0 %v4374
  %7582 = vmatprep.subr.bf16.mxu0 0
  %7583 = vmatpush1.bf16.msra.mxu0 %v4371
  %7584 = vmatprep.subr.bf16.mxu0 0
  %7585 = vmatpush1.bf16.msra.mxu0 %v4368
  %7586 = vmatprep.subr.bf16.mxu0 0
  %7587 = vmatpush1.bf16.msra.mxu0 %v4365
  %7588 = vmatprep.subr.bf16.mxu0 0
  %7589 = vmatpush1.bf16.msra.mxu0 %v4362
  %7590 = vmatprep.subr.bf16.mxu0 0
  %7591 = vmatpush1.bf16.msra.mxu0 %v4359
  %7592 = vmatprep.subr.bf16.mxu0 0
  %7593 = vmatpush1.bf16.msra.mxu0 %v4356
  %7594 = vmatprep.subr.bf16.mxu0 0
  %7595 = vmatpush2.bf16.msra.mxu0 %v4401
  %7596 = vmatprep.subr.bf16.mxu0 0
  %7597 = vmatpush2.bf16.msra.mxu0 %v4398
  %7598 = vmatprep.subr.bf16.mxu0 0
  %7599 = vmatpush2.bf16.msra.mxu0 %v4395
  %7600 = vmatprep.subr.bf16.mxu0 0
  %7601 = vmatpush2.bf16.msra.mxu0 %v4392
  %7602 = vmatprep.subr.bf16.mxu0 0
  %7603 = vmatpush2.bf16.msra.mxu0 %v4389
  %7604 = vmatprep.subr.bf16.mxu0 0
  %7605 = vmatpush2.bf16.msra.mxu0 %v4386
  %7606 = vmatprep.subr.bf16.mxu0 0
  %7607 = vmatpush2.bf16.msra.mxu0 %v4383
  %7608 = vmatprep.subr.bf16.mxu0 0
  %7609 = vmatpush2.bf16.msra.mxu0 %v4380
  %7610 = vmatprep.mubr.bf16.mxu0 %v1697
  %7611 = vmatmul.mubr.bf16.gmra.mxu0 %v1696
  %v7612 = vpop.f32.mrf.mxu0
  %v7613 = vadd.f32 %v7494, %v7612
  %v7614 = vpop.f32.mrf.mxu0
  %v7615 = vpop.f32.mrf.mxu0
  %v7616 = vadd.f32 %v7497, %v7615
  %v7617 = vpop.f32.mrf.mxu0
  %7618 = vmatprep.mubr.bf16.mxu0 %v1719
  %7619 = vmatmul.mubr.bf16.gmra.mxu0 %v1718
  %v7620 = vpop.f32.mrf.mxu0
  %v7621 = vadd.f32 %v7502, %v7620
  %v7622 = vpop.f32.mrf.mxu0
  %v7623 = vpop.f32.mrf.mxu0
  %v7624 = vadd.f32 %v7505, %v7623
  %v7625 = vpop.f32.mrf.mxu0
  %7626 = vmatprep.mubr.bf16.mxu0 %v1741
  %7627 = vmatmul.mubr.bf16.gmra.mxu0 %v1740
  %v7628 = vpop.f32.mrf.mxu0
  %v7629 = vadd.f32 %v7510, %v7628
  %v7630 = vpop.f32.mrf.mxu0
  %v7631 = vpop.f32.mrf.mxu0
  %v7632 = vadd.f32 %v7513, %v7631
  %v7633 = vpop.f32.mrf.mxu0
  %7634 = vmatprep.mubr.bf16.mxu0 %v1763
  %7635 = vmatmul.mubr.bf16.gmra.mxu0 %v1762
  %v7636 = vpop.f32.mrf.mxu0
  %v7637 = vadd.f32 %v7518, %v7636
  %v7638 = vpop.f32.mrf.mxu0
  %v7639 = vpop.f32.mrf.mxu0
  %v7640 = vadd.f32 %v7521, %v7639
  %v7641 = vpop.f32.mrf.mxu0
  %7642 = vmatprep.mubr.bf16.mxu0 %v1785
  %7643 = vmatmul.mubr.bf16.gmra.mxu0 %v1784
  %v7644 = vpop.f32.mrf.mxu0
  %v7645 = vadd.f32 %v7526, %v7644
  %v7646 = vpop.f32.mrf.mxu0
  %v7647 = vpop.f32.mrf.mxu0
  %v7648 = vadd.f32 %v7529, %v7647
  %v7649 = vpop.f32.mrf.mxu0
  %7650 = vmatprep.mubr.bf16.mxu0 %v1807
  %7651 = vmatmul.mubr.bf16.gmra.mxu0 %v1806
  %v7652 = vpop.f32.mrf.mxu0
  %v7653 = vpop.f32.mrf.mxu0
  %v7654 = vpop.f32.mrf.mxu0
  %v7655 = vadd.f32 %v7536, %v7654
  %v7656 = vpop.f32.mrf.mxu0
  %7657 = vmatprep.mubr.bf16.mxu0 %v1829
  %7658 = vmatmul.mubr.bf16.gmra.mxu0 %v1828
  %v7659 = vpop.f32.mrf.mxu0
  %v7660 = vadd.f32 %v7541, %v7659
  %v7661 = vpop.f32.mrf.mxu0
  %v7662 = vpop.f32.mrf.mxu0
  %v7663 = vadd.f32 %v7544, %v7662
  %v7664 = vpop.f32.mrf.mxu0
  %7665 = vmatprep.mubr.bf16.mxu0 %v1851
  %7666 = vmatmul.mubr.bf16.gmra.mxu0 %v1850
  %v7667 = vpop.f32.mrf.mxu0
  %v7668 = vadd.f32 %v7549, %v7667
  %v7669 = vpop.f32.mrf.mxu0
  %v7670 = vpop.f32.mrf.mxu0
  %v7671 = vadd.f32 %v7552, %v7670
  %v7672 = vpop.f32.mrf.mxu0
  %7673 = vmatprep.mubr.bf16.mxu0 %v1873
  %7674 = vmatmul.mubr.bf16.gmra.mxu0 %v1872
  %v7675 = vpop.f32.mrf.mxu0
  %v7676 = vadd.f32 %v7557, %v7675
  %v7677 = vpop.f32.mrf.mxu0
  %v7678 = vpop.f32.mrf.mxu0
  %v7679 = vadd.f32 %v7560, %v7678
  %v7680 = vpop.f32.mrf.mxu0
  %7681 = vmatprep.mubr.bf16.mxu0 %v1895
  %7682 = vmatmul.mubr.bf16.gmra.mxu0 %v1894
  %v7683 = vpop.f32.mrf.mxu0
  %v7684 = vadd.f32 %v7565, %v7683
  %v7685 = vpop.f32.mrf.mxu0
  %v7686 = vpop.f32.mrf.mxu0
  %v7687 = vadd.f32 %v7568, %v7686
  %v7688 = vpop.f32.mrf.mxu0
  %7689 = vmatprep.mubr.bf16.mxu0 %v1917
  %7690 = vmatmul.mubr.bf16.gmra.mxu0 %v1916
  %v7691 = vpop.f32.mrf.mxu0
  %v7692 = vadd.f32 %v7573, %v7691
  %v7693 = vpop.f32.mrf.mxu0
  %v7694 = vpop.f32.mrf.mxu0
  %v7695 = vpop.f32.mrf.mxu0
  %7696 = vdwg.mxu0
  %7697 = vmatprep.subr.bf16.mxu0 0
  %7698 = vmatpush1.bf16.msra.mxu0 %v4425
  %7699 = vmatprep.subr.bf16.mxu0 0
  %7700 = vmatpush1.bf16.msra.mxu0 %v4422
  %7701 = vmatprep.subr.bf16.mxu0 0
  %7702 = vmatpush1.bf16.msra.mxu0 %v4419
  %7703 = vmatprep.subr.bf16.mxu0 0
  %7704 = vmatpush1.bf16.msra.mxu0 %v4416
  %7705 = vmatprep.subr.bf16.mxu0 0
  %7706 = vmatpush1.bf16.msra.mxu0 %v4413
  %7707 = vmatprep.subr.bf16.mxu0 0
  %7708 = vmatpush1.bf16.msra.mxu0 %v4410
  %7709 = vmatprep.subr.bf16.mxu0 0
  %7710 = vmatpush1.bf16.msra.mxu0 %v4407
  %7711 = vmatprep.subr.bf16.mxu0 0
  %7712 = vmatpush1.bf16.msra.mxu0 %v4404
  %7713 = vmatprep.subr.bf16.mxu0 0
  %7714 = vmatpush2.bf16.msra.mxu0 %v4449
  %7715 = vmatprep.subr.bf16.mxu0 0
  %7716 = vmatpush2.bf16.msra.mxu0 %v4446
  %7717 = vmatprep.subr.bf16.mxu0 0
  %7718 = vmatpush2.bf16.msra.mxu0 %v4443
  %7719 = vmatprep.subr.bf16.mxu0 0
  %7720 = vmatpush2.bf16.msra.mxu0 %v4440
  %7721 = vmatprep.subr.bf16.mxu0 0
  %7722 = vmatpush2.bf16.msra.mxu0 %v4437
  %7723 = vmatprep.subr.bf16.mxu0 0
  %7724 = vmatpush2.bf16.msra.mxu0 %v4434
  %7725 = vmatprep.subr.bf16.mxu0 0
  %7726 = vmatpush2.bf16.msra.mxu0 %v4431
  %7727 = vmatprep.subr.bf16.mxu0 0
  %7728 = vmatpush2.bf16.msra.mxu0 %v4428
  %7729 = vmatprep.mubr.bf16.mxu0 %v1699
  %7730 = vmatmul.mubr.bf16.gmra.mxu0 %v1698
  %v7731 = vpop.f32.mrf.mxu0
  %v7732 = vadd.f32 %v7613, %v7731
  %v7733 = vpop.f32.mrf.mxu0
  %v7734 = vpop.f32.mrf.mxu0
  %v7735 = vadd.f32 %v7616, %v7734
  %v7736 = vpop.f32.mrf.mxu0
  %7737 = vmatprep.mubr.bf16.mxu0 %v1721
  %7738 = vmatmul.mubr.bf16.gmra.mxu0 %v1720
  %v7739 = vpop.f32.mrf.mxu0
  %v7740 = vadd.f32 %v7621, %v7739
  %v7741 = vpop.f32.mrf.mxu0
  %v7742 = vpop.f32.mrf.mxu0
  %v7743 = vadd.f32 %v7624, %v7742
  %v7744 = vpop.f32.mrf.mxu0
  %7745 = vmatprep.mubr.bf16.mxu0 %v1743
  %7746 = vmatmul.mubr.bf16.gmra.mxu0 %v1742
  %v7747 = vpop.f32.mrf.mxu0
  %v7748 = vadd.f32 %v7629, %v7747
  %v7749 = vpop.f32.mrf.mxu0
  %v7750 = vpop.f32.mrf.mxu0
  %v7751 = vadd.f32 %v7632, %v7750
  %v7752 = vpop.f32.mrf.mxu0
  %7753 = vmatprep.mubr.bf16.mxu0 %v1765
  %7754 = vmatmul.mubr.bf16.gmra.mxu0 %v1764
  %v7755 = vpop.f32.mrf.mxu0
  %v7756 = vadd.f32 %v7637, %v7755
  %v7757 = vpop.f32.mrf.mxu0
  %v7758 = vpop.f32.mrf.mxu0
  %v7759 = vadd.f32 %v7640, %v7758
  %v7760 = vpop.f32.mrf.mxu0
  %7761 = vmatprep.mubr.bf16.mxu0 %v1787
  %7762 = vmatmul.mubr.bf16.gmra.mxu0 %v1786
  %v7763 = vpop.f32.mrf.mxu0
  %v7764 = vadd.f32 %v7645, %v7763
  %v7765 = vpop.f32.mrf.mxu0
  %v7766 = vpop.f32.mrf.mxu0
  %v7767 = vadd.f32 %v7648, %v7766
  %v7768 = vpop.f32.mrf.mxu0
  %7769 = vmatprep.mubr.bf16.mxu0 %v1809
  %7770 = vmatmul.mubr.bf16.gmra.mxu0 %v1808
  %v7771 = vpop.f32.mrf.mxu0
  %v7772 = vpop.f32.mrf.mxu0
  %v7773 = vpop.f32.mrf.mxu0
  %v7774 = vadd.f32 %v7655, %v7773
  %v7775 = vpop.f32.mrf.mxu0
  %7776 = vmatprep.mubr.bf16.mxu0 %v1831
  %7777 = vmatmul.mubr.bf16.gmra.mxu0 %v1830
  %v7778 = vpop.f32.mrf.mxu0
  %v7779 = vadd.f32 %v7660, %v7778
  %v7780 = vpop.f32.mrf.mxu0
  %v7781 = vpop.f32.mrf.mxu0
  %v7782 = vadd.f32 %v7663, %v7781
  %v7783 = vpop.f32.mrf.mxu0
  %7784 = vmatprep.mubr.bf16.mxu0 %v1853
  %7785 = vmatmul.mubr.bf16.gmra.mxu0 %v1852
  %v7786 = vpop.f32.mrf.mxu0
  %v7787 = vadd.f32 %v7668, %v7786
  %v7788 = vpop.f32.mrf.mxu0
  %v7789 = vpop.f32.mrf.mxu0
  %v7790 = vadd.f32 %v7671, %v7789
  %v7791 = vpop.f32.mrf.mxu0
  %7792 = vmatprep.mubr.bf16.mxu0 %v1875
  %7793 = vmatmul.mubr.bf16.gmra.mxu0 %v1874
  %v7794 = vpop.f32.mrf.mxu0
  %v7795 = vadd.f32 %v7676, %v7794
  %v7796 = vpop.f32.mrf.mxu0
  %v7797 = vpop.f32.mrf.mxu0
  %v7798 = vadd.f32 %v7679, %v7797
  %v7799 = vpop.f32.mrf.mxu0
  %7800 = vmatprep.mubr.bf16.mxu0 %v1897
  %7801 = vmatmul.mubr.bf16.gmra.mxu0 %v1896
  %v7802 = vpop.f32.mrf.mxu0
  %v7803 = vadd.f32 %v7684, %v7802
  %v7804 = vpop.f32.mrf.mxu0
  %v7805 = vpop.f32.mrf.mxu0
  %v7806 = vadd.f32 %v7687, %v7805
  %v7807 = vpop.f32.mrf.mxu0
  %7808 = vmatprep.mubr.bf16.mxu0 %v1919
  %7809 = vmatmul.mubr.bf16.gmra.mxu0 %v1918
  %v7810 = vpop.f32.mrf.mxu0
  %v7811 = vadd.f32 %v7692, %v7810
  %v7812 = vpop.f32.mrf.mxu0
  %v7813 = vpop.f32.mrf.mxu0
  %v7814 = vpop.f32.mrf.mxu0
  %7815 = vdwg.mxu0
  %v7816 = vmax.f32 %v6403, 0.0
  %v7817 = vmax.f32 %v6405, 0.0
  %v7818 = vmax.f32 %v7732, 0.0
  %v7819 = vmax.f32 %v6407, 0.0
  %v7820 = vmax.f32 %v6409, 0.0
  %v7821 = vmax.f32 %v7735, 0.0
  %v7822 = vmax.f32 %v6413, 0.0
  %v7823 = vmax.f32 %v6415, 0.0
  %v7824 = vmax.f32 %v7740, 0.0
  %v7825 = vmax.f32 %v6417, 0.0
  %v7826 = vmax.f32 %v6419, 0.0
  %v7827 = vmax.f32 %v7743, 0.0
  %v7828 = vmax.f32 %v6423, 0.0
  %v7829 = vmax.f32 %v6425, 0.0
  %v7830 = vmax.f32 %v7748, 0.0
  %v7831 = vmax.f32 %v6427, 0.0
  %v7832 = vmax.f32 %v6429, 0.0
  %v7833 = vmax.f32 %v7751, 0.0
  %v7834 = vmax.f32 %v6433, 0.0
  %v7835 = vmax.f32 %v6435, 0.0
  %v7836 = vmax.f32 %v7756, 0.0
  %v7837 = vmax.f32 %v6437, 0.0
  %v7838 = vmax.f32 %v6439, 0.0
  %v7839 = vmax.f32 %v7759, 0.0
  %v7840 = vmax.f32 %v6443, 0.0
  %v7841 = vmax.f32 %v6445, 0.0
  %v7842 = vmax.f32 %v7764, 0.0
  %v7843 = vmax.f32 %v6447, 0.0
  %v7844 = vmax.f32 %v6449, 0.0
  %v7845 = vmax.f32 %v7767, 0.0
  %v7846 = vmax.f32 %v6455, 0.0
  %v7847 = vmax.f32 %v6457, 0.0
  %v7848 = vmax.f32 %v7774, 0.0
  %v7849 = vmax.f32 %v6461, 0.0
  %v7850 = vmax.f32 %v6463, 0.0
  %v7851 = vmax.f32 %v7779, 0.0
  %v7852 = vmax.f32 %v6465, 0.0
  %v7853 = vmax.f32 %v6467, 0.0
  %v7854 = vmax.f32 %v7782, 0.0
  %v7855 = vmax.f32 %v6471, 0.0
  %v7856 = vmax.f32 %v6473, 0.0
  %v7857 = vmax.f32 %v7787, 0.0
  %v7858 = vmax.f32 %v6475, 0.0
  %v7859 = vmax.f32 %v6477, 0.0
  %v7860 = vmax.f32 %v7790, 0.0
  %v7861 = vmax.f32 %v6481, 0.0
  %v7862 = vmax.f32 %v6483, 0.0
  %v7863 = vmax.f32 %v7795, 0.0
  %v7864 = vmax.f32 %v6485, 0.0
  %v7865 = vmax.f32 %v6487, 0.0
  %v7866 = vmax.f32 %v7798, 0.0
  %v7867 = vmax.f32 %v6491, 0.0
  %v7868 = vmax.f32 %v6493, 0.0
  %v7869 = vmax.f32 %v7803, 0.0
  %v7870 = vmax.f32 %v6495, 0.0
  %v7871 = vmax.f32 %v6497, 0.0
  %v7872 = vmax.f32 %v7806, 0.0
  %v7873 = vmax.f32 %v6501, 0.0
  %v7874 = vmax.f32 %v6503, 0.0
  %v7875 = vmax.f32 %v7811, 0.0
  %v7876 = vpack.c.bf16 %v7819, %v7816
  %v7877 = vpack.c.bf16 %v7820, %v7817
  %v7878 = vpack.c.bf16 %v7821, %v7818
  %v7879 = vpack.c.bf16 %v7825, %v7822
  %v7880 = vpack.c.bf16 %v7826, %v7823
  %v7881 = vpack.c.bf16 %v7827, %v7824
  %v7882 = vpack.c.bf16 %v7831, %v7828
  %v7883 = vpack.c.bf16 %v7832, %v7829
  %v7884 = vpack.c.bf16 %v7833, %v7830
  %v7885 = vpack.c.bf16 %v7837, %v7834
  %v7886 = vpack.c.bf16 %v7838, %v7835
  %v7887 = vpack.c.bf16 %v7839, %v7836
  %v7888 = vpack.c.bf16 %v7840, %v7840
  %v7889 = vpack.c.bf16 %v7841, %v7841
  %v7890 = vpack.c.bf16 %v7842, %v7842
  %v7891 = vld [vmem:[%s3] sm:$0xff]
  %v7892 = vld [vmem:[%s3 + $0x8] sm:$0xf]
  %v7893 = vld [vmem:[%s3 + $0xc] sm:$0xff]
  %v7894 = vld [vmem:[%s3 + $0x14] sm:$0xf]
  %v7895 = vld [vmem:[%s3 + $0x18] sm:$0xff]
  %v7896 = vld [vmem:[%s3 + $0x20] sm:$0xf]
  %v7897 = vld [vmem:[%s3 + $0x24] sm:$0xff]
  %v7898 = vld [vmem:[%s3 + $0x2c] sm:$0xf]
  %v7899 = vld [vmem:[%s3 + $0x30] sm:$0xff]
  %v7900 = vld [vmem:[%s3 + $0x38] sm:$0xf]
  %v7901 = vld [vmem:[%s3 + $0x3c] sm:$0xff]
  %v7902 = vld [vmem:[%s3 + $0x44] sm:$0xf]
  %v7903 = vld [vmem:[%s3 + $0x48] sm:$0xff]
  %v7904 = vld [vmem:[%s3 + $0x50] sm:$0xf]
  %v7905 = vld [vmem:[%s3 + $0x54] sm:$0xff]
  %v7906 = vld [vmem:[%s3 + $0x5c] sm:$0xf]
  %v7907 = vld [vmem:[%s3 + $0x60] sm:$0xff]
  %v7908 = vld [vmem:[%s3 + $0x68] sm:$0xf]
  %v7909 = vld [vmem:[%s3 + $0x6c] sm:$0xff]
  %v7910 = vld [vmem:[%s3 + $0x74] sm:$0xf]
  %v7911 = vld [vmem:[%s3 + $0x78] sm:$0xff]
  %v7912 = vld [vmem:[%s3 + $0x80] sm:$0xf]
  %v7913 = vld [vmem:[%s3 + $0x84] sm:$0xff]
  %v7914 = vld [vmem:[%s3 + $0x8c] sm:$0xf]
  %v7915 = vld [vmem:[%s3 + $0x90] sm:$0xff]
  %v7916 = vld [vmem:[%s3 + $0x98] sm:$0xf]
  %v7917 = vld [vmem:[%s3 + $0x9c] sm:$0xff]
  %v7918 = vld [vmem:[%s3 + $0xa4] sm:$0xf]
  %v7919 = vld [vmem:[%s3 + $0xa8] sm:$0xff]
  %v7920 = vld [vmem:[%s3 + $0xb0] sm:$0xf]
  %v7921 = vld [vmem:[%s3 + $0xb4] sm:$0xff]
  %v7922 = vld [vmem:[%s3 + $0xbc] sm:$0xf]
  %v7923 = vld [vmem:[%s3 + $0xc0] sm:$0xff]
  %v7924 = vld [vmem:[%s3 + $0xc8] sm:$0xf]
  %v7925 = vld [vmem:[%s3 + $0xcc] sm:$0xff]
  %v7926 = vld [vmem:[%s3 + $0xd4] sm:$0xf]
  %v7927 = vld [vmem:[%s3 + $0xd8] sm:$0xff]
  %v7928 = vld [vmem:[%s3 + $0xe0] sm:$0xf]
  %v7929 = vld [vmem:[%s3 + $0xe4] sm:$0xff]
  %v7930 = vld [vmem:[%s3 + $0xec] sm:$0xf]
  %v7931 = vld [vmem:[%s3 + $0xf0] sm:$0xff]
  %v7932 = vld [vmem:[%s3 + $0xf8] sm:$0xf]
  %v7933 = vld [vmem:[%s3 + $0xfc] sm:$0xff]
  %v7934 = vld [vmem:[%s3 + $0x104] sm:$0xf]
  %v7935 = vld [vmem:[%s3 + $0x108] sm:$0xff]
  %v7936 = vld [vmem:[%s3 + $0x110] sm:$0xf]
  %v7937 = vld [vmem:[%s3 + $0x114] sm:$0xff]
  %v7938 = vld [vmem:[%s3 + $0x11c] sm:$0xf]
  %v7939 = vld [vmem:[%s3 + $0x120] sm:$0xff]
  %v7940 = vld [vmem:[%s3 + $0x128] sm:$0xf]
  %v7941 = vld [vmem:[%s3 + $0x12c] sm:$0xff]
  %v7942 = vld [vmem:[%s3 + $0x134] sm:$0xf]
  %v7943 = vld [vmem:[%s3 + $0x138] sm:$0xff]
  %v7944 = vld [vmem:[%s3 + $0x140] sm:$0xf]
  %v7945 = vld [vmem:[%s3 + $0x144] sm:$0xff]
  %v7946 = vld [vmem:[%s3 + $0x14c] sm:$0xf]
  %v7947 = vld [vmem:[%s3 + $0x150] sm:$0xff]
  %v7948 = vld [vmem:[%s3 + $0x158] sm:$0xf]
  %v7949 = vld [vmem:[%s3 + $0x15c] sm:$0xff]
  %v7950 = vld [vmem:[%s3 + $0x164] sm:$0xf]
  %v7951 = vld [vmem:[%s3 + $0x168] sm:$0xff]
  %v7952 = vld [vmem:[%s3 + $0x170] sm:$0xf]
  %v7953 = vld [vmem:[%s3 + $0x174] sm:$0xff]
  %v7954 = vld [vmem:[%s3 + $0x17c] sm:$0xf]
  %v7955 = vld [vmem:[%s3 + $0x180] sm:$0xff]
  %v7956 = vld [vmem:[%s3 + $0x188] sm:$0xf]
  %v7957 = vld [vmem:[%s3 + $0x18c] sm:$0xff]
  %v7958 = vld [vmem:[%s3 + $0x194] sm:$0xf]
  %v7959 = vld [vmem:[%s3 + $0x198] sm:$0xff]
  %v7960 = vld [vmem:[%s3 + $0x1a0] sm:$0xf]
  %v7961 = vld [vmem:[%s3 + $0x1a4] sm:$0xff]
  %v7962 = vld [vmem:[%s3 + $0x1ac] sm:$0xf]
  %v7963 = vld [vmem:[%s3 + $0x1b0] sm:$0xff]
  %v7964 = vld [vmem:[%s3 + $0x1b8] sm:$0xf]
  %v7965 = vld [vmem:[%s3 + $0x1bc] sm:$0xff]
  %v7966 = vld [vmem:[%s3 + $0x1c4] sm:$0xf]
  %v7967 = vld [vmem:[%s3 + $0x1c8] sm:$0xff]
  %v7968 = vld [vmem:[%s3 + $0x1d0] sm:$0xf]
  %v7969 = vld [vmem:[%s3 + $0x1d4] sm:$0xff]
  %v7970 = vld [vmem:[%s3 + $0x1dc] sm:$0xf]
  %v7971 = vld [vmem:[%s3 + $0x1e0] sm:$0xff]
  %v7972 = vld [vmem:[%s3 + $0x1e8] sm:$0xf]
  %v7973 = vld [vmem:[%s3 + $0x1ec] sm:$0xff]
  %v7974 = vld [vmem:[%s3 + $0x1f4] sm:$0xf]
  %v7975 = vpack.c.bf16 %v7849, %v7846
  %v7976 = vpack.c.bf16 %v7850, %v7847
  %v7977 = vpack.c.bf16 %v7851, %v7848
  %v7978 = vpack.c.bf16 %v7855, %v7852
  %v7979 = vpack.c.bf16 %v7856, %v7853
  %v7980 = vpack.c.bf16 %v7857, %v7854
  %v7981 = vpack.c.bf16 %v7861, %v7858
  %v7982 = vpack.c.bf16 %v7862, %v7859
  %v7983 = vpack.c.bf16 %v7863, %v7860
  %v7984 = vpack.c.bf16 %v7867, %v7864
  %v7985 = vpack.c.bf16 %v7868, %v7865
  %v7986 = vpack.c.bf16 %v7869, %v7866
  %v7987 = vpack.c.bf16 %v7870, %v7870
  %v7988 = vpack.c.bf16 %v7871, %v7871
  %v7989 = vpack.c.bf16 %v7872, %v7872
  %s7990 = scalar_lea.vmem %s3, 504
  %v7991 = vld [vmem:[%s7990] sm:$0xff]
  %v7992 = vld [vmem:[%s7990 + $0x8] sm:$0xf]
  %v7993 = vld [vmem:[%s7990 + $0xc] sm:$0xff]
  %v7994 = vld [vmem:[%s7990 + $0x14] sm:$0xf]
  %v7995 = vld [vmem:[%s7990 + $0x18] sm:$0xff]
  %v7996 = vld [vmem:[%s7990 + $0x20] sm:$0xf]
  %v7997 = vld [vmem:[%s7990 + $0x24] sm:$0xff]
  %v7998 = vld [vmem:[%s7990 + $0x2c] sm:$0xf]
  %v7999 = vld [vmem:[%s7990 + $0x30] sm:$0xff]
  %v8000 = vld [vmem:[%s7990 + $0x38] sm:$0xf]
  %v8001 = vld [vmem:[%s7990 + $0x3c] sm:$0xff]
  %v8002 = vld [vmem:[%s7990 + $0x44] sm:$0xf]
  %v8003 = vld [vmem:[%s7990 + $0x48] sm:$0xff]
  %v8004 = vld [vmem:[%s7990 + $0x50] sm:$0xf]
  %v8005 = vld [vmem:[%s7990 + $0x54] sm:$0xff]
  %v8006 = vld [vmem:[%s7990 + $0x5c] sm:$0xf]
  %v8007 = vld [vmem:[%s7990 + $0x60] sm:$0xff]
  %v8008 = vld [vmem:[%s7990 + $0x68] sm:$0xf]
  %v8009 = vld [vmem:[%s7990 + $0x6c] sm:$0xff]
  %v8010 = vld [vmem:[%s7990 + $0x74] sm:$0xf]
  %v8011 = vld [vmem:[%s7990 + $0x78] sm:$0xff]
  %v8012 = vld [vmem:[%s7990 + $0x80] sm:$0xf]
  %v8013 = vld [vmem:[%s7990 + $0x84] sm:$0xff]
  %v8014 = vld [vmem:[%s7990 + $0x8c] sm:$0xf]
  %v8015 = vld [vmem:[%s7990 + $0x90] sm:$0xff]
  %v8016 = vld [vmem:[%s7990 + $0x98] sm:$0xf]
  %v8017 = vld [vmem:[%s7990 + $0x9c] sm:$0xff]
  %v8018 = vld [vmem:[%s7990 + $0xa4] sm:$0xf]
  %v8019 = vld [vmem:[%s7990 + $0xa8] sm:$0xff]
  %v8020 = vld [vmem:[%s7990 + $0xb0] sm:$0xf]
  %v8021 = vld [vmem:[%s7990 + $0xb4] sm:$0xff]
  %v8022 = vld [vmem:[%s7990 + $0xbc] sm:$0xf]
  %v8023 = vld [vmem:[%s7990 + $0xc0] sm:$0xff]
  %v8024 = vld [vmem:[%s7990 + $0xc8] sm:$0xf]
  %v8025 = vld [vmem:[%s7990 + $0xcc] sm:$0xff]
  %v8026 = vld [vmem:[%s7990 + $0xd4] sm:$0xf]
  %v8027 = vld [vmem:[%s7990 + $0xd8] sm:$0xff]
  %v8028 = vld [vmem:[%s7990 + $0xe0] sm:$0xf]
  %v8029 = vld [vmem:[%s7990 + $0xe4] sm:$0xff]
  %v8030 = vld [vmem:[%s7990 + $0xec] sm:$0xf]
  %v8031 = vld [vmem:[%s7990 + $0xf0] sm:$0xff]
  %v8032 = vld [vmem:[%s7990 + $0xf8] sm:$0xf]
  %v8033 = vld [vmem:[%s7990 + $0xfc] sm:$0xff]
  %v8034 = vld [vmem:[%s7990 + $0x104] sm:$0xf]
  %v8035 = vld [vmem:[%s7990 + $0x108] sm:$0xff]
  %v8036 = vld [vmem:[%s7990 + $0x110] sm:$0xf]
  %v8037 = vld [vmem:[%s7990 + $0x114] sm:$0xff]
  %v8038 = vld [vmem:[%s7990 + $0x11c] sm:$0xf]
  %v8039 = vld [vmem:[%s7990 + $0x120] sm:$0xff]
  %v8040 = vld [vmem:[%s7990 + $0x128] sm:$0xf]
  %v8041 = vld [vmem:[%s7990 + $0x12c] sm:$0xff]
  %v8042 = vld [vmem:[%s7990 + $0x134] sm:$0xf]
  %v8043 = vld [vmem:[%s7990 + $0x138] sm:$0xff]
  %v8044 = vld [vmem:[%s7990 + $0x140] sm:$0xf]
  %v8045 = vld [vmem:[%s7990 + $0x144] sm:$0xff]
  %v8046 = vld [vmem:[%s7990 + $0x14c] sm:$0xf]
  %v8047 = vld [vmem:[%s7990 + $0x150] sm:$0xff]
  %v8048 = vld [vmem:[%s7990 + $0x158] sm:$0xf]
  %v8049 = vld [vmem:[%s7990 + $0x15c] sm:$0xff]
  %v8050 = vld [vmem:[%s7990 + $0x164] sm:$0xf]
  %v8051 = vld [vmem:[%s7990 + $0x168] sm:$0xff]
  %v8052 = vld [vmem:[%s7990 + $0x170] sm:$0xf]
  %v8053 = vld [vmem:[%s7990 + $0x174] sm:$0xff]
  %v8054 = vld [vmem:[%s7990 + $0x17c] sm:$0xf]
  %v8055 = vld [vmem:[%s7990 + $0x180] sm:$0xff]
  %v8056 = vld [vmem:[%s7990 + $0x188] sm:$0xf]
  %v8057 = vld [vmem:[%s7990 + $0x18c] sm:$0xff]
  %v8058 = vld [vmem:[%s7990 + $0x194] sm:$0xf]
  %v8059 = vld [vmem:[%s7990 + $0x198] sm:$0xff]
  %v8060 = vld [vmem:[%s7990 + $0x1a0] sm:$0xf]
  %v8061 = vld [vmem:[%s7990 + $0x1a4] sm:$0xff]
  %v8062 = vld [vmem:[%s7990 + $0x1ac] sm:$0xf]
  %v8063 = vld [vmem:[%s7990 + $0x1b0] sm:$0xff]
  %v8064 = vld [vmem:[%s7990 + $0x1b8] sm:$0xf]
  %v8065 = vld [vmem:[%s7990 + $0x1bc] sm:$0xff]
  %v8066 = vld [vmem:[%s7990 + $0x1c4] sm:$0xf]
  %v8067 = vld [vmem:[%s7990 + $0x1c8] sm:$0xff]
  %v8068 = vld [vmem:[%s7990 + $0x1d0] sm:$0xf]
  %v8069 = vld [vmem:[%s7990 + $0x1d4] sm:$0xff]
  %v8070 = vld [vmem:[%s7990 + $0x1dc] sm:$0xf]
  %v8071 = vld [vmem:[%s7990 + $0x1e0] sm:$0xff]
  %v8072 = vld [vmem:[%s7990 + $0x1e8] sm:$0xf]
  %v8073 = vld [vmem:[%s7990 + $0x1ec] sm:$0xff]
  %v8074 = vld [vmem:[%s7990 + $0x1f4] sm:$0xf]
  %v8159 = vunpack.c.l.b16 %v7991
  %v8160 = vunpack.c.h.b16 %v7991
  %v8161 = vunpack.c.l.b16 %v7992
  %v8162 = vunpack.c.l.b16 %v7993
  %v8163 = vunpack.c.h.b16 %v7993
  %v8164 = vunpack.c.l.b16 %v7994
  %v8165 = vunpack.c.l.b16 %v7995
  %v8166 = vunpack.c.h.b16 %v7995
  %v8167 = vunpack.c.l.b16 %v7996
  %v8168 = vunpack.c.l.b16 %v7997
  %v8169 = vunpack.c.h.b16 %v7997
  %v8170 = vunpack.c.l.b16 %v7998
  %v8171 = vunpack.c.l.b16 %v7999
  %v8172 = vunpack.c.h.b16 %v7999
  %v8173 = vunpack.c.l.b16 %v8000
  %v8174 = vunpack.c.l.b16 %v8001
  %v8175 = vunpack.c.h.b16 %v8001
  %v8176 = vunpack.c.l.b16 %v8002
  %v8177 = vunpack.c.l.b16 %v8003
  %v8178 = vunpack.c.h.b16 %v8003
  %v8179 = vunpack.c.l.b16 %v8004
  %v8180 = vunpack.c.l.b16 %v8005
  %v8181 = vunpack.c.h.b16 %v8005
  %v8182 = vunpack.c.l.b16 %v8006
  %v8183 = vunpack.c.l.b16 %v8007
  %v8184 = vunpack.c.h.b16 %v8007
  %v8185 = vunpack.c.l.b16 %v8008
  %v8186 = vunpack.c.l.b16 %v8009
  %v8187 = vunpack.c.h.b16 %v8009
  %v8188 = vunpack.c.l.b16 %v8010
  %v8189 = vunpack.c.l.b16 %v8011
  %v8190 = vunpack.c.h.b16 %v8011
  %v8191 = vunpack.c.l.b16 %v8012
  %v8192 = vunpack.c.l.b16 %v8013
  %v8193 = vunpack.c.h.b16 %v8013
  %v8194 = vunpack.c.l.b16 %v8014
  %v8195 = vunpack.c.l.b16 %v8015
  %v8196 = vunpack.c.h.b16 %v8015
  %v8197 = vunpack.c.l.b16 %v8016
  %v8198 = vunpack.c.l.b16 %v8017
  %v8199 = vunpack.c.h.b16 %v8017
  %v8200 = vunpack.c.l.b16 %v8018
  %v8201 = vunpack.c.l.b16 %v8019
  %v8202 = vunpack.c.h.b16 %v8019
  %v8203 = vunpack.c.l.b16 %v8020
  %v8204 = vunpack.c.l.b16 %v8021
  %v8205 = vunpack.c.h.b16 %v8021
  %v8206 = vunpack.c.l.b16 %v8022
  %v8207 = vunpack.c.l.b16 %v8023
  %v8208 = vunpack.c.h.b16 %v8023
  %v8209 = vunpack.c.l.b16 %v8024
  %v8210 = vunpack.c.l.b16 %v8025
  %v8211 = vunpack.c.h.b16 %v8025
  %v8212 = vunpack.c.l.b16 %v8026
  %v8213 = vunpack.c.l.b16 %v8027
  %v8214 = vunpack.c.h.b16 %v8027
  %v8215 = vunpack.c.l.b16 %v8028
  %v8216 = vunpack.c.l.b16 %v8029
  %v8217 = vunpack.c.h.b16 %v8029
  %v8218 = vunpack.c.l.b16 %v8030
  %v8219 = vunpack.c.l.b16 %v8031
  %v8220 = vunpack.c.h.b16 %v8031
  %v8221 = vunpack.c.l.b16 %v8032
  %v8222 = vunpack.c.l.b16 %v8033
  %v8223 = vunpack.c.h.b16 %v8033
  %v8224 = vunpack.c.l.b16 %v8034
  %v8225 = vunpack.c.l.b16 %v8035
  %v8226 = vunpack.c.h.b16 %v8035
  %v8227 = vunpack.c.l.b16 %v8036
  %v8228 = vunpack.c.l.b16 %v8037
  %v8229 = vunpack.c.h.b16 %v8037
  %v8230 = vunpack.c.l.b16 %v8038
  %v8231 = vunpack.c.l.b16 %v8039
  %v8232 = vunpack.c.h.b16 %v8039
  %v8233 = vunpack.c.l.b16 %v8040
  %v8234 = vunpack.c.l.b16 %v8041
  %v8235 = vunpack.c.h.b16 %v8041
  %v8236 = vunpack.c.l.b16 %v8042
  %v8237 = vunpack.c.l.b16 %v8043
  %v8238 = vunpack.c.h.b16 %v8043
  %v8239 = vunpack.c.l.b16 %v8044
  %v8240 = vunpack.c.l.b16 %v8045
  %v8241 = vunpack.c.h.b16 %v8045
  %v8242 = vunpack.c.l.b16 %v8046
  %v8243 = vunpack.c.l.b16 %v8047
  %v8244 = vunpack.c.h.b16 %v8047
  %v8245 = vunpack.c.l.b16 %v8048
  %v8246 = vunpack.c.l.b16 %v8049
  %v8247 = vunpack.c.h.b16 %v8049
  %v8248 = vunpack.c.l.b16 %v8050
  %v8249 = vunpack.c.l.b16 %v8051
  %v8250 = vunpack.c.h.b16 %v8051
  %v8251 = vunpack.c.l.b16 %v8052
  %v8252 = vunpack.c.l.b16 %v8053
  %v8253 = vunpack.c.h.b16 %v8053
  %v8254 = vunpack.c.l.b16 %v8054
  %v8255 = vunpack.c.l.b16 %v8055
  %v8256 = vunpack.c.h.b16 %v8055
  %v8257 = vunpack.c.l.b16 %v8056
  %v8258 = vunpack.c.l.b16 %v8057
  %v8259 = vunpack.c.h.b16 %v8057
  %v8260 = vunpack.c.l.b16 %v8058
  %v8261 = vunpack.c.l.b16 %v8059
  %v8262 = vunpack.c.h.b16 %v8059
  %v8263 = vunpack.c.l.b16 %v8060
  %v8264 = vunpack.c.l.b16 %v8061
  %v8265 = vunpack.c.h.b16 %v8061
  %v8266 = vunpack.c.l.b16 %v8062
  %v8267 = vunpack.c.l.b16 %v8063
  %v8268 = vunpack.c.h.b16 %v8063
  %v8269 = vunpack.c.l.b16 %v8064
  %v8270 = vunpack.c.l.b16 %v8065
  %v8271 = vunpack.c.h.b16 %v8065
  %v8272 = vunpack.c.l.b16 %v8066
  %v8273 = vunpack.c.l.b16 %v8067
  %v8274 = vunpack.c.h.b16 %v8067
  %v8275 = vunpack.c.l.b16 %v8068
  %v8276 = vunpack.c.l.b16 %v8069
  %v8277 = vunpack.c.h.b16 %v8069
  %v8278 = vunpack.c.l.b16 %v8070
  %v8279 = vunpack.c.l.b16 %v8071
  %v8280 = vunpack.c.h.b16 %v8071
  %v8281 = vunpack.c.l.b16 %v8072
  %v8282 = vunpack.c.l.b16 %v8073
  %v8283 = vunpack.c.h.b16 %v8073
  %v8284 = vunpack.c.l.b16 %v8074
  %v8285 = vpack.c.b16 %v8162, %v8159
  %v8286 = vpack.c.b16 %v8163, %v8160
  %v8287 = vpack.c.b16 %v8164, %v8161
  %v8288 = vpack.c.b16 %v8168, %v8165
  %v8289 = vpack.c.b16 %v8169, %v8166
  %v8290 = vpack.c.b16 %v8170, %v8167
  %v8291 = vpack.c.b16 %v8174, %v8171
  %v8292 = vpack.c.b16 %v8175, %v8172
  %v8293 = vpack.c.b16 %v8176, %v8173
  %v8294 = vpack.c.b16 %v8180, %v8177
  %v8295 = vpack.c.b16 %v8181, %v8178
  %v8296 = vpack.c.b16 %v8182, %v8179
  %v8297 = vpack.c.b16 %v8186, %v8183
  %v8298 = vpack.c.b16 %v8187, %v8184
  %v8299 = vpack.c.b16 %v8188, %v8185
  %v8300 = vpack.c.b16 %v8192, %v8189
  %v8301 = vpack.c.b16 %v8193, %v8190
  %v8302 = vpack.c.b16 %v8194, %v8191
  %v8303 = vpack.c.b16 %v8198, %v8195
  %v8304 = vpack.c.b16 %v8199, %v8196
  %v8305 = vpack.c.b16 %v8200, %v8197
  %v8306 = vpack.c.b16 %v8204, %v8201
  %v8307 = vpack.c.b16 %v8205, %v8202
  %v8308 = vpack.c.b16 %v8206, %v8203
  %v8309 = vpack.c.b16 %v8210, %v8207
  %v8310 = vpack.c.b16 %v8211, %v8208
  %v8311 = vpack.c.b16 %v8212, %v8209
  %v8312 = vpack.c.b16 %v8216, %v8213
  %v8313 = vpack.c.b16 %v8217, %v8214
  %v8314 = vpack.c.b16 %v8218, %v8215
  %v8315 = vpack.c.b16 %v8222, %v8219
  %v8316 = vpack.c.b16 %v8223, %v8220
  %v8317 = vpack.c.b16 %v8224, %v8221
  %v8318 = vpack.c.b16 %v8228, %v8225
  %v8319 = vpack.c.b16 %v8229, %v8226
  %v8320 = vpack.c.b16 %v8230, %v8227
  %v8321 = vpack.c.b16 %v8234, %v8231
  %v8322 = vpack.c.b16 %v8235, %v8232
  %v8323 = vpack.c.b16 %v8236, %v8233
  %v8324 = vpack.c.b16 %v8240, %v8237
  %v8325 = vpack.c.b16 %v8241, %v8238
  %v8326 = vpack.c.b16 %v8242, %v8239
  %v8327 = vpack.c.b16 %v8246, %v8243
  %v8328 = vpack.c.b16 %v8247, %v8244
  %v8329 = vpack.c.b16 %v8248, %v8245
  %v8330 = vpack.c.b16 %v8252, %v8249
  %v8331 = vpack.c.b16 %v8253, %v8250
  %v8332 = vpack.c.b16 %v8254, %v8251
  %v8333 = vpack.c.b16 %v8258, %v8255
  %v8334 = vpack.c.b16 %v8259, %v8256
  %v8335 = vpack.c.b16 %v8260, %v8257
  %v8336 = vpack.c.b16 %v8264, %v8261
  %v8337 = vpack.c.b16 %v8265, %v8262
  %v8338 = vpack.c.b16 %v8266, %v8263
  %v8339 = vpack.c.b16 %v8270, %v8267
  %v8340 = vpack.c.b16 %v8271, %v8268
  %v8341 = vpack.c.b16 %v8272, %v8269
  %v8342 = vpack.c.b16 %v8276, %v8273
  %v8343 = vpack.c.b16 %v8277, %v8274
  %v8344 = vpack.c.b16 %v8278, %v8275
  %v8345 = vpack.c.b16 %v8282, %v8279
  %v8346 = vpack.c.b16 %v8283, %v8280
  %v8347 = vpack.c.b16 %v8284, %v8281
  %vm8411 = vcmask 654336
  %v8413 = vsel %vm8411, %v7977, 0
  %v8416 = vsel %vm8411, %v7980, 0
  %v8419 = vsel %vm8411, %v7983, 0
  %v8422 = vsel %vm8411, %v7986, 0
  %v8425 = vsel %vm8411, %v7989, 0
  %8427 = vmatprep.subr.bf16.mxu0 %v8307
  %8428 = vmatpush1.bf16.msra.mxu0 %v8306
  %8429 = vmatprep.subr.bf16.mxu0 %v8304
  %8430 = vmatpush1.bf16.msra.mxu0 %v8303
  %8431 = vmatprep.subr.bf16.mxu0 %v8301
  %8432 = vmatpush1.bf16.msra.mxu0 %v8300
  %8433 = vmatprep.subr.bf16.mxu0 %v8298
  %8434 = vmatpush1.bf16.msra.mxu0 %v8297
  %8435 = vmatprep.subr.bf16.mxu0 %v8295
  %8436 = vmatpush1.bf16.msra.mxu0 %v8294
  %8437 = vmatprep.subr.bf16.mxu0 %v8292
  %8438 = vmatpush1.bf16.msra.mxu0 %v8291
  %8439 = vmatprep.subr.bf16.mxu0 %v8289
  %8440 = vmatpush1.bf16.msra.mxu0 %v8288
  %8441 = vmatprep.subr.bf16.mxu0 %v8286
  %8442 = vmatpush1.bf16.msra.mxu0 %v8285
  %8443 = vmatprep.subr.bf16.mxu0 %v8331
  %8444 = vmatpush2.bf16.msra.mxu0 %v8330
  %8445 = vmatprep.subr.bf16.mxu0 %v8328
  %8446 = vmatpush2.bf16.msra.mxu0 %v8327
  %8447 = vmatprep.subr.bf16.mxu0 %v8325
  %8448 = vmatpush2.bf16.msra.mxu0 %v8324
  %8449 = vmatprep.subr.bf16.mxu0 %v8322
  %8450 = vmatpush2.bf16.msra.mxu0 %v8321
  %8451 = vmatprep.subr.bf16.mxu0 %v8319
  %8452 = vmatpush2.bf16.msra.mxu0 %v8318
  %8453 = vmatprep.subr.bf16.mxu0 %v8316
  %8454 = vmatpush2.bf16.msra.mxu0 %v8315
  %8455 = vmatprep.subr.bf16.mxu0 %v8313
  %8456 = vmatpush2.bf16.msra.mxu0 %v8312
  %8457 = vmatprep.subr.bf16.mxu0 %v8310
  %8458 = vmatpush2.bf16.msra.mxu0 %v8309
  %8459 = vmatprep.mubr.bf16.mxu0 %v7976
  %8460 = vmatmul.mubr.bf16.gmra.mxu0 %v7975
  %v8461 = vpop.f32.mrf.mxu0
  %v8462 = vadd.f32 0.0, %v8461
  %v8463 = vpop.f32.mrf.mxu0
  %v8464 = vadd.f32 0.0, %v8463
  %v8465 = vpop.f32.mrf.mxu0
  %v8466 = vadd.f32 0.0, %v8465
  %v8467 = vpop.f32.mrf.mxu0
  %v8468 = vadd.f32 0.0, %v8467
  %8469 = vmatprep.mubr.bf16.mxu0 %v7979
  %8470 = vmatmul.mubr.bf16.gmra.mxu0 %v7978
  %v8471 = vpop.f32.mrf.mxu0
  %v8472 = vadd.f32 0.0, %v8471
  %v8473 = vpop.f32.mrf.mxu0
  %v8474 = vadd.f32 0.0, %v8473
  %v8475 = vpop.f32.mrf.mxu0
  %v8476 = vadd.f32 0.0, %v8475
  %v8477 = vpop.f32.mrf.mxu0
  %v8478 = vadd.f32 0.0, %v8477
  %8479 = vmatprep.mubr.bf16.mxu0 %v7982
  %8480 = vmatmul.mubr.bf16.gmra.mxu0 %v7981
  %v8481 = vpop.f32.mrf.mxu0
  %v8482 = vadd.f32 0.0, %v8481
  %v8483 = vpop.f32.mrf.mxu0
  %v8484 = vadd.f32 0.0, %v8483
  %v8485 = vpop.f32.mrf.mxu0
  %v8486 = vadd.f32 0.0, %v8485
  %v8487 = vpop.f32.mrf.mxu0
  %v8488 = vadd.f32 0.0, %v8487
  %8489 = vmatprep.mubr.bf16.mxu0 %v7985
  %8490 = vmatmul.mubr.bf16.gmra.mxu0 %v7984
  %v8491 = vpop.f32.mrf.mxu0
  %v8492 = vadd.f32 0.0, %v8491
  %v8493 = vpop.f32.mrf.mxu0
  %v8494 = vadd.f32 0.0, %v8493
  %v8495 = vpop.f32.mrf.mxu0
  %v8496 = vadd.f32 0.0, %v8495
  %v8497 = vpop.f32.mrf.mxu0
  %v8498 = vadd.f32 0.0, %v8497
  %8499 = vmatprep.mubr.bf16.mxu0 %v7988
  %8500 = vmatmul.mubr.bf16.gmra.mxu0 %v7987
  %v8501 = vpop.f32.mrf.mxu0
  %v8502 = vadd.f32 0.0, %v8501
  %v8503 = vpop.f32.mrf.mxu0
  %v8504 = vadd.f32 0.0, %v8503
  %v8505 = vpop.f32.mrf.mxu0
  %v8506 = vpop.f32.mrf.mxu0
  %8507 = vdwg.mxu0
  %8508 = vmatprep.subr.bf16.mxu0 0
  %8509 = vmatpush1.bf16.msra.mxu0 0
  %8510 = vmatprep.subr.bf16.mxu0 0
  %8511 = vmatpush1.bf16.msra.mxu0 0
  %8512 = vmatprep.subr.bf16.mxu0 0
  %8513 = vmatpush1.bf16.msra.mxu0 0
  %8514 = vmatprep.subr.bf16.mxu0 %v8346
  %8515 = vmatpush1.bf16.msra.mxu0 %v8345
  %8516 = vmatprep.subr.bf16.mxu0 %v8343
  %8517 = vmatpush1.bf16.msra.mxu0 %v8342
  %8518 = vmatprep.subr.bf16.mxu0 %v8340
  %8519 = vmatpush1.bf16.msra.mxu0 %v8339
  %8520 = vmatprep.subr.bf16.mxu0 %v8337
  %8521 = vmatpush1.bf16.msra.mxu0 %v8336
  %8522 = vmatprep.subr.bf16.mxu0 %v8334
  %8523 = vmatpush1.bf16.msra.mxu0 %v8333
  %8524 = vmatprep.subr.bf16.mxu0 0
  %8525 = vmatpush2.bf16.msra.mxu0 0
  %8526 = vmatprep.subr.bf16.mxu0 0
  %8527 = vmatpush2.bf16.msra.mxu0 0
  %8528 = vmatprep.subr.bf16.mxu0 0
  %8529 = vmatpush2.bf16.msra.mxu0 0
  %8530 = vmatprep.subr.bf16.mxu0 0
  %8531 = vmatpush2.bf16.msra.mxu0 0
  %8532 = vmatprep.subr.bf16.mxu0 0
  %8533 = vmatpush2.bf16.msra.mxu0 0
  %8534 = vmatprep.subr.bf16.mxu0 0
  %8535 = vmatpush2.bf16.msra.mxu0 0
  %8536 = vmatprep.subr.bf16.mxu0 0
  %8537 = vmatpush2.bf16.msra.mxu0 0
  %8538 = vmatprep.subr.bf16.mxu0 0
  %8539 = vmatpush2.bf16.msra.mxu0 0
  %8540 = vmatprep.mubr.bf16.mxu0 0
  %8541 = vmatmul.mubr.bf16.gmra.mxu0 %v8413
  %v8542 = vpop.f32.mrf.mxu0
  %v8543 = vadd.f32 %v8462, %v8542
  %v8544 = vpop.f32.mrf.mxu0
  %v8545 = vadd.f32 %v8464, %v8544
  %v8546 = vpop.f32.mrf.mxu0
  %v8547 = vadd.f32 %v8466, %v8546
  %v8548 = vpop.f32.mrf.mxu0
  %v8549 = vadd.f32 %v8468, %v8548
  %8550 = vmatprep.mubr.bf16.mxu0 0
  %8551 = vmatmul.mubr.bf16.gmra.mxu0 %v8416
  %v8552 = vpop.f32.mrf.mxu0
  %v8553 = vadd.f32 %v8472, %v8552
  %v8554 = vpop.f32.mrf.mxu0
  %v8555 = vadd.f32 %v8474, %v8554
  %v8556 = vpop.f32.mrf.mxu0
  %v8557 = vadd.f32 %v8476, %v8556
  %v8558 = vpop.f32.mrf.mxu0
  %v8559 = vadd.f32 %v8478, %v8558
  %8560 = vmatprep.mubr.bf16.mxu0 0
  %8561 = vmatmul.mubr.bf16.gmra.mxu0 %v8419
  %v8562 = vpop.f32.mrf.mxu0
  %v8563 = vadd.f32 %v8482, %v8562
  %v8564 = vpop.f32.mrf.mxu0
  %v8565 = vadd.f32 %v8484, %v8564
  %v8566 = vpop.f32.mrf.mxu0
  %v8567 = vadd.f32 %v8486, %v8566
  %v8568 = vpop.f32.mrf.mxu0
  %v8569 = vadd.f32 %v8488, %v8568
  %8570 = vmatprep.mubr.bf16.mxu0 0
  %8571 = vmatmul.mubr.bf16.gmra.mxu0 %v8422
  %v8572 = vpop.f32.mrf.mxu0
  %v8573 = vadd.f32 %v8492, %v8572
  %v8574 = vpop.f32.mrf.mxu0
  %v8575 = vadd.f32 %v8494, %v8574
  %v8576 = vpop.f32.mrf.mxu0
  %v8577 = vadd.f32 %v8496, %v8576
  %v8578 = vpop.f32.mrf.mxu0
  %v8579 = vadd.f32 %v8498, %v8578
  %8580 = vmatprep.mubr.bf16.mxu0 0
  %8581 = vmatmul.mubr.bf16.gmra.mxu0 %v8425
  %v8582 = vpop.f32.mrf.mxu0
  %v8583 = vadd.f32 %v8502, %v8582
  %v8584 = vpop.f32.mrf.mxu0
  %v8585 = vadd.f32 %v8504, %v8584
  %v8586 = vpop.f32.mrf.mxu0
  %v8587 = vpop.f32.mrf.mxu0
  %8588 = vdwg.mxu0
  %8589 = vmatprep.subr.bf16.mxu0 0
  %8590 = vmatpush1.bf16.msra.mxu0 %v8308
  %8591 = vmatprep.subr.bf16.mxu0 0
  %8592 = vmatpush1.bf16.msra.mxu0 %v8305
  %8593 = vmatprep.subr.bf16.mxu0 0
  %8594 = vmatpush1.bf16.msra.mxu0 %v8302
  %8595 = vmatprep.subr.bf16.mxu0 0
  %8596 = vmatpush1.bf16.msra.mxu0 %v8299
  %8597 = vmatprep.subr.bf16.mxu0 0
  %8598 = vmatpush1.bf16.msra.mxu0 %v8296
  %8599 = vmatprep.subr.bf16.mxu0 0
  %8600 = vmatpush1.bf16.msra.mxu0 %v8293
  %8601 = vmatprep.subr.bf16.mxu0 0
  %8602 = vmatpush1.bf16.msra.mxu0 %v8290
  %8603 = vmatprep.subr.bf16.mxu0 0
  %8604 = vmatpush1.bf16.msra.mxu0 %v8287
  %8605 = vmatprep.subr.bf16.mxu0 0
  %8606 = vmatpush2.bf16.msra.mxu0 %v8332
  %8607 = vmatprep.subr.bf16.mxu0 0
  %8608 = vmatpush2.bf16.msra.mxu0 %v8329
  %8609 = vmatprep.subr.bf16.mxu0 0
  %8610 = vmatpush2.bf16.msra.mxu0 %v8326
  %8611 = vmatprep.subr.bf16.mxu0 0
  %8612 = vmatpush2.bf16.msra.mxu0 %v8323
  %8613 = vmatprep.subr.bf16.mxu0 0
  %8614 = vmatpush2.bf16.msra.mxu0 %v8320
  %8615 = vmatprep.subr.bf16.mxu0 0
  %8616 = vmatpush2.bf16.msra.mxu0 %v8317
  %8617 = vmatprep.subr.bf16.mxu0 0
  %8618 = vmatpush2.bf16.msra.mxu0 %v8314
  %8619 = vmatprep.subr.bf16.mxu0 0
  %8620 = vmatpush2.bf16.msra.mxu0 %v8311
  %8621 = vmatprep.mubr.bf16.mxu0 %v7976
  %8622 = vmatmul.mubr.bf16.gmra.mxu0 %v7975
  %v8623 = vpop.f32.mrf.mxu0
  %v8624 = vadd.f32 0.0, %v8623
  %v8625 = vpop.f32.mrf.mxu0
  %v8626 = vpop.f32.mrf.mxu0
  %v8627 = vadd.f32 0.0, %v8626
  %v8628 = vpop.f32.mrf.mxu0
  %8629 = vmatprep.mubr.bf16.mxu0 %v7979
  %8630 = vmatmul.mubr.bf16.gmra.mxu0 %v7978
  %v8631 = vpop.f32.mrf.mxu0
  %v8632 = vadd.f32 0.0, %v8631
  %v8633 = vpop.f32.mrf.mxu0
  %v8634 = vpop.f32.mrf.mxu0
  %v8635 = vadd.f32 0.0, %v8634
  %v8636 = vpop.f32.mrf.mxu0
  %8637 = vmatprep.mubr.bf16.mxu0 %v7982
  %8638 = vmatmul.mubr.bf16.gmra.mxu0 %v7981
  %v8639 = vpop.f32.mrf.mxu0
  %v8640 = vadd.f32 0.0, %v8639
  %v8641 = vpop.f32.mrf.mxu0
  %v8642 = vpop.f32.mrf.mxu0
  %v8643 = vadd.f32 0.0, %v8642
  %v8644 = vpop.f32.mrf.mxu0
  %8645 = vmatprep.mubr.bf16.mxu0 %v7985
  %8646 = vmatmul.mubr.bf16.gmra.mxu0 %v7984
  %v8647 = vpop.f32.mrf.mxu0
  %v8648 = vadd.f32 0.0, %v8647
  %v8649 = vpop.f32.mrf.mxu0
  %v8650 = vpop.f32.mrf.mxu0
  %v8651 = vadd.f32 0.0, %v8650
  %v8652 = vpop.f32.mrf.mxu0
  %8653 = vmatprep.mubr.bf16.mxu0 %v7988
  %8654 = vmatmul.mubr.bf16.gmra.mxu0 %v7987
  %v8655 = vpop.f32.mrf.mxu0
  %v8656 = vadd.f32 0.0, %v8655
  %v8657 = vpop.f32.mrf.mxu0
  %v8658 = vpop.f32.mrf.mxu0
  %v8659 = vpop.f32.mrf.mxu0
  %8660 = vdwg.mxu0
  %8661 = vmatprep.subr.bf16.mxu0 0
  %8662 = vmatpush1.bf16.msra.mxu0 0
  %8663 = vmatprep.subr.bf16.mxu0 0
  %8664 = vmatpush1.bf16.msra.mxu0 0
  %8665 = vmatprep.subr.bf16.mxu0 0
  %8666 = vmatpush1.bf16.msra.mxu0 0
  %8667 = vmatprep.subr.bf16.mxu0 0
  %8668 = vmatpush1.bf16.msra.mxu0 %v8347
  %8669 = vmatprep.subr.bf16.mxu0 0
  %8670 = vmatpush1.bf16.msra.mxu0 %v8344
  %8671 = vmatprep.subr.bf16.mxu0 0
  %8672 = vmatpush1.bf16.msra.mxu0 %v8341
  %8673 = vmatprep.subr.bf16.mxu0 0
  %8674 = vmatpush1.bf16.msra.mxu0 %v8338
  %8675 = vmatprep.subr.bf16.mxu0 0
  %8676 = vmatpush1.bf16.msra.mxu0 %v8335
  %8677 = vmatprep.subr.bf16.mxu0 0
  %8678 = vmatpush2.bf16.msra.mxu0 0
  %8679 = vmatprep.subr.bf16.mxu0 0
  %8680 = vmatpush2.bf16.msra.mxu0 0
  %8681 = vmatprep.subr.bf16.mxu0 0
  %8682 = vmatpush2.bf16.msra.mxu0 0
  %8683 = vmatprep.subr.bf16.mxu0 0
  %8684 = vmatpush2.bf16.msra.mxu0 0
  %8685 = vmatprep.subr.bf16.mxu0 0
  %8686 = vmatpush2.bf16.msra.mxu0 0
  %8687 = vmatprep.subr.bf16.mxu0 0
  %8688 = vmatpush2.bf16.msra.mxu0 0
  %8689 = vmatprep.subr.bf16.mxu0 0
  %8690 = vmatpush2.bf16.msra.mxu0 0
  %8691 = vmatprep.subr.bf16.mxu0 0
  %8692 = vmatpush2.bf16.msra.mxu0 0
  %8693 = vmatprep.mubr.bf16.mxu0 0
  %8694 = vmatmul.mubr.bf16.gmra.mxu0 %v8413
  %v8695 = vpop.f32.mrf.mxu0
  %v8696 = vadd.f32 %v8624, %v8695
  %v8697 = vpop.f32.mrf.mxu0
  %v8698 = vpop.f32.mrf.mxu0
  %v8699 = vadd.f32 %v8627, %v8698
  %v8700 = vpop.f32.mrf.mxu0
  %8701 = vmatprep.mubr.bf16.mxu0 0
  %8702 = vmatmul.mubr.bf16.gmra.mxu0 %v8416
  %v8703 = vpop.f32.mrf.mxu0
  %v8704 = vadd.f32 %v8632, %v8703
  %v8705 = vpop.f32.mrf.mxu0
  %v8706 = vpop.f32.mrf.mxu0
  %v8707 = vadd.f32 %v8635, %v8706
  %v8708 = vpop.f32.mrf.mxu0
  %8709 = vmatprep.mubr.bf16.mxu0 0
  %8710 = vmatmul.mubr.bf16.gmra.mxu0 %v8419
  %v8711 = vpop.f32.mrf.mxu0
  %v8712 = vadd.f32 %v8640, %v8711
  %v8713 = vpop.f32.mrf.mxu0
  %v8714 = vpop.f32.mrf.mxu0
  %v8715 = vadd.f32 %v8643, %v8714
  %v8716 = vpop.f32.mrf.mxu0
  %8717 = vmatprep.mubr.bf16.mxu0 0
  %8718 = vmatmul.mubr.bf16.gmra.mxu0 %v8422
  %v8719 = vpop.f32.mrf.mxu0
  %v8720 = vadd.f32 %v8648, %v8719
  %v8721 = vpop.f32.mrf.mxu0
  %v8722 = vpop.f32.mrf.mxu0
  %v8723 = vadd.f32 %v8651, %v8722
  %v8724 = vpop.f32.mrf.mxu0
  %8725 = vmatprep.mubr.bf16.mxu0 0
  %8726 = vmatmul.mubr.bf16.gmra.mxu0 %v8425
  %v8727 = vpop.f32.mrf.mxu0
  %v8728 = vadd.f32 %v8656, %v8727
  %v8729 = vpop.f32.mrf.mxu0
  %v8730 = vpop.f32.mrf.mxu0
  %v8731 = vpop.f32.mrf.mxu0
  %8732 = vdwg.mxu0
  %v8817 = vunpack.c.l.b16 %v7891
  %v8818 = vunpack.c.h.b16 %v7891
  %v8819 = vunpack.c.l.b16 %v7892
  %v8820 = vunpack.c.l.b16 %v7893
  %v8821 = vunpack.c.h.b16 %v7893
  %v8822 = vunpack.c.l.b16 %v7894
  %v8823 = vunpack.c.l.b16 %v7895
  %v8824 = vunpack.c.h.b16 %v7895
  %v8825 = vunpack.c.l.b16 %v7896
  %v8826 = vunpack.c.l.b16 %v7897
  %v8827 = vunpack.c.h.b16 %v7897
  %v8828 = vunpack.c.l.b16 %v7898
  %v8829 = vunpack.c.l.b16 %v7899
  %v8830 = vunpack.c.h.b16 %v7899
  %v8831 = vunpack.c.l.b16 %v7900
  %v8832 = vunpack.c.l.b16 %v7901
  %v8833 = vunpack.c.h.b16 %v7901
  %v8834 = vunpack.c.l.b16 %v7902
  %v8835 = vunpack.c.l.b16 %v7903
  %v8836 = vunpack.c.h.b16 %v7903
  %v8837 = vunpack.c.l.b16 %v7904
  %v8838 = vunpack.c.l.b16 %v7905
  %v8839 = vunpack.c.h.b16 %v7905
  %v8840 = vunpack.c.l.b16 %v7906
  %v8841 = vunpack.c.l.b16 %v7907
  %v8842 = vunpack.c.h.b16 %v7907
  %v8843 = vunpack.c.l.b16 %v7908
  %v8844 = vunpack.c.l.b16 %v7909
  %v8845 = vunpack.c.h.b16 %v7909
  %v8846 = vunpack.c.l.b16 %v7910
  %v8847 = vunpack.c.l.b16 %v7911
  %v8848 = vunpack.c.h.b16 %v7911
  %v8849 = vunpack.c.l.b16 %v7912
  %v8850 = vunpack.c.l.b16 %v7913
  %v8851 = vunpack.c.h.b16 %v7913
  %v8852 = vunpack.c.l.b16 %v7914
  %v8853 = vunpack.c.l.b16 %v7915
  %v8854 = vunpack.c.h.b16 %v7915
  %v8855 = vunpack.c.l.b16 %v7916
  %v8856 = vunpack.c.l.b16 %v7917
  %v8857 = vunpack.c.h.b16 %v7917
  %v8858 = vunpack.c.l.b16 %v7918
  %v8859 = vunpack.c.l.b16 %v7919
  %v8860 = vunpack.c.h.b16 %v7919
  %v8861 = vunpack.c.l.b16 %v7920
  %v8862 = vunpack.c.l.b16 %v7921
  %v8863 = vunpack.c.h.b16 %v7921
  %v8864 = vunpack.c.l.b16 %v7922
  %v8865 = vunpack.c.l.b16 %v7923
  %v8866 = vunpack.c.h.b16 %v7923
  %v8867 = vunpack.c.l.b16 %v7924
  %v8868 = vunpack.c.l.b16 %v7925
  %v8869 = vunpack.c.h.b16 %v7925
  %v8870 = vunpack.c.l.b16 %v7926
  %v8871 = vunpack.c.l.b16 %v7927
  %v8872 = vunpack.c.h.b16 %v7927
  %v8873 = vunpack.c.l.b16 %v7928
  %v8874 = vunpack.c.l.b16 %v7929
  %v8875 = vunpack.c.h.b16 %v7929
  %v8876 = vunpack.c.l.b16 %v7930
  %v8877 = vunpack.c.l.b16 %v7931
  %v8878 = vunpack.c.h.b16 %v7931
  %v8879 = vunpack.c.l.b16 %v7932
  %v8880 = vunpack.c.l.b16 %v7933
  %v8881 = vunpack.c.h.b16 %v7933
  %v8882 = vunpack.c.l.b16 %v7934
  %v8883 = vunpack.c.l.b16 %v7935
  %v8884 = vunpack.c.h.b16 %v7935
  %v8885 = vunpack.c.l.b16 %v7936
  %v8886 = vunpack.c.l.b16 %v7937
  %v8887 = vunpack.c.h.b16 %v7937
  %v8888 = vunpack.c.l.b16 %v7938
  %v8889 = vunpack.c.l.b16 %v7939
  %v8890 = vunpack.c.h.b16 %v7939
  %v8891 = vunpack.c.l.b16 %v7940
  %v8892 = vunpack.c.l.b16 %v7941
  %v8893 = vunpack.c.h.b16 %v7941
  %v8894 = vunpack.c.l.b16 %v7942
  %v8895 = vunpack.c.l.b16 %v7943
  %v8896 = vunpack.c.h.b16 %v7943
  %v8897 = vunpack.c.l.b16 %v7944
  %v8898 = vunpack.c.l.b16 %v7945
  %v8899 = vunpack.c.h.b16 %v7945
  %v8900 = vunpack.c.l.b16 %v7946
  %v8901 = vunpack.c.l.b16 %v7947
  %v8902 = vunpack.c.h.b16 %v7947
  %v8903 = vunpack.c.l.b16 %v7948
  %v8904 = vunpack.c.l.b16 %v7949
  %v8905 = vunpack.c.h.b16 %v7949
  %v8906 = vunpack.c.l.b16 %v7950
  %v8907 = vunpack.c.l.b16 %v7951
  %v8908 = vunpack.c.h.b16 %v7951
  %v8909 = vunpack.c.l.b16 %v7952
  %v8910 = vunpack.c.l.b16 %v7953
  %v8911 = vunpack.c.h.b16 %v7953
  %v8912 = vunpack.c.l.b16 %v7954
  %v8913 = vunpack.c.l.b16 %v7955
  %v8914 = vunpack.c.h.b16 %v7955
  %v8915 = vunpack.c.l.b16 %v7956
  %v8916 = vunpack.c.l.b16 %v7957
  %v8917 = vunpack.c.h.b16 %v7957
  %v8918 = vunpack.c.l.b16 %v7958
  %v8919 = vunpack.c.l.b16 %v7959
  %v8920 = vunpack.c.h.b16 %v7959
  %v8921 = vunpack.c.l.b16 %v7960
  %v8922 = vunpack.c.l.b16 %v7961
  %v8923 = vunpack.c.h.b16 %v7961
  %v8924 = vunpack.c.l.b16 %v7962
  %v8925 = vunpack.c.l.b16 %v7963
  %v8926 = vunpack.c.h.b16 %v7963
  %v8927 = vunpack.c.l.b16 %v7964
  %v8928 = vunpack.c.l.b16 %v7965
  %v8929 = vunpack.c.h.b16 %v7965
  %v8930 = vunpack.c.l.b16 %v7966
  %v8931 = vunpack.c.l.b16 %v7967
  %v8932 = vunpack.c.h.b16 %v7967
  %v8933 = vunpack.c.l.b16 %v7968
  %v8934 = vunpack.c.l.b16 %v7969
  %v8935 = vunpack.c.h.b16 %v7969
  %v8936 = vunpack.c.l.b16 %v7970
  %v8937 = vunpack.c.l.b16 %v7971
  %v8938 = vunpack.c.h.b16 %v7971
  %v8939 = vunpack.c.l.b16 %v7972
  %v8940 = vunpack.c.l.b16 %v7973
  %v8941 = vunpack.c.h.b16 %v7973
  %v8942 = vunpack.c.l.b16 %v7974
  %v8943 = vpack.c.b16 %v8820, %v8817
  %v8944 = vpack.c.b16 %v8821, %v8818
  %v8945 = vpack.c.b16 %v8822, %v8819
  %v8946 = vpack.c.b16 %v8826, %v8823
  %v8947 = vpack.c.b16 %v8827, %v8824
  %v8948 = vpack.c.b16 %v8828, %v8825
  %v8949 = vpack.c.b16 %v8832, %v8829
  %v8950 = vpack.c.b16 %v8833, %v8830
  %v8951 = vpack.c.b16 %v8834, %v8831
  %v8952 = vpack.c.b16 %v8838, %v8835
  %v8953 = vpack.c.b16 %v8839, %v8836
  %v8954 = vpack.c.b16 %v8840, %v8837
  %v8955 = vpack.c.b16 %v8844, %v8841
  %v8956 = vpack.c.b16 %v8845, %v8842
  %v8957 = vpack.c.b16 %v8846, %v8843
  %v8958 = vpack.c.b16 %v8850, %v8847
  %v8959 = vpack.c.b16 %v8851, %v8848
  %v8960 = vpack.c.b16 %v8852, %v8849
  %v8961 = vpack.c.b16 %v8856, %v8853
  %v8962 = vpack.c.b16 %v8857, %v8854
  %v8963 = vpack.c.b16 %v8858, %v8855
  %v8964 = vpack.c.b16 %v8862, %v8859
  %v8965 = vpack.c.b16 %v8863, %v8860
  %v8966 = vpack.c.b16 %v8864, %v8861
  %v8967 = vpack.c.b16 %v8868, %v8865
  %v8968 = vpack.c.b16 %v8869, %v8866
  %v8969 = vpack.c.b16 %v8870, %v8867
  %v8970 = vpack.c.b16 %v8874, %v8871
  %v8971 = vpack.c.b16 %v8875, %v8872
  %v8972 = vpack.c.b16 %v8876, %v8873
  %v8973 = vpack.c.b16 %v8880, %v8877
  %v8974 = vpack.c.b16 %v8881, %v8878
  %v8975 = vpack.c.b16 %v8882, %v8879
  %v8976 = vpack.c.b16 %v8886, %v8883
  %v8977 = vpack.c.b16 %v8887, %v8884
  %v8978 = vpack.c.b16 %v8888, %v8885
  %v8979 = vpack.c.b16 %v8892, %v8889
  %v8980 = vpack.c.b16 %v8893, %v8890
  %v8981 = vpack.c.b16 %v8894, %v8891
  %v8982 = vpack.c.b16 %v8898, %v8895
  %v8983 = vpack.c.b16 %v8899, %v8896
  %v8984 = vpack.c.b16 %v8900, %v8897
  %v8985 = vpack.c.b16 %v8904, %v8901
  %v8986 = vpack.c.b16 %v8905, %v8902
  %v8987 = vpack.c.b16 %v8906, %v8903
  %v8988 = vpack.c.b16 %v8910, %v8907
  %v8989 = vpack.c.b16 %v8911, %v8908
  %v8990 = vpack.c.b16 %v8912, %v8909
  %v8991 = vpack.c.b16 %v8916, %v8913
  %v8992 = vpack.c.b16 %v8917, %v8914
  %v8993 = vpack.c.b16 %v8918, %v8915
  %v8994 = vpack.c.b16 %v8922, %v8919
  %v8995 = vpack.c.b16 %v8923, %v8920
  %v8996 = vpack.c.b16 %v8924, %v8921
  %v8997 = vpack.c.b16 %v8928, %v8925
  %v8998 = vpack.c.b16 %v8929, %v8926
  %v8999 = vpack.c.b16 %v8930, %v8927
  %v9000 = vpack.c.b16 %v8934, %v8931
  %v9001 = vpack.c.b16 %v8935, %v8932
  %v9002 = vpack.c.b16 %v8936, %v8933
  %v9003 = vpack.c.b16 %v8940, %v8937
  %v9004 = vpack.c.b16 %v8941, %v8938
  %v9005 = vpack.c.b16 %v8942, %v8939
  %v9070 = vsel %vm8411, %v7878, 0
  %v9073 = vsel %vm8411, %v7881, 0
  %v9076 = vsel %vm8411, %v7884, 0
  %v9079 = vsel %vm8411, %v7887, 0
  %v9082 = vsel %vm8411, %v7890, 0
  %9084 = vmatprep.subr.bf16.mxu0 %v8965
  %9085 = vmatpush1.bf16.msra.mxu0 %v8964
  %9086 = vmatprep.subr.bf16.mxu0 %v8962
  %9087 = vmatpush1.bf16.msra.mxu0 %v8961
  %9088 = vmatprep.subr.bf16.mxu0 %v8959
  %9089 = vmatpush1.bf16.msra.mxu0 %v8958
  %9090 = vmatprep.subr.bf16.mxu0 %v8956
  %9091 = vmatpush1.bf16.msra.mxu0 %v8955
  %9092 = vmatprep.subr.bf16.mxu0 %v8953
  %9093 = vmatpush1.bf16.msra.mxu0 %v8952
  %9094 = vmatprep.subr.bf16.mxu0 %v8950
  %9095 = vmatpush1.bf16.msra.mxu0 %v8949
  %9096 = vmatprep.subr.bf16.mxu0 %v8947
  %9097 = vmatpush1.bf16.msra.mxu0 %v8946
  %9098 = vmatprep.subr.bf16.mxu0 %v8944
  %9099 = vmatpush1.bf16.msra.mxu0 %v8943
  %9100 = vmatprep.subr.bf16.mxu0 %v8989
  %9101 = vmatpush2.bf16.msra.mxu0 %v8988
  %9102 = vmatprep.subr.bf16.mxu0 %v8986
  %9103 = vmatpush2.bf16.msra.mxu0 %v8985
  %9104 = vmatprep.subr.bf16.mxu0 %v8983
  %9105 = vmatpush2.bf16.msra.mxu0 %v8982
  %9106 = vmatprep.subr.bf16.mxu0 %v8980
  %9107 = vmatpush2.bf16.msra.mxu0 %v8979
  %9108 = vmatprep.subr.bf16.mxu0 %v8977
  %9109 = vmatpush2.bf16.msra.mxu0 %v8976
  %9110 = vmatprep.subr.bf16.mxu0 %v8974
  %9111 = vmatpush2.bf16.msra.mxu0 %v8973
  %9112 = vmatprep.subr.bf16.mxu0 %v8971
  %9113 = vmatpush2.bf16.msra.mxu0 %v8970
  %9114 = vmatprep.subr.bf16.mxu0 %v8968
  %9115 = vmatpush2.bf16.msra.mxu0 %v8967
  %9116 = vmatprep.mubr.bf16.mxu0 %v7877
  %9117 = vmatmul.mubr.bf16.gmra.mxu0 %v7876
  %v9118 = vpop.f32.mrf.mxu0
  %v9119 = vadd.f32 %v8543, %v9118
  %v9120 = vpop.f32.mrf.mxu0
  %v9121 = vadd.f32 %v8545, %v9120
  %v9122 = vpop.f32.mrf.mxu0
  %v9123 = vadd.f32 %v8547, %v9122
  %v9124 = vpop.f32.mrf.mxu0
  %v9125 = vadd.f32 %v8549, %v9124
  %9126 = vmatprep.mubr.bf16.mxu0 %v7880
  %9127 = vmatmul.mubr.bf16.gmra.mxu0 %v7879
  %v9128 = vpop.f32.mrf.mxu0
  %v9129 = vadd.f32 %v8553, %v9128
  %v9130 = vpop.f32.mrf.mxu0
  %v9131 = vadd.f32 %v8555, %v9130
  %v9132 = vpop.f32.mrf.mxu0
  %v9133 = vadd.f32 %v8557, %v9132
  %v9134 = vpop.f32.mrf.mxu0
  %v9135 = vadd.f32 %v8559, %v9134
  %9136 = vmatprep.mubr.bf16.mxu0 %v7883
  %9137 = vmatmul.mubr.bf16.gmra.mxu0 %v7882
  %v9138 = vpop.f32.mrf.mxu0
  %v9139 = vadd.f32 %v8563, %v9138
  %v9140 = vpop.f32.mrf.mxu0
  %v9141 = vadd.f32 %v8565, %v9140
  %v9142 = vpop.f32.mrf.mxu0
  %v9143 = vadd.f32 %v8567, %v9142
  %v9144 = vpop.f32.mrf.mxu0
  %v9145 = vadd.f32 %v8569, %v9144
  %9146 = vmatprep.mubr.bf16.mxu0 %v7886
  %9147 = vmatmul.mubr.bf16.gmra.mxu0 %v7885
  %v9148 = vpop.f32.mrf.mxu0
  %v9149 = vadd.f32 %v8573, %v9148
  %v9150 = vpop.f32.mrf.mxu0
  %v9151 = vadd.f32 %v8575, %v9150
  %v9152 = vpop.f32.mrf.mxu0
  %v9153 = vadd.f32 %v8577, %v9152
  %v9154 = vpop.f32.mrf.mxu0
  %v9155 = vadd.f32 %v8579, %v9154
  %9156 = vmatprep.mubr.bf16.mxu0 %v7889
  %9157 = vmatmul.mubr.bf16.gmra.mxu0 %v7888
  %v9158 = vpop.f32.mrf.mxu0
  %v9159 = vadd.f32 %v8583, %v9158
  %v9160 = vpop.f32.mrf.mxu0
  %v9161 = vadd.f32 %v8585, %v9160
  %v9162 = vpop.f32.mrf.mxu0
  %v9163 = vpop.f32.mrf.mxu0
  %9164 = vdwg.mxu0
  %9165 = vmatprep.subr.bf16.mxu0 0
  %9166 = vmatpush1.bf16.msra.mxu0 0
  %9167 = vmatprep.subr.bf16.mxu0 0
  %9168 = vmatpush1.bf16.msra.mxu0 0
  %9169 = vmatprep.subr.bf16.mxu0 0
  %9170 = vmatpush1.bf16.msra.mxu0 0
  %9171 = vmatprep.subr.bf16.mxu0 %v9004
  %9172 = vmatpush1.bf16.msra.mxu0 %v9003
  %9173 = vmatprep.subr.bf16.mxu0 %v9001
  %9174 = vmatpush1.bf16.msra.mxu0 %v9000
  %9175 = vmatprep.subr.bf16.mxu0 %v8998
  %9176 = vmatpush1.bf16.msra.mxu0 %v8997
  %9177 = vmatprep.subr.bf16.mxu0 %v8995
  %9178 = vmatpush1.bf16.msra.mxu0 %v8994
  %9179 = vmatprep.subr.bf16.mxu0 %v8992
  %9180 = vmatpush1.bf16.msra.mxu0 %v8991
  %9181 = vmatprep.subr.bf16.mxu0 0
  %9182 = vmatpush2.bf16.msra.mxu0 0
  %9183 = vmatprep.subr.bf16.mxu0 0
  %9184 = vmatpush2.bf16.msra.mxu0 0
  %9185 = vmatprep.subr.bf16.mxu0 0
  %9186 = vmatpush2.bf16.msra.mxu0 0
  %9187 = vmatprep.subr.bf16.mxu0 0
  %9188 = vmatpush2.bf16.msra.mxu0 0
  %9189 = vmatprep.subr.bf16.mxu0 0
  %9190 = vmatpush2.bf16.msra.mxu0 0
  %9191 = vmatprep.subr.bf16.mxu0 0
  %9192 = vmatpush2.bf16.msra.mxu0 0
  %9193 = vmatprep.subr.bf16.mxu0 0
  %9194 = vmatpush2.bf16.msra.mxu0 0
  %9195 = vmatprep.subr.bf16.mxu0 0
  %9196 = vmatpush2.bf16.msra.mxu0 0
  %9197 = vmatprep.mubr.bf16.mxu0 0
  %9198 = vmatmul.mubr.bf16.gmra.mxu0 %v9070
  %v9199 = vpop.f32.mrf.mxu0
  %v9200 = vadd.f32 %v9119, %v9199
  %v9201 = vpop.f32.mrf.mxu0
  %v9202 = vadd.f32 %v9121, %v9201
  %v9203 = vpop.f32.mrf.mxu0
  %v9204 = vadd.f32 %v9123, %v9203
  %v9205 = vpop.f32.mrf.mxu0
  %v9206 = vadd.f32 %v9125, %v9205
  %9207 = vmatprep.mubr.bf16.mxu0 0
  %9208 = vmatmul.mubr.bf16.gmra.mxu0 %v9073
  %v9209 = vpop.f32.mrf.mxu0
  %v9210 = vadd.f32 %v9129, %v9209
  %v9211 = vpop.f32.mrf.mxu0
  %v9212 = vadd.f32 %v9131, %v9211
  %v9213 = vpop.f32.mrf.mxu0
  %v9214 = vadd.f32 %v9133, %v9213
  %v9215 = vpop.f32.mrf.mxu0
  %v9216 = vadd.f32 %v9135, %v9215
  %9217 = vmatprep.mubr.bf16.mxu0 0
  %9218 = vmatmul.mubr.bf16.gmra.mxu0 %v9076
  %v9219 = vpop.f32.mrf.mxu0
  %v9220 = vadd.f32 %v9139, %v9219
  %v9221 = vpop.f32.mrf.mxu0
  %v9222 = vadd.f32 %v9141, %v9221
  %v9223 = vpop.f32.mrf.mxu0
  %v9224 = vadd.f32 %v9143, %v9223
  %v9225 = vpop.f32.mrf.mxu0
  %v9226 = vadd.f32 %v9145, %v9225
  %9227 = vmatprep.mubr.bf16.mxu0 0
  %9228 = vmatmul.mubr.bf16.gmra.mxu0 %v9079
  %v9229 = vpop.f32.mrf.mxu0
  %v9230 = vadd.f32 %v9149, %v9229
  %v9231 = vpop.f32.mrf.mxu0
  %v9232 = vadd.f32 %v9151, %v9231
  %v9233 = vpop.f32.mrf.mxu0
  %v9234 = vadd.f32 %v9153, %v9233
  %v9235 = vpop.f32.mrf.mxu0
  %v9236 = vadd.f32 %v9155, %v9235
  %9237 = vmatprep.mubr.bf16.mxu0 0
  %9238 = vmatmul.mubr.bf16.gmra.mxu0 %v9082
  %v9239 = vpop.f32.mrf.mxu0
  %v9240 = vadd.f32 %v9159, %v9239
  %v9241 = vpop.f32.mrf.mxu0
  %v9242 = vadd.f32 %v9161, %v9241
  %v9243 = vpop.f32.mrf.mxu0
  %v9244 = vpop.f32.mrf.mxu0
  %9245 = vdwg.mxu0
  %9246 = vmatprep.subr.bf16.mxu0 0
  %9247 = vmatpush1.bf16.msra.mxu0 %v8966
  %9248 = vmatprep.subr.bf16.mxu0 0
  %9249 = vmatpush1.bf16.msra.mxu0 %v8963
  %9250 = vmatprep.subr.bf16.mxu0 0
  %9251 = vmatpush1.bf16.msra.mxu0 %v8960
  %9252 = vmatprep.subr.bf16.mxu0 0
  %9253 = vmatpush1.bf16.msra.mxu0 %v8957
  %9254 = vmatprep.subr.bf16.mxu0 0
  %9255 = vmatpush1.bf16.msra.mxu0 %v8954
  %9256 = vmatprep.subr.bf16.mxu0 0
  %9257 = vmatpush1.bf16.msra.mxu0 %v8951
  %9258 = vmatprep.subr.bf16.mxu0 0
  %9259 = vmatpush1.bf16.msra.mxu0 %v8948
  %9260 = vmatprep.subr.bf16.mxu0 0
  %9261 = vmatpush1.bf16.msra.mxu0 %v8945
  %9262 = vmatprep.subr.bf16.mxu0 0
  %9263 = vmatpush2.bf16.msra.mxu0 %v8990
  %9264 = vmatprep.subr.bf16.mxu0 0
  %9265 = vmatpush2.bf16.msra.mxu0 %v8987
  %9266 = vmatprep.subr.bf16.mxu0 0
  %9267 = vmatpush2.bf16.msra.mxu0 %v8984
  %9268 = vmatprep.subr.bf16.mxu0 0
  %9269 = vmatpush2.bf16.msra.mxu0 %v8981
  %9270 = vmatprep.subr.bf16.mxu0 0
  %9271 = vmatpush2.bf16.msra.mxu0 %v8978
  %9272 = vmatprep.subr.bf16.mxu0 0
  %9273 = vmatpush2.bf16.msra.mxu0 %v8975
  %9274 = vmatprep.subr.bf16.mxu0 0
  %9275 = vmatpush2.bf16.msra.mxu0 %v8972
  %9276 = vmatprep.subr.bf16.mxu0 0
  %9277 = vmatpush2.bf16.msra.mxu0 %v8969
  %9278 = vmatprep.mubr.bf16.mxu0 %v7877
  %9279 = vmatmul.mubr.bf16.gmra.mxu0 %v7876
  %v9280 = vpop.f32.mrf.mxu0
  %v9281 = vadd.f32 %v8696, %v9280
  %v9282 = vpop.f32.mrf.mxu0
  %v9283 = vpop.f32.mrf.mxu0
  %v9284 = vadd.f32 %v8699, %v9283
  %v9285 = vpop.f32.mrf.mxu0
  %9286 = vmatprep.mubr.bf16.mxu0 %v7880
  %9287 = vmatmul.mubr.bf16.gmra.mxu0 %v7879
  %v9288 = vpop.f32.mrf.mxu0
  %v9289 = vadd.f32 %v8704, %v9288
  %v9290 = vpop.f32.mrf.mxu0
  %v9291 = vpop.f32.mrf.mxu0
  %v9292 = vadd.f32 %v8707, %v9291
  %v9293 = vpop.f32.mrf.mxu0
  %9294 = vmatprep.mubr.bf16.mxu0 %v7883
  %9295 = vmatmul.mubr.bf16.gmra.mxu0 %v7882
  %v9296 = vpop.f32.mrf.mxu0
  %v9297 = vadd.f32 %v8712, %v9296
  %v9298 = vpop.f32.mrf.mxu0
  %v9299 = vpop.f32.mrf.mxu0
  %v9300 = vadd.f32 %v8715, %v9299
  %v9301 = vpop.f32.mrf.mxu0
  %9302 = vmatprep.mubr.bf16.mxu0 %v7886
  %9303 = vmatmul.mubr.bf16.gmra.mxu0 %v7885
  %v9304 = vpop.f32.mrf.mxu0
  %v9305 = vadd.f32 %v8720, %v9304
  %v9306 = vpop.f32.mrf.mxu0
  %v9307 = vpop.f32.mrf.mxu0
  %v9308 = vadd.f32 %v8723, %v9307
  %v9309 = vpop.f32.mrf.mxu0
  %9310 = vmatprep.mubr.bf16.mxu0 %v7889
  %9311 = vmatmul.mubr.bf16.gmra.mxu0 %v7888
  %v9312 = vpop.f32.mrf.mxu0
  %v9313 = vadd.f32 %v8728, %v9312
  %v9314 = vpop.f32.mrf.mxu0
  %v9315 = vpop.f32.mrf.mxu0
  %v9316 = vpop.f32.mrf.mxu0
  %9317 = vdwg.mxu0
  %9318 = vmatprep.subr.bf16.mxu0 0
  %9319 = vmatpush1.bf16.msra.mxu0 0
  %9320 = vmatprep.subr.bf16.mxu0 0
  %9321 = vmatpush1.bf16.msra.mxu0 0
  %9322 = vmatprep.subr.bf16.mxu0 0
  %9323 = vmatpush1.bf16.msra.mxu0 0
  %9324 = vmatprep.subr.bf16.mxu0 0
  %9325 = vmatpush1.bf16.msra.mxu0 %v9005
  %9326 = vmatprep.subr.bf16.mxu0 0
  %9327 = vmatpush1.bf16.msra.mxu0 %v9002
  %9328 = vmatprep.subr.bf16.mxu0 0
  %9329 = vmatpush1.bf16.msra.mxu0 %v8999
  %9330 = vmatprep.subr.bf16.mxu0 0
  %9331 = vmatpush1.bf16.msra.mxu0 %v8996
  %9332 = vmatprep.subr.bf16.mxu0 0
  %9333 = vmatpush1.bf16.msra.mxu0 %v8993
  %9334 = vmatprep.subr.bf16.mxu0 0
  %9335 = vmatpush2.bf16.msra.mxu0 0
  %9336 = vmatprep.subr.bf16.mxu0 0
  %9337 = vmatpush2.bf16.msra.mxu0 0
  %9338 = vmatprep.subr.bf16.mxu0 0
  %9339 = vmatpush2.bf16.msra.mxu0 0
  %9340 = vmatprep.subr.bf16.mxu0 0
  %9341 = vmatpush2.bf16.msra.mxu0 0
  %9342 = vmatprep.subr.bf16.mxu0 0
  %9343 = vmatpush2.bf16.msra.mxu0 0
  %9344 = vmatprep.subr.bf16.mxu0 0
  %9345 = vmatpush2.bf16.msra.mxu0 0
  %9346 = vmatprep.subr.bf16.mxu0 0
  %9347 = vmatpush2.bf16.msra.mxu0 0
  %9348 = vmatprep.subr.bf16.mxu0 0
  %9349 = vmatpush2.bf16.msra.mxu0 0
  %9350 = vmatprep.mubr.bf16.mxu0 0
  %9351 = vmatmul.mubr.bf16.gmra.mxu0 %v9070
  %v9352 = vpop.f32.mrf.mxu0
  %v9353 = vadd.f32 %v9281, %v9352
  %v9354 = vpop.f32.mrf.mxu0
  %v9355 = vpop.f32.mrf.mxu0
  %v9356 = vadd.f32 %v9284, %v9355
  %v9357 = vpop.f32.mrf.mxu0
  %9358 = vmatprep.mubr.bf16.mxu0 0
  %9359 = vmatmul.mubr.bf16.gmra.mxu0 %v9073
  %v9360 = vpop.f32.mrf.mxu0
  %v9361 = vadd.f32 %v9289, %v9360
  %v9362 = vpop.f32.mrf.mxu0
  %v9363 = vpop.f32.mrf.mxu0
  %v9364 = vadd.f32 %v9292, %v9363
  %v9365 = vpop.f32.mrf.mxu0
  %9366 = vmatprep.mubr.bf16.mxu0 0
  %9367 = vmatmul.mubr.bf16.gmra.mxu0 %v9076
  %v9368 = vpop.f32.mrf.mxu0
  %v9369 = vadd.f32 %v9297, %v9368
  %v9370 = vpop.f32.mrf.mxu0
  %v9371 = vpop.f32.mrf.mxu0
  %v9372 = vadd.f32 %v9300, %v9371
  %v9373 = vpop.f32.mrf.mxu0
  %9374 = vmatprep.mubr.bf16.mxu0 0
  %9375 = vmatmul.mubr.bf16.gmra.mxu0 %v9079
  %v9376 = vpop.f32.mrf.mxu0
  %v9377 = vadd.f32 %v9305, %v9376
  %v9378 = vpop.f32.mrf.mxu0
  %v9379 = vpop.f32.mrf.mxu0
  %v9380 = vadd.f32 %v9308, %v9379
  %v9381 = vpop.f32.mrf.mxu0
  %9382 = vmatprep.mubr.bf16.mxu0 0
  %9383 = vmatmul.mubr.bf16.gmra.mxu0 %v9082
  %v9384 = vpop.f32.mrf.mxu0
  %v9385 = vadd.f32 %v9313, %v9384
  %v9386 = vpop.f32.mrf.mxu0
  %v9387 = vpop.f32.mrf.mxu0
  %v9388 = vpop.f32.mrf.mxu0
  %9389 = vdwg.mxu0
  %v9390 = vpack.c.bf16 %v7822, %v7819
  %v9391 = vpack.c.bf16 %v7823, %v7820
  %v9392 = vpack.c.bf16 %v7824, %v7821
  %v9393 = vpack.c.bf16 %v7828, %v7825
  %v9394 = vpack.c.bf16 %v7829, %v7826
  %v9395 = vpack.c.bf16 %v7830, %v7827
  %v9396 = vpack.c.bf16 %v7834, %v7831
  %v9397 = vpack.c.bf16 %v7835, %v7832
  %v9398 = vpack.c.bf16 %v7836, %v7833
  %v9399 = vpack.c.bf16 %v7840, %v7837
  %v9400 = vpack.c.bf16 %v7841, %v7838
  %v9401 = vpack.c.bf16 %v7842, %v7839
  %v9402 = vpack.c.bf16 %v7843, %v7843
  %v9403 = vpack.c.bf16 %v7844, %v7844
  %v9404 = vpack.c.bf16 %v7845, %v7845
  %s9405 = scalar_lea.vmem %s3, 1008
  %v9406 = vld [vmem:[%s9405] sm:$0xff]
  %v9407 = vld [vmem:[%s9405 + $0x8] sm:$0xf]
  %v9408 = vld [vmem:[%s9405 + $0xc] sm:$0xff]
  %v9409 = vld [vmem:[%s9405 + $0x14] sm:$0xf]
  %v9410 = vld [vmem:[%s9405 + $0x18] sm:$0xff]
  %v9411 = vld [vmem:[%s9405 + $0x20] sm:$0xf]
  %v9412 = vld [vmem:[%s9405 + $0x24] sm:$0xff]
  %v9413 = vld [vmem:[%s9405 + $0x2c] sm:$0xf]
  %v9414 = vld [vmem:[%s9405 + $0x30] sm:$0xff]
  %v9415 = vld [vmem:[%s9405 + $0x38] sm:$0xf]
  %v9416 = vld [vmem:[%s9405 + $0x3c] sm:$0xff]
  %v9417 = vld [vmem:[%s9405 + $0x44] sm:$0xf]
  %v9418 = vld [vmem:[%s9405 + $0x48] sm:$0xff]
  %v9419 = vld [vmem:[%s9405 + $0x50] sm:$0xf]
  %v9420 = vld [vmem:[%s9405 + $0x54] sm:$0xff]
  %v9421 = vld [vmem:[%s9405 + $0x5c] sm:$0xf]
  %v9422 = vld [vmem:[%s9405 + $0x60] sm:$0xff]
  %v9423 = vld [vmem:[%s9405 + $0x68] sm:$0xf]
  %v9424 = vld [vmem:[%s9405 + $0x6c] sm:$0xff]
  %v9425 = vld [vmem:[%s9405 + $0x74] sm:$0xf]
  %v9426 = vld [vmem:[%s9405 + $0x78] sm:$0xff]
  %v9427 = vld [vmem:[%s9405 + $0x80] sm:$0xf]
  %v9428 = vld [vmem:[%s9405 + $0x84] sm:$0xff]
  %v9429 = vld [vmem:[%s9405 + $0x8c] sm:$0xf]
  %v9430 = vld [vmem:[%s9405 + $0x90] sm:$0xff]
  %v9431 = vld [vmem:[%s9405 + $0x98] sm:$0xf]
  %v9432 = vld [vmem:[%s9405 + $0x9c] sm:$0xff]
  %v9433 = vld [vmem:[%s9405 + $0xa4] sm:$0xf]
  %v9434 = vld [vmem:[%s9405 + $0xa8] sm:$0xff]
  %v9435 = vld [vmem:[%s9405 + $0xb0] sm:$0xf]
  %v9436 = vld [vmem:[%s9405 + $0xb4] sm:$0xff]
  %v9437 = vld [vmem:[%s9405 + $0xbc] sm:$0xf]
  %v9438 = vld [vmem:[%s9405 + $0xc0] sm:$0xff]
  %v9439 = vld [vmem:[%s9405 + $0xc8] sm:$0xf]
  %v9440 = vld [vmem:[%s9405 + $0xcc] sm:$0xff]
  %v9441 = vld [vmem:[%s9405 + $0xd4] sm:$0xf]
  %v9442 = vld [vmem:[%s9405 + $0xd8] sm:$0xff]
  %v9443 = vld [vmem:[%s9405 + $0xe0] sm:$0xf]
  %v9444 = vld [vmem:[%s9405 + $0xe4] sm:$0xff]
  %v9445 = vld [vmem:[%s9405 + $0xec] sm:$0xf]
  %v9446 = vld [vmem:[%s9405 + $0xf0] sm:$0xff]
  %v9447 = vld [vmem:[%s9405 + $0xf8] sm:$0xf]
  %v9448 = vld [vmem:[%s9405 + $0xfc] sm:$0xff]
  %v9449 = vld [vmem:[%s9405 + $0x104] sm:$0xf]
  %v9450 = vld [vmem:[%s9405 + $0x108] sm:$0xff]
  %v9451 = vld [vmem:[%s9405 + $0x110] sm:$0xf]
  %v9452 = vld [vmem:[%s9405 + $0x114] sm:$0xff]
  %v9453 = vld [vmem:[%s9405 + $0x11c] sm:$0xf]
  %v9454 = vld [vmem:[%s9405 + $0x120] sm:$0xff]
  %v9455 = vld [vmem:[%s9405 + $0x128] sm:$0xf]
  %v9456 = vld [vmem:[%s9405 + $0x12c] sm:$0xff]
  %v9457 = vld [vmem:[%s9405 + $0x134] sm:$0xf]
  %v9458 = vld [vmem:[%s9405 + $0x138] sm:$0xff]
  %v9459 = vld [vmem:[%s9405 + $0x140] sm:$0xf]
  %v9460 = vld [vmem:[%s9405 + $0x144] sm:$0xff]
  %v9461 = vld [vmem:[%s9405 + $0x14c] sm:$0xf]
  %v9462 = vld [vmem:[%s9405 + $0x150] sm:$0xff]
  %v9463 = vld [vmem:[%s9405 + $0x158] sm:$0xf]
  %v9464 = vld [vmem:[%s9405 + $0x15c] sm:$0xff]
  %v9465 = vld [vmem:[%s9405 + $0x164] sm:$0xf]
  %v9466 = vld [vmem:[%s9405 + $0x168] sm:$0xff]
  %v9467 = vld [vmem:[%s9405 + $0x170] sm:$0xf]
  %v9468 = vld [vmem:[%s9405 + $0x174] sm:$0xff]
  %v9469 = vld [vmem:[%s9405 + $0x17c] sm:$0xf]
  %v9470 = vld [vmem:[%s9405 + $0x180] sm:$0xff]
  %v9471 = vld [vmem:[%s9405 + $0x188] sm:$0xf]
  %v9472 = vld [vmem:[%s9405 + $0x18c] sm:$0xff]
  %v9473 = vld [vmem:[%s9405 + $0x194] sm:$0xf]
  %v9474 = vld [vmem:[%s9405 + $0x198] sm:$0xff]
  %v9475 = vld [vmem:[%s9405 + $0x1a0] sm:$0xf]
  %v9476 = vld [vmem:[%s9405 + $0x1a4] sm:$0xff]
  %v9477 = vld [vmem:[%s9405 + $0x1ac] sm:$0xf]
  %v9478 = vld [vmem:[%s9405 + $0x1b0] sm:$0xff]
  %v9479 = vld [vmem:[%s9405 + $0x1b8] sm:$0xf]
  %v9480 = vld [vmem:[%s9405 + $0x1bc] sm:$0xff]
  %v9481 = vld [vmem:[%s9405 + $0x1c4] sm:$0xf]
  %v9482 = vld [vmem:[%s9405 + $0x1c8] sm:$0xff]
  %v9483 = vld [vmem:[%s9405 + $0x1d0] sm:$0xf]
  %v9484 = vld [vmem:[%s9405 + $0x1d4] sm:$0xff]
  %v9485 = vld [vmem:[%s9405 + $0x1dc] sm:$0xf]
  %v9486 = vld [vmem:[%s9405 + $0x1e0] sm:$0xff]
  %v9487 = vld [vmem:[%s9405 + $0x1e8] sm:$0xf]
  %v9488 = vld [vmem:[%s9405 + $0x1ec] sm:$0xff]
  %v9489 = vld [vmem:[%s9405 + $0x1f4] sm:$0xf]
  %v9574 = vunpack.c.l.b16 %v9406
  %v9575 = vunpack.c.h.b16 %v9406
  %v9576 = vunpack.c.l.b16 %v9407
  %v9577 = vunpack.c.l.b16 %v9408
  %v9578 = vunpack.c.h.b16 %v9408
  %v9579 = vunpack.c.l.b16 %v9409
  %v9580 = vunpack.c.l.b16 %v9410
  %v9581 = vunpack.c.h.b16 %v9410
  %v9582 = vunpack.c.l.b16 %v9411
  %v9583 = vunpack.c.l.b16 %v9412
  %v9584 = vunpack.c.h.b16 %v9412
  %v9585 = vunpack.c.l.b16 %v9413
  %v9586 = vunpack.c.l.b16 %v9414
  %v9587 = vunpack.c.h.b16 %v9414
  %v9588 = vunpack.c.l.b16 %v9415
  %v9589 = vunpack.c.l.b16 %v9416
  %v9590 = vunpack.c.h.b16 %v9416
  %v9591 = vunpack.c.l.b16 %v9417
  %v9592 = vunpack.c.l.b16 %v9418
  %v9593 = vunpack.c.h.b16 %v9418
  %v9594 = vunpack.c.l.b16 %v9419
  %v9595 = vunpack.c.l.b16 %v9420
  %v9596 = vunpack.c.h.b16 %v9420
  %v9597 = vunpack.c.l.b16 %v9421
  %v9598 = vunpack.c.l.b16 %v9422
  %v9599 = vunpack.c.h.b16 %v9422
  %v9600 = vunpack.c.l.b16 %v9423
  %v9601 = vunpack.c.l.b16 %v9424
  %v9602 = vunpack.c.h.b16 %v9424
  %v9603 = vunpack.c.l.b16 %v9425
  %v9604 = vunpack.c.l.b16 %v9426
  %v9605 = vunpack.c.h.b16 %v9426
  %v9606 = vunpack.c.l.b16 %v9427
  %v9607 = vunpack.c.l.b16 %v9428
  %v9608 = vunpack.c.h.b16 %v9428
  %v9609 = vunpack.c.l.b16 %v9429
  %v9610 = vunpack.c.l.b16 %v9430
  %v9611 = vunpack.c.h.b16 %v9430
  %v9612 = vunpack.c.l.b16 %v9431
  %v9613 = vunpack.c.l.b16 %v9432
  %v9614 = vunpack.c.h.b16 %v9432
  %v9615 = vunpack.c.l.b16 %v9433
  %v9616 = vunpack.c.l.b16 %v9434
  %v9617 = vunpack.c.h.b16 %v9434
  %v9618 = vunpack.c.l.b16 %v9435
  %v9619 = vunpack.c.l.b16 %v9436
  %v9620 = vunpack.c.h.b16 %v9436
  %v9621 = vunpack.c.l.b16 %v9437
  %v9622 = vunpack.c.l.b16 %v9438
  %v9623 = vunpack.c.h.b16 %v9438
  %v9624 = vunpack.c.l.b16 %v9439
  %v9625 = vunpack.c.l.b16 %v9440
  %v9626 = vunpack.c.h.b16 %v9440
  %v9627 = vunpack.c.l.b16 %v9441
  %v9628 = vunpack.c.l.b16 %v9442
  %v9629 = vunpack.c.h.b16 %v9442
  %v9630 = vunpack.c.l.b16 %v9443
  %v9631 = vunpack.c.l.b16 %v9444
  %v9632 = vunpack.c.h.b16 %v9444
  %v9633 = vunpack.c.l.b16 %v9445
  %v9634 = vunpack.c.l.b16 %v9446
  %v9635 = vunpack.c.h.b16 %v9446
  %v9636 = vunpack.c.l.b16 %v9447
  %v9637 = vunpack.c.l.b16 %v9448
  %v9638 = vunpack.c.h.b16 %v9448
  %v9639 = vunpack.c.l.b16 %v9449
  %v9640 = vunpack.c.l.b16 %v9450
  %v9641 = vunpack.c.h.b16 %v9450
  %v9642 = vunpack.c.l.b16 %v9451
  %v9643 = vunpack.c.l.b16 %v9452
  %v9644 = vunpack.c.h.b16 %v9452
  %v9645 = vunpack.c.l.b16 %v9453
  %v9646 = vunpack.c.l.b16 %v9454
  %v9647 = vunpack.c.h.b16 %v9454
  %v9648 = vunpack.c.l.b16 %v9455
  %v9649 = vunpack.c.l.b16 %v9456
  %v9650 = vunpack.c.h.b16 %v9456
  %v9651 = vunpack.c.l.b16 %v9457
  %v9652 = vunpack.c.l.b16 %v9458
  %v9653 = vunpack.c.h.b16 %v9458
  %v9654 = vunpack.c.l.b16 %v9459
  %v9655 = vunpack.c.l.b16 %v9460
  %v9656 = vunpack.c.h.b16 %v9460
  %v9657 = vunpack.c.l.b16 %v9461
  %v9658 = vunpack.c.l.b16 %v9462
  %v9659 = vunpack.c.h.b16 %v9462
  %v9660 = vunpack.c.l.b16 %v9463
  %v9661 = vunpack.c.l.b16 %v9464
  %v9662 = vunpack.c.h.b16 %v9464
  %v9663 = vunpack.c.l.b16 %v9465
  %v9664 = vunpack.c.l.b16 %v9466
  %v9665 = vunpack.c.h.b16 %v9466
  %v9666 = vunpack.c.l.b16 %v9467
  %v9667 = vunpack.c.l.b16 %v9468
  %v9668 = vunpack.c.h.b16 %v9468
  %v9669 = vunpack.c.l.b16 %v9469
  %v9670 = vunpack.c.l.b16 %v9470
  %v9671 = vunpack.c.h.b16 %v9470
  %v9672 = vunpack.c.l.b16 %v9471
  %v9673 = vunpack.c.l.b16 %v9472
  %v9674 = vunpack.c.h.b16 %v9472
  %v9675 = vunpack.c.l.b16 %v9473
  %v9676 = vunpack.c.l.b16 %v9474
  %v9677 = vunpack.c.h.b16 %v9474
  %v9678 = vunpack.c.l.b16 %v9475
  %v9679 = vunpack.c.l.b16 %v9476
  %v9680 = vunpack.c.h.b16 %v9476
  %v9681 = vunpack.c.l.b16 %v9477
  %v9682 = vunpack.c.l.b16 %v9478
  %v9683 = vunpack.c.h.b16 %v9478
  %v9684 = vunpack.c.l.b16 %v9479
  %v9685 = vunpack.c.l.b16 %v9480
  %v9686 = vunpack.c.h.b16 %v9480
  %v9687 = vunpack.c.l.b16 %v9481
  %v9688 = vunpack.c.l.b16 %v9482
  %v9689 = vunpack.c.h.b16 %v9482
  %v9690 = vunpack.c.l.b16 %v9483
  %v9691 = vunpack.c.l.b16 %v9484
  %v9692 = vunpack.c.h.b16 %v9484
  %v9693 = vunpack.c.l.b16 %v9485
  %v9694 = vunpack.c.l.b16 %v9486
  %v9695 = vunpack.c.h.b16 %v9486
  %v9696 = vunpack.c.l.b16 %v9487
  %v9697 = vunpack.c.l.b16 %v9488
  %v9698 = vunpack.c.h.b16 %v9488
  %v9699 = vunpack.c.l.b16 %v9489
  %v9700 = vpack.c.b16 %v9577, %v9574
  %v9701 = vpack.c.b16 %v9578, %v9575
  %v9702 = vpack.c.b16 %v9579, %v9576
  %v9703 = vpack.c.b16 %v9583, %v9580
  %v9704 = vpack.c.b16 %v9584, %v9581
  %v9705 = vpack.c.b16 %v9585, %v9582
  %v9706 = vpack.c.b16 %v9589, %v9586
  %v9707 = vpack.c.b16 %v9590, %v9587
  %v9708 = vpack.c.b16 %v9591, %v9588
  %v9709 = vpack.c.b16 %v9595, %v9592
  %v9710 = vpack.c.b16 %v9596, %v9593
  %v9711 = vpack.c.b16 %v9597, %v9594
  %v9712 = vpack.c.b16 %v9601, %v9598
  %v9713 = vpack.c.b16 %v9602, %v9599
  %v9714 = vpack.c.b16 %v9603, %v9600
  %v9715 = vpack.c.b16 %v9607, %v9604
  %v9716 = vpack.c.b16 %v9608, %v9605
  %v9717 = vpack.c.b16 %v9609, %v9606
  %v9718 = vpack.c.b16 %v9613, %v9610
  %v9719 = vpack.c.b16 %v9614, %v9611
  %v9720 = vpack.c.b16 %v9615, %v9612
  %v9721 = vpack.c.b16 %v9619, %v9616
  %v9722 = vpack.c.b16 %v9620, %v9617
  %v9723 = vpack.c.b16 %v9621, %v9618
  %v9724 = vpack.c.b16 %v9625, %v9622
  %v9725 = vpack.c.b16 %v9626, %v9623
  %v9726 = vpack.c.b16 %v9627, %v9624
  %v9727 = vpack.c.b16 %v9631, %v9628
  %v9728 = vpack.c.b16 %v9632, %v9629
  %v9729 = vpack.c.b16 %v9633, %v9630
  %v9730 = vpack.c.b16 %v9637, %v9634
  %v9731 = vpack.c.b16 %v9638, %v9635
  %v9732 = vpack.c.b16 %v9639, %v9636
  %v9733 = vpack.c.b16 %v9643, %v9640
  %v9734 = vpack.c.b16 %v9644, %v9641
  %v9735 = vpack.c.b16 %v9645, %v9642
  %v9736 = vpack.c.b16 %v9649, %v9646
  %v9737 = vpack.c.b16 %v9650, %v9647
  %v9738 = vpack.c.b16 %v9651, %v9648
  %v9739 = vpack.c.b16 %v9655, %v9652
  %v9740 = vpack.c.b16 %v9656, %v9653
  %v9741 = vpack.c.b16 %v9657, %v9654
  %v9742 = vpack.c.b16 %v9661, %v9658
  %v9743 = vpack.c.b16 %v9662, %v9659
  %v9744 = vpack.c.b16 %v9663, %v9660
  %v9745 = vpack.c.b16 %v9667, %v9664
  %v9746 = vpack.c.b16 %v9668, %v9665
  %v9747 = vpack.c.b16 %v9669, %v9666
  %v9748 = vpack.c.b16 %v9673, %v9670
  %v9749 = vpack.c.b16 %v9674, %v9671
  %v9750 = vpack.c.b16 %v9675, %v9672
  %v9751 = vpack.c.b16 %v9679, %v9676
  %v9752 = vpack.c.b16 %v9680, %v9677
  %v9753 = vpack.c.b16 %v9681, %v9678
  %v9754 = vpack.c.b16 %v9685, %v9682
  %v9755 = vpack.c.b16 %v9686, %v9683
  %v9756 = vpack.c.b16 %v9687, %v9684
  %v9757 = vpack.c.b16 %v9691, %v9688
  %v9758 = vpack.c.b16 %v9692, %v9689
  %v9759 = vpack.c.b16 %v9693, %v9690
  %v9760 = vpack.c.b16 %v9697, %v9694
  %v9761 = vpack.c.b16 %v9698, %v9695
  %v9762 = vpack.c.b16 %v9699, %v9696
  %v9827 = vsel %vm8411, %v9392, 0
  %v9830 = vsel %vm8411, %v9395, 0
  %v9833 = vsel %vm8411, %v9398, 0
  %v9836 = vsel %vm8411, %v9401, 0
  %v9839 = vsel %vm8411, %v9404, 0
  %9841 = vmatprep.subr.bf16.mxu0 %v9722
  %9842 = vmatpush1.bf16.msra.mxu0 %v9721
  %9843 = vmatprep.subr.bf16.mxu0 %v9719
  %9844 = vmatpush1.bf16.msra.mxu0 %v9718
  %9845 = vmatprep.subr.bf16.mxu0 %v9716
  %9846 = vmatpush1.bf16.msra.mxu0 %v9715
  %9847 = vmatprep.subr.bf16.mxu0 %v9713
  %9848 = vmatpush1.bf16.msra.mxu0 %v9712
  %9849 = vmatprep.subr.bf16.mxu0 %v9710
  %9850 = vmatpush1.bf16.msra.mxu0 %v9709
  %9851 = vmatprep.subr.bf16.mxu0 %v9707
  %9852 = vmatpush1.bf16.msra.mxu0 %v9706
  %9853 = vmatprep.subr.bf16.mxu0 %v9704
  %9854 = vmatpush1.bf16.msra.mxu0 %v9703
  %9855 = vmatprep.subr.bf16.mxu0 %v9701
  %9856 = vmatpush1.bf16.msra.mxu0 %v9700
  %9857 = vmatprep.subr.bf16.mxu0 %v9746
  %9858 = vmatpush2.bf16.msra.mxu0 %v9745
  %9859 = vmatprep.subr.bf16.mxu0 %v9743
  %9860 = vmatpush2.bf16.msra.mxu0 %v9742
  %9861 = vmatprep.subr.bf16.mxu0 %v9740
  %9862 = vmatpush2.bf16.msra.mxu0 %v9739
  %9863 = vmatprep.subr.bf16.mxu0 %v9737
  %9864 = vmatpush2.bf16.msra.mxu0 %v9736
  %9865 = vmatprep.subr.bf16.mxu0 %v9734
  %9866 = vmatpush2.bf16.msra.mxu0 %v9733
  %9867 = vmatprep.subr.bf16.mxu0 %v9731
  %9868 = vmatpush2.bf16.msra.mxu0 %v9730
  %9869 = vmatprep.subr.bf16.mxu0 %v9728
  %9870 = vmatpush2.bf16.msra.mxu0 %v9727
  %9871 = vmatprep.subr.bf16.mxu0 %v9725
  %9872 = vmatpush2.bf16.msra.mxu0 %v9724
  %9873 = vmatprep.mubr.bf16.mxu0 %v9391
  %9874 = vmatmul.mubr.bf16.gmra.mxu0 %v9390
  %v9875 = vpop.f32.mrf.mxu0
  %v9876 = vadd.f32 0.0, %v9875
  %v9877 = vpop.f32.mrf.mxu0
  %v9878 = vadd.f32 0.0, %v9877
  %v9879 = vpop.f32.mrf.mxu0
  %v9880 = vadd.f32 0.0, %v9879
  %v9881 = vpop.f32.mrf.mxu0
  %v9882 = vadd.f32 0.0, %v9881
  %9883 = vmatprep.mubr.bf16.mxu0 %v9394
  %9884 = vmatmul.mubr.bf16.gmra.mxu0 %v9393
  %v9885 = vpop.f32.mrf.mxu0
  %v9886 = vadd.f32 0.0, %v9885
  %v9887 = vpop.f32.mrf.mxu0
  %v9888 = vadd.f32 0.0, %v9887
  %v9889 = vpop.f32.mrf.mxu0
  %v9890 = vadd.f32 0.0, %v9889
  %v9891 = vpop.f32.mrf.mxu0
  %v9892 = vadd.f32 0.0, %v9891
  %9893 = vmatprep.mubr.bf16.mxu0 %v9397
  %9894 = vmatmul.mubr.bf16.gmra.mxu0 %v9396
  %v9895 = vpop.f32.mrf.mxu0
  %v9896 = vadd.f32 0.0, %v9895
  %v9897 = vpop.f32.mrf.mxu0
  %v9898 = vadd.f32 0.0, %v9897
  %v9899 = vpop.f32.mrf.mxu0
  %v9900 = vadd.f32 0.0, %v9899
  %v9901 = vpop.f32.mrf.mxu0
  %v9902 = vadd.f32 0.0, %v9901
  %9903 = vmatprep.mubr.bf16.mxu0 %v9400
  %9904 = vmatmul.mubr.bf16.gmra.mxu0 %v9399
  %v9905 = vpop.f32.mrf.mxu0
  %v9906 = vadd.f32 0.0, %v9905
  %v9907 = vpop.f32.mrf.mxu0
  %v9908 = vadd.f32 0.0, %v9907
  %v9909 = vpop.f32.mrf.mxu0
  %v9910 = vadd.f32 0.0, %v9909
  %v9911 = vpop.f32.mrf.mxu0
  %v9912 = vadd.f32 0.0, %v9911
  %9913 = vmatprep.mubr.bf16.mxu0 %v9403
  %9914 = vmatmul.mubr.bf16.gmra.mxu0 %v9402
  %v9915 = vpop.f32.mrf.mxu0
  %v9916 = vadd.f32 0.0, %v9915
  %v9917 = vpop.f32.mrf.mxu0
  %v9918 = vadd.f32 0.0, %v9917
  %v9919 = vpop.f32.mrf.mxu0
  %v9920 = vpop.f32.mrf.mxu0
  %9921 = vdwg.mxu0
  %9922 = vmatprep.subr.bf16.mxu0 0
  %9923 = vmatpush1.bf16.msra.mxu0 0
  %9924 = vmatprep.subr.bf16.mxu0 0
  %9925 = vmatpush1.bf16.msra.mxu0 0
  %9926 = vmatprep.subr.bf16.mxu0 0
  %9927 = vmatpush1.bf16.msra.mxu0 0
  %9928 = vmatprep.subr.bf16.mxu0 %v9761
  %9929 = vmatpush1.bf16.msra.mxu0 %v9760
  %9930 = vmatprep.subr.bf16.mxu0 %v9758
  %9931 = vmatpush1.bf16.msra.mxu0 %v9757
  %9932 = vmatprep.subr.bf16.mxu0 %v9755
  %9933 = vmatpush1.bf16.msra.mxu0 %v9754
  %9934 = vmatprep.subr.bf16.mxu0 %v9752
  %9935 = vmatpush1.bf16.msra.mxu0 %v9751
  %9936 = vmatprep.subr.bf16.mxu0 %v9749
  %9937 = vmatpush1.bf16.msra.mxu0 %v9748
  %9938 = vmatprep.subr.bf16.mxu0 0
  %9939 = vmatpush2.bf16.msra.mxu0 0
  %9940 = vmatprep.subr.bf16.mxu0 0
  %9941 = vmatpush2.bf16.msra.mxu0 0
  %9942 = vmatprep.subr.bf16.mxu0 0
  %9943 = vmatpush2.bf16.msra.mxu0 0
  %9944 = vmatprep.subr.bf16.mxu0 0
  %9945 = vmatpush2.bf16.msra.mxu0 0
  %9946 = vmatprep.subr.bf16.mxu0 0
  %9947 = vmatpush2.bf16.msra.mxu0 0
  %9948 = vmatprep.subr.bf16.mxu0 0
  %9949 = vmatpush2.bf16.msra.mxu0 0
  %9950 = vmatprep.subr.bf16.mxu0 0
  %9951 = vmatpush2.bf16.msra.mxu0 0
  %9952 = vmatprep.subr.bf16.mxu0 0
  %9953 = vmatpush2.bf16.msra.mxu0 0
  %9954 = vmatprep.mubr.bf16.mxu0 0
  %9955 = vmatmul.mubr.bf16.gmra.mxu0 %v9827
  %v9956 = vpop.f32.mrf.mxu0
  %v9957 = vadd.f32 %v9876, %v9956
  %v9958 = vpop.f32.mrf.mxu0
  %v9959 = vadd.f32 %v9878, %v9958
  %v9960 = vpop.f32.mrf.mxu0
  %v9961 = vadd.f32 %v9880, %v9960
  %v9962 = vpop.f32.mrf.mxu0
  %v9963 = vadd.f32 %v9882, %v9962
  %9964 = vmatprep.mubr.bf16.mxu0 0
  %9965 = vmatmul.mubr.bf16.gmra.mxu0 %v9830
  %v9966 = vpop.f32.mrf.mxu0
  %v9967 = vadd.f32 %v9886, %v9966
  %v9968 = vpop.f32.mrf.mxu0
  %v9969 = vadd.f32 %v9888, %v9968
  %v9970 = vpop.f32.mrf.mxu0
  %v9971 = vadd.f32 %v9890, %v9970
  %v9972 = vpop.f32.mrf.mxu0
  %v9973 = vadd.f32 %v9892, %v9972
  %9974 = vmatprep.mubr.bf16.mxu0 0
  %9975 = vmatmul.mubr.bf16.gmra.mxu0 %v9833
  %v9976 = vpop.f32.mrf.mxu0
  %v9977 = vadd.f32 %v9896, %v9976
  %v9978 = vpop.f32.mrf.mxu0
  %v9979 = vadd.f32 %v9898, %v9978
  %v9980 = vpop.f32.mrf.mxu0
  %v9981 = vadd.f32 %v9900, %v9980
  %v9982 = vpop.f32.mrf.mxu0
  %v9983 = vadd.f32 %v9902, %v9982
  %9984 = vmatprep.mubr.bf16.mxu0 0
  %9985 = vmatmul.mubr.bf16.gmra.mxu0 %v9836
  %v9986 = vpop.f32.mrf.mxu0
  %v9987 = vadd.f32 %v9906, %v9986
  %v9988 = vpop.f32.mrf.mxu0
  %v9989 = vadd.f32 %v9908, %v9988
  %v9990 = vpop.f32.mrf.mxu0
  %v9991 = vadd.f32 %v9910, %v9990
  %v9992 = vpop.f32.mrf.mxu0
  %v9993 = vadd.f32 %v9912, %v9992
  %9994 = vmatprep.mubr.bf16.mxu0 0
  %9995 = vmatmul.mubr.bf16.gmra.mxu0 %v9839
  %v9996 = vpop.f32.mrf.mxu0
  %v9997 = vadd.f32 %v9916, %v9996
  %v9998 = vpop.f32.mrf.mxu0
  %v9999 = vadd.f32 %v9918, %v9998
  %v10000 = vpop.f32.mrf.mxu0
  %v10001 = vpop.f32.mrf.mxu0
  %10002 = vdwg.mxu0
  %10003 = vmatprep.subr.bf16.mxu0 0
  %10004 = vmatpush1.bf16.msra.mxu0 %v9723
  %10005 = vmatprep.subr.bf16.mxu0 0
  %10006 = vmatpush1.bf16.msra.mxu0 %v9720
  %10007 = vmatprep.subr.bf16.mxu0 0
  %10008 = vmatpush1.bf16.msra.mxu0 %v9717
  %10009 = vmatprep.subr.bf16.mxu0 0
  %10010 = vmatpush1.bf16.msra.mxu0 %v9714
  %10011 = vmatprep.subr.bf16.mxu0 0
  %10012 = vmatpush1.bf16.msra.mxu0 %v9711
  %10013 = vmatprep.subr.bf16.mxu0 0
  %10014 = vmatpush1.bf16.msra.mxu0 %v9708
  %10015 = vmatprep.subr.bf16.mxu0 0
  %10016 = vmatpush1.bf16.msra.mxu0 %v9705
  %10017 = vmatprep.subr.bf16.mxu0 0
  %10018 = vmatpush1.bf16.msra.mxu0 %v9702
  %10019 = vmatprep.subr.bf16.mxu0 0
  %10020 = vmatpush2.bf16.msra.mxu0 %v9747
  %10021 = vmatprep.subr.bf16.mxu0 0
  %10022 = vmatpush2.bf16.msra.mxu0 %v9744
  %10023 = vmatprep.subr.bf16.mxu0 0
  %10024 = vmatpush2.bf16.msra.mxu0 %v9741
  %10025 = vmatprep.subr.bf16.mxu0 0
  %10026 = vmatpush2.bf16.msra.mxu0 %v9738
  %10027 = vmatprep.subr.bf16.mxu0 0
  %10028 = vmatpush2.bf16.msra.mxu0 %v9735
  %10029 = vmatprep.subr.bf16.mxu0 0
  %10030 = vmatpush2.bf16.msra.mxu0 %v9732
  %10031 = vmatprep.subr.bf16.mxu0 0
  %10032 = vmatpush2.bf16.msra.mxu0 %v9729
  %10033 = vmatprep.subr.bf16.mxu0 0
  %10034 = vmatpush2.bf16.msra.mxu0 %v9726
  %10035 = vmatprep.mubr.bf16.mxu0 %v9391
  %10036 = vmatmul.mubr.bf16.gmra.mxu0 %v9390
  %v10037 = vpop.f32.mrf.mxu0
  %v10038 = vadd.f32 0.0, %v10037
  %v10039 = vpop.f32.mrf.mxu0
  %v10040 = vpop.f32.mrf.mxu0
  %v10041 = vadd.f32 0.0, %v10040
  %v10042 = vpop.f32.mrf.mxu0
  %10043 = vmatprep.mubr.bf16.mxu0 %v9394
  %10044 = vmatmul.mubr.bf16.gmra.mxu0 %v9393
  %v10045 = vpop.f32.mrf.mxu0
  %v10046 = vadd.f32 0.0, %v10045
  %v10047 = vpop.f32.mrf.mxu0
  %v10048 = vpop.f32.mrf.mxu0
  %v10049 = vadd.f32 0.0, %v10048
  %v10050 = vpop.f32.mrf.mxu0
  %10051 = vmatprep.mubr.bf16.mxu0 %v9397
  %10052 = vmatmul.mubr.bf16.gmra.mxu0 %v9396
  %v10053 = vpop.f32.mrf.mxu0
  %v10054 = vadd.f32 0.0, %v10053
  %v10055 = vpop.f32.mrf.mxu0
  %v10056 = vpop.f32.mrf.mxu0
  %v10057 = vadd.f32 0.0, %v10056
  %v10058 = vpop.f32.mrf.mxu0
  %10059 = vmatprep.mubr.bf16.mxu0 %v9400
  %10060 = vmatmul.mubr.bf16.gmra.mxu0 %v9399
  %v10061 = vpop.f32.mrf.mxu0
  %v10062 = vadd.f32 0.0, %v10061
  %v10063 = vpop.f32.mrf.mxu0
  %v10064 = vpop.f32.mrf.mxu0
  %v10065 = vadd.f32 0.0, %v10064
  %v10066 = vpop.f32.mrf.mxu0
  %10067 = vmatprep.mubr.bf16.mxu0 %v9403
  %10068 = vmatmul.mubr.bf16.gmra.mxu0 %v9402
  %v10069 = vpop.f32.mrf.mxu0
  %v10070 = vadd.f32 0.0, %v10069
  %v10071 = vpop.f32.mrf.mxu0
  %v10072 = vpop.f32.mrf.mxu0
  %v10073 = vpop.f32.mrf.mxu0
  %10074 = vdwg.mxu0
  %10075 = vmatprep.subr.bf16.mxu0 0
  %10076 = vmatpush1.bf16.msra.mxu0 0
  %10077 = vmatprep.subr.bf16.mxu0 0
  %10078 = vmatpush1.bf16.msra.mxu0 0
  %10079 = vmatprep.subr.bf16.mxu0 0
  %10080 = vmatpush1.bf16.msra.mxu0 0
  %10081 = vmatprep.subr.bf16.mxu0 0
  %10082 = vmatpush1.bf16.msra.mxu0 %v9762
  %10083 = vmatprep.subr.bf16.mxu0 0
  %10084 = vmatpush1.bf16.msra.mxu0 %v9759
  %10085 = vmatprep.subr.bf16.mxu0 0
  %10086 = vmatpush1.bf16.msra.mxu0 %v9756
  %10087 = vmatprep.subr.bf16.mxu0 0
  %10088 = vmatpush1.bf16.msra.mxu0 %v9753
  %10089 = vmatprep.subr.bf16.mxu0 0
  %10090 = vmatpush1.bf16.msra.mxu0 %v9750
  %10091 = vmatprep.subr.bf16.mxu0 0
  %10092 = vmatpush2.bf16.msra.mxu0 0
  %10093 = vmatprep.subr.bf16.mxu0 0
  %10094 = vmatpush2.bf16.msra.mxu0 0
  %10095 = vmatprep.subr.bf16.mxu0 0
  %10096 = vmatpush2.bf16.msra.mxu0 0
  %10097 = vmatprep.subr.bf16.mxu0 0
  %10098 = vmatpush2.bf16.msra.mxu0 0
  %10099 = vmatprep.subr.bf16.mxu0 0
  %10100 = vmatpush2.bf16.msra.mxu0 0
  %10101 = vmatprep.subr.bf16.mxu0 0
  %10102 = vmatpush2.bf16.msra.mxu0 0
  %10103 = vmatprep.subr.bf16.mxu0 0
  %10104 = vmatpush2.bf16.msra.mxu0 0
  %10105 = vmatprep.subr.bf16.mxu0 0
  %10106 = vmatpush2.bf16.msra.mxu0 0
  %10107 = vmatprep.mubr.bf16.mxu0 0
  %10108 = vmatmul.mubr.bf16.gmra.mxu0 %v9827
  %v10109 = vpop.f32.mrf.mxu0
  %v10110 = vadd.f32 %v10038, %v10109
  %v10111 = vpop.f32.mrf.mxu0
  %v10112 = vpop.f32.mrf.mxu0
  %v10113 = vadd.f32 %v10041, %v10112
  %v10114 = vpop.f32.mrf.mxu0
  %10115 = vmatprep.mubr.bf16.mxu0 0
  %10116 = vmatmul.mubr.bf16.gmra.mxu0 %v9830
  %v10117 = vpop.f32.mrf.mxu0
  %v10118 = vadd.f32 %v10046, %v10117
  %v10119 = vpop.f32.mrf.mxu0
  %v10120 = vpop.f32.mrf.mxu0
  %v10121 = vadd.f32 %v10049, %v10120
  %v10122 = vpop.f32.mrf.mxu0
  %10123 = vmatprep.mubr.bf16.mxu0 0
  %10124 = vmatmul.mubr.bf16.gmra.mxu0 %v9833
  %v10125 = vpop.f32.mrf.mxu0
  %v10126 = vadd.f32 %v10054, %v10125
  %v10127 = vpop.f32.mrf.mxu0
  %v10128 = vpop.f32.mrf.mxu0
  %v10129 = vadd.f32 %v10057, %v10128
  %v10130 = vpop.f32.mrf.mxu0
  %10131 = vmatprep.mubr.bf16.mxu0 0
  %10132 = vmatmul.mubr.bf16.gmra.mxu0 %v9836
  %v10133 = vpop.f32.mrf.mxu0
  %v10134 = vadd.f32 %v10062, %v10133
  %v10135 = vpop.f32.mrf.mxu0
  %v10136 = vpop.f32.mrf.mxu0
  %v10137 = vadd.f32 %v10065, %v10136
  %v10138 = vpop.f32.mrf.mxu0
  %10139 = vmatprep.mubr.bf16.mxu0 0
  %10140 = vmatmul.mubr.bf16.gmra.mxu0 %v9839
  %v10141 = vpop.f32.mrf.mxu0
  %v10142 = vadd.f32 %v10070, %v10141
  %v10143 = vpop.f32.mrf.mxu0
  %v10144 = vpop.f32.mrf.mxu0
  %v10145 = vpop.f32.mrf.mxu0
  %10146 = vdwg.mxu0
  %v10147 = vadd.f32 %v9200, %v9957
  %v10148 = vadd.f32 %v9202, %v9959
  %v10149 = vadd.f32 %v9353, %v10110
  %v10150 = vadd.f32 %v9204, %v9961
  %v10151 = vadd.f32 %v9206, %v9963
  %v10152 = vadd.f32 %v9356, %v10113
  %v10153 = vadd.f32 %v9210, %v9967
  %v10154 = vadd.f32 %v9212, %v9969
  %v10155 = vadd.f32 %v9361, %v10118
  %v10156 = vadd.f32 %v9214, %v9971
  %v10157 = vadd.f32 %v9216, %v9973
  %v10158 = vadd.f32 %v9364, %v10121
  %v10159 = vadd.f32 %v9220, %v9977
  %v10160 = vadd.f32 %v9222, %v9979
  %v10161 = vadd.f32 %v9369, %v10126
  %v10162 = vadd.f32 %v9224, %v9981
  %v10163 = vadd.f32 %v9226, %v9983
  %v10164 = vadd.f32 %v9372, %v10129
  %v10165 = vadd.f32 %v9230, %v9987
  %v10166 = vadd.f32 %v9232, %v9989
  %v10167 = vadd.f32 %v9377, %v10134
  %v10168 = vadd.f32 %v9234, %v9991
  %v10169 = vadd.f32 %v9236, %v9993
  %v10170 = vadd.f32 %v9380, %v10137
  %v10171 = vadd.f32 %v9240, %v9997
  %v10172 = vadd.f32 %v9242, %v9999
  %v10173 = vadd.f32 %v9385, %v10142
  %v10174 = vpack.c.bf16 %v7852, %v7849
  %v10175 = vpack.c.bf16 %v7853, %v7850
  %v10176 = vpack.c.bf16 %v7854, %v7851
  %v10177 = vpack.c.bf16 %v7858, %v7855
  %v10178 = vpack.c.bf16 %v7859, %v7856
  %v10179 = vpack.c.bf16 %v7860, %v7857
  %v10180 = vpack.c.bf16 %v7864, %v7861
  %v10181 = vpack.c.bf16 %v7865, %v7862
  %v10182 = vpack.c.bf16 %v7866, %v7863
  %v10183 = vpack.c.bf16 %v7870, %v7867
  %v10184 = vpack.c.bf16 %v7871, %v7868
  %v10185 = vpack.c.bf16 %v7872, %v7869
  %v10186 = vpack.c.bf16 %v7873, %v7873
  %v10187 = vpack.c.bf16 %v7874, %v7874
  %v10188 = vpack.c.bf16 %v7875, %v7875
  %s10189 = scalar_lea.vmem %s3, 1512
  %v10190 = vld [vmem:[%s10189] sm:$0xff]
  %v10191 = vld [vmem:[%s10189 + $0x8] sm:$0xf]
  %v10192 = vld [vmem:[%s10189 + $0xc] sm:$0xff]
  %v10193 = vld [vmem:[%s10189 + $0x14] sm:$0xf]
  %v10194 = vld [vmem:[%s10189 + $0x18] sm:$0xff]
  %v10195 = vld [vmem:[%s10189 + $0x20] sm:$0xf]
  %v10196 = vld [vmem:[%s10189 + $0x24] sm:$0xff]
  %v10197 = vld [vmem:[%s10189 + $0x2c] sm:$0xf]
  %v10198 = vld [vmem:[%s10189 + $0x30] sm:$0xff]
  %v10199 = vld [vmem:[%s10189 + $0x38] sm:$0xf]
  %v10200 = vld [vmem:[%s10189 + $0x3c] sm:$0xff]
  %v10201 = vld [vmem:[%s10189 + $0x44] sm:$0xf]
  %v10202 = vld [vmem:[%s10189 + $0x48] sm:$0xff]
  %v10203 = vld [vmem:[%s10189 + $0x50] sm:$0xf]
  %v10204 = vld [vmem:[%s10189 + $0x54] sm:$0xff]
  %v10205 = vld [vmem:[%s10189 + $0x5c] sm:$0xf]
  %v10206 = vld [vmem:[%s10189 + $0x60] sm:$0xff]
  %v10207 = vld [vmem:[%s10189 + $0x68] sm:$0xf]
  %v10208 = vld [vmem:[%s10189 + $0x6c] sm:$0xff]
  %v10209 = vld [vmem:[%s10189 + $0x74] sm:$0xf]
  %v10210 = vld [vmem:[%s10189 + $0x78] sm:$0xff]
  %v10211 = vld [vmem:[%s10189 + $0x80] sm:$0xf]
  %v10212 = vld [vmem:[%s10189 + $0x84] sm:$0xff]
  %v10213 = vld [vmem:[%s10189 + $0x8c] sm:$0xf]
  %v10214 = vld [vmem:[%s10189 + $0x90] sm:$0xff]
  %v10215 = vld [vmem:[%s10189 + $0x98] sm:$0xf]
  %v10216 = vld [vmem:[%s10189 + $0x9c] sm:$0xff]
  %v10217 = vld [vmem:[%s10189 + $0xa4] sm:$0xf]
  %v10218 = vld [vmem:[%s10189 + $0xa8] sm:$0xff]
  %v10219 = vld [vmem:[%s10189 + $0xb0] sm:$0xf]
  %v10220 = vld [vmem:[%s10189 + $0xb4] sm:$0xff]
  %v10221 = vld [vmem:[%s10189 + $0xbc] sm:$0xf]
  %v10222 = vld [vmem:[%s10189 + $0xc0] sm:$0xff]
  %v10223 = vld [vmem:[%s10189 + $0xc8] sm:$0xf]
  %v10224 = vld [vmem:[%s10189 + $0xcc] sm:$0xff]
  %v10225 = vld [vmem:[%s10189 + $0xd4] sm:$0xf]
  %v10226 = vld [vmem:[%s10189 + $0xd8] sm:$0xff]
  %v10227 = vld [vmem:[%s10189 + $0xe0] sm:$0xf]
  %v10228 = vld [vmem:[%s10189 + $0xe4] sm:$0xff]
  %v10229 = vld [vmem:[%s10189 + $0xec] sm:$0xf]
  %v10230 = vld [vmem:[%s10189 + $0xf0] sm:$0xff]
  %v10231 = vld [vmem:[%s10189 + $0xf8] sm:$0xf]
  %v10232 = vld [vmem:[%s10189 + $0xfc] sm:$0xff]
  %v10233 = vld [vmem:[%s10189 + $0x104] sm:$0xf]
  %v10234 = vld [vmem:[%s10189 + $0x108] sm:$0xff]
  %v10235 = vld [vmem:[%s10189 + $0x110] sm:$0xf]
  %v10236 = vld [vmem:[%s10189 + $0x114] sm:$0xff]
  %v10237 = vld [vmem:[%s10189 + $0x11c] sm:$0xf]
  %v10238 = vld [vmem:[%s10189 + $0x120] sm:$0xff]
  %v10239 = vld [vmem:[%s10189 + $0x128] sm:$0xf]
  %v10240 = vld [vmem:[%s10189 + $0x12c] sm:$0xff]
  %v10241 = vld [vmem:[%s10189 + $0x134] sm:$0xf]
  %v10242 = vld [vmem:[%s10189 + $0x138] sm:$0xff]
  %v10243 = vld [vmem:[%s10189 + $0x140] sm:$0xf]
  %v10244 = vld [vmem:[%s10189 + $0x144] sm:$0xff]
  %v10245 = vld [vmem:[%s10189 + $0x14c] sm:$0xf]
  %v10246 = vld [vmem:[%s10189 + $0x150] sm:$0xff]
  %v10247 = vld [vmem:[%s10189 + $0x158] sm:$0xf]
  %v10248 = vld [vmem:[%s10189 + $0x15c] sm:$0xff]
  %v10249 = vld [vmem:[%s10189 + $0x164] sm:$0xf]
  %v10250 = vld [vmem:[%s10189 + $0x168] sm:$0xff]
  %v10251 = vld [vmem:[%s10189 + $0x170] sm:$0xf]
  %v10252 = vld [vmem:[%s10189 + $0x174] sm:$0xff]
  %v10253 = vld [vmem:[%s10189 + $0x17c] sm:$0xf]
  %v10254 = vld [vmem:[%s10189 + $0x180] sm:$0xff]
  %v10255 = vld [vmem:[%s10189 + $0x188] sm:$0xf]
  %v10256 = vld [vmem:[%s10189 + $0x18c] sm:$0xff]
  %v10257 = vld [vmem:[%s10189 + $0x194] sm:$0xf]
  %v10258 = vld [vmem:[%s10189 + $0x198] sm:$0xff]
  %v10259 = vld [vmem:[%s10189 + $0x1a0] sm:$0xf]
  %v10260 = vld [vmem:[%s10189 + $0x1a4] sm:$0xff]
  %v10261 = vld [vmem:[%s10189 + $0x1ac] sm:$0xf]
  %v10262 = vld [vmem:[%s10189 + $0x1b0] sm:$0xff]
  %v10263 = vld [vmem:[%s10189 + $0x1b8] sm:$0xf]
  %v10264 = vld [vmem:[%s10189 + $0x1bc] sm:$0xff]
  %v10265 = vld [vmem:[%s10189 + $0x1c4] sm:$0xf]
  %v10266 = vld [vmem:[%s10189 + $0x1c8] sm:$0xff]
  %v10267 = vld [vmem:[%s10189 + $0x1d0] sm:$0xf]
  %v10268 = vld [vmem:[%s10189 + $0x1d4] sm:$0xff]
  %v10269 = vld [vmem:[%s10189 + $0x1dc] sm:$0xf]
  %v10270 = vld [vmem:[%s10189 + $0x1e0] sm:$0xff]
  %v10271 = vld [vmem:[%s10189 + $0x1e8] sm:$0xf]
  %v10272 = vld [vmem:[%s10189 + $0x1ec] sm:$0xff]
  %v10273 = vld [vmem:[%s10189 + $0x1f4] sm:$0xf]
  %v10358 = vunpack.c.l.b16 %v10190
  %v10359 = vunpack.c.h.b16 %v10190
  %v10360 = vunpack.c.l.b16 %v10191
  %v10361 = vunpack.c.l.b16 %v10192
  %v10362 = vunpack.c.h.b16 %v10192
  %v10363 = vunpack.c.l.b16 %v10193
  %v10364 = vunpack.c.l.b16 %v10194
  %v10365 = vunpack.c.h.b16 %v10194
  %v10366 = vunpack.c.l.b16 %v10195
  %v10367 = vunpack.c.l.b16 %v10196
  %v10368 = vunpack.c.h.b16 %v10196
  %v10369 = vunpack.c.l.b16 %v10197
  %v10370 = vunpack.c.l.b16 %v10198
  %v10371 = vunpack.c.h.b16 %v10198
  %v10372 = vunpack.c.l.b16 %v10199
  %v10373 = vunpack.c.l.b16 %v10200
  %v10374 = vunpack.c.h.b16 %v10200
  %v10375 = vunpack.c.l.b16 %v10201
  %v10376 = vunpack.c.l.b16 %v10202
  %v10377 = vunpack.c.h.b16 %v10202
  %v10378 = vunpack.c.l.b16 %v10203
  %v10379 = vunpack.c.l.b16 %v10204
  %v10380 = vunpack.c.h.b16 %v10204
  %v10381 = vunpack.c.l.b16 %v10205
  %v10382 = vunpack.c.l.b16 %v10206
  %v10383 = vunpack.c.h.b16 %v10206
  %v10384 = vunpack.c.l.b16 %v10207
  %v10385 = vunpack.c.l.b16 %v10208
  %v10386 = vunpack.c.h.b16 %v10208
  %v10387 = vunpack.c.l.b16 %v10209
  %v10388 = vunpack.c.l.b16 %v10210
  %v10389 = vunpack.c.h.b16 %v10210
  %v10390 = vunpack.c.l.b16 %v10211
  %v10391 = vunpack.c.l.b16 %v10212
  %v10392 = vunpack.c.h.b16 %v10212
  %v10393 = vunpack.c.l.b16 %v10213
  %v10394 = vunpack.c.l.b16 %v10214
  %v10395 = vunpack.c.h.b16 %v10214
  %v10396 = vunpack.c.l.b16 %v10215
  %v10397 = vunpack.c.l.b16 %v10216
  %v10398 = vunpack.c.h.b16 %v10216
  %v10399 = vunpack.c.l.b16 %v10217
  %v10400 = vunpack.c.l.b16 %v10218
  %v10401 = vunpack.c.h.b16 %v10218
  %v10402 = vunpack.c.l.b16 %v10219
  %v10403 = vunpack.c.l.b16 %v10220
  %v10404 = vunpack.c.h.b16 %v10220
  %v10405 = vunpack.c.l.b16 %v10221
  %v10406 = vunpack.c.l.b16 %v10222
  %v10407 = vunpack.c.h.b16 %v10222
  %v10408 = vunpack.c.l.b16 %v10223
  %v10409 = vunpack.c.l.b16 %v10224
  %v10410 = vunpack.c.h.b16 %v10224
  %v10411 = vunpack.c.l.b16 %v10225
  %v10412 = vunpack.c.l.b16 %v10226
  %v10413 = vunpack.c.h.b16 %v10226
  %v10414 = vunpack.c.l.b16 %v10227
  %v10415 = vunpack.c.l.b16 %v10228
  %v10416 = vunpack.c.h.b16 %v10228
  %v10417 = vunpack.c.l.b16 %v10229
  %v10418 = vunpack.c.l.b16 %v10230
  %v10419 = vunpack.c.h.b16 %v10230
  %v10420 = vunpack.c.l.b16 %v10231
  %v10421 = vunpack.c.l.b16 %v10232
  %v10422 = vunpack.c.h.b16 %v10232
  %v10423 = vunpack.c.l.b16 %v10233
  %v10424 = vunpack.c.l.b16 %v10234
  %v10425 = vunpack.c.h.b16 %v10234
  %v10426 = vunpack.c.l.b16 %v10235
  %v10427 = vunpack.c.l.b16 %v10236
  %v10428 = vunpack.c.h.b16 %v10236
  %v10429 = vunpack.c.l.b16 %v10237
  %v10430 = vunpack.c.l.b16 %v10238
  %v10431 = vunpack.c.h.b16 %v10238
  %v10432 = vunpack.c.l.b16 %v10239
  %v10433 = vunpack.c.l.b16 %v10240
  %v10434 = vunpack.c.h.b16 %v10240
  %v10435 = vunpack.c.l.b16 %v10241
  %v10436 = vunpack.c.l.b16 %v10242
  %v10437 = vunpack.c.h.b16 %v10242
  %v10438 = vunpack.c.l.b16 %v10243
  %v10439 = vunpack.c.l.b16 %v10244
  %v10440 = vunpack.c.h.b16 %v10244
  %v10441 = vunpack.c.l.b16 %v10245
  %v10442 = vunpack.c.l.b16 %v10246
  %v10443 = vunpack.c.h.b16 %v10246
  %v10444 = vunpack.c.l.b16 %v10247
  %v10445 = vunpack.c.l.b16 %v10248
  %v10446 = vunpack.c.h.b16 %v10248
  %v10447 = vunpack.c.l.b16 %v10249
  %v10448 = vunpack.c.l.b16 %v10250
  %v10449 = vunpack.c.h.b16 %v10250
  %v10450 = vunpack.c.l.b16 %v10251
  %v10451 = vunpack.c.l.b16 %v10252
  %v10452 = vunpack.c.h.b16 %v10252
  %v10453 = vunpack.c.l.b16 %v10253
  %v10454 = vunpack.c.l.b16 %v10254
  %v10455 = vunpack.c.h.b16 %v10254
  %v10456 = vunpack.c.l.b16 %v10255
  %v10457 = vunpack.c.l.b16 %v10256
  %v10458 = vunpack.c.h.b16 %v10256
  %v10459 = vunpack.c.l.b16 %v10257
  %v10460 = vunpack.c.l.b16 %v10258
  %v10461 = vunpack.c.h.b16 %v10258
  %v10462 = vunpack.c.l.b16 %v10259
  %v10463 = vunpack.c.l.b16 %v10260
  %v10464 = vunpack.c.h.b16 %v10260
  %v10465 = vunpack.c.l.b16 %v10261
  %v10466 = vunpack.c.l.b16 %v10262
  %v10467 = vunpack.c.h.b16 %v10262
  %v10468 = vunpack.c.l.b16 %v10263
  %v10469 = vunpack.c.l.b16 %v10264
  %v10470 = vunpack.c.h.b16 %v10264
  %v10471 = vunpack.c.l.b16 %v10265
  %v10472 = vunpack.c.l.b16 %v10266
  %v10473 = vunpack.c.h.b16 %v10266
  %v10474 = vunpack.c.l.b16 %v10267
  %v10475 = vunpack.c.l.b16 %v10268
  %v10476 = vunpack.c.h.b16 %v10268
  %v10477 = vunpack.c.l.b16 %v10269
  %v10478 = vunpack.c.l.b16 %v10270
  %v10479 = vunpack.c.h.b16 %v10270
  %v10480 = vunpack.c.l.b16 %v10271
  %v10481 = vunpack.c.l.b16 %v10272
  %v10482 = vunpack.c.h.b16 %v10272
  %v10483 = vunpack.c.l.b16 %v10273
  %v10484 = vpack.c.b16 %v10361, %v10358
  %v10485 = vpack.c.b16 %v10362, %v10359
  %v10486 = vpack.c.b16 %v10363, %v10360
  %v10487 = vpack.c.b16 %v10367, %v10364
  %v10488 = vpack.c.b16 %v10368, %v10365
  %v10489 = vpack.c.b16 %v10369, %v10366
  %v10490 = vpack.c.b16 %v10373, %v10370
  %v10491 = vpack.c.b16 %v10374, %v10371
  %v10492 = vpack.c.b16 %v10375, %v10372
  %v10493 = vpack.c.b16 %v10379, %v10376
  %v10494 = vpack.c.b16 %v10380, %v10377
  %v10495 = vpack.c.b16 %v10381, %v10378
  %v10496 = vpack.c.b16 %v10385, %v10382
  %v10497 = vpack.c.b16 %v10386, %v10383
  %v10498 = vpack.c.b16 %v10387, %v10384
  %v10499 = vpack.c.b16 %v10391, %v10388
  %v10500 = vpack.c.b16 %v10392, %v10389
  %v10501 = vpack.c.b16 %v10393, %v10390
  %v10502 = vpack.c.b16 %v10397, %v10394
  %v10503 = vpack.c.b16 %v10398, %v10395
  %v10504 = vpack.c.b16 %v10399, %v10396
  %v10505 = vpack.c.b16 %v10403, %v10400
  %v10506 = vpack.c.b16 %v10404, %v10401
  %v10507 = vpack.c.b16 %v10405, %v10402
  %v10508 = vpack.c.b16 %v10409, %v10406
  %v10509 = vpack.c.b16 %v10410, %v10407
  %v10510 = vpack.c.b16 %v10411, %v10408
  %v10511 = vpack.c.b16 %v10415, %v10412
  %v10512 = vpack.c.b16 %v10416, %v10413
  %v10513 = vpack.c.b16 %v10417, %v10414
  %v10514 = vpack.c.b16 %v10421, %v10418
  %v10515 = vpack.c.b16 %v10422, %v10419
  %v10516 = vpack.c.b16 %v10423, %v10420
  %v10517 = vpack.c.b16 %v10427, %v10424
  %v10518 = vpack.c.b16 %v10428, %v10425
  %v10519 = vpack.c.b16 %v10429, %v10426
  %v10520 = vpack.c.b16 %v10433, %v10430
  %v10521 = vpack.c.b16 %v10434, %v10431
  %v10522 = vpack.c.b16 %v10435, %v10432
  %v10523 = vpack.c.b16 %v10439, %v10436
  %v10524 = vpack.c.b16 %v10440, %v10437
  %v10525 = vpack.c.b16 %v10441, %v10438
  %v10526 = vpack.c.b16 %v10445, %v10442
  %v10527 = vpack.c.b16 %v10446, %v10443
  %v10528 = vpack.c.b16 %v10447, %v10444
  %v10529 = vpack.c.b16 %v10451, %v10448
  %v10530 = vpack.c.b16 %v10452, %v10449
  %v10531 = vpack.c.b16 %v10453, %v10450
  %v10532 = vpack.c.b16 %v10457, %v10454
  %v10533 = vpack.c.b16 %v10458, %v10455
  %v10534 = vpack.c.b16 %v10459, %v10456
  %v10535 = vpack.c.b16 %v10463, %v10460
  %v10536 = vpack.c.b16 %v10464, %v10461
  %v10537 = vpack.c.b16 %v10465, %v10462
  %v10538 = vpack.c.b16 %v10469, %v10466
  %v10539 = vpack.c.b16 %v10470, %v10467
  %v10540 = vpack.c.b16 %v10471, %v10468
  %v10541 = vpack.c.b16 %v10475, %v10472
  %v10542 = vpack.c.b16 %v10476, %v10473
  %v10543 = vpack.c.b16 %v10477, %v10474
  %v10544 = vpack.c.b16 %v10481, %v10478
  %v10545 = vpack.c.b16 %v10482, %v10479
  %v10546 = vpack.c.b16 %v10483, %v10480
  %v10611 = vsel %vm8411, %v10176, 0
  %v10614 = vsel %vm8411, %v10179, 0
  %v10617 = vsel %vm8411, %v10182, 0
  %v10620 = vsel %vm8411, %v10185, 0
  %v10623 = vsel %vm8411, %v10188, 0
  %10625 = vmatprep.subr.bf16.mxu0 %v10506
  %10626 = vmatpush1.bf16.msra.mxu0 %v10505
  %10627 = vmatprep.subr.bf16.mxu0 %v10503
  %10628 = vmatpush1.bf16.msra.mxu0 %v10502
  %10629 = vmatprep.subr.bf16.mxu0 %v10500
  %10630 = vmatpush1.bf16.msra.mxu0 %v10499
  %10631 = vmatprep.subr.bf16.mxu0 %v10497
  %10632 = vmatpush1.bf16.msra.mxu0 %v10496
  %10633 = vmatprep.subr.bf16.mxu0 %v10494
  %10634 = vmatpush1.bf16.msra.mxu0 %v10493
  %10635 = vmatprep.subr.bf16.mxu0 %v10491
  %10636 = vmatpush1.bf16.msra.mxu0 %v10490
  %10637 = vmatprep.subr.bf16.mxu0 %v10488
  %10638 = vmatpush1.bf16.msra.mxu0 %v10487
  %10639 = vmatprep.subr.bf16.mxu0 %v10485
  %10640 = vmatpush1.bf16.msra.mxu0 %v10484
  %10641 = vmatprep.subr.bf16.mxu0 %v10530
  %10642 = vmatpush2.bf16.msra.mxu0 %v10529
  %10643 = vmatprep.subr.bf16.mxu0 %v10527
  %10644 = vmatpush2.bf16.msra.mxu0 %v10526
  %10645 = vmatprep.subr.bf16.mxu0 %v10524
  %10646 = vmatpush2.bf16.msra.mxu0 %v10523
  %10647 = vmatprep.subr.bf16.mxu0 %v10521
  %10648 = vmatpush2.bf16.msra.mxu0 %v10520
  %10649 = vmatprep.subr.bf16.mxu0 %v10518
  %10650 = vmatpush2.bf16.msra.mxu0 %v10517
  %10651 = vmatprep.subr.bf16.mxu0 %v10515
  %10652 = vmatpush2.bf16.msra.mxu0 %v10514
  %10653 = vmatprep.subr.bf16.mxu0 %v10512
  %10654 = vmatpush2.bf16.msra.mxu0 %v10511
  %10655 = vmatprep.subr.bf16.mxu0 %v10509
  %10656 = vmatpush2.bf16.msra.mxu0 %v10508
  %10657 = vmatprep.mubr.bf16.mxu0 %v10175
  %10658 = vmatmul.mubr.bf16.gmra.mxu0 %v10174
  %v10659 = vpop.f32.mrf.mxu0
  %v10660 = vadd.f32 0.0, %v10659
  %v10661 = vpop.f32.mrf.mxu0
  %v10662 = vadd.f32 0.0, %v10661
  %v10663 = vpop.f32.mrf.mxu0
  %v10664 = vadd.f32 0.0, %v10663
  %v10665 = vpop.f32.mrf.mxu0
  %v10666 = vadd.f32 0.0, %v10665
  %10667 = vmatprep.mubr.bf16.mxu0 %v10178
  %10668 = vmatmul.mubr.bf16.gmra.mxu0 %v10177
  %v10669 = vpop.f32.mrf.mxu0
  %v10670 = vadd.f32 0.0, %v10669
  %v10671 = vpop.f32.mrf.mxu0
  %v10672 = vadd.f32 0.0, %v10671
  %v10673 = vpop.f32.mrf.mxu0
  %v10674 = vadd.f32 0.0, %v10673
  %v10675 = vpop.f32.mrf.mxu0
  %v10676 = vadd.f32 0.0, %v10675
  %10677 = vmatprep.mubr.bf16.mxu0 %v10181
  %10678 = vmatmul.mubr.bf16.gmra.mxu0 %v10180
  %v10679 = vpop.f32.mrf.mxu0
  %v10680 = vadd.f32 0.0, %v10679
  %v10681 = vpop.f32.mrf.mxu0
  %v10682 = vadd.f32 0.0, %v10681
  %v10683 = vpop.f32.mrf.mxu0
  %v10684 = vadd.f32 0.0, %v10683
  %v10685 = vpop.f32.mrf.mxu0
  %v10686 = vadd.f32 0.0, %v10685
  %10687 = vmatprep.mubr.bf16.mxu0 %v10184
  %10688 = vmatmul.mubr.bf16.gmra.mxu0 %v10183
  %v10689 = vpop.f32.mrf.mxu0
  %v10690 = vadd.f32 0.0, %v10689
  %v10691 = vpop.f32.mrf.mxu0
  %v10692 = vadd.f32 0.0, %v10691
  %v10693 = vpop.f32.mrf.mxu0
  %v10694 = vadd.f32 0.0, %v10693
  %v10695 = vpop.f32.mrf.mxu0
  %v10696 = vadd.f32 0.0, %v10695
  %10697 = vmatprep.mubr.bf16.mxu0 %v10187
  %10698 = vmatmul.mubr.bf16.gmra.mxu0 %v10186
  %v10699 = vpop.f32.mrf.mxu0
  %v10700 = vadd.f32 0.0, %v10699
  %v10701 = vpop.f32.mrf.mxu0
  %v10702 = vadd.f32 0.0, %v10701
  %v10703 = vpop.f32.mrf.mxu0
  %v10704 = vpop.f32.mrf.mxu0
  %10705 = vdwg.mxu0
  %10706 = vmatprep.subr.bf16.mxu0 0
  %10707 = vmatpush1.bf16.msra.mxu0 0
  %10708 = vmatprep.subr.bf16.mxu0 0
  %10709 = vmatpush1.bf16.msra.mxu0 0
  %10710 = vmatprep.subr.bf16.mxu0 0
  %10711 = vmatpush1.bf16.msra.mxu0 0
  %10712 = vmatprep.subr.bf16.mxu0 %v10545
  %10713 = vmatpush1.bf16.msra.mxu0 %v10544
  %10714 = vmatprep.subr.bf16.mxu0 %v10542
  %10715 = vmatpush1.bf16.msra.mxu0 %v10541
  %10716 = vmatprep.subr.bf16.mxu0 %v10539
  %10717 = vmatpush1.bf16.msra.mxu0 %v10538
  %10718 = vmatprep.subr.bf16.mxu0 %v10536
  %10719 = vmatpush1.bf16.msra.mxu0 %v10535
  %10720 = vmatprep.subr.bf16.mxu0 %v10533
  %10721 = vmatpush1.bf16.msra.mxu0 %v10532
  %10722 = vmatprep.subr.bf16.mxu0 0
  %10723 = vmatpush2.bf16.msra.mxu0 0
  %10724 = vmatprep.subr.bf16.mxu0 0
  %10725 = vmatpush2.bf16.msra.mxu0 0
  %10726 = vmatprep.subr.bf16.mxu0 0
  %10727 = vmatpush2.bf16.msra.mxu0 0
  %10728 = vmatprep.subr.bf16.mxu0 0
  %10729 = vmatpush2.bf16.msra.mxu0 0
  %10730 = vmatprep.subr.bf16.mxu0 0
  %10731 = vmatpush2.bf16.msra.mxu0 0
  %10732 = vmatprep.subr.bf16.mxu0 0
  %10733 = vmatpush2.bf16.msra.mxu0 0
  %10734 = vmatprep.subr.bf16.mxu0 0
  %10735 = vmatpush2.bf16.msra.mxu0 0
  %10736 = vmatprep.subr.bf16.mxu0 0
  %10737 = vmatpush2.bf16.msra.mxu0 0
  %10738 = vmatprep.mubr.bf16.mxu0 0
  %10739 = vmatmul.mubr.bf16.gmra.mxu0 %v10611
  %v10740 = vpop.f32.mrf.mxu0
  %v10741 = vadd.f32 %v10660, %v10740
  %v10742 = vpop.f32.mrf.mxu0
  %v10743 = vadd.f32 %v10662, %v10742
  %v10744 = vpop.f32.mrf.mxu0
  %v10745 = vadd.f32 %v10664, %v10744
  %v10746 = vpop.f32.mrf.mxu0
  %v10747 = vadd.f32 %v10666, %v10746
  %10748 = vmatprep.mubr.bf16.mxu0 0
  %10749 = vmatmul.mubr.bf16.gmra.mxu0 %v10614
  %v10750 = vpop.f32.mrf.mxu0
  %v10751 = vadd.f32 %v10670, %v10750
  %v10752 = vpop.f32.mrf.mxu0
  %v10753 = vadd.f32 %v10672, %v10752
  %v10754 = vpop.f32.mrf.mxu0
  %v10755 = vadd.f32 %v10674, %v10754
  %v10756 = vpop.f32.mrf.mxu0
  %v10757 = vadd.f32 %v10676, %v10756
  %10758 = vmatprep.mubr.bf16.mxu0 0
  %10759 = vmatmul.mubr.bf16.gmra.mxu0 %v10617
  %v10760 = vpop.f32.mrf.mxu0
  %v10761 = vadd.f32 %v10680, %v10760
  %v10762 = vpop.f32.mrf.mxu0
  %v10763 = vadd.f32 %v10682, %v10762
  %v10764 = vpop.f32.mrf.mxu0
  %v10765 = vadd.f32 %v10684, %v10764
  %v10766 = vpop.f32.mrf.mxu0
  %v10767 = vadd.f32 %v10686, %v10766
  %10768 = vmatprep.mubr.bf16.mxu0 0
  %10769 = vmatmul.mubr.bf16.gmra.mxu0 %v10620
  %v10770 = vpop.f32.mrf.mxu0
  %v10771 = vadd.f32 %v10690, %v10770
  %v10772 = vpop.f32.mrf.mxu0
  %v10773 = vadd.f32 %v10692, %v10772
  %v10774 = vpop.f32.mrf.mxu0
  %v10775 = vadd.f32 %v10694, %v10774
  %v10776 = vpop.f32.mrf.mxu0
  %v10777 = vadd.f32 %v10696, %v10776
  %10778 = vmatprep.mubr.bf16.mxu0 0
  %10779 = vmatmul.mubr.bf16.gmra.mxu0 %v10623
  %v10780 = vpop.f32.mrf.mxu0
  %v10781 = vadd.f32 %v10700, %v10780
  %v10782 = vpop.f32.mrf.mxu0
  %v10783 = vadd.f32 %v10702, %v10782
  %v10784 = vpop.f32.mrf.mxu0
  %v10785 = vpop.f32.mrf.mxu0
  %10786 = vdwg.mxu0
  %10787 = vmatprep.subr.bf16.mxu0 0
  %10788 = vmatpush1.bf16.msra.mxu0 %v10507
  %10789 = vmatprep.subr.bf16.mxu0 0
  %10790 = vmatpush1.bf16.msra.mxu0 %v10504
  %10791 = vmatprep.subr.bf16.mxu0 0
  %10792 = vmatpush1.bf16.msra.mxu0 %v10501
  %10793 = vmatprep.subr.bf16.mxu0 0
  %10794 = vmatpush1.bf16.msra.mxu0 %v10498
  %10795 = vmatprep.subr.bf16.mxu0 0
  %10796 = vmatpush1.bf16.msra.mxu0 %v10495
  %10797 = vmatprep.subr.bf16.mxu0 0
  %10798 = vmatpush1.bf16.msra.mxu0 %v10492
  %10799 = vmatprep.subr.bf16.mxu0 0
  %10800 = vmatpush1.bf16.msra.mxu0 %v10489
  %10801 = vmatprep.subr.bf16.mxu0 0
  %10802 = vmatpush1.bf16.msra.mxu0 %v10486
  %10803 = vmatprep.subr.bf16.mxu0 0
  %10804 = vmatpush2.bf16.msra.mxu0 %v10531
  %10805 = vmatprep.subr.bf16.mxu0 0
  %10806 = vmatpush2.bf16.msra.mxu0 %v10528
  %10807 = vmatprep.subr.bf16.mxu0 0
  %10808 = vmatpush2.bf16.msra.mxu0 %v10525
  %10809 = vmatprep.subr.bf16.mxu0 0
  %10810 = vmatpush2.bf16.msra.mxu0 %v10522
  %10811 = vmatprep.subr.bf16.mxu0 0
  %10812 = vmatpush2.bf16.msra.mxu0 %v10519
  %10813 = vmatprep.subr.bf16.mxu0 0
  %10814 = vmatpush2.bf16.msra.mxu0 %v10516
  %10815 = vmatprep.subr.bf16.mxu0 0
  %10816 = vmatpush2.bf16.msra.mxu0 %v10513
  %10817 = vmatprep.subr.bf16.mxu0 0
  %10818 = vmatpush2.bf16.msra.mxu0 %v10510
  %10819 = vmatprep.mubr.bf16.mxu0 %v10175
  %10820 = vmatmul.mubr.bf16.gmra.mxu0 %v10174
  %v10821 = vpop.f32.mrf.mxu0
  %v10822 = vadd.f32 0.0, %v10821
  %v10823 = vpop.f32.mrf.mxu0
  %v10824 = vpop.f32.mrf.mxu0
  %v10825 = vadd.f32 0.0, %v10824
  %v10826 = vpop.f32.mrf.mxu0
  %10827 = vmatprep.mubr.bf16.mxu0 %v10178
  %10828 = vmatmul.mubr.bf16.gmra.mxu0 %v10177
  %v10829 = vpop.f32.mrf.mxu0
  %v10830 = vadd.f32 0.0, %v10829
  %v10831 = vpop.f32.mrf.mxu0
  %v10832 = vpop.f32.mrf.mxu0
  %v10833 = vadd.f32 0.0, %v10832
  %v10834 = vpop.f32.mrf.mxu0
  %10835 = vmatprep.mubr.bf16.mxu0 %v10181
  %10836 = vmatmul.mubr.bf16.gmra.mxu0 %v10180
  %v10837 = vpop.f32.mrf.mxu0
  %v10838 = vadd.f32 0.0, %v10837
  %v10839 = vpop.f32.mrf.mxu0
  %v10840 = vpop.f32.mrf.mxu0
  %v10841 = vadd.f32 0.0, %v10840
  %v10842 = vpop.f32.mrf.mxu0
  %10843 = vmatprep.mubr.bf16.mxu0 %v10184
  %10844 = vmatmul.mubr.bf16.gmra.mxu0 %v10183
  %v10845 = vpop.f32.mrf.mxu0
  %v10846 = vadd.f32 0.0, %v10845
  %v10847 = vpop.f32.mrf.mxu0
  %v10848 = vpop.f32.mrf.mxu0
  %v10849 = vadd.f32 0.0, %v10848
  %v10850 = vpop.f32.mrf.mxu0
  %10851 = vmatprep.mubr.bf16.mxu0 %v10187
  %10852 = vmatmul.mubr.bf16.gmra.mxu0 %v10186
  %v10853 = vpop.f32.mrf.mxu0
  %v10854 = vadd.f32 0.0, %v10853
  %v10855 = vpop.f32.mrf.mxu0
  %v10856 = vpop.f32.mrf.mxu0
  %v10857 = vpop.f32.mrf.mxu0
  %10858 = vdwg.mxu0
  %10859 = vmatprep.subr.bf16.mxu0 0
  %10860 = vmatpush1.bf16.msra.mxu0 0
  %10861 = vmatprep.subr.bf16.mxu0 0
  %10862 = vmatpush1.bf16.msra.mxu0 0
  %10863 = vmatprep.subr.bf16.mxu0 0
  %10864 = vmatpush1.bf16.msra.mxu0 0
  %10865 = vmatprep.subr.bf16.mxu0 0
  %10866 = vmatpush1.bf16.msra.mxu0 %v10546
  %10867 = vmatprep.subr.bf16.mxu0 0
  %10868 = vmatpush1.bf16.msra.mxu0 %v10543
  %10869 = vmatprep.subr.bf16.mxu0 0
  %10870 = vmatpush1.bf16.msra.mxu0 %v10540
  %10871 = vmatprep.subr.bf16.mxu0 0
  %10872 = vmatpush1.bf16.msra.mxu0 %v10537
  %10873 = vmatprep.subr.bf16.mxu0 0
  %10874 = vmatpush1.bf16.msra.mxu0 %v10534
  %10875 = vmatprep.subr.bf16.mxu0 0
  %10876 = vmatpush2.bf16.msra.mxu0 0
  %10877 = vmatprep.subr.bf16.mxu0 0
  %10878 = vmatpush2.bf16.msra.mxu0 0
  %10879 = vmatprep.subr.bf16.mxu0 0
  %10880 = vmatpush2.bf16.msra.mxu0 0
  %10881 = vmatprep.subr.bf16.mxu0 0
  %10882 = vmatpush2.bf16.msra.mxu0 0
  %10883 = vmatprep.subr.bf16.mxu0 0
  %10884 = vmatpush2.bf16.msra.mxu0 0
  %10885 = vmatprep.subr.bf16.mxu0 0
  %10886 = vmatpush2.bf16.msra.mxu0 0
  %10887 = vmatprep.subr.bf16.mxu0 0
  %10888 = vmatpush2.bf16.msra.mxu0 0
  %10889 = vmatprep.subr.bf16.mxu0 0
  %10890 = vmatpush2.bf16.msra.mxu0 0
  %10891 = vmatprep.mubr.bf16.mxu0 0
  %10892 = vmatmul.mubr.bf16.gmra.mxu0 %v10611
  %v10893 = vpop.f32.mrf.mxu0
  %v10894 = vadd.f32 %v10822, %v10893
  %v10895 = vpop.f32.mrf.mxu0
  %v10896 = vpop.f32.mrf.mxu0
  %v10897 = vadd.f32 %v10825, %v10896
  %v10898 = vpop.f32.mrf.mxu0
  %10899 = vmatprep.mubr.bf16.mxu0 0
  %10900 = vmatmul.mubr.bf16.gmra.mxu0 %v10614
  %v10901 = vpop.f32.mrf.mxu0
  %v10902 = vadd.f32 %v10830, %v10901
  %v10903 = vpop.f32.mrf.mxu0
  %v10904 = vpop.f32.mrf.mxu0
  %v10905 = vadd.f32 %v10833, %v10904
  %v10906 = vpop.f32.mrf.mxu0
  %10907 = vmatprep.mubr.bf16.mxu0 0
  %10908 = vmatmul.mubr.bf16.gmra.mxu0 %v10617
  %v10909 = vpop.f32.mrf.mxu0
  %v10910 = vadd.f32 %v10838, %v10909
  %v10911 = vpop.f32.mrf.mxu0
  %v10912 = vpop.f32.mrf.mxu0
  %v10913 = vadd.f32 %v10841, %v10912
  %v10914 = vpop.f32.mrf.mxu0
  %10915 = vmatprep.mubr.bf16.mxu0 0
  %10916 = vmatmul.mubr.bf16.gmra.mxu0 %v10620
  %v10917 = vpop.f32.mrf.mxu0
  %v10918 = vadd.f32 %v10846, %v10917
  %v10919 = vpop.f32.mrf.mxu0
  %v10920 = vpop.f32.mrf.mxu0
  %v10921 = vadd.f32 %v10849, %v10920
  %v10922 = vpop.f32.mrf.mxu0
  %10923 = vmatprep.mubr.bf16.mxu0 0
  %10924 = vmatmul.mubr.bf16.gmra.mxu0 %v10623
  %v10925 = vpop.f32.mrf.mxu0
  %v10926 = vadd.f32 %v10854, %v10925
  %v10927 = vpop.f32.mrf.mxu0
  %v10928 = vpop.f32.mrf.mxu0
  %v10929 = vpop.f32.mrf.mxu0
  %10930 = vdwg.mxu0
  %v10931 = vadd.f32 %v10147, %v10741
  %v10932 = vadd.f32 %v10148, %v10743
  %v10933 = vadd.f32 %v10149, %v10894
  %v10934 = vadd.f32 %v10150, %v10745
  %v10935 = vadd.f32 %v10151, %v10747
  %v10936 = vadd.f32 %v10152, %v10897
  %v10937 = vadd.f32 %v10153, %v10751
  %v10938 = vadd.f32 %v10154, %v10753
  %v10939 = vadd.f32 %v10155, %v10902
  %v10940 = vadd.f32 %v10156, %v10755
  %v10941 = vadd.f32 %v10157, %v10757
  %v10942 = vadd.f32 %v10158, %v10905
  %v10943 = vadd.f32 %v10159, %v10761
  %v10944 = vadd.f32 %v10160, %v10763
  %v10945 = vadd.f32 %v10161, %v10910
  %v10946 = vadd.f32 %v10162, %v10765
  %v10947 = vadd.f32 %v10163, %v10767
  %v10948 = vadd.f32 %v10164, %v10913
  %v10949 = vadd.f32 %v10165, %v10771
  %v10950 = vadd.f32 %v10166, %v10773
  %v10951 = vadd.f32 %v10167, %v10918
  %v10952 = vadd.f32 %v10168, %v10775
  %v10953 = vadd.f32 %v10169, %v10777
  %v10954 = vadd.f32 %v10170, %v10921
  %v10955 = vadd.f32 %v10171, %v10781
  %v10956 = vadd.f32 %v10172, %v10783
  %v10957 = vadd.f32 %v10173, %v10926
  %v10958 = vld [vmem:[%s4] sm:$0x7]
  %v10960 = vlaneseq
  %v10961 = vshrl.u32 %v10960, 7
  %v10962 = vsub.s32 0, %v10961
  %v10963 = vrot.slane %v10958, %v10962
  %v10964 = vlaneseq
  %v10965 = vshrl.u32 %v10964, 7
  %v10966 = vsub.s32 1, %v10965
  %v10967 = vrot.slane %v10958, %v10966
  %v10968 = vlaneseq
  %v10969 = vshrl.u32 %v10968, 7
  %v10970 = vsub.s32 2, %v10969
  %v10971 = vrot.slane %v10958, %v10970
  %v10975 = vadd.f32 %v10931, %v10963
  %v10976 = vadd.f32 %v10932, %v10967
  %v10977 = vadd.f32 %v10933, %v10971
  %v10978 = vadd.f32 %v10934, %v10963
  %v10979 = vadd.f32 %v10935, %v10967
  %v10980 = vadd.f32 %v10936, %v10971
  %v10981 = vadd.f32 %v10937, %v10963
  %v10982 = vadd.f32 %v10938, %v10967
  %v10983 = vadd.f32 %v10939, %v10971
  %v10984 = vadd.f32 %v10940, %v10963
  %v10985 = vadd.f32 %v10941, %v10967
  %v10986 = vadd.f32 %v10942, %v10971
  %v10987 = vadd.f32 %v10943, %v10963
  %v10988 = vadd.f32 %v10944, %v10967
  %v10989 = vadd.f32 %v10945, %v10971
  %v10990 = vadd.f32 %v10946, %v10963
  %v10991 = vadd.f32 %v10947, %v10967
  %v10992 = vadd.f32 %v10948, %v10971
  %v10993 = vadd.f32 %v10949, %v10963
  %v10994 = vadd.f32 %v10950, %v10967
  %v10995 = vadd.f32 %v10951, %v10971
  %v10996 = vadd.f32 %v10952, %v10963
  %v10997 = vadd.f32 %v10953, %v10967
  %v10998 = vadd.f32 %v10954, %v10971
  %v10999 = vadd.f32 %v10955, %v10963
  %v11000 = vadd.f32 %v10956, %v10967
  %v11001 = vadd.f32 %v10957, %v10971
  %v11002 = vmax.f32 %v10975, 0.0
  %v11003 = vmax.f32 %v10976, 0.0
  %v11004 = vmax.f32 %v10977, 0.0
  %v11005 = vmax.f32 %v10978, 0.0
  %v11006 = vmax.f32 %v10979, 0.0
  %v11007 = vmax.f32 %v10980, 0.0
  %v11008 = vmax.f32 %v10981, 0.0
  %v11009 = vmax.f32 %v10982, 0.0
  %v11010 = vmax.f32 %v10983, 0.0
  %v11011 = vmax.f32 %v10984, 0.0
  %v11012 = vmax.f32 %v10985, 0.0
  %v11013 = vmax.f32 %v10986, 0.0
  %v11014 = vmax.f32 %v10987, 0.0
  %v11015 = vmax.f32 %v10988, 0.0
  %v11016 = vmax.f32 %v10989, 0.0
  %v11017 = vmax.f32 %v10990, 0.0
  %v11018 = vmax.f32 %v10991, 0.0
  %v11019 = vmax.f32 %v10992, 0.0
  %v11020 = vmax.f32 %v10993, 0.0
  %v11021 = vmax.f32 %v10994, 0.0
  %v11022 = vmax.f32 %v10995, 0.0
  %v11023 = vmax.f32 %v10996, 0.0
  %v11024 = vmax.f32 %v10997, 0.0
  %v11025 = vmax.f32 %v10998, 0.0
  %v11026 = vmax.f32 %v10999, 0.0
  %v11027 = vmax.f32 %v11000, 0.0
  %v11028 = vmax.f32 %v11001, 0.0
  %v11029 = vpack.c.bf16 %v11002, %v11002
  %v11030 = vpack.c.bf16 %v11003, %v11003
  %v11031 = vpack.c.bf16 %v11004, %v11004
  %v11032 = vpack.c.bf16 %v11005, %v11005
  %v11033 = vpack.c.bf16 %v11006, %v11006
  %v11034 = vpack.c.bf16 %v11007, %v11007
  %v11035 = vpack.c.bf16 %v11008, %v11008
  %v11036 = vpack.c.bf16 %v11009, %v11009
  %v11037 = vpack.c.bf16 %v11010, %v11010
  %v11038 = vpack.c.bf16 %v11011, %v11011
  %v11039 = vpack.c.bf16 %v11012, %v11012
  %v11040 = vpack.c.bf16 %v11013, %v11013
  %v11041 = vpack.c.bf16 %v11014, %v11014
  %v11042 = vpack.c.bf16 %v11015, %v11015
  %v11043 = vpack.c.bf16 %v11016, %v11016
  %v11044 = vpack.c.bf16 %v11017, %v11017
  %v11045 = vpack.c.bf16 %v11018, %v11018
  %v11046 = vpack.c.bf16 %v11019, %v11019
  %v11047 = vpack.c.bf16 %v11020, %v11020
  %v11048 = vpack.c.bf16 %v11021, %v11021
  %v11049 = vpack.c.bf16 %v11022, %v11022
  %v11050 = vpack.c.bf16 %v11023, %v11023
  %v11051 = vpack.c.bf16 %v11024, %v11024
  %v11052 = vpack.c.bf16 %v11025, %v11025
  %v11053 = vpack.c.bf16 %v11026, %v11026
  %v11054 = vpack.c.bf16 %v11027, %v11027
  %v11055 = vpack.c.bf16 %v11028, %v11028
  %v11056 = vld [vmem:[%s5] sm:$0xff]
  %v11057 = vld [vmem:[%s5 + $0x8] sm:$0xff]
  %v11058 = vld [vmem:[%s5 + $0x10] sm:$0xff]
  %v11059 = vld [vmem:[%s5 + $0x18] sm:$0xff]
  %v11060 = vld [vmem:[%s5 + $0x20] sm:$0xff]
  %v11061 = vld [vmem:[%s5 + $0x28] sm:$0xff]
  %v11062 = vld [vmem:[%s5 + $0x30] sm:$0xff]
  %v11063 = vld [vmem:[%s5 + $0x38] sm:$0xff]
  %v11064 = vld [vmem:[%s5 + $0x40] sm:$0xff]
  %v11065 = vld [vmem:[%s5 + $0x48] sm:$0xff]
  %v11066 = vld [vmem:[%s5 + $0x50] sm:$0xff]
  %v11067 = vld [vmem:[%s5 + $0x58] sm:$0xff]
  %v11068 = vld [vmem:[%s5 + $0x60] sm:$0xff]
  %v11069 = vld [vmem:[%s5 + $0x68] sm:$0xff]
  %v11070 = vld [vmem:[%s5 + $0x70] sm:$0xff]
  %v11071 = vld [vmem:[%s5 + $0x78] sm:$0xff]
  %v11072 = vld [vmem:[%s5 + $0x80] sm:$0xff]
  %v11073 = vld [vmem:[%s5 + $0x88] sm:$0xff]
  %v11074 = vld [vmem:[%s5 + $0x90] sm:$0xff]
  %v11075 = vld [vmem:[%s5 + $0x98] sm:$0xff]
  %v11076 = vld [vmem:[%s5 + $0xa0] sm:$0xff]
  %v11077 = vld [vmem:[%s5 + $0xa8] sm:$0xff]
  %v11078 = vld [vmem:[%s5 + $0xb0] sm:$0xff]
  %v11079 = vld [vmem:[%s5 + $0xb8] sm:$0xff]
  %v11080 = vld [vmem:[%s5 + $0xc0] sm:$0xff]
  %v11081 = vld [vmem:[%s5 + $0xc8] sm:$0xff]
  %v11082 = vld [vmem:[%s5 + $0xd0] sm:$0xff]
  %v11083 = vld [vmem:[%s5 + $0xd8] sm:$0xff]
  %v11084 = vld [vmem:[%s5 + $0xe0] sm:$0xff]
  %v11085 = vld [vmem:[%s5 + $0xe8] sm:$0xff]
  %v11086 = vld [vmem:[%s5 + $0xf0] sm:$0xff]
  %v11087 = vld [vmem:[%s5 + $0xf8] sm:$0xff]
  %v11088 = vld [vmem:[%s5 + $0x100] sm:$0xff]
  %v11089 = vld [vmem:[%s5 + $0x108] sm:$0xff]
  %v11090 = vld [vmem:[%s5 + $0x110] sm:$0xff]
  %v11091 = vld [vmem:[%s5 + $0x118] sm:$0xff]
  %v11092 = vld [vmem:[%s5 + $0x120] sm:$0xff]
  %v11093 = vld [vmem:[%s5 + $0x128] sm:$0xff]
  %v11094 = vld [vmem:[%s5 + $0x130] sm:$0xff]
  %v11095 = vld [vmem:[%s5 + $0x138] sm:$0xff]
  %v11096 = vld [vmem:[%s5 + $0x140] sm:$0xff]
  %v11097 = vld [vmem:[%s5 + $0x148] sm:$0xff]
  %v11098 = vld [vmem:[%s5 + $0x150] sm:$0xff]
  %v11099 = vld [vmem:[%s5 + $0x158] sm:$0xff]
  %v11100 = vld [vmem:[%s5 + $0x160] sm:$0xff]
  %v11101 = vld [vmem:[%s5 + $0x168] sm:$0xff]
  %v11102 = vld [vmem:[%s5 + $0x170] sm:$0xff]
  %v11103 = vld [vmem:[%s5 + $0x178] sm:$0xff]
  %v11104 = vld [vmem:[%s5 + $0x180] sm:$0xff]
  %v11105 = vld [vmem:[%s5 + $0x188] sm:$0xff]
  %v11106 = vld [vmem:[%s5 + $0x190] sm:$0xff]
  %v11107 = vld [vmem:[%s5 + $0x198] sm:$0xff]
  %v11108 = vld [vmem:[%s5 + $0x1a0] sm:$0xff]
  %v11109 = vld [vmem:[%s5 + $0x1a8] sm:$0xff]
  %v11110 = vld [vmem:[%s5 + $0x1b0] sm:$0xff]
  %v11111 = vld [vmem:[%s5 + $0x1b8] sm:$0xff]
  %v11112 = vld [vmem:[%s5 + $0x1c0] sm:$0xff]
  %v11113 = vld [vmem:[%s5 + $0x1c8] sm:$0xff]
  %v11114 = vld [vmem:[%s5 + $0x1d0] sm:$0xff]
  %v11115 = vld [vmem:[%s5 + $0x1d8] sm:$0xff]
  %v11116 = vld [vmem:[%s5 + $0x1e0] sm:$0xff]
  %v11117 = vld [vmem:[%s5 + $0x1e8] sm:$0xff]
  %v11118 = vld [vmem:[%s5 + $0x1f0] sm:$0xff]
  %v11119 = vld [vmem:[%s5 + $0x1f8] sm:$0xff]
  %v11120 = vld [vmem:[%s5 + $0x200] sm:$0xff]
  %v11121 = vld [vmem:[%s5 + $0x208] sm:$0xff]
  %v11122 = vld [vmem:[%s5 + $0x210] sm:$0xff]
  %v11123 = vld [vmem:[%s5 + $0x218] sm:$0xff]
  %v11124 = vld [vmem:[%s5 + $0x220] sm:$0xff]
  %v11125 = vld [vmem:[%s5 + $0x228] sm:$0xff]
  %v11126 = vld [vmem:[%s5 + $0x230] sm:$0xff]
  %v11127 = vld [vmem:[%s5 + $0x238] sm:$0xff]
  %v11128 = vld [vmem:[%s5 + $0x240] sm:$0xff]
  %v11129 = vld [vmem:[%s5 + $0x248] sm:$0xff]
  %v11130 = vld [vmem:[%s5 + $0x250] sm:$0xff]
  %v11131 = vld [vmem:[%s5 + $0x258] sm:$0xff]
  %v11132 = vld [vmem:[%s5 + $0x260] sm:$0xff]
  %v11133 = vld [vmem:[%s5 + $0x268] sm:$0xff]
  %v11134 = vld [vmem:[%s5 + $0x270] sm:$0xff]
  %v11135 = vld [vmem:[%s5 + $0x278] sm:$0xff]
  %v11136 = vld [vmem:[%s5 + $0x280] sm:$0xff]
  %v11137 = vld [vmem:[%s5 + $0x288] sm:$0xff]
  %v11138 = vld [vmem:[%s5 + $0x290] sm:$0xff]
  %v11139 = vld [vmem:[%s5 + $0x298] sm:$0xff]
  %v11140 = vld [vmem:[%s5 + $0x2a0] sm:$0xff]
  %v11141 = vld [vmem:[%s5 + $0x2a8] sm:$0xff]
  %v11142 = vld [vmem:[%s5 + $0x2b0] sm:$0xff]
  %v11143 = vld [vmem:[%s5 + $0x2b8] sm:$0xff]
  %v11144 = vld [vmem:[%s5 + $0x2c0] sm:$0xff]
  %v11145 = vld [vmem:[%s5 + $0x2c8] sm:$0xff]
  %v11146 = vld [vmem:[%s5 + $0x2d0] sm:$0xff]
  %v11147 = vld [vmem:[%s5 + $0x2d8] sm:$0xff]
  %v11148 = vld [vmem:[%s5 + $0x2e0] sm:$0xff]
  %v11149 = vld [vmem:[%s5 + $0x2e8] sm:$0xff]
  %v11150 = vld [vmem:[%s5 + $0x2f0] sm:$0xff]
  %v11151 = vld [vmem:[%s5 + $0x2f8] sm:$0xff]
  %v11152 = vld [vmem:[%s5 + $0x300] sm:$0xff]
  %v11153 = vld [vmem:[%s5 + $0x308] sm:$0xff]
  %v11154 = vld [vmem:[%s5 + $0x310] sm:$0xff]
  %v11155 = vld [vmem:[%s5 + $0x318] sm:$0xff]
  %v11156 = vld [vmem:[%s5 + $0x320] sm:$0xff]
  %v11157 = vld [vmem:[%s5 + $0x328] sm:$0xff]
  %v11158 = vld [vmem:[%s5 + $0x330] sm:$0xff]
  %v11159 = vld [vmem:[%s5 + $0x338] sm:$0xff]
  %v11160 = vld [vmem:[%s5 + $0x340] sm:$0xff]
  %v11161 = vld [vmem:[%s5 + $0x348] sm:$0xff]
  %v11162 = vld [vmem:[%s5 + $0x350] sm:$0xff]
  %v11163 = vld [vmem:[%s5 + $0x358] sm:$0xff]
  %v11164 = vld [vmem:[%s5 + $0x360] sm:$0xff]
  %v11165 = vld [vmem:[%s5 + $0x368] sm:$0xff]
  %v11166 = vld [vmem:[%s5 + $0x370] sm:$0xff]
  %v11167 = vld [vmem:[%s5 + $0x378] sm:$0xff]
  %v11168 = vld [vmem:[%s5 + $0x380] sm:$0xff]
  %v11169 = vld [vmem:[%s5 + $0x388] sm:$0xff]
  %v11170 = vld [vmem:[%s5 + $0x390] sm:$0xff]
  %v11171 = vld [vmem:[%s5 + $0x398] sm:$0xff]
  %v11172 = vld [vmem:[%s5 + $0x3a0] sm:$0xff]
  %v11173 = vld [vmem:[%s5 + $0x3a8] sm:$0xff]
  %v11174 = vld [vmem:[%s5 + $0x3b0] sm:$0xff]
  %v11175 = vld [vmem:[%s5 + $0x3b8] sm:$0xff]
  %v11176 = vld [vmem:[%s5 + $0x3c0] sm:$0xff]
  %v11177 = vld [vmem:[%s5 + $0x3c8] sm:$0xff]
  %v11178 = vld [vmem:[%s5 + $0x3d0] sm:$0xff]
  %v11179 = vld [vmem:[%s5 + $0x3d8] sm:$0xff]
  %v11180 = vld [vmem:[%s5 + $0x3e0] sm:$0xff]
  %v11181 = vld [vmem:[%s5 + $0x3e8] sm:$0xff]
  %v11182 = vld [vmem:[%s5 + $0x3f0] sm:$0xff]
  %v11183 = vld [vmem:[%s5 + $0x3f8] sm:$0xff]
  %v11184 = vld [vmem:[%s5 + $0x400] sm:$0xff]
  %v11185 = vld [vmem:[%s5 + $0x408] sm:$0xff]
  %v11186 = vld [vmem:[%s5 + $0x410] sm:$0xff]
  %v11187 = vld [vmem:[%s5 + $0x418] sm:$0xff]
  %v11188 = vld [vmem:[%s5 + $0x420] sm:$0xff]
  %v11189 = vld [vmem:[%s5 + $0x428] sm:$0xff]
  %v11190 = vld [vmem:[%s5 + $0x430] sm:$0xff]
  %v11191 = vld [vmem:[%s5 + $0x438] sm:$0xff]
  %v11192 = vld [vmem:[%s5 + $0x440] sm:$0xff]
  %v11193 = vld [vmem:[%s5 + $0x448] sm:$0xff]
  %v11194 = vld [vmem:[%s5 + $0x450] sm:$0xff]
  %v11195 = vld [vmem:[%s5 + $0x458] sm:$0xff]
  %v11196 = vld [vmem:[%s5 + $0x460] sm:$0xff]
  %v11197 = vld [vmem:[%s5 + $0x468] sm:$0xff]
  %v11198 = vld [vmem:[%s5 + $0x470] sm:$0xff]
  %v11199 = vld [vmem:[%s5 + $0x478] sm:$0xff]
  %v11200 = vld [vmem:[%s5 + $0x480] sm:$0xff]
  %v11201 = vld [vmem:[%s5 + $0x488] sm:$0xff]
  %v11202 = vld [vmem:[%s5 + $0x490] sm:$0xff]
  %v11203 = vld [vmem:[%s5 + $0x498] sm:$0xff]
  %v11204 = vld [vmem:[%s5 + $0x4a0] sm:$0xff]
  %v11205 = vld [vmem:[%s5 + $0x4a8] sm:$0xff]
  %v11206 = vld [vmem:[%s5 + $0x4b0] sm:$0xff]
  %v11207 = vld [vmem:[%s5 + $0x4b8] sm:$0xff]
  %v11208 = vld [vmem:[%s5 + $0x4c0] sm:$0xff]
  %v11209 = vld [vmem:[%s5 + $0x4c8] sm:$0xff]
  %v11210 = vld [vmem:[%s5 + $0x4d0] sm:$0xff]
  %v11211 = vld [vmem:[%s5 + $0x4d8] sm:$0xff]
  %v11212 = vld [vmem:[%s5 + $0x4e0] sm:$0xff]
  %v11213 = vld [vmem:[%s5 + $0x4e8] sm:$0xff]
  %v11214 = vld [vmem:[%s5 + $0x4f0] sm:$0xff]
  %v11215 = vld [vmem:[%s5 + $0x4f8] sm:$0xff]
  %v11216 = vld [vmem:[%s5 + $0x500] sm:$0xff]
  %v11217 = vld [vmem:[%s5 + $0x508] sm:$0xff]
  %v11218 = vld [vmem:[%s5 + $0x510] sm:$0xff]
  %v11219 = vld [vmem:[%s5 + $0x518] sm:$0xff]
  %v11220 = vld [vmem:[%s5 + $0x520] sm:$0xff]
  %v11221 = vld [vmem:[%s5 + $0x528] sm:$0xff]
  %v11222 = vld [vmem:[%s5 + $0x530] sm:$0xff]
  %v11223 = vld [vmem:[%s5 + $0x538] sm:$0xff]
  %v11224 = vld [vmem:[%s5 + $0x540] sm:$0xff]
  %v11225 = vld [vmem:[%s5 + $0x548] sm:$0xff]
  %v11226 = vld [vmem:[%s5 + $0x550] sm:$0xff]
  %v11227 = vld [vmem:[%s5 + $0x558] sm:$0xff]
  %v11228 = vld [vmem:[%s5 + $0x560] sm:$0xff]
  %v11229 = vld [vmem:[%s5 + $0x568] sm:$0xff]
  %v11230 = vld [vmem:[%s5 + $0x570] sm:$0xff]
  %v11231 = vld [vmem:[%s5 + $0x578] sm:$0xff]
  %v11232 = vld [vmem:[%s5 + $0x580] sm:$0xff]
  %v11233 = vld [vmem:[%s5 + $0x588] sm:$0xff]
  %v11234 = vld [vmem:[%s5 + $0x590] sm:$0xff]
  %v11235 = vld [vmem:[%s5 + $0x598] sm:$0xff]
  %v11236 = vld [vmem:[%s5 + $0x5a0] sm:$0xff]
  %v11237 = vld [vmem:[%s5 + $0x5a8] sm:$0xff]
  %v11238 = vld [vmem:[%s5 + $0x5b0] sm:$0xff]
  %v11239 = vld [vmem:[%s5 + $0x5b8] sm:$0xff]
  %v11240 = vld [vmem:[%s5 + $0x5c0] sm:$0xff]
  %v11241 = vld [vmem:[%s5 + $0x5c8] sm:$0xff]
  %v11242 = vld [vmem:[%s5 + $0x5d0] sm:$0xff]
  %v11243 = vld [vmem:[%s5 + $0x5d8] sm:$0xff]
  %v11244 = vld [vmem:[%s5 + $0x5e0] sm:$0xff]
  %v11245 = vld [vmem:[%s5 + $0x5e8] sm:$0xff]
  %v11246 = vld [vmem:[%s5 + $0x5f0] sm:$0xff]
  %v11247 = vld [vmem:[%s5 + $0x5f8] sm:$0xff]
  %v11248 = vld [vmem:[%s5 + $0x600] sm:$0xff]
  %v11249 = vld [vmem:[%s5 + $0x608] sm:$0xff]
  %v11250 = vld [vmem:[%s5 + $0x610] sm:$0xff]
  %v11251 = vld [vmem:[%s5 + $0x618] sm:$0xff]
  %v11252 = vld [vmem:[%s5 + $0x620] sm:$0xff]
  %v11253 = vld [vmem:[%s5 + $0x628] sm:$0xff]
  %v11254 = vld [vmem:[%s5 + $0x630] sm:$0xff]
  %v11255 = vld [vmem:[%s5 + $0x638] sm:$0xff]
  %v11256 = vld [vmem:[%s5 + $0x640] sm:$0xff]
  %v11257 = vld [vmem:[%s5 + $0x648] sm:$0xff]
  %v11258 = vld [vmem:[%s5 + $0x650] sm:$0xff]
  %v11259 = vld [vmem:[%s5 + $0x658] sm:$0xff]
  %v11260 = vld [vmem:[%s5 + $0x660] sm:$0xff]
  %v11261 = vld [vmem:[%s5 + $0x668] sm:$0xff]
  %v11262 = vld [vmem:[%s5 + $0x670] sm:$0xff]
  %v11263 = vld [vmem:[%s5 + $0x678] sm:$0xff]
  %v11264 = vld [vmem:[%s5 + $0x680] sm:$0xff]
  %v11265 = vld [vmem:[%s5 + $0x688] sm:$0xff]
  %v11266 = vld [vmem:[%s5 + $0x690] sm:$0xff]
  %v11267 = vld [vmem:[%s5 + $0x698] sm:$0xff]
  %v11268 = vld [vmem:[%s5 + $0x6a0] sm:$0xff]
  %v11269 = vld [vmem:[%s5 + $0x6a8] sm:$0xff]
  %v11270 = vld [vmem:[%s5 + $0x6b0] sm:$0xff]
  %v11271 = vld [vmem:[%s5 + $0x6b8] sm:$0xff]
  %v11272 = vld [vmem:[%s5 + $0x6c0] sm:$0xff]
  %v11273 = vld [vmem:[%s5 + $0x6c8] sm:$0xff]
  %v11274 = vld [vmem:[%s5 + $0x6d0] sm:$0xff]
  %v11275 = vld [vmem:[%s5 + $0x6d8] sm:$0xff]
  %v11276 = vld [vmem:[%s5 + $0x6e0] sm:$0xff]
  %v11277 = vld [vmem:[%s5 + $0x6e8] sm:$0xff]
  %v11278 = vld [vmem:[%s5 + $0x6f0] sm:$0xff]
  %v11279 = vld [vmem:[%s5 + $0x6f8] sm:$0xff]
  %v11280 = vld [vmem:[%s5 + $0x700] sm:$0xff]
  %v11281 = vld [vmem:[%s5 + $0x708] sm:$0xff]
  %v11282 = vld [vmem:[%s5 + $0x710] sm:$0xff]
  %v11283 = vld [vmem:[%s5 + $0x718] sm:$0xff]
  %v11284 = vld [vmem:[%s5 + $0x720] sm:$0xff]
  %v11285 = vld [vmem:[%s5 + $0x728] sm:$0xff]
  %v11286 = vld [vmem:[%s5 + $0x730] sm:$0xff]
  %v11287 = vld [vmem:[%s5 + $0x738] sm:$0xff]
  %v11288 = vld [vmem:[%s5 + $0x740] sm:$0xff]
  %v11289 = vld [vmem:[%s5 + $0x748] sm:$0xff]
  %v11290 = vld [vmem:[%s5 + $0x750] sm:$0xff]
  %v11291 = vld [vmem:[%s5 + $0x758] sm:$0xff]
  %v11292 = vld [vmem:[%s5 + $0x760] sm:$0xff]
  %v11293 = vld [vmem:[%s5 + $0x768] sm:$0xff]
  %v11294 = vld [vmem:[%s5 + $0x770] sm:$0xff]
  %v11295 = vld [vmem:[%s5 + $0x778] sm:$0xff]
  %v11296 = vld [vmem:[%s5 + $0x780] sm:$0xff]
  %v11297 = vld [vmem:[%s5 + $0x788] sm:$0xff]
  %v11298 = vld [vmem:[%s5 + $0x790] sm:$0xff]
  %v11299 = vld [vmem:[%s5 + $0x798] sm:$0xff]
  %v11300 = vld [vmem:[%s5 + $0x7a0] sm:$0xff]
  %v11301 = vld [vmem:[%s5 + $0x7a8] sm:$0xff]
  %v11302 = vld [vmem:[%s5 + $0x7b0] sm:$0xff]
  %v11303 = vld [vmem:[%s5 + $0x7b8] sm:$0xff]
  %v11304 = vld [vmem:[%s5 + $0x7c0] sm:$0xff]
  %v11305 = vld [vmem:[%s5 + $0x7c8] sm:$0xff]
  %v11306 = vld [vmem:[%s5 + $0x7d0] sm:$0xff]
  %v11307 = vld [vmem:[%s5 + $0x7d8] sm:$0xff]
  %v11308 = vld [vmem:[%s5 + $0x7e0] sm:$0xff]
  %v11309 = vld [vmem:[%s5 + $0x7e8] sm:$0xff]
  %v11310 = vld [vmem:[%s5 + $0x7f0] sm:$0xff]
  %v11311 = vld [vmem:[%s5 + $0x7f8] sm:$0xff]
  %v11312 = vld [vmem:[%s5 + $0x800] sm:$0xff]
  %v11313 = vld [vmem:[%s5 + $0x808] sm:$0xff]
  %v11314 = vld [vmem:[%s5 + $0x810] sm:$0xff]
  %v11315 = vld [vmem:[%s5 + $0x818] sm:$0xff]
  %v11316 = vld [vmem:[%s5 + $0x820] sm:$0xff]
  %v11317 = vld [vmem:[%s5 + $0x828] sm:$0xff]
  %v11318 = vld [vmem:[%s5 + $0x830] sm:$0xff]
  %v11319 = vld [vmem:[%s5 + $0x838] sm:$0xff]
  %v11320 = vld [vmem:[%s5 + $0x840] sm:$0xff]
  %v11321 = vld [vmem:[%s5 + $0x848] sm:$0xff]
  %v11322 = vld [vmem:[%s5 + $0x850] sm:$0xff]
  %v11323 = vld [vmem:[%s5 + $0x858] sm:$0xff]
  %v11324 = vld [vmem:[%s5 + $0x860] sm:$0xff]
  %v11325 = vld [vmem:[%s5 + $0x868] sm:$0xff]
  %v11326 = vld [vmem:[%s5 + $0x870] sm:$0xff]
  %v11327 = vld [vmem:[%s5 + $0x878] sm:$0xff]
  %v11328 = vld [vmem:[%s5 + $0x880] sm:$0xff]
  %v11329 = vld [vmem:[%s5 + $0x888] sm:$0xff]
  %v11330 = vld [vmem:[%s5 + $0x890] sm:$0xff]
  %v11331 = vld [vmem:[%s5 + $0x898] sm:$0xff]
  %v11332 = vld [vmem:[%s5 + $0x8a0] sm:$0xff]
  %v11333 = vld [vmem:[%s5 + $0x8a8] sm:$0xff]
  %v11334 = vld [vmem:[%s5 + $0x8b0] sm:$0xff]
  %v11335 = vld [vmem:[%s5 + $0x8b8] sm:$0xff]
  %v11336 = vld [vmem:[%s5 + $0x8c0] sm:$0xff]
  %v11337 = vld [vmem:[%s5 + $0x8c8] sm:$0xff]
  %v11338 = vld [vmem:[%s5 + $0x8d0] sm:$0xff]
  %v11339 = vld [vmem:[%s5 + $0x8d8] sm:$0xff]
  %v11340 = vld [vmem:[%s5 + $0x8e0] sm:$0xff]
  %v11341 = vld [vmem:[%s5 + $0x8e8] sm:$0xff]
  %v11342 = vld [vmem:[%s5 + $0x8f0] sm:$0xff]
  %v11343 = vld [vmem:[%s5 + $0x8f8] sm:$0xff]
  %v11344 = vld [vmem:[%s5 + $0x900] sm:$0xff]
  %v11345 = vld [vmem:[%s5 + $0x908] sm:$0xff]
  %v11346 = vld [vmem:[%s5 + $0x910] sm:$0xff]
  %v11347 = vld [vmem:[%s5 + $0x918] sm:$0xff]
  %v11348 = vld [vmem:[%s5 + $0x920] sm:$0xff]
  %v11349 = vld [vmem:[%s5 + $0x928] sm:$0xff]
  %v11350 = vld [vmem:[%s5 + $0x930] sm:$0xff]
  %v11351 = vld [vmem:[%s5 + $0x938] sm:$0xff]
  %v11352 = vld [vmem:[%s5 + $0x940] sm:$0xff]
  %v11353 = vld [vmem:[%s5 + $0x948] sm:$0xff]
  %v11354 = vld [vmem:[%s5 + $0x950] sm:$0xff]
  %v11355 = vld [vmem:[%s5 + $0x958] sm:$0xff]
  %v11356 = vld [vmem:[%s5 + $0x960] sm:$0xff]
  %v11357 = vld [vmem:[%s5 + $0x968] sm:$0xff]
  %v11358 = vld [vmem:[%s5 + $0x970] sm:$0xff]
  %v11359 = vld [vmem:[%s5 + $0x978] sm:$0xff]
  %v11360 = vld [vmem:[%s5 + $0x980] sm:$0xff]
  %v11361 = vld [vmem:[%s5 + $0x988] sm:$0xff]
  %v11362 = vld [vmem:[%s5 + $0x990] sm:$0xff]
  %v11363 = vld [vmem:[%s5 + $0x998] sm:$0xff]
  %v11364 = vld [vmem:[%s5 + $0x9a0] sm:$0xff]
  %v11365 = vld [vmem:[%s5 + $0x9a8] sm:$0xff]
  %v11366 = vld [vmem:[%s5 + $0x9b0] sm:$0xff]
  %v11367 = vld [vmem:[%s5 + $0x9b8] sm:$0xff]
  %v11368 = vld [vmem:[%s5 + $0x9c0] sm:$0xff]
  %v11369 = vld [vmem:[%s5 + $0x9c8] sm:$0xff]
  %v11370 = vld [vmem:[%s5 + $0x9d0] sm:$0xff]
  %v11371 = vld [vmem:[%s5 + $0x9d8] sm:$0xff]
  %v11372 = vld [vmem:[%s5 + $0x9e0] sm:$0xff]
  %v11373 = vld [vmem:[%s5 + $0x9e8] sm:$0xff]
  %v11374 = vld [vmem:[%s5 + $0x9f0] sm:$0xff]
  %v11375 = vld [vmem:[%s5 + $0x9f8] sm:$0xff]
  %v11376 = vld [vmem:[%s5 + $0xa00] sm:$0xff]
  %v11377 = vld [vmem:[%s5 + $0xa08] sm:$0xff]
  %v11378 = vld [vmem:[%s5 + $0xa10] sm:$0xff]
  %v11379 = vld [vmem:[%s5 + $0xa18] sm:$0xff]
  %v11416 = vunpack.c.l.b16 %v11056
  %v11417 = vunpack.c.h.b16 %v11056
  %v11418 = vunpack.c.l.b16 %v11057
  %v11419 = vunpack.c.h.b16 %v11057
  %v11420 = vunpack.c.l.b16 %v11058
  %v11421 = vunpack.c.h.b16 %v11058
  %v11422 = vunpack.c.l.b16 %v11059
  %v11423 = vunpack.c.h.b16 %v11059
  %v11424 = vunpack.c.l.b16 %v11060
  %v11425 = vunpack.c.h.b16 %v11060
  %v11426 = vunpack.c.l.b16 %v11061
  %v11427 = vunpack.c.h.b16 %v11061
  %v11428 = vunpack.c.l.b16 %v11062
  %v11429 = vunpack.c.h.b16 %v11062
  %v11430 = vunpack.c.l.b16 %v11063
  %v11431 = vunpack.c.h.b16 %v11063
  %v11432 = vunpack.c.l.b16 %v11064
  %v11433 = vunpack.c.h.b16 %v11064
  %v11434 = vunpack.c.l.b16 %v11065
  %v11435 = vunpack.c.h.b16 %v11065
  %v11436 = vunpack.c.l.b16 %v11066
  %v11437 = vunpack.c.h.b16 %v11066
  %v11438 = vunpack.c.l.b16 %v11067
  %v11439 = vunpack.c.h.b16 %v11067
  %v11440 = vunpack.c.l.b16 %v11068
  %v11441 = vunpack.c.h.b16 %v11068
  %v11442 = vunpack.c.l.b16 %v11069
  %v11443 = vunpack.c.h.b16 %v11069
  %v11444 = vunpack.c.l.b16 %v11070
  %v11445 = vunpack.c.h.b16 %v11070
  %v11446 = vunpack.c.l.b16 %v11071
  %v11447 = vunpack.c.h.b16 %v11071
  %v11448 = vunpack.c.l.b16 %v11072
  %v11449 = vunpack.c.h.b16 %v11072
  %v11450 = vunpack.c.l.b16 %v11073
  %v11451 = vunpack.c.h.b16 %v11073
  %v11452 = vunpack.c.l.b16 %v11074
  %v11453 = vunpack.c.h.b16 %v11074
  %v11454 = vunpack.c.l.b16 %v11075
  %v11455 = vunpack.c.h.b16 %v11075
  %v11456 = vunpack.c.l.b16 %v11076
  %v11457 = vunpack.c.h.b16 %v11076
  %v11458 = vunpack.c.l.b16 %v11077
  %v11459 = vunpack.c.h.b16 %v11077
  %v11460 = vunpack.c.l.b16 %v11078
  %v11461 = vunpack.c.h.b16 %v11078
  %v11462 = vunpack.c.l.b16 %v11079
  %v11463 = vunpack.c.h.b16 %v11079
  %v11464 = vunpack.c.l.b16 %v11080
  %v11465 = vunpack.c.h.b16 %v11080
  %v11466 = vunpack.c.l.b16 %v11081
  %v11467 = vunpack.c.h.b16 %v11081
  %v11468 = vunpack.c.l.b16 %v11082
  %v11469 = vunpack.c.h.b16 %v11082
  %v11470 = vunpack.c.l.b16 %v11083
  %v11471 = vunpack.c.h.b16 %v11083
  %v11472 = vunpack.c.l.b16 %v11084
  %v11473 = vunpack.c.h.b16 %v11084
  %v11474 = vunpack.c.l.b16 %v11085
  %v11475 = vunpack.c.h.b16 %v11085
  %v11476 = vunpack.c.l.b16 %v11086
  %v11477 = vunpack.c.h.b16 %v11086
  %v11478 = vunpack.c.l.b16 %v11087
  %v11479 = vunpack.c.h.b16 %v11087
  %v11480 = vunpack.c.l.b16 %v11088
  %v11481 = vunpack.c.h.b16 %v11088
  %v11482 = vunpack.c.l.b16 %v11089
  %v11483 = vunpack.c.h.b16 %v11089
  %v11484 = vunpack.c.l.b16 %v11090
  %v11485 = vunpack.c.h.b16 %v11090
  %v11486 = vunpack.c.l.b16 %v11091
  %v11487 = vunpack.c.h.b16 %v11091
  %v11488 = vpack.c.b16 %v11418, %v11416
  %v11489 = vpack.c.b16 %v11419, %v11417
  %v11490 = vpack.c.b16 %v11422, %v11420
  %v11491 = vpack.c.b16 %v11423, %v11421
  %v11492 = vpack.c.b16 %v11426, %v11424
  %v11493 = vpack.c.b16 %v11427, %v11425
  %v11494 = vpack.c.b16 %v11430, %v11428
  %v11495 = vpack.c.b16 %v11431, %v11429
  %v11496 = vpack.c.b16 %v11434, %v11432
  %v11497 = vpack.c.b16 %v11435, %v11433
  %v11498 = vpack.c.b16 %v11438, %v11436
  %v11499 = vpack.c.b16 %v11439, %v11437
  %v11500 = vpack.c.b16 %v11442, %v11440
  %v11501 = vpack.c.b16 %v11443, %v11441
  %v11502 = vpack.c.b16 %v11446, %v11444
  %v11503 = vpack.c.b16 %v11447, %v11445
  %v11504 = vpack.c.b16 %v11450, %v11448
  %v11505 = vpack.c.b16 %v11451, %v11449
  %v11506 = vpack.c.b16 %v11454, %v11452
  %v11507 = vpack.c.b16 %v11455, %v11453
  %v11508 = vpack.c.b16 %v11458, %v11456
  %v11509 = vpack.c.b16 %v11459, %v11457
  %v11510 = vpack.c.b16 %v11462, %v11460
  %v11511 = vpack.c.b16 %v11463, %v11461
  %v11512 = vpack.c.b16 %v11466, %v11464
  %v11513 = vpack.c.b16 %v11467, %v11465
  %v11514 = vpack.c.b16 %v11470, %v11468
  %v11515 = vpack.c.b16 %v11471, %v11469
  %v11516 = vpack.c.b16 %v11474, %v11472
  %v11517 = vpack.c.b16 %v11475, %v11473
  %v11518 = vpack.c.b16 %v11478, %v11476
  %v11519 = vpack.c.b16 %v11479, %v11477
  %v11520 = vpack.c.b16 %v11482, %v11480
  %v11521 = vpack.c.b16 %v11483, %v11481
  %v11522 = vpack.c.b16 %v11486, %v11484
  %v11523 = vpack.c.b16 %v11487, %v11485
  %vm11560 = vcmask 261120
  %v11562 = vsel %vm11560, %v11031, 0
  %11564 = vmatprep.subr.bf16.mxu0 %v11503
  %11565 = vmatpush1.bf16.msra.mxu0 %v11502
  %11566 = vmatprep.subr.bf16.mxu0 %v11501
  %11567 = vmatpush1.bf16.msra.mxu0 %v11500
  %11568 = vmatprep.subr.bf16.mxu0 %v11499
  %11569 = vmatpush1.bf16.msra.mxu0 %v11498
  %11570 = vmatprep.subr.bf16.mxu0 %v11497
  %11571 = vmatpush1.bf16.msra.mxu0 %v11496
  %11572 = vmatprep.subr.bf16.mxu0 %v11495
  %11573 = vmatpush1.bf16.msra.mxu0 %v11494
  %11574 = vmatprep.subr.bf16.mxu0 %v11493
  %11575 = vmatpush1.bf16.msra.mxu0 %v11492
  %11576 = vmatprep.subr.bf16.mxu0 %v11491
  %11577 = vmatpush1.bf16.msra.mxu0 %v11490
  %11578 = vmatprep.subr.bf16.mxu0 %v11489
  %11579 = vmatpush1.bf16.msra.mxu0 %v11488
  %11580 = vmatprep.subr.bf16.mxu0 %v11519
  %11581 = vmatpush2.bf16.msra.mxu0 %v11518
  %11582 = vmatprep.subr.bf16.mxu0 %v11517
  %11583 = vmatpush2.bf16.msra.mxu0 %v11516
  %11584 = vmatprep.subr.bf16.mxu0 %v11515
  %11585 = vmatpush2.bf16.msra.mxu0 %v11514
  %11586 = vmatprep.subr.bf16.mxu0 %v11513
  %11587 = vmatpush2.bf16.msra.mxu0 %v11512
  %11588 = vmatprep.subr.bf16.mxu0 %v11511
  %11589 = vmatpush2.bf16.msra.mxu0 %v11510
  %11590 = vmatprep.subr.bf16.mxu0 %v11509
  %11591 = vmatpush2.bf16.msra.mxu0 %v11508
  %11592 = vmatprep.subr.bf16.mxu0 %v11507
  %11593 = vmatpush2.bf16.msra.mxu0 %v11506
  %11594 = vmatprep.subr.bf16.mxu0 %v11505
  %11595 = vmatpush2.bf16.msra.mxu0 %v11504
  %11596 = vmatprep.mubr.bf16.mxu0 %v11030
  %11597 = vmatmul.mubr.bf16.gmra.mxu0 %v11029
  %v11598 = vpop.f32.mrf.mxu0
  %v11599 = vadd.f32 0.0, %v11598
  %v11600 = vpop.f32.mrf.mxu0
  %v11601 = vadd.f32 0.0, %v11600
  %v11602 = vpop.f32.mrf.mxu0
  %v11603 = vpop.f32.mrf.mxu0
  %11604 = vdwg.mxu0
  %11605 = vmatprep.subr.bf16.mxu0 0
  %11606 = vmatpush1.bf16.msra.mxu0 0
  %11607 = vmatprep.subr.bf16.mxu0 0
  %11608 = vmatpush1.bf16.msra.mxu0 0
  %11609 = vmatprep.subr.bf16.mxu0 0
  %11610 = vmatpush1.bf16.msra.mxu0 0
  %11611 = vmatprep.subr.bf16.mxu0 0
  %11612 = vmatpush1.bf16.msra.mxu0 0
  %11613 = vmatprep.subr.bf16.mxu0 0
  %11614 = vmatpush1.bf16.msra.mxu0 0
  %11615 = vmatprep.subr.bf16.mxu0 0
  %11616 = vmatpush1.bf16.msra.mxu0 0
  %11617 = vmatprep.subr.bf16.mxu0 %v11523
  %11618 = vmatpush1.bf16.msra.mxu0 %v11522
  %11619 = vmatprep.subr.bf16.mxu0 %v11521
  %11620 = vmatpush1.bf16.msra.mxu0 %v11520
  %11621 = vmatprep.subr.bf16.mxu0 0
  %11622 = vmatpush2.bf16.msra.mxu0 0
  %11623 = vmatprep.subr.bf16.mxu0 0
  %11624 = vmatpush2.bf16.msra.mxu0 0
  %11625 = vmatprep.subr.bf16.mxu0 0
  %11626 = vmatpush2.bf16.msra.mxu0 0
  %11627 = vmatprep.subr.bf16.mxu0 0
  %11628 = vmatpush2.bf16.msra.mxu0 0
  %11629 = vmatprep.subr.bf16.mxu0 0
  %11630 = vmatpush2.bf16.msra.mxu0 0
  %11631 = vmatprep.subr.bf16.mxu0 0
  %11632 = vmatpush2.bf16.msra.mxu0 0
  %11633 = vmatprep.subr.bf16.mxu0 0
  %11634 = vmatpush2.bf16.msra.mxu0 0
  %11635 = vmatprep.subr.bf16.mxu0 0
  %11636 = vmatpush2.bf16.msra.mxu0 0
  %11637 = vmatprep.mubr.bf16.mxu0 0
  %11638 = vmatmul.mubr.bf16.gmra.mxu0 %v11562
  %v11639 = vpop.f32.mrf.mxu0
  %v11640 = vadd.f32 %v11599, %v11639
  %v11641 = vpop.f32.mrf.mxu0
  %v11642 = vadd.f32 %v11601, %v11641
  %v11643 = vpop.f32.mrf.mxu0
  %v11644 = vpop.f32.mrf.mxu0
  %11645 = vdwg.mxu0
  %v11682 = vunpack.c.l.b16 %v11092
  %v11683 = vunpack.c.h.b16 %v11092
  %v11684 = vunpack.c.l.b16 %v11093
  %v11685 = vunpack.c.h.b16 %v11093
  %v11686 = vunpack.c.l.b16 %v11094
  %v11687 = vunpack.c.h.b16 %v11094
  %v11688 = vunpack.c.l.b16 %v11095
  %v11689 = vunpack.c.h.b16 %v11095
  %v11690 = vunpack.c.l.b16 %v11096
  %v11691 = vunpack.c.h.b16 %v11096
  %v11692 = vunpack.c.l.b16 %v11097
  %v11693 = vunpack.c.h.b16 %v11097
  %v11694 = vunpack.c.l.b16 %v11098
  %v11695 = vunpack.c.h.b16 %v11098
  %v11696 = vunpack.c.l.b16 %v11099
  %v11697 = vunpack.c.h.b16 %v11099
  %v11698 = vunpack.c.l.b16 %v11100
  %v11699 = vunpack.c.h.b16 %v11100
  %v11700 = vunpack.c.l.b16 %v11101
  %v11701 = vunpack.c.h.b16 %v11101
  %v11702 = vunpack.c.l.b16 %v11102
  %v11703 = vunpack.c.h.b16 %v11102
  %v11704 = vunpack.c.l.b16 %v11103
  %v11705 = vunpack.c.h.b16 %v11103
  %v11706 = vunpack.c.l.b16 %v11104
  %v11707 = vunpack.c.h.b16 %v11104
  %v11708 = vunpack.c.l.b16 %v11105
  %v11709 = vunpack.c.h.b16 %v11105
  %v11710 = vunpack.c.l.b16 %v11106
  %v11711 = vunpack.c.h.b16 %v11106
  %v11712 = vunpack.c.l.b16 %v11107
  %v11713 = vunpack.c.h.b16 %v11107
  %v11714 = vunpack.c.l.b16 %v11108
  %v11715 = vunpack.c.h.b16 %v11108
  %v11716 = vunpack.c.l.b16 %v11109
  %v11717 = vunpack.c.h.b16 %v11109
  %v11718 = vunpack.c.l.b16 %v11110
  %v11719 = vunpack.c.h.b16 %v11110
  %v11720 = vunpack.c.l.b16 %v11111
  %v11721 = vunpack.c.h.b16 %v11111
  %v11722 = vunpack.c.l.b16 %v11112
  %v11723 = vunpack.c.h.b16 %v11112
  %v11724 = vunpack.c.l.b16 %v11113
  %v11725 = vunpack.c.h.b16 %v11113
  %v11726 = vunpack.c.l.b16 %v11114
  %v11727 = vunpack.c.h.b16 %v11114
  %v11728 = vunpack.c.l.b16 %v11115
  %v11729 = vunpack.c.h.b16 %v11115
  %v11730 = vunpack.c.l.b16 %v11116
  %v11731 = vunpack.c.h.b16 %v11116
  %v11732 = vunpack.c.l.b16 %v11117
  %v11733 = vunpack.c.h.b16 %v11117
  %v11734 = vunpack.c.l.b16 %v11118
  %v11735 = vunpack.c.h.b16 %v11118
  %v11736 = vunpack.c.l.b16 %v11119
  %v11737 = vunpack.c.h.b16 %v11119
  %v11738 = vunpack.c.l.b16 %v11120
  %v11739 = vunpack.c.h.b16 %v11120
  %v11740 = vunpack.c.l.b16 %v11121
  %v11741 = vunpack.c.h.b16 %v11121
  %v11742 = vunpack.c.l.b16 %v11122
  %v11743 = vunpack.c.h.b16 %v11122
  %v11744 = vunpack.c.l.b16 %v11123
  %v11745 = vunpack.c.h.b16 %v11123
  %v11746 = vunpack.c.l.b16 %v11124
  %v11747 = vunpack.c.h.b16 %v11124
  %v11748 = vunpack.c.l.b16 %v11125
  %v11749 = vunpack.c.h.b16 %v11125
  %v11750 = vunpack.c.l.b16 %v11126
  %v11751 = vunpack.c.h.b16 %v11126
  %v11752 = vunpack.c.l.b16 %v11127
  %v11753 = vunpack.c.h.b16 %v11127
  %v11754 = vpack.c.b16 %v11684, %v11682
  %v11755 = vpack.c.b16 %v11685, %v11683
  %v11756 = vpack.c.b16 %v11688, %v11686
  %v11757 = vpack.c.b16 %v11689, %v11687
  %v11758 = vpack.c.b16 %v11692, %v11690
  %v11759 = vpack.c.b16 %v11693, %v11691
  %v11760 = vpack.c.b16 %v11696, %v11694
  %v11761 = vpack.c.b16 %v11697, %v11695
  %v11762 = vpack.c.b16 %v11700, %v11698
  %v11763 = vpack.c.b16 %v11701, %v11699
  %v11764 = vpack.c.b16 %v11704, %v11702
  %v11765 = vpack.c.b16 %v11705, %v11703
  %v11766 = vpack.c.b16 %v11708, %v11706
  %v11767 = vpack.c.b16 %v11709, %v11707
  %v11768 = vpack.c.b16 %v11712, %v11710
  %v11769 = vpack.c.b16 %v11713, %v11711
  %v11770 = vpack.c.b16 %v11716, %v11714
  %v11771 = vpack.c.b16 %v11717, %v11715
  %v11772 = vpack.c.b16 %v11720, %v11718
  %v11773 = vpack.c.b16 %v11721, %v11719
  %v11774 = vpack.c.b16 %v11724, %v11722
  %v11775 = vpack.c.b16 %v11725, %v11723
  %v11776 = vpack.c.b16 %v11728, %v11726
  %v11777 = vpack.c.b16 %v11729, %v11727
  %v11778 = vpack.c.b16 %v11732, %v11730
  %v11779 = vpack.c.b16 %v11733, %v11731
  %v11780 = vpack.c.b16 %v11736, %v11734
  %v11781 = vpack.c.b16 %v11737, %v11735
  %v11782 = vpack.c.b16 %v11740, %v11738
  %v11783 = vpack.c.b16 %v11741, %v11739
  %v11784 = vpack.c.b16 %v11744, %v11742
  %v11785 = vpack.c.b16 %v11745, %v11743
  %v11786 = vpack.c.b16 %v11748, %v11746
  %v11787 = vpack.c.b16 %v11749, %v11747
  %v11788 = vpack.c.b16 %v11752, %v11750
  %v11789 = vpack.c.b16 %v11753, %v11751
  %v11827 = vsel %vm11560, %v11034, 0
  %11829 = vmatprep.subr.bf16.mxu0 %v11769
  %11830 = vmatpush1.bf16.msra.mxu0 %v11768
  %11831 = vmatprep.subr.bf16.mxu0 %v11767
  %11832 = vmatpush1.bf16.msra.mxu0 %v11766
  %11833 = vmatprep.subr.bf16.mxu0 %v11765
  %11834 = vmatpush1.bf16.msra.mxu0 %v11764
  %11835 = vmatprep.subr.bf16.mxu0 %v11763
  %11836 = vmatpush1.bf16.msra.mxu0 %v11762
  %11837 = vmatprep.subr.bf16.mxu0 %v11761
  %11838 = vmatpush1.bf16.msra.mxu0 %v11760
  %11839 = vmatprep.subr.bf16.mxu0 %v11759
  %11840 = vmatpush1.bf16.msra.mxu0 %v11758
  %11841 = vmatprep.subr.bf16.mxu0 %v11757
  %11842 = vmatpush1.bf16.msra.mxu0 %v11756
  %11843 = vmatprep.subr.bf16.mxu0 %v11755
  %11844 = vmatpush1.bf16.msra.mxu0 %v11754
  %11845 = vmatprep.subr.bf16.mxu0 %v11785
  %11846 = vmatpush2.bf16.msra.mxu0 %v11784
  %11847 = vmatprep.subr.bf16.mxu0 %v11783
  %11848 = vmatpush2.bf16.msra.mxu0 %v11782
  %11849 = vmatprep.subr.bf16.mxu0 %v11781
  %11850 = vmatpush2.bf16.msra.mxu0 %v11780
  %11851 = vmatprep.subr.bf16.mxu0 %v11779
  %11852 = vmatpush2.bf16.msra.mxu0 %v11778
  %11853 = vmatprep.subr.bf16.mxu0 %v11777
  %11854 = vmatpush2.bf16.msra.mxu0 %v11776
  %11855 = vmatprep.subr.bf16.mxu0 %v11775
  %11856 = vmatpush2.bf16.msra.mxu0 %v11774
  %11857 = vmatprep.subr.bf16.mxu0 %v11773
  %11858 = vmatpush2.bf16.msra.mxu0 %v11772
  %11859 = vmatprep.subr.bf16.mxu0 %v11771
  %11860 = vmatpush2.bf16.msra.mxu0 %v11770
  %11861 = vmatprep.mubr.bf16.mxu0 %v11033
  %11862 = vmatmul.mubr.bf16.gmra.mxu0 %v11032
  %v11863 = vpop.f32.mrf.mxu0
  %v11864 = vadd.f32 0.0, %v11863
  %v11865 = vpop.f32.mrf.mxu0
  %v11866 = vadd.f32 0.0, %v11865
  %v11867 = vpop.f32.mrf.mxu0
  %v11868 = vpop.f32.mrf.mxu0
  %11869 = vdwg.mxu0
  %11870 = vmatprep.subr.bf16.mxu0 0
  %11871 = vmatpush1.bf16.msra.mxu0 0
  %11872 = vmatprep.subr.bf16.mxu0 0
  %11873 = vmatpush1.bf16.msra.mxu0 0
  %11874 = vmatprep.subr.bf16.mxu0 0
  %11875 = vmatpush1.bf16.msra.mxu0 0
  %11876 = vmatprep.subr.bf16.mxu0 0
  %11877 = vmatpush1.bf16.msra.mxu0 0
  %11878 = vmatprep.subr.bf16.mxu0 0
  %11879 = vmatpush1.bf16.msra.mxu0 0
  %11880 = vmatprep.subr.bf16.mxu0 0
  %11881 = vmatpush1.bf16.msra.mxu0 0
  %11882 = vmatprep.subr.bf16.mxu0 %v11789
  %11883 = vmatpush1.bf16.msra.mxu0 %v11788
  %11884 = vmatprep.subr.bf16.mxu0 %v11787
  %11885 = vmatpush1.bf16.msra.mxu0 %v11786
  %11886 = vmatprep.subr.bf16.mxu0 0
  %11887 = vmatpush2.bf16.msra.mxu0 0
  %11888 = vmatprep.subr.bf16.mxu0 0
  %11889 = vmatpush2.bf16.msra.mxu0 0
  %11890 = vmatprep.subr.bf16.mxu0 0
  %11891 = vmatpush2.bf16.msra.mxu0 0
  %11892 = vmatprep.subr.bf16.mxu0 0
  %11893 = vmatpush2.bf16.msra.mxu0 0
  %11894 = vmatprep.subr.bf16.mxu0 0
  %11895 = vmatpush2.bf16.msra.mxu0 0
  %11896 = vmatprep.subr.bf16.mxu0 0
  %11897 = vmatpush2.bf16.msra.mxu0 0
  %11898 = vmatprep.subr.bf16.mxu0 0
  %11899 = vmatpush2.bf16.msra.mxu0 0
  %11900 = vmatprep.subr.bf16.mxu0 0
  %11901 = vmatpush2.bf16.msra.mxu0 0
  %11902 = vmatprep.mubr.bf16.mxu0 0
  %11903 = vmatmul.mubr.bf16.gmra.mxu0 %v11827
  %v11904 = vpop.f32.mrf.mxu0
  %v11905 = vadd.f32 %v11864, %v11904
  %v11906 = vpop.f32.mrf.mxu0
  %v11907 = vadd.f32 %v11866, %v11906
  %v11908 = vpop.f32.mrf.mxu0
  %v11909 = vpop.f32.mrf.mxu0
  %11910 = vdwg.mxu0
  %v11947 = vunpack.c.l.b16 %v11128
  %v11948 = vunpack.c.h.b16 %v11128
  %v11949 = vunpack.c.l.b16 %v11129
  %v11950 = vunpack.c.h.b16 %v11129
  %v11951 = vunpack.c.l.b16 %v11130
  %v11952 = vunpack.c.h.b16 %v11130
  %v11953 = vunpack.c.l.b16 %v11131
  %v11954 = vunpack.c.h.b16 %v11131
  %v11955 = vunpack.c.l.b16 %v11132
  %v11956 = vunpack.c.h.b16 %v11132
  %v11957 = vunpack.c.l.b16 %v11133
  %v11958 = vunpack.c.h.b16 %v11133
  %v11959 = vunpack.c.l.b16 %v11134
  %v11960 = vunpack.c.h.b16 %v11134
  %v11961 = vunpack.c.l.b16 %v11135
  %v11962 = vunpack.c.h.b16 %v11135
  %v11963 = vunpack.c.l.b16 %v11136
  %v11964 = vunpack.c.h.b16 %v11136
  %v11965 = vunpack.c.l.b16 %v11137
  %v11966 = vunpack.c.h.b16 %v11137
  %v11967 = vunpack.c.l.b16 %v11138
  %v11968 = vunpack.c.h.b16 %v11138
  %v11969 = vunpack.c.l.b16 %v11139
  %v11970 = vunpack.c.h.b16 %v11139
  %v11971 = vunpack.c.l.b16 %v11140
  %v11972 = vunpack.c.h.b16 %v11140
  %v11973 = vunpack.c.l.b16 %v11141
  %v11974 = vunpack.c.h.b16 %v11141
  %v11975 = vunpack.c.l.b16 %v11142
  %v11976 = vunpack.c.h.b16 %v11142
  %v11977 = vunpack.c.l.b16 %v11143
  %v11978 = vunpack.c.h.b16 %v11143
  %v11979 = vunpack.c.l.b16 %v11144
  %v11980 = vunpack.c.h.b16 %v11144
  %v11981 = vunpack.c.l.b16 %v11145
  %v11982 = vunpack.c.h.b16 %v11145
  %v11983 = vunpack.c.l.b16 %v11146
  %v11984 = vunpack.c.h.b16 %v11146
  %v11985 = vunpack.c.l.b16 %v11147
  %v11986 = vunpack.c.h.b16 %v11147
  %v11987 = vunpack.c.l.b16 %v11148
  %v11988 = vunpack.c.h.b16 %v11148
  %v11989 = vunpack.c.l.b16 %v11149
  %v11990 = vunpack.c.h.b16 %v11149
  %v11991 = vunpack.c.l.b16 %v11150
  %v11992 = vunpack.c.h.b16 %v11150
  %v11993 = vunpack.c.l.b16 %v11151
  %v11994 = vunpack.c.h.b16 %v11151
  %v11995 = vunpack.c.l.b16 %v11152
  %v11996 = vunpack.c.h.b16 %v11152
  %v11997 = vunpack.c.l.b16 %v11153
  %v11998 = vunpack.c.h.b16 %v11153
  %v11999 = vunpack.c.l.b16 %v11154
  %v12000 = vunpack.c.h.b16 %v11154
  %v12001 = vunpack.c.l.b16 %v11155
  %v12002 = vunpack.c.h.b16 %v11155
  %v12003 = vunpack.c.l.b16 %v11156
  %v12004 = vunpack.c.h.b16 %v11156
  %v12005 = vunpack.c.l.b16 %v11157
  %v12006 = vunpack.c.h.b16 %v11157
  %v12007 = vunpack.c.l.b16 %v11158
  %v12008 = vunpack.c.h.b16 %v11158
  %v12009 = vunpack.c.l.b16 %v11159
  %v12010 = vunpack.c.h.b16 %v11159
  %v12011 = vunpack.c.l.b16 %v11160
  %v12012 = vunpack.c.h.b16 %v11160
  %v12013 = vunpack.c.l.b16 %v11161
  %v12014 = vunpack.c.h.b16 %v11161
  %v12015 = vunpack.c.l.b16 %v11162
  %v12016 = vunpack.c.h.b16 %v11162
  %v12017 = vunpack.c.l.b16 %v11163
  %v12018 = vunpack.c.h.b16 %v11163
  %v12019 = vpack.c.b16 %v11949, %v11947
  %v12020 = vpack.c.b16 %v11950, %v11948
  %v12021 = vpack.c.b16 %v11953, %v11951
  %v12022 = vpack.c.b16 %v11954, %v11952
  %v12023 = vpack.c.b16 %v11957, %v11955
  %v12024 = vpack.c.b16 %v11958, %v11956
  %v12025 = vpack.c.b16 %v11961, %v11959
  %v12026 = vpack.c.b16 %v11962, %v11960
  %v12027 = vpack.c.b16 %v11965, %v11963
  %v12028 = vpack.c.b16 %v11966, %v11964
  %v12029 = vpack.c.b16 %v11969, %v11967
  %v12030 = vpack.c.b16 %v11970, %v11968
  %v12031 = vpack.c.b16 %v11973, %v11971
  %v12032 = vpack.c.b16 %v11974, %v11972
  %v12033 = vpack.c.b16 %v11977, %v11975
  %v12034 = vpack.c.b16 %v11978, %v11976
  %v12035 = vpack.c.b16 %v11981, %v11979
  %v12036 = vpack.c.b16 %v11982, %v11980
  %v12037 = vpack.c.b16 %v11985, %v11983
  %v12038 = vpack.c.b16 %v11986, %v11984
  %v12039 = vpack.c.b16 %v11989, %v11987
  %v12040 = vpack.c.b16 %v11990, %v11988
  %v12041 = vpack.c.b16 %v11993, %v11991
  %v12042 = vpack.c.b16 %v11994, %v11992
  %v12043 = vpack.c.b16 %v11997, %v11995
  %v12044 = vpack.c.b16 %v11998, %v11996
  %v12045 = vpack.c.b16 %v12001, %v11999
  %v12046 = vpack.c.b16 %v12002, %v12000
  %v12047 = vpack.c.b16 %v12005, %v12003
  %v12048 = vpack.c.b16 %v12006, %v12004
  %v12049 = vpack.c.b16 %v12009, %v12007
  %v12050 = vpack.c.b16 %v12010, %v12008
  %v12051 = vpack.c.b16 %v12013, %v12011
  %v12052 = vpack.c.b16 %v12014, %v12012
  %v12053 = vpack.c.b16 %v12017, %v12015
  %v12054 = vpack.c.b16 %v12018, %v12016
  %v12092 = vsel %vm11560, %v11037, 0
  %12094 = vmatprep.subr.bf16.mxu0 %v12034
  %12095 = vmatpush1.bf16.msra.mxu0 %v12033
  %12096 = vmatprep.subr.bf16.mxu0 %v12032
  %12097 = vmatpush1.bf16.msra.mxu0 %v12031
  %12098 = vmatprep.subr.bf16.mxu0 %v12030
  %12099 = vmatpush1.bf16.msra.mxu0 %v12029
  %12100 = vmatprep.subr.bf16.mxu0 %v12028
  %12101 = vmatpush1.bf16.msra.mxu0 %v12027
  %12102 = vmatprep.subr.bf16.mxu0 %v12026
  %12103 = vmatpush1.bf16.msra.mxu0 %v12025
  %12104 = vmatprep.subr.bf16.mxu0 %v12024
  %12105 = vmatpush1.bf16.msra.mxu0 %v12023
  %12106 = vmatprep.subr.bf16.mxu0 %v12022
  %12107 = vmatpush1.bf16.msra.mxu0 %v12021
  %12108 = vmatprep.subr.bf16.mxu0 %v12020
  %12109 = vmatpush1.bf16.msra.mxu0 %v12019
  %12110 = vmatprep.subr.bf16.mxu0 %v12050
  %12111 = vmatpush2.bf16.msra.mxu0 %v12049
  %12112 = vmatprep.subr.bf16.mxu0 %v12048
  %12113 = vmatpush2.bf16.msra.mxu0 %v12047
  %12114 = vmatprep.subr.bf16.mxu0 %v12046
  %12115 = vmatpush2.bf16.msra.mxu0 %v12045
  %12116 = vmatprep.subr.bf16.mxu0 %v12044
  %12117 = vmatpush2.bf16.msra.mxu0 %v12043
  %12118 = vmatprep.subr.bf16.mxu0 %v12042
  %12119 = vmatpush2.bf16.msra.mxu0 %v12041
  %12120 = vmatprep.subr.bf16.mxu0 %v12040
  %12121 = vmatpush2.bf16.msra.mxu0 %v12039
  %12122 = vmatprep.subr.bf16.mxu0 %v12038
  %12123 = vmatpush2.bf16.msra.mxu0 %v12037
  %12124 = vmatprep.subr.bf16.mxu0 %v12036
  %12125 = vmatpush2.bf16.msra.mxu0 %v12035
  %12126 = vmatprep.mubr.bf16.mxu0 %v11036
  %12127 = vmatmul.mubr.bf16.gmra.mxu0 %v11035
  %v12128 = vpop.f32.mrf.mxu0
  %v12129 = vadd.f32 0.0, %v12128
  %v12130 = vpop.f32.mrf.mxu0
  %v12131 = vadd.f32 0.0, %v12130
  %v12132 = vpop.f32.mrf.mxu0
  %v12133 = vpop.f32.mrf.mxu0
  %12134 = vdwg.mxu0
  %12135 = vmatprep.subr.bf16.mxu0 0
  %12136 = vmatpush1.bf16.msra.mxu0 0
  %12137 = vmatprep.subr.bf16.mxu0 0
  %12138 = vmatpush1.bf16.msra.mxu0 0
  %12139 = vmatprep.subr.bf16.mxu0 0
  %12140 = vmatpush1.bf16.msra.mxu0 0
  %12141 = vmatprep.subr.bf16.mxu0 0
  %12142 = vmatpush1.bf16.msra.mxu0 0
  %12143 = vmatprep.subr.bf16.mxu0 0
  %12144 = vmatpush1.bf16.msra.mxu0 0
  %12145 = vmatprep.subr.bf16.mxu0 0
  %12146 = vmatpush1.bf16.msra.mxu0 0
  %12147 = vmatprep.subr.bf16.mxu0 %v12054
  %12148 = vmatpush1.bf16.msra.mxu0 %v12053
  %12149 = vmatprep.subr.bf16.mxu0 %v12052
  %12150 = vmatpush1.bf16.msra.mxu0 %v12051
  %12151 = vmatprep.subr.bf16.mxu0 0
  %12152 = vmatpush2.bf16.msra.mxu0 0
  %12153 = vmatprep.subr.bf16.mxu0 0
  %12154 = vmatpush2.bf16.msra.mxu0 0
  %12155 = vmatprep.subr.bf16.mxu0 0
  %12156 = vmatpush2.bf16.msra.mxu0 0
  %12157 = vmatprep.subr.bf16.mxu0 0
  %12158 = vmatpush2.bf16.msra.mxu0 0
  %12159 = vmatprep.subr.bf16.mxu0 0
  %12160 = vmatpush2.bf16.msra.mxu0 0
  %12161 = vmatprep.subr.bf16.mxu0 0
  %12162 = vmatpush2.bf16.msra.mxu0 0
  %12163 = vmatprep.subr.bf16.mxu0 0
  %12164 = vmatpush2.bf16.msra.mxu0 0
  %12165 = vmatprep.subr.bf16.mxu0 0
  %12166 = vmatpush2.bf16.msra.mxu0 0
  %12167 = vmatprep.mubr.bf16.mxu0 0
  %12168 = vmatmul.mubr.bf16.gmra.mxu0 %v12092
  %v12169 = vpop.f32.mrf.mxu0
  %v12170 = vadd.f32 %v12129, %v12169
  %v12171 = vpop.f32.mrf.mxu0
  %v12172 = vadd.f32 %v12131, %v12171
  %v12173 = vpop.f32.mrf.mxu0
  %v12174 = vpop.f32.mrf.mxu0
  %12175 = vdwg.mxu0
  %v12212 = vunpack.c.l.b16 %v11164
  %v12213 = vunpack.c.h.b16 %v11164
  %v12214 = vunpack.c.l.b16 %v11165
  %v12215 = vunpack.c.h.b16 %v11165
  %v12216 = vunpack.c.l.b16 %v11166
  %v12217 = vunpack.c.h.b16 %v11166
  %v12218 = vunpack.c.l.b16 %v11167
  %v12219 = vunpack.c.h.b16 %v11167
  %v12220 = vunpack.c.l.b16 %v11168
  %v12221 = vunpack.c.h.b16 %v11168
  %v12222 = vunpack.c.l.b16 %v11169
  %v12223 = vunpack.c.h.b16 %v11169
  %v12224 = vunpack.c.l.b16 %v11170
  %v12225 = vunpack.c.h.b16 %v11170
  %v12226 = vunpack.c.l.b16 %v11171
  %v12227 = vunpack.c.h.b16 %v11171
  %v12228 = vunpack.c.l.b16 %v11172
  %v12229 = vunpack.c.h.b16 %v11172
  %v12230 = vunpack.c.l.b16 %v11173
  %v12231 = vunpack.c.h.b16 %v11173
  %v12232 = vunpack.c.l.b16 %v11174
  %v12233 = vunpack.c.h.b16 %v11174
  %v12234 = vunpack.c.l.b16 %v11175
  %v12235 = vunpack.c.h.b16 %v11175
  %v12236 = vunpack.c.l.b16 %v11176
  %v12237 = vunpack.c.h.b16 %v11176
  %v12238 = vunpack.c.l.b16 %v11177
  %v12239 = vunpack.c.h.b16 %v11177
  %v12240 = vunpack.c.l.b16 %v11178
  %v12241 = vunpack.c.h.b16 %v11178
  %v12242 = vunpack.c.l.b16 %v11179
  %v12243 = vunpack.c.h.b16 %v11179
  %v12244 = vunpack.c.l.b16 %v11180
  %v12245 = vunpack.c.h.b16 %v11180
  %v12246 = vunpack.c.l.b16 %v11181
  %v12247 = vunpack.c.h.b16 %v11181
  %v12248 = vunpack.c.l.b16 %v11182
  %v12249 = vunpack.c.h.b16 %v11182
  %v12250 = vunpack.c.l.b16 %v11183
  %v12251 = vunpack.c.h.b16 %v11183
  %v12252 = vunpack.c.l.b16 %v11184
  %v12253 = vunpack.c.h.b16 %v11184
  %v12254 = vunpack.c.l.b16 %v11185
  %v12255 = vunpack.c.h.b16 %v11185
  %v12256 = vunpack.c.l.b16 %v11186
  %v12257 = vunpack.c.h.b16 %v11186
  %v12258 = vunpack.c.l.b16 %v11187
  %v12259 = vunpack.c.h.b16 %v11187
  %v12260 = vunpack.c.l.b16 %v11188
  %v12261 = vunpack.c.h.b16 %v11188
  %v12262 = vunpack.c.l.b16 %v11189
  %v12263 = vunpack.c.h.b16 %v11189
  %v12264 = vunpack.c.l.b16 %v11190
  %v12265 = vunpack.c.h.b16 %v11190
  %v12266 = vunpack.c.l.b16 %v11191
  %v12267 = vunpack.c.h.b16 %v11191
  %v12268 = vunpack.c.l.b16 %v11192
  %v12269 = vunpack.c.h.b16 %v11192
  %v12270 = vunpack.c.l.b16 %v11193
  %v12271 = vunpack.c.h.b16 %v11193
  %v12272 = vunpack.c.l.b16 %v11194
  %v12273 = vunpack.c.h.b16 %v11194
  %v12274 = vunpack.c.l.b16 %v11195
  %v12275 = vunpack.c.h.b16 %v11195
  %v12276 = vunpack.c.l.b16 %v11196
  %v12277 = vunpack.c.h.b16 %v11196
  %v12278 = vunpack.c.l.b16 %v11197
  %v12279 = vunpack.c.h.b16 %v11197
  %v12280 = vunpack.c.l.b16 %v11198
  %v12281 = vunpack.c.h.b16 %v11198
  %v12282 = vunpack.c.l.b16 %v11199
  %v12283 = vunpack.c.h.b16 %v11199
  %v12284 = vpack.c.b16 %v12214, %v12212
  %v12285 = vpack.c.b16 %v12215, %v12213
  %v12286 = vpack.c.b16 %v12218, %v12216
  %v12287 = vpack.c.b16 %v12219, %v12217
  %v12288 = vpack.c.b16 %v12222, %v12220
  %v12289 = vpack.c.b16 %v12223, %v12221
  %v12290 = vpack.c.b16 %v12226, %v12224
  %v12291 = vpack.c.b16 %v12227, %v12225
  %v12292 = vpack.c.b16 %v12230, %v12228
  %v12293 = vpack.c.b16 %v12231, %v12229
  %v12294 = vpack.c.b16 %v12234, %v12232
  %v12295 = vpack.c.b16 %v12235, %v12233
  %v12296 = vpack.c.b16 %v12238, %v12236
  %v12297 = vpack.c.b16 %v12239, %v12237
  %v12298 = vpack.c.b16 %v12242, %v12240
  %v12299 = vpack.c.b16 %v12243, %v12241
  %v12300 = vpack.c.b16 %v12246, %v12244
  %v12301 = vpack.c.b16 %v12247, %v12245
  %v12302 = vpack.c.b16 %v12250, %v12248
  %v12303 = vpack.c.b16 %v12251, %v12249
  %v12304 = vpack.c.b16 %v12254, %v12252
  %v12305 = vpack.c.b16 %v12255, %v12253
  %v12306 = vpack.c.b16 %v12258, %v12256
  %v12307 = vpack.c.b16 %v12259, %v12257
  %v12308 = vpack.c.b16 %v12262, %v12260
  %v12309 = vpack.c.b16 %v12263, %v12261
  %v12310 = vpack.c.b16 %v12266, %v12264
  %v12311 = vpack.c.b16 %v12267, %v12265
  %v12312 = vpack.c.b16 %v12270, %v12268
  %v12313 = vpack.c.b16 %v12271, %v12269
  %v12314 = vpack.c.b16 %v12274, %v12272
  %v12315 = vpack.c.b16 %v12275, %v12273
  %v12316 = vpack.c.b16 %v12278, %v12276
  %v12317 = vpack.c.b16 %v12279, %v12277
  %v12318 = vpack.c.b16 %v12282, %v12280
  %v12319 = vpack.c.b16 %v12283, %v12281
  %v12357 = vsel %vm11560, %v11040, 0
  %12359 = vmatprep.subr.bf16.mxu0 %v12299
  %12360 = vmatpush1.bf16.msra.mxu0 %v12298
  %12361 = vmatprep.subr.bf16.mxu0 %v12297
  %12362 = vmatpush1.bf16.msra.mxu0 %v12296
  %12363 = vmatprep.subr.bf16.mxu0 %v12295
  %12364 = vmatpush1.bf16.msra.mxu0 %v12294
  %12365 = vmatprep.subr.bf16.mxu0 %v12293
  %12366 = vmatpush1.bf16.msra.mxu0 %v12292
  %12367 = vmatprep.subr.bf16.mxu0 %v12291
  %12368 = vmatpush1.bf16.msra.mxu0 %v12290
  %12369 = vmatprep.subr.bf16.mxu0 %v12289
  %12370 = vmatpush1.bf16.msra.mxu0 %v12288
  %12371 = vmatprep.subr.bf16.mxu0 %v12287
  %12372 = vmatpush1.bf16.msra.mxu0 %v12286
  %12373 = vmatprep.subr.bf16.mxu0 %v12285
  %12374 = vmatpush1.bf16.msra.mxu0 %v12284
  %12375 = vmatprep.subr.bf16.mxu0 %v12315
  %12376 = vmatpush2.bf16.msra.mxu0 %v12314
  %12377 = vmatprep.subr.bf16.mxu0 %v12313
  %12378 = vmatpush2.bf16.msra.mxu0 %v12312
  %12379 = vmatprep.subr.bf16.mxu0 %v12311
  %12380 = vmatpush2.bf16.msra.mxu0 %v12310
  %12381 = vmatprep.subr.bf16.mxu0 %v12309
  %12382 = vmatpush2.bf16.msra.mxu0 %v12308
  %12383 = vmatprep.subr.bf16.mxu0 %v12307
  %12384 = vmatpush2.bf16.msra.mxu0 %v12306
  %12385 = vmatprep.subr.bf16.mxu0 %v12305
  %12386 = vmatpush2.bf16.msra.mxu0 %v12304
  %12387 = vmatprep.subr.bf16.mxu0 %v12303
  %12388 = vmatpush2.bf16.msra.mxu0 %v12302
  %12389 = vmatprep.subr.bf16.mxu0 %v12301
  %12390 = vmatpush2.bf16.msra.mxu0 %v12300
  %12391 = vmatprep.mubr.bf16.mxu0 %v11039
  %12392 = vmatmul.mubr.bf16.gmra.mxu0 %v11038
  %v12393 = vpop.f32.mrf.mxu0
  %v12394 = vadd.f32 0.0, %v12393
  %v12395 = vpop.f32.mrf.mxu0
  %v12396 = vadd.f32 0.0, %v12395
  %v12397 = vpop.f32.mrf.mxu0
  %v12398 = vpop.f32.mrf.mxu0
  %12399 = vdwg.mxu0
  %12400 = vmatprep.subr.bf16.mxu0 0
  %12401 = vmatpush1.bf16.msra.mxu0 0
  %12402 = vmatprep.subr.bf16.mxu0 0
  %12403 = vmatpush1.bf16.msra.mxu0 0
  %12404 = vmatprep.subr.bf16.mxu0 0
  %12405 = vmatpush1.bf16.msra.mxu0 0
  %12406 = vmatprep.subr.bf16.mxu0 0
  %12407 = vmatpush1.bf16.msra.mxu0 0
  %12408 = vmatprep.subr.bf16.mxu0 0
  %12409 = vmatpush1.bf16.msra.mxu0 0
  %12410 = vmatprep.subr.bf16.mxu0 0
  %12411 = vmatpush1.bf16.msra.mxu0 0
  %12412 = vmatprep.subr.bf16.mxu0 %v12319
  %12413 = vmatpush1.bf16.msra.mxu0 %v12318
  %12414 = vmatprep.subr.bf16.mxu0 %v12317
  %12415 = vmatpush1.bf16.msra.mxu0 %v12316
  %12416 = vmatprep.subr.bf16.mxu0 0
  %12417 = vmatpush2.bf16.msra.mxu0 0
  %12418 = vmatprep.subr.bf16.mxu0 0
  %12419 = vmatpush2.bf16.msra.mxu0 0
  %12420 = vmatprep.subr.bf16.mxu0 0
  %12421 = vmatpush2.bf16.msra.mxu0 0
  %12422 = vmatprep.subr.bf16.mxu0 0
  %12423 = vmatpush2.bf16.msra.mxu0 0
  %12424 = vmatprep.subr.bf16.mxu0 0
  %12425 = vmatpush2.bf16.msra.mxu0 0
  %12426 = vmatprep.subr.bf16.mxu0 0
  %12427 = vmatpush2.bf16.msra.mxu0 0
  %12428 = vmatprep.subr.bf16.mxu0 0
  %12429 = vmatpush2.bf16.msra.mxu0 0
  %12430 = vmatprep.subr.bf16.mxu0 0
  %12431 = vmatpush2.bf16.msra.mxu0 0
  %12432 = vmatprep.mubr.bf16.mxu0 0
  %12433 = vmatmul.mubr.bf16.gmra.mxu0 %v12357
  %v12434 = vpop.f32.mrf.mxu0
  %v12435 = vadd.f32 %v12394, %v12434
  %v12436 = vpop.f32.mrf.mxu0
  %v12437 = vadd.f32 %v12396, %v12436
  %v12438 = vpop.f32.mrf.mxu0
  %v12439 = vpop.f32.mrf.mxu0
  %12440 = vdwg.mxu0
  %v12477 = vunpack.c.l.b16 %v11200
  %v12478 = vunpack.c.h.b16 %v11200
  %v12479 = vunpack.c.l.b16 %v11201
  %v12480 = vunpack.c.h.b16 %v11201
  %v12481 = vunpack.c.l.b16 %v11202
  %v12482 = vunpack.c.h.b16 %v11202
  %v12483 = vunpack.c.l.b16 %v11203
  %v12484 = vunpack.c.h.b16 %v11203
  %v12485 = vunpack.c.l.b16 %v11204
  %v12486 = vunpack.c.h.b16 %v11204
  %v12487 = vunpack.c.l.b16 %v11205
  %v12488 = vunpack.c.h.b16 %v11205
  %v12489 = vunpack.c.l.b16 %v11206
  %v12490 = vunpack.c.h.b16 %v11206
  %v12491 = vunpack.c.l.b16 %v11207
  %v12492 = vunpack.c.h.b16 %v11207
  %v12493 = vunpack.c.l.b16 %v11208
  %v12494 = vunpack.c.h.b16 %v11208
  %v12495 = vunpack.c.l.b16 %v11209
  %v12496 = vunpack.c.h.b16 %v11209
  %v12497 = vunpack.c.l.b16 %v11210
  %v12498 = vunpack.c.h.b16 %v11210
  %v12499 = vunpack.c.l.b16 %v11211
  %v12500 = vunpack.c.h.b16 %v11211
  %v12501 = vunpack.c.l.b16 %v11212
  %v12502 = vunpack.c.h.b16 %v11212
  %v12503 = vunpack.c.l.b16 %v11213
  %v12504 = vunpack.c.h.b16 %v11213
  %v12505 = vunpack.c.l.b16 %v11214
  %v12506 = vunpack.c.h.b16 %v11214
  %v12507 = vunpack.c.l.b16 %v11215
  %v12508 = vunpack.c.h.b16 %v11215
  %v12509 = vunpack.c.l.b16 %v11216
  %v12510 = vunpack.c.h.b16 %v11216
  %v12511 = vunpack.c.l.b16 %v11217
  %v12512 = vunpack.c.h.b16 %v11217
  %v12513 = vunpack.c.l.b16 %v11218
  %v12514 = vunpack.c.h.b16 %v11218
  %v12515 = vunpack.c.l.b16 %v11219
  %v12516 = vunpack.c.h.b16 %v11219
  %v12517 = vunpack.c.l.b16 %v11220
  %v12518 = vunpack.c.h.b16 %v11220
  %v12519 = vunpack.c.l.b16 %v11221
  %v12520 = vunpack.c.h.b16 %v11221
  %v12521 = vunpack.c.l.b16 %v11222
  %v12522 = vunpack.c.h.b16 %v11222
  %v12523 = vunpack.c.l.b16 %v11223
  %v12524 = vunpack.c.h.b16 %v11223
  %v12525 = vunpack.c.l.b16 %v11224
  %v12526 = vunpack.c.h.b16 %v11224
  %v12527 = vunpack.c.l.b16 %v11225
  %v12528 = vunpack.c.h.b16 %v11225
  %v12529 = vunpack.c.l.b16 %v11226
  %v12530 = vunpack.c.h.b16 %v11226
  %v12531 = vunpack.c.l.b16 %v11227
  %v12532 = vunpack.c.h.b16 %v11227
  %v12533 = vunpack.c.l.b16 %v11228
  %v12534 = vunpack.c.h.b16 %v11228
  %v12535 = vunpack.c.l.b16 %v11229
  %v12536 = vunpack.c.h.b16 %v11229
  %v12537 = vunpack.c.l.b16 %v11230
  %v12538 = vunpack.c.h.b16 %v11230
  %v12539 = vunpack.c.l.b16 %v11231
  %v12540 = vunpack.c.h.b16 %v11231
  %v12541 = vunpack.c.l.b16 %v11232
  %v12542 = vunpack.c.h.b16 %v11232
  %v12543 = vunpack.c.l.b16 %v11233
  %v12544 = vunpack.c.h.b16 %v11233
  %v12545 = vunpack.c.l.b16 %v11234
  %v12546 = vunpack.c.h.b16 %v11234
  %v12547 = vunpack.c.l.b16 %v11235
  %v12548 = vunpack.c.h.b16 %v11235
  %v12549 = vpack.c.b16 %v12479, %v12477
  %v12550 = vpack.c.b16 %v12480, %v12478
  %v12551 = vpack.c.b16 %v12483, %v12481
  %v12552 = vpack.c.b16 %v12484, %v12482
  %v12553 = vpack.c.b16 %v12487, %v12485
  %v12554 = vpack.c.b16 %v12488, %v12486
  %v12555 = vpack.c.b16 %v12491, %v12489
  %v12556 = vpack.c.b16 %v12492, %v12490
  %v12557 = vpack.c.b16 %v12495, %v12493
  %v12558 = vpack.c.b16 %v12496, %v12494
  %v12559 = vpack.c.b16 %v12499, %v12497
  %v12560 = vpack.c.b16 %v12500, %v12498
  %v12561 = vpack.c.b16 %v12503, %v12501
  %v12562 = vpack.c.b16 %v12504, %v12502
  %v12563 = vpack.c.b16 %v12507, %v12505
  %v12564 = vpack.c.b16 %v12508, %v12506
  %v12565 = vpack.c.b16 %v12511, %v12509
  %v12566 = vpack.c.b16 %v12512, %v12510
  %v12567 = vpack.c.b16 %v12515, %v12513
  %v12568 = vpack.c.b16 %v12516, %v12514
  %v12569 = vpack.c.b16 %v12519, %v12517
  %v12570 = vpack.c.b16 %v12520, %v12518
  %v12571 = vpack.c.b16 %v12523, %v12521
  %v12572 = vpack.c.b16 %v12524, %v12522
  %v12573 = vpack.c.b16 %v12527, %v12525
  %v12574 = vpack.c.b16 %v12528, %v12526
  %v12575 = vpack.c.b16 %v12531, %v12529
  %v12576 = vpack.c.b16 %v12532, %v12530
  %v12577 = vpack.c.b16 %v12535, %v12533
  %v12578 = vpack.c.b16 %v12536, %v12534
  %v12579 = vpack.c.b16 %v12539, %v12537
  %v12580 = vpack.c.b16 %v12540, %v12538
  %v12581 = vpack.c.b16 %v12543, %v12541
  %v12582 = vpack.c.b16 %v12544, %v12542
  %v12583 = vpack.c.b16 %v12547, %v12545
  %v12584 = vpack.c.b16 %v12548, %v12546
  %v12622 = vsel %vm11560, %v11043, 0
  %12624 = vmatprep.subr.bf16.mxu0 %v12564
  %12625 = vmatpush1.bf16.msra.mxu0 %v12563
  %12626 = vmatprep.subr.bf16.mxu0 %v12562
  %12627 = vmatpush1.bf16.msra.mxu0 %v12561
  %12628 = vmatprep.subr.bf16.mxu0 %v12560
  %12629 = vmatpush1.bf16.msra.mxu0 %v12559
  %12630 = vmatprep.subr.bf16.mxu0 %v12558
  %12631 = vmatpush1.bf16.msra.mxu0 %v12557
  %12632 = vmatprep.subr.bf16.mxu0 %v12556
  %12633 = vmatpush1.bf16.msra.mxu0 %v12555
  %12634 = vmatprep.subr.bf16.mxu0 %v12554
  %12635 = vmatpush1.bf16.msra.mxu0 %v12553
  %12636 = vmatprep.subr.bf16.mxu0 %v12552
  %12637 = vmatpush1.bf16.msra.mxu0 %v12551
  %12638 = vmatprep.subr.bf16.mxu0 %v12550
  %12639 = vmatpush1.bf16.msra.mxu0 %v12549
  %12640 = vmatprep.subr.bf16.mxu0 %v12580
  %12641 = vmatpush2.bf16.msra.mxu0 %v12579
  %12642 = vmatprep.subr.bf16.mxu0 %v12578
  %12643 = vmatpush2.bf16.msra.mxu0 %v12577
  %12644 = vmatprep.subr.bf16.mxu0 %v12576
  %12645 = vmatpush2.bf16.msra.mxu0 %v12575
  %12646 = vmatprep.subr.bf16.mxu0 %v12574
  %12647 = vmatpush2.bf16.msra.mxu0 %v12573
  %12648 = vmatprep.subr.bf16.mxu0 %v12572
  %12649 = vmatpush2.bf16.msra.mxu0 %v12571
  %12650 = vmatprep.subr.bf16.mxu0 %v12570
  %12651 = vmatpush2.bf16.msra.mxu0 %v12569
  %12652 = vmatprep.subr.bf16.mxu0 %v12568
  %12653 = vmatpush2.bf16.msra.mxu0 %v12567
  %12654 = vmatprep.subr.bf16.mxu0 %v12566
  %12655 = vmatpush2.bf16.msra.mxu0 %v12565
  %12656 = vmatprep.mubr.bf16.mxu0 %v11042
  %12657 = vmatmul.mubr.bf16.gmra.mxu0 %v11041
  %v12658 = vpop.f32.mrf.mxu0
  %v12659 = vadd.f32 0.0, %v12658
  %v12660 = vpop.f32.mrf.mxu0
  %v12661 = vadd.f32 0.0, %v12660
  %v12662 = vpop.f32.mrf.mxu0
  %v12663 = vpop.f32.mrf.mxu0
  %12664 = vdwg.mxu0
  %12665 = vmatprep.subr.bf16.mxu0 0
  %12666 = vmatpush1.bf16.msra.mxu0 0
  %12667 = vmatprep.subr.bf16.mxu0 0
  %12668 = vmatpush1.bf16.msra.mxu0 0
  %12669 = vmatprep.subr.bf16.mxu0 0
  %12670 = vmatpush1.bf16.msra.mxu0 0
  %12671 = vmatprep.subr.bf16.mxu0 0
  %12672 = vmatpush1.bf16.msra.mxu0 0
  %12673 = vmatprep.subr.bf16.mxu0 0
  %12674 = vmatpush1.bf16.msra.mxu0 0
  %12675 = vmatprep.subr.bf16.mxu0 0
  %12676 = vmatpush1.bf16.msra.mxu0 0
  %12677 = vmatprep.subr.bf16.mxu0 %v12584
  %12678 = vmatpush1.bf16.msra.mxu0 %v12583
  %12679 = vmatprep.subr.bf16.mxu0 %v12582
  %12680 = vmatpush1.bf16.msra.mxu0 %v12581
  %12681 = vmatprep.subr.bf16.mxu0 0
  %12682 = vmatpush2.bf16.msra.mxu0 0
  %12683 = vmatprep.subr.bf16.mxu0 0
  %12684 = vmatpush2.bf16.msra.mxu0 0
  %12685 = vmatprep.subr.bf16.mxu0 0
  %12686 = vmatpush2.bf16.msra.mxu0 0
  %12687 = vmatprep.subr.bf16.mxu0 0
  %12688 = vmatpush2.bf16.msra.mxu0 0
  %12689 = vmatprep.subr.bf16.mxu0 0
  %12690 = vmatpush2.bf16.msra.mxu0 0
  %12691 = vmatprep.subr.bf16.mxu0 0
  %12692 = vmatpush2.bf16.msra.mxu0 0
  %12693 = vmatprep.subr.bf16.mxu0 0
  %12694 = vmatpush2.bf16.msra.mxu0 0
  %12695 = vmatprep.subr.bf16.mxu0 0
  %12696 = vmatpush2.bf16.msra.mxu0 0
  %12697 = vmatprep.mubr.bf16.mxu0 0
  %12698 = vmatmul.mubr.bf16.gmra.mxu0 %v12622
  %v12699 = vpop.f32.mrf.mxu0
  %v12700 = vadd.f32 %v12659, %v12699
  %v12701 = vpop.f32.mrf.mxu0
  %v12702 = vadd.f32 %v12661, %v12701
  %v12703 = vpop.f32.mrf.mxu0
  %v12704 = vpop.f32.mrf.mxu0
  %12705 = vdwg.mxu0
  %v12742 = vunpack.c.l.b16 %v11236
  %v12743 = vunpack.c.h.b16 %v11236
  %v12744 = vunpack.c.l.b16 %v11237
  %v12745 = vunpack.c.h.b16 %v11237
  %v12746 = vunpack.c.l.b16 %v11238
  %v12747 = vunpack.c.h.b16 %v11238
  %v12748 = vunpack.c.l.b16 %v11239
  %v12749 = vunpack.c.h.b16 %v11239
  %v12750 = vunpack.c.l.b16 %v11240
  %v12751 = vunpack.c.h.b16 %v11240
  %v12752 = vunpack.c.l.b16 %v11241
  %v12753 = vunpack.c.h.b16 %v11241
  %v12754 = vunpack.c.l.b16 %v11242
  %v12755 = vunpack.c.h.b16 %v11242
  %v12756 = vunpack.c.l.b16 %v11243
  %v12757 = vunpack.c.h.b16 %v11243
  %v12758 = vunpack.c.l.b16 %v11244
  %v12759 = vunpack.c.h.b16 %v11244
  %v12760 = vunpack.c.l.b16 %v11245
  %v12761 = vunpack.c.h.b16 %v11245
  %v12762 = vunpack.c.l.b16 %v11246
  %v12763 = vunpack.c.h.b16 %v11246
  %v12764 = vunpack.c.l.b16 %v11247
  %v12765 = vunpack.c.h.b16 %v11247
  %v12766 = vunpack.c.l.b16 %v11248
  %v12767 = vunpack.c.h.b16 %v11248
  %v12768 = vunpack.c.l.b16 %v11249
  %v12769 = vunpack.c.h.b16 %v11249
  %v12770 = vunpack.c.l.b16 %v11250
  %v12771 = vunpack.c.h.b16 %v11250
  %v12772 = vunpack.c.l.b16 %v11251
  %v12773 = vunpack.c.h.b16 %v11251
  %v12774 = vunpack.c.l.b16 %v11252
  %v12775 = vunpack.c.h.b16 %v11252
  %v12776 = vunpack.c.l.b16 %v11253
  %v12777 = vunpack.c.h.b16 %v11253
  %v12778 = vunpack.c.l.b16 %v11254
  %v12779 = vunpack.c.h.b16 %v11254
  %v12780 = vunpack.c.l.b16 %v11255
  %v12781 = vunpack.c.h.b16 %v11255
  %v12782 = vunpack.c.l.b16 %v11256
  %v12783 = vunpack.c.h.b16 %v11256
  %v12784 = vunpack.c.l.b16 %v11257
  %v12785 = vunpack.c.h.b16 %v11257
  %v12786 = vunpack.c.l.b16 %v11258
  %v12787 = vunpack.c.h.b16 %v11258
  %v12788 = vunpack.c.l.b16 %v11259
  %v12789 = vunpack.c.h.b16 %v11259
  %v12790 = vunpack.c.l.b16 %v11260
  %v12791 = vunpack.c.h.b16 %v11260
  %v12792 = vunpack.c.l.b16 %v11261
  %v12793 = vunpack.c.h.b16 %v11261
  %v12794 = vunpack.c.l.b16 %v11262
  %v12795 = vunpack.c.h.b16 %v11262
  %v12796 = vunpack.c.l.b16 %v11263
  %v12797 = vunpack.c.h.b16 %v11263
  %v12798 = vunpack.c.l.b16 %v11264
  %v12799 = vunpack.c.h.b16 %v11264
  %v12800 = vunpack.c.l.b16 %v11265
  %v12801 = vunpack.c.h.b16 %v11265
  %v12802 = vunpack.c.l.b16 %v11266
  %v12803 = vunpack.c.h.b16 %v11266
  %v12804 = vunpack.c.l.b16 %v11267
  %v12805 = vunpack.c.h.b16 %v11267
  %v12806 = vunpack.c.l.b16 %v11268
  %v12807 = vunpack.c.h.b16 %v11268
  %v12808 = vunpack.c.l.b16 %v11269
  %v12809 = vunpack.c.h.b16 %v11269
  %v12810 = vunpack.c.l.b16 %v11270
  %v12811 = vunpack.c.h.b16 %v11270
  %v12812 = vunpack.c.l.b16 %v11271
  %v12813 = vunpack.c.h.b16 %v11271
  %v12814 = vpack.c.b16 %v12744, %v12742
  %v12815 = vpack.c.b16 %v12745, %v12743
  %v12816 = vpack.c.b16 %v12748, %v12746
  %v12817 = vpack.c.b16 %v12749, %v12747
  %v12818 = vpack.c.b16 %v12752, %v12750
  %v12819 = vpack.c.b16 %v12753, %v12751
  %v12820 = vpack.c.b16 %v12756, %v12754
  %v12821 = vpack.c.b16 %v12757, %v12755
  %v12822 = vpack.c.b16 %v12760, %v12758
  %v12823 = vpack.c.b16 %v12761, %v12759
  %v12824 = vpack.c.b16 %v12764, %v12762
  %v12825 = vpack.c.b16 %v12765, %v12763
  %v12826 = vpack.c.b16 %v12768, %v12766
  %v12827 = vpack.c.b16 %v12769, %v12767
  %v12828 = vpack.c.b16 %v12772, %v12770
  %v12829 = vpack.c.b16 %v12773, %v12771
  %v12830 = vpack.c.b16 %v12776, %v12774
  %v12831 = vpack.c.b16 %v12777, %v12775
  %v12832 = vpack.c.b16 %v12780, %v12778
  %v12833 = vpack.c.b16 %v12781, %v12779
  %v12834 = vpack.c.b16 %v12784, %v12782
  %v12835 = vpack.c.b16 %v12785, %v12783
  %v12836 = vpack.c.b16 %v12788, %v12786
  %v12837 = vpack.c.b16 %v12789, %v12787
  %v12838 = vpack.c.b16 %v12792, %v12790
  %v12839 = vpack.c.b16 %v12793, %v12791
  %v12840 = vpack.c.b16 %v12796, %v12794
  %v12841 = vpack.c.b16 %v12797, %v12795
  %v12842 = vpack.c.b16 %v12800, %v12798
  %v12843 = vpack.c.b16 %v12801, %v12799
  %v12844 = vpack.c.b16 %v12804, %v12802
  %v12845 = vpack.c.b16 %v12805, %v12803
  %v12846 = vpack.c.b16 %v12808, %v12806
  %v12847 = vpack.c.b16 %v12809, %v12807
  %v12848 = vpack.c.b16 %v12812, %v12810
  %v12849 = vpack.c.b16 %v12813, %v12811
  %v12887 = vsel %vm11560, %v11046, 0
  %12889 = vmatprep.subr.bf16.mxu0 %v12829
  %12890 = vmatpush1.bf16.msra.mxu0 %v12828
  %12891 = vmatprep.subr.bf16.mxu0 %v12827
  %12892 = vmatpush1.bf16.msra.mxu0 %v12826
  %12893 = vmatprep.subr.bf16.mxu0 %v12825
  %12894 = vmatpush1.bf16.msra.mxu0 %v12824
  %12895 = vmatprep.subr.bf16.mxu0 %v12823
  %12896 = vmatpush1.bf16.msra.mxu0 %v12822
  %12897 = vmatprep.subr.bf16.mxu0 %v12821
  %12898 = vmatpush1.bf16.msra.mxu0 %v12820
  %12899 = vmatprep.subr.bf16.mxu0 %v12819
  %12900 = vmatpush1.bf16.msra.mxu0 %v12818
  %12901 = vmatprep.subr.bf16.mxu0 %v12817
  %12902 = vmatpush1.bf16.msra.mxu0 %v12816
  %12903 = vmatprep.subr.bf16.mxu0 %v12815
  %12904 = vmatpush1.bf16.msra.mxu0 %v12814
  %12905 = vmatprep.subr.bf16.mxu0 %v12845
  %12906 = vmatpush2.bf16.msra.mxu0 %v12844
  %12907 = vmatprep.subr.bf16.mxu0 %v12843
  %12908 = vmatpush2.bf16.msra.mxu0 %v12842
  %12909 = vmatprep.subr.bf16.mxu0 %v12841
  %12910 = vmatpush2.bf16.msra.mxu0 %v12840
  %12911 = vmatprep.subr.bf16.mxu0 %v12839
  %12912 = vmatpush2.bf16.msra.mxu0 %v12838
  %12913 = vmatprep.subr.bf16.mxu0 %v12837
  %12914 = vmatpush2.bf16.msra.mxu0 %v12836
  %12915 = vmatprep.subr.bf16.mxu0 %v12835
  %12916 = vmatpush2.bf16.msra.mxu0 %v12834
  %12917 = vmatprep.subr.bf16.mxu0 %v12833
  %12918 = vmatpush2.bf16.msra.mxu0 %v12832
  %12919 = vmatprep.subr.bf16.mxu0 %v12831
  %12920 = vmatpush2.bf16.msra.mxu0 %v12830
  %12921 = vmatprep.mubr.bf16.mxu0 %v11045
  %12922 = vmatmul.mubr.bf16.gmra.mxu0 %v11044
  %v12923 = vpop.f32.mrf.mxu0
  %v12924 = vadd.f32 0.0, %v12923
  %v12925 = vpop.f32.mrf.mxu0
  %v12926 = vadd.f32 0.0, %v12925
  %v12927 = vpop.f32.mrf.mxu0
  %v12928 = vpop.f32.mrf.mxu0
  %12929 = vdwg.mxu0
  %12930 = vmatprep.subr.bf16.mxu0 0
  %12931 = vmatpush1.bf16.msra.mxu0 0
  %12932 = vmatprep.subr.bf16.mxu0 0
  %12933 = vmatpush1.bf16.msra.mxu0 0
  %12934 = vmatprep.subr.bf16.mxu0 0
  %12935 = vmatpush1.bf16.msra.mxu0 0
  %12936 = vmatprep.subr.bf16.mxu0 0
  %12937 = vmatpush1.bf16.msra.mxu0 0
  %12938 = vmatprep.subr.bf16.mxu0 0
  %12939 = vmatpush1.bf16.msra.mxu0 0
  %12940 = vmatprep.subr.bf16.mxu0 0
  %12941 = vmatpush1.bf16.msra.mxu0 0
  %12942 = vmatprep.subr.bf16.mxu0 %v12849
  %12943 = vmatpush1.bf16.msra.mxu0 %v12848
  %12944 = vmatprep.subr.bf16.mxu0 %v12847
  %12945 = vmatpush1.bf16.msra.mxu0 %v12846
  %12946 = vmatprep.subr.bf16.mxu0 0
  %12947 = vmatpush2.bf16.msra.mxu0 0
  %12948 = vmatprep.subr.bf16.mxu0 0
  %12949 = vmatpush2.bf16.msra.mxu0 0
  %12950 = vmatprep.subr.bf16.mxu0 0
  %12951 = vmatpush2.bf16.msra.mxu0 0
  %12952 = vmatprep.subr.bf16.mxu0 0
  %12953 = vmatpush2.bf16.msra.mxu0 0
  %12954 = vmatprep.subr.bf16.mxu0 0
  %12955 = vmatpush2.bf16.msra.mxu0 0
  %12956 = vmatprep.subr.bf16.mxu0 0
  %12957 = vmatpush2.bf16.msra.mxu0 0
  %12958 = vmatprep.subr.bf16.mxu0 0
  %12959 = vmatpush2.bf16.msra.mxu0 0
  %12960 = vmatprep.subr.bf16.mxu0 0
  %12961 = vmatpush2.bf16.msra.mxu0 0
  %12962 = vmatprep.mubr.bf16.mxu0 0
  %12963 = vmatmul.mubr.bf16.gmra.mxu0 %v12887
  %v12964 = vpop.f32.mrf.mxu0
  %v12965 = vadd.f32 %v12924, %v12964
  %v12966 = vpop.f32.mrf.mxu0
  %v12967 = vadd.f32 %v12926, %v12966
  %v12968 = vpop.f32.mrf.mxu0
  %v12969 = vpop.f32.mrf.mxu0
  %12970 = vdwg.mxu0
  %v13007 = vunpack.c.l.b16 %v11272
  %v13008 = vunpack.c.h.b16 %v11272
  %v13009 = vunpack.c.l.b16 %v11273
  %v13010 = vunpack.c.h.b16 %v11273
  %v13011 = vunpack.c.l.b16 %v11274
  %v13012 = vunpack.c.h.b16 %v11274
  %v13013 = vunpack.c.l.b16 %v11275
  %v13014 = vunpack.c.h.b16 %v11275
  %v13015 = vunpack.c.l.b16 %v11276
  %v13016 = vunpack.c.h.b16 %v11276
  %v13017 = vunpack.c.l.b16 %v11277
  %v13018 = vunpack.c.h.b16 %v11277
  %v13019 = vunpack.c.l.b16 %v11278
  %v13020 = vunpack.c.h.b16 %v11278
  %v13021 = vunpack.c.l.b16 %v11279
  %v13022 = vunpack.c.h.b16 %v11279
  %v13023 = vunpack.c.l.b16 %v11280
  %v13024 = vunpack.c.h.b16 %v11280
  %v13025 = vunpack.c.l.b16 %v11281
  %v13026 = vunpack.c.h.b16 %v11281
  %v13027 = vunpack.c.l.b16 %v11282
  %v13028 = vunpack.c.h.b16 %v11282
  %v13029 = vunpack.c.l.b16 %v11283
  %v13030 = vunpack.c.h.b16 %v11283
  %v13031 = vunpack.c.l.b16 %v11284
  %v13032 = vunpack.c.h.b16 %v11284
  %v13033 = vunpack.c.l.b16 %v11285
  %v13034 = vunpack.c.h.b16 %v11285
  %v13035 = vunpack.c.l.b16 %v11286
  %v13036 = vunpack.c.h.b16 %v11286
  %v13037 = vunpack.c.l.b16 %v11287
  %v13038 = vunpack.c.h.b16 %v11287
  %v13039 = vunpack.c.l.b16 %v11288
  %v13040 = vunpack.c.h.b16 %v11288
  %v13041 = vunpack.c.l.b16 %v11289
  %v13042 = vunpack.c.h.b16 %v11289
  %v13043 = vunpack.c.l.b16 %v11290
  %v13044 = vunpack.c.h.b16 %v11290
  %v13045 = vunpack.c.l.b16 %v11291
  %v13046 = vunpack.c.h.b16 %v11291
  %v13047 = vunpack.c.l.b16 %v11292
  %v13048 = vunpack.c.h.b16 %v11292
  %v13049 = vunpack.c.l.b16 %v11293
  %v13050 = vunpack.c.h.b16 %v11293
  %v13051 = vunpack.c.l.b16 %v11294
  %v13052 = vunpack.c.h.b16 %v11294
  %v13053 = vunpack.c.l.b16 %v11295
  %v13054 = vunpack.c.h.b16 %v11295
  %v13055 = vunpack.c.l.b16 %v11296
  %v13056 = vunpack.c.h.b16 %v11296
  %v13057 = vunpack.c.l.b16 %v11297
  %v13058 = vunpack.c.h.b16 %v11297
  %v13059 = vunpack.c.l.b16 %v11298
  %v13060 = vunpack.c.h.b16 %v11298
  %v13061 = vunpack.c.l.b16 %v11299
  %v13062 = vunpack.c.h.b16 %v11299
  %v13063 = vunpack.c.l.b16 %v11300
  %v13064 = vunpack.c.h.b16 %v11300
  %v13065 = vunpack.c.l.b16 %v11301
  %v13066 = vunpack.c.h.b16 %v11301
  %v13067 = vunpack.c.l.b16 %v11302
  %v13068 = vunpack.c.h.b16 %v11302
  %v13069 = vunpack.c.l.b16 %v11303
  %v13070 = vunpack.c.h.b16 %v11303
  %v13071 = vunpack.c.l.b16 %v11304
  %v13072 = vunpack.c.h.b16 %v11304
  %v13073 = vunpack.c.l.b16 %v11305
  %v13074 = vunpack.c.h.b16 %v11305
  %v13075 = vunpack.c.l.b16 %v11306
  %v13076 = vunpack.c.h.b16 %v11306
  %v13077 = vunpack.c.l.b16 %v11307
  %v13078 = vunpack.c.h.b16 %v11307
  %v13079 = vpack.c.b16 %v13009, %v13007
  %v13080 = vpack.c.b16 %v13010, %v13008
  %v13081 = vpack.c.b16 %v13013, %v13011
  %v13082 = vpack.c.b16 %v13014, %v13012
  %v13083 = vpack.c.b16 %v13017, %v13015
  %v13084 = vpack.c.b16 %v13018, %v13016
  %v13085 = vpack.c.b16 %v13021, %v13019
  %v13086 = vpack.c.b16 %v13022, %v13020
  %v13087 = vpack.c.b16 %v13025, %v13023
  %v13088 = vpack.c.b16 %v13026, %v13024
  %v13089 = vpack.c.b16 %v13029, %v13027
  %v13090 = vpack.c.b16 %v13030, %v13028
  %v13091 = vpack.c.b16 %v13033, %v13031
  %v13092 = vpack.c.b16 %v13034, %v13032
  %v13093 = vpack.c.b16 %v13037, %v13035
  %v13094 = vpack.c.b16 %v13038, %v13036
  %v13095 = vpack.c.b16 %v13041, %v13039
  %v13096 = vpack.c.b16 %v13042, %v13040
  %v13097 = vpack.c.b16 %v13045, %v13043
  %v13098 = vpack.c.b16 %v13046, %v13044
  %v13099 = vpack.c.b16 %v13049, %v13047
  %v13100 = vpack.c.b16 %v13050, %v13048
  %v13101 = vpack.c.b16 %v13053, %v13051
  %v13102 = vpack.c.b16 %v13054, %v13052
  %v13103 = vpack.c.b16 %v13057, %v13055
  %v13104 = vpack.c.b16 %v13058, %v13056
  %v13105 = vpack.c.b16 %v13061, %v13059
  %v13106 = vpack.c.b16 %v13062, %v13060
  %v13107 = vpack.c.b16 %v13065, %v13063
  %v13108 = vpack.c.b16 %v13066, %v13064
  %v13109 = vpack.c.b16 %v13069, %v13067
  %v13110 = vpack.c.b16 %v13070, %v13068
  %v13111 = vpack.c.b16 %v13073, %v13071
  %v13112 = vpack.c.b16 %v13074, %v13072
  %v13113 = vpack.c.b16 %v13077, %v13075
  %v13114 = vpack.c.b16 %v13078, %v13076
  %v13152 = vsel %vm11560, %v11049, 0
  %13154 = vmatprep.subr.bf16.mxu0 %v13094
  %13155 = vmatpush1.bf16.msra.mxu0 %v13093
  %13156 = vmatprep.subr.bf16.mxu0 %v13092
  %13157 = vmatpush1.bf16.msra.mxu0 %v13091
  %13158 = vmatprep.subr.bf16.mxu0 %v13090
  %13159 = vmatpush1.bf16.msra.mxu0 %v13089
  %13160 = vmatprep.subr.bf16.mxu0 %v13088
  %13161 = vmatpush1.bf16.msra.mxu0 %v13087
  %13162 = vmatprep.subr.bf16.mxu0 %v13086
  %13163 = vmatpush1.bf16.msra.mxu0 %v13085
  %13164 = vmatprep.subr.bf16.mxu0 %v13084
  %13165 = vmatpush1.bf16.msra.mxu0 %v13083
  %13166 = vmatprep.subr.bf16.mxu0 %v13082
  %13167 = vmatpush1.bf16.msra.mxu0 %v13081
  %13168 = vmatprep.subr.bf16.mxu0 %v13080
  %13169 = vmatpush1.bf16.msra.mxu0 %v13079
  %13170 = vmatprep.subr.bf16.mxu0 %v13110
  %13171 = vmatpush2.bf16.msra.mxu0 %v13109
  %13172 = vmatprep.subr.bf16.mxu0 %v13108
  %13173 = vmatpush2.bf16.msra.mxu0 %v13107
  %13174 = vmatprep.subr.bf16.mxu0 %v13106
  %13175 = vmatpush2.bf16.msra.mxu0 %v13105
  %13176 = vmatprep.subr.bf16.mxu0 %v13104
  %13177 = vmatpush2.bf16.msra.mxu0 %v13103
  %13178 = vmatprep.subr.bf16.mxu0 %v13102
  %13179 = vmatpush2.bf16.msra.mxu0 %v13101
  %13180 = vmatprep.subr.bf16.mxu0 %v13100
  %13181 = vmatpush2.bf16.msra.mxu0 %v13099
  %13182 = vmatprep.subr.bf16.mxu0 %v13098
  %13183 = vmatpush2.bf16.msra.mxu0 %v13097
  %13184 = vmatprep.subr.bf16.mxu0 %v13096
  %13185 = vmatpush2.bf16.msra.mxu0 %v13095
  %13186 = vmatprep.mubr.bf16.mxu0 %v11048
  %13187 = vmatmul.mubr.bf16.gmra.mxu0 %v11047
  %v13188 = vpop.f32.mrf.mxu0
  %v13189 = vadd.f32 0.0, %v13188
  %v13190 = vpop.f32.mrf.mxu0
  %v13191 = vadd.f32 0.0, %v13190
  %v13192 = vpop.f32.mrf.mxu0
  %v13193 = vpop.f32.mrf.mxu0
  %13194 = vdwg.mxu0
  %13195 = vmatprep.subr.bf16.mxu0 0
  %13196 = vmatpush1.bf16.msra.mxu0 0
  %13197 = vmatprep.subr.bf16.mxu0 0
  %13198 = vmatpush1.bf16.msra.mxu0 0
  %13199 = vmatprep.subr.bf16.mxu0 0
  %13200 = vmatpush1.bf16.msra.mxu0 0
  %13201 = vmatprep.subr.bf16.mxu0 0
  %13202 = vmatpush1.bf16.msra.mxu0 0
  %13203 = vmatprep.subr.bf16.mxu0 0
  %13204 = vmatpush1.bf16.msra.mxu0 0
  %13205 = vmatprep.subr.bf16.mxu0 0
  %13206 = vmatpush1.bf16.msra.mxu0 0
  %13207 = vmatprep.subr.bf16.mxu0 %v13114
  %13208 = vmatpush1.bf16.msra.mxu0 %v13113
  %13209 = vmatprep.subr.bf16.mxu0 %v13112
  %13210 = vmatpush1.bf16.msra.mxu0 %v13111
  %13211 = vmatprep.subr.bf16.mxu0 0
  %13212 = vmatpush2.bf16.msra.mxu0 0
  %13213 = vmatprep.subr.bf16.mxu0 0
  %13214 = vmatpush2.bf16.msra.mxu0 0
  %13215 = vmatprep.subr.bf16.mxu0 0
  %13216 = vmatpush2.bf16.msra.mxu0 0
  %13217 = vmatprep.subr.bf16.mxu0 0
  %13218 = vmatpush2.bf16.msra.mxu0 0
  %13219 = vmatprep.subr.bf16.mxu0 0
  %13220 = vmatpush2.bf16.msra.mxu0 0
  %13221 = vmatprep.subr.bf16.mxu0 0
  %13222 = vmatpush2.bf16.msra.mxu0 0
  %13223 = vmatprep.subr.bf16.mxu0 0
  %13224 = vmatpush2.bf16.msra.mxu0 0
  %13225 = vmatprep.subr.bf16.mxu0 0
  %13226 = vmatpush2.bf16.msra.mxu0 0
  %13227 = vmatprep.mubr.bf16.mxu0 0
  %13228 = vmatmul.mubr.bf16.gmra.mxu0 %v13152
  %v13229 = vpop.f32.mrf.mxu0
  %v13230 = vadd.f32 %v13189, %v13229
  %v13231 = vpop.f32.mrf.mxu0
  %v13232 = vadd.f32 %v13191, %v13231
  %v13233 = vpop.f32.mrf.mxu0
  %v13234 = vpop.f32.mrf.mxu0
  %13235 = vdwg.mxu0
  %v13272 = vunpack.c.l.b16 %v11308
  %v13273 = vunpack.c.h.b16 %v11308
  %v13274 = vunpack.c.l.b16 %v11309
  %v13275 = vunpack.c.h.b16 %v11309
  %v13276 = vunpack.c.l.b16 %v11310
  %v13277 = vunpack.c.h.b16 %v11310
  %v13278 = vunpack.c.l.b16 %v11311
  %v13279 = vunpack.c.h.b16 %v11311
  %v13280 = vunpack.c.l.b16 %v11312
  %v13281 = vunpack.c.h.b16 %v11312
  %v13282 = vunpack.c.l.b16 %v11313
  %v13283 = vunpack.c.h.b16 %v11313
  %v13284 = vunpack.c.l.b16 %v11314
  %v13285 = vunpack.c.h.b16 %v11314
  %v13286 = vunpack.c.l.b16 %v11315
  %v13287 = vunpack.c.h.b16 %v11315
  %v13288 = vunpack.c.l.b16 %v11316
  %v13289 = vunpack.c.h.b16 %v11316
  %v13290 = vunpack.c.l.b16 %v11317
  %v13291 = vunpack.c.h.b16 %v11317
  %v13292 = vunpack.c.l.b16 %v11318
  %v13293 = vunpack.c.h.b16 %v11318
  %v13294 = vunpack.c.l.b16 %v11319
  %v13295 = vunpack.c.h.b16 %v11319
  %v13296 = vunpack.c.l.b16 %v11320
  %v13297 = vunpack.c.h.b16 %v11320
  %v13298 = vunpack.c.l.b16 %v11321
  %v13299 = vunpack.c.h.b16 %v11321
  %v13300 = vunpack.c.l.b16 %v11322
  %v13301 = vunpack.c.h.b16 %v11322
  %v13302 = vunpack.c.l.b16 %v11323
  %v13303 = vunpack.c.h.b16 %v11323
  %v13304 = vunpack.c.l.b16 %v11324
  %v13305 = vunpack.c.h.b16 %v11324
  %v13306 = vunpack.c.l.b16 %v11325
  %v13307 = vunpack.c.h.b16 %v11325
  %v13308 = vunpack.c.l.b16 %v11326
  %v13309 = vunpack.c.h.b16 %v11326
  %v13310 = vunpack.c.l.b16 %v11327
  %v13311 = vunpack.c.h.b16 %v11327
  %v13312 = vunpack.c.l.b16 %v11328
  %v13313 = vunpack.c.h.b16 %v11328
  %v13314 = vunpack.c.l.b16 %v11329
  %v13315 = vunpack.c.h.b16 %v11329
  %v13316 = vunpack.c.l.b16 %v11330
  %v13317 = vunpack.c.h.b16 %v11330
  %v13318 = vunpack.c.l.b16 %v11331
  %v13319 = vunpack.c.h.b16 %v11331
  %v13320 = vunpack.c.l.b16 %v11332
  %v13321 = vunpack.c.h.b16 %v11332
  %v13322 = vunpack.c.l.b16 %v11333
  %v13323 = vunpack.c.h.b16 %v11333
  %v13324 = vunpack.c.l.b16 %v11334
  %v13325 = vunpack.c.h.b16 %v11334
  %v13326 = vunpack.c.l.b16 %v11335
  %v13327 = vunpack.c.h.b16 %v11335
  %v13328 = vunpack.c.l.b16 %v11336
  %v13329 = vunpack.c.h.b16 %v11336
  %v13330 = vunpack.c.l.b16 %v11337
  %v13331 = vunpack.c.h.b16 %v11337
  %v13332 = vunpack.c.l.b16 %v11338
  %v13333 = vunpack.c.h.b16 %v11338
  %v13334 = vunpack.c.l.b16 %v11339
  %v13335 = vunpack.c.h.b16 %v11339
  %v13336 = vunpack.c.l.b16 %v11340
  %v13337 = vunpack.c.h.b16 %v11340
  %v13338 = vunpack.c.l.b16 %v11341
  %v13339 = vunpack.c.h.b16 %v11341
  %v13340 = vunpack.c.l.b16 %v11342
  %v13341 = vunpack.c.h.b16 %v11342
  %v13342 = vunpack.c.l.b16 %v11343
  %v13343 = vunpack.c.h.b16 %v11343
  %v13344 = vpack.c.b16 %v13274, %v13272
  %v13345 = vpack.c.b16 %v13275, %v13273
  %v13346 = vpack.c.b16 %v13278, %v13276
  %v13347 = vpack.c.b16 %v13279, %v13277
  %v13348 = vpack.c.b16 %v13282, %v13280
  %v13349 = vpack.c.b16 %v13283, %v13281
  %v13350 = vpack.c.b16 %v13286, %v13284
  %v13351 = vpack.c.b16 %v13287, %v13285
  %v13352 = vpack.c.b16 %v13290, %v13288
  %v13353 = vpack.c.b16 %v13291, %v13289
  %v13354 = vpack.c.b16 %v13294, %v13292
  %v13355 = vpack.c.b16 %v13295, %v13293
  %v13356 = vpack.c.b16 %v13298, %v13296
  %v13357 = vpack.c.b16 %v13299, %v13297
  %v13358 = vpack.c.b16 %v13302, %v13300
  %v13359 = vpack.c.b16 %v13303, %v13301
  %v13360 = vpack.c.b16 %v13306, %v13304
  %v13361 = vpack.c.b16 %v13307, %v13305
  %v13362 = vpack.c.b16 %v13310, %v13308
  %v13363 = vpack.c.b16 %v13311, %v13309
  %v13364 = vpack.c.b16 %v13314, %v13312
  %v13365 = vpack.c.b16 %v13315, %v13313
  %v13366 = vpack.c.b16 %v13318, %v13316
  %v13367 = vpack.c.b16 %v13319, %v13317
  %v13368 = vpack.c.b16 %v13322, %v13320
  %v13369 = vpack.c.b16 %v13323, %v13321
  %v13370 = vpack.c.b16 %v13326, %v13324
  %v13371 = vpack.c.b16 %v13327, %v13325
  %v13372 = vpack.c.b16 %v13330, %v13328
  %v13373 = vpack.c.b16 %v13331, %v13329
  %v13374 = vpack.c.b16 %v13334, %v13332
  %v13375 = vpack.c.b16 %v13335, %v13333
  %v13376 = vpack.c.b16 %v13338, %v13336
  %v13377 = vpack.c.b16 %v13339, %v13337
  %v13378 = vpack.c.b16 %v13342, %v13340
  %v13379 = vpack.c.b16 %v13343, %v13341
  %v13417 = vsel %vm11560, %v11052, 0
  %13419 = vmatprep.subr.bf16.mxu0 %v13359
  %13420 = vmatpush1.bf16.msra.mxu0 %v13358
  %13421 = vmatprep.subr.bf16.mxu0 %v13357
  %13422 = vmatpush1.bf16.msra.mxu0 %v13356
  %13423 = vmatprep.subr.bf16.mxu0 %v13355
  %13424 = vmatpush1.bf16.msra.mxu0 %v13354
  %13425 = vmatprep.subr.bf16.mxu0 %v13353
  %13426 = vmatpush1.bf16.msra.mxu0 %v13352
  %13427 = vmatprep.subr.bf16.mxu0 %v13351
  %13428 = vmatpush1.bf16.msra.mxu0 %v13350
  %13429 = vmatprep.subr.bf16.mxu0 %v13349
  %13430 = vmatpush1.bf16.msra.mxu0 %v13348
  %13431 = vmatprep.subr.bf16.mxu0 %v13347
  %13432 = vmatpush1.bf16.msra.mxu0 %v13346
  %13433 = vmatprep.subr.bf16.mxu0 %v13345
  %13434 = vmatpush1.bf16.msra.mxu0 %v13344
  %13435 = vmatprep.subr.bf16.mxu0 %v13375
  %13436 = vmatpush2.bf16.msra.mxu0 %v13374
  %13437 = vmatprep.subr.bf16.mxu0 %v13373
  %13438 = vmatpush2.bf16.msra.mxu0 %v13372
  %13439 = vmatprep.subr.bf16.mxu0 %v13371
  %13440 = vmatpush2.bf16.msra.mxu0 %v13370
  %13441 = vmatprep.subr.bf16.mxu0 %v13369
  %13442 = vmatpush2.bf16.msra.mxu0 %v13368
  %13443 = vmatprep.subr.bf16.mxu0 %v13367
  %13444 = vmatpush2.bf16.msra.mxu0 %v13366
  %13445 = vmatprep.subr.bf16.mxu0 %v13365
  %13446 = vmatpush2.bf16.msra.mxu0 %v13364
  %13447 = vmatprep.subr.bf16.mxu0 %v13363
  %13448 = vmatpush2.bf16.msra.mxu0 %v13362
  %13449 = vmatprep.subr.bf16.mxu0 %v13361
  %13450 = vmatpush2.bf16.msra.mxu0 %v13360
  %13451 = vmatprep.mubr.bf16.mxu0 %v11051
  %13452 = vmatmul.mubr.bf16.gmra.mxu0 %v11050
  %v13453 = vpop.f32.mrf.mxu0
  %v13454 = vadd.f32 0.0, %v13453
  %v13455 = vpop.f32.mrf.mxu0
  %v13456 = vadd.f32 0.0, %v13455
  %v13457 = vpop.f32.mrf.mxu0
  %v13458 = vpop.f32.mrf.mxu0
  %13459 = vdwg.mxu0
  %13460 = vmatprep.subr.bf16.mxu0 0
  %13461 = vmatpush1.bf16.msra.mxu0 0
  %13462 = vmatprep.subr.bf16.mxu0 0
  %13463 = vmatpush1.bf16.msra.mxu0 0
  %13464 = vmatprep.subr.bf16.mxu0 0
  %13465 = vmatpush1.bf16.msra.mxu0 0
  %13466 = vmatprep.subr.bf16.mxu0 0
  %13467 = vmatpush1.bf16.msra.mxu0 0
  %13468 = vmatprep.subr.bf16.mxu0 0
  %13469 = vmatpush1.bf16.msra.mxu0 0
  %13470 = vmatprep.subr.bf16.mxu0 0
  %13471 = vmatpush1.bf16.msra.mxu0 0
  %13472 = vmatprep.subr.bf16.mxu0 %v13379
  %13473 = vmatpush1.bf16.msra.mxu0 %v13378
  %13474 = vmatprep.subr.bf16.mxu0 %v13377
  %13475 = vmatpush1.bf16.msra.mxu0 %v13376
  %13476 = vmatprep.subr.bf16.mxu0 0
  %13477 = vmatpush2.bf16.msra.mxu0 0
  %13478 = vmatprep.subr.bf16.mxu0 0
  %13479 = vmatpush2.bf16.msra.mxu0 0
  %13480 = vmatprep.subr.bf16.mxu0 0
  %13481 = vmatpush2.bf16.msra.mxu0 0
  %13482 = vmatprep.subr.bf16.mxu0 0
  %13483 = vmatpush2.bf16.msra.mxu0 0
  %13484 = vmatprep.subr.bf16.mxu0 0
  %13485 = vmatpush2.bf16.msra.mxu0 0
  %13486 = vmatprep.subr.bf16.mxu0 0
  %13487 = vmatpush2.bf16.msra.mxu0 0
  %13488 = vmatprep.subr.bf16.mxu0 0
  %13489 = vmatpush2.bf16.msra.mxu0 0
  %13490 = vmatprep.subr.bf16.mxu0 0
  %13491 = vmatpush2.bf16.msra.mxu0 0
  %13492 = vmatprep.mubr.bf16.mxu0 0
  %13493 = vmatmul.mubr.bf16.gmra.mxu0 %v13417
  %v13494 = vpop.f32.mrf.mxu0
  %v13495 = vadd.f32 %v13454, %v13494
  %v13496 = vpop.f32.mrf.mxu0
  %v13497 = vadd.f32 %v13456, %v13496
  %v13498 = vpop.f32.mrf.mxu0
  %v13499 = vpop.f32.mrf.mxu0
  %13500 = vdwg.mxu0
  %v13537 = vunpack.c.l.b16 %v11344
  %v13538 = vunpack.c.h.b16 %v11344
  %v13539 = vunpack.c.l.b16 %v11345
  %v13540 = vunpack.c.h.b16 %v11345
  %v13541 = vunpack.c.l.b16 %v11346
  %v13542 = vunpack.c.h.b16 %v11346
  %v13543 = vunpack.c.l.b16 %v11347
  %v13544 = vunpack.c.h.b16 %v11347
  %v13545 = vunpack.c.l.b16 %v11348
  %v13546 = vunpack.c.h.b16 %v11348
  %v13547 = vunpack.c.l.b16 %v11349
  %v13548 = vunpack.c.h.b16 %v11349
  %v13549 = vunpack.c.l.b16 %v11350
  %v13550 = vunpack.c.h.b16 %v11350
  %v13551 = vunpack.c.l.b16 %v11351
  %v13552 = vunpack.c.h.b16 %v11351
  %v13553 = vunpack.c.l.b16 %v11352
  %v13554 = vunpack.c.h.b16 %v11352
  %v13555 = vunpack.c.l.b16 %v11353
  %v13556 = vunpack.c.h.b16 %v11353
  %v13557 = vunpack.c.l.b16 %v11354
  %v13558 = vunpack.c.h.b16 %v11354
  %v13559 = vunpack.c.l.b16 %v11355
  %v13560 = vunpack.c.h.b16 %v11355
  %v13561 = vunpack.c.l.b16 %v11356
  %v13562 = vunpack.c.h.b16 %v11356
  %v13563 = vunpack.c.l.b16 %v11357
  %v13564 = vunpack.c.h.b16 %v11357
  %v13565 = vunpack.c.l.b16 %v11358
  %v13566 = vunpack.c.h.b16 %v11358
  %v13567 = vunpack.c.l.b16 %v11359
  %v13568 = vunpack.c.h.b16 %v11359
  %v13569 = vunpack.c.l.b16 %v11360
  %v13570 = vunpack.c.h.b16 %v11360
  %v13571 = vunpack.c.l.b16 %v11361
  %v13572 = vunpack.c.h.b16 %v11361
  %v13573 = vunpack.c.l.b16 %v11362
  %v13574 = vunpack.c.h.b16 %v11362
  %v13575 = vunpack.c.l.b16 %v11363
  %v13576 = vunpack.c.h.b16 %v11363
  %v13577 = vunpack.c.l.b16 %v11364
  %v13578 = vunpack.c.h.b16 %v11364
  %v13579 = vunpack.c.l.b16 %v11365
  %v13580 = vunpack.c.h.b16 %v11365
  %v13581 = vunpack.c.l.b16 %v11366
  %v13582 = vunpack.c.h.b16 %v11366
  %v13583 = vunpack.c.l.b16 %v11367
  %v13584 = vunpack.c.h.b16 %v11367
  %v13585 = vunpack.c.l.b16 %v11368
  %v13586 = vunpack.c.h.b16 %v11368
  %v13587 = vunpack.c.l.b16 %v11369
  %v13588 = vunpack.c.h.b16 %v11369
  %v13589 = vunpack.c.l.b16 %v11370
  %v13590 = vunpack.c.h.b16 %v11370
  %v13591 = vunpack.c.l.b16 %v11371
  %v13592 = vunpack.c.h.b16 %v11371
  %v13593 = vunpack.c.l.b16 %v11372
  %v13594 = vunpack.c.h.b16 %v11372
  %v13595 = vunpack.c.l.b16 %v11373
  %v13596 = vunpack.c.h.b16 %v11373
  %v13597 = vunpack.c.l.b16 %v11374
  %v13598 = vunpack.c.h.b16 %v11374
  %v13599 = vunpack.c.l.b16 %v11375
  %v13600 = vunpack.c.h.b16 %v11375
  %v13601 = vunpack.c.l.b16 %v11376
  %v13602 = vunpack.c.h.b16 %v11376
  %v13603 = vunpack.c.l.b16 %v11377
  %v13604 = vunpack.c.h.b16 %v11377
  %v13605 = vunpack.c.l.b16 %v11378
  %v13606 = vunpack.c.h.b16 %v11378
  %v13607 = vunpack.c.l.b16 %v11379
  %v13608 = vunpack.c.h.b16 %v11379
  %v13609 = vpack.c.b16 %v13539, %v13537
  %v13610 = vpack.c.b16 %v13540, %v13538
  %v13611 = vpack.c.b16 %v13543, %v13541
  %v13612 = vpack.c.b16 %v13544, %v13542
  %v13613 = vpack.c.b16 %v13547, %v13545
  %v13614 = vpack.c.b16 %v13548, %v13546
  %v13615 = vpack.c.b16 %v13551, %v13549
  %v13616 = vpack.c.b16 %v13552, %v13550
  %v13617 = vpack.c.b16 %v13555, %v13553
  %v13618 = vpack.c.b16 %v13556, %v13554
  %v13619 = vpack.c.b16 %v13559, %v13557
  %v13620 = vpack.c.b16 %v13560, %v13558
  %v13621 = vpack.c.b16 %v13563, %v13561
  %v13622 = vpack.c.b16 %v13564, %v13562
  %v13623 = vpack.c.b16 %v13567, %v13565
  %v13624 = vpack.c.b16 %v13568, %v13566
  %v13625 = vpack.c.b16 %v13571, %v13569
  %v13626 = vpack.c.b16 %v13572, %v13570
  %v13627 = vpack.c.b16 %v13575, %v13573
  %v13628 = vpack.c.b16 %v13576, %v13574
  %v13629 = vpack.c.b16 %v13579, %v13577
  %v13630 = vpack.c.b16 %v13580, %v13578
  %v13631 = vpack.c.b16 %v13583, %v13581
  %v13632 = vpack.c.b16 %v13584, %v13582
  %v13633 = vpack.c.b16 %v13587, %v13585
  %v13634 = vpack.c.b16 %v13588, %v13586
  %v13635 = vpack.c.b16 %v13591, %v13589
  %v13636 = vpack.c.b16 %v13592, %v13590
  %v13637 = vpack.c.b16 %v13595, %v13593
  %v13638 = vpack.c.b16 %v13596, %v13594
  %v13639 = vpack.c.b16 %v13599, %v13597
  %v13640 = vpack.c.b16 %v13600, %v13598
  %v13641 = vpack.c.b16 %v13603, %v13601
  %v13642 = vpack.c.b16 %v13604, %v13602
  %v13643 = vpack.c.b16 %v13607, %v13605
  %v13644 = vpack.c.b16 %v13608, %v13606
  %v13682 = vsel %vm11560, %v11055, 0
  %13684 = vmatprep.subr.bf16.mxu0 %v13624
  %13685 = vmatpush1.bf16.msra.mxu0 %v13623
  %13686 = vmatprep.subr.bf16.mxu0 %v13622
  %13687 = vmatpush1.bf16.msra.mxu0 %v13621
  %13688 = vmatprep.subr.bf16.mxu0 %v13620
  %13689 = vmatpush1.bf16.msra.mxu0 %v13619
  %13690 = vmatprep.subr.bf16.mxu0 %v13618
  %13691 = vmatpush1.bf16.msra.mxu0 %v13617
  %13692 = vmatprep.subr.bf16.mxu0 %v13616
  %13693 = vmatpush1.bf16.msra.mxu0 %v13615
  %13694 = vmatprep.subr.bf16.mxu0 %v13614
  %13695 = vmatpush1.bf16.msra.mxu0 %v13613
  %13696 = vmatprep.subr.bf16.mxu0 %v13612
  %13697 = vmatpush1.bf16.msra.mxu0 %v13611
  %13698 = vmatprep.subr.bf16.mxu0 %v13610
  %13699 = vmatpush1.bf16.msra.mxu0 %v13609
  %13700 = vmatprep.subr.bf16.mxu0 %v13640
  %13701 = vmatpush2.bf16.msra.mxu0 %v13639
  %13702 = vmatprep.subr.bf16.mxu0 %v13638
  %13703 = vmatpush2.bf16.msra.mxu0 %v13637
  %13704 = vmatprep.subr.bf16.mxu0 %v13636
  %13705 = vmatpush2.bf16.msra.mxu0 %v13635
  %13706 = vmatprep.subr.bf16.mxu0 %v13634
  %13707 = vmatpush2.bf16.msra.mxu0 %v13633
  %13708 = vmatprep.subr.bf16.mxu0 %v13632
  %13709 = vmatpush2.bf16.msra.mxu0 %v13631
  %13710 = vmatprep.subr.bf16.mxu0 %v13630
  %13711 = vmatpush2.bf16.msra.mxu0 %v13629
  %13712 = vmatprep.subr.bf16.mxu0 %v13628
  %13713 = vmatpush2.bf16.msra.mxu0 %v13627
  %13714 = vmatprep.subr.bf16.mxu0 %v13626
  %13715 = vmatpush2.bf16.msra.mxu0 %v13625
  %13716 = vmatprep.mubr.bf16.mxu0 %v11054
  %13717 = vmatmul.mubr.bf16.gmra.mxu0 %v11053
  %v13718 = vpop.f32.mrf.mxu0
  %v13719 = vadd.f32 0.0, %v13718
  %v13720 = vpop.f32.mrf.mxu0
  %v13721 = vadd.f32 0.0, %v13720
  %v13722 = vpop.f32.mrf.mxu0
  %v13723 = vpop.f32.mrf.mxu0
  %13724 = vdwg.mxu0
  %13725 = vmatprep.subr.bf16.mxu0 0
  %13726 = vmatpush1.bf16.msra.mxu0 0
  %13727 = vmatprep.subr.bf16.mxu0 0
  %13728 = vmatpush1.bf16.msra.mxu0 0
  %13729 = vmatprep.subr.bf16.mxu0 0
  %13730 = vmatpush1.bf16.msra.mxu0 0
  %13731 = vmatprep.subr.bf16.mxu0 0
  %13732 = vmatpush1.bf16.msra.mxu0 0
  %13733 = vmatprep.subr.bf16.mxu0 0
  %13734 = vmatpush1.bf16.msra.mxu0 0
  %13735 = vmatprep.subr.bf16.mxu0 0
  %13736 = vmatpush1.bf16.msra.mxu0 0
  %13737 = vmatprep.subr.bf16.mxu0 %v13644
  %13738 = vmatpush1.bf16.msra.mxu0 %v13643
  %13739 = vmatprep.subr.bf16.mxu0 %v13642
  %13740 = vmatpush1.bf16.msra.mxu0 %v13641
  %13741 = vmatprep.subr.bf16.mxu0 0
  %13742 = vmatpush2.bf16.msra.mxu0 0
  %13743 = vmatprep.subr.bf16.mxu0 0
  %13744 = vmatpush2.bf16.msra.mxu0 0
  %13745 = vmatprep.subr.bf16.mxu0 0
  %13746 = vmatpush2.bf16.msra.mxu0 0
  %13747 = vmatprep.subr.bf16.mxu0 0
  %13748 = vmatpush2.bf16.msra.mxu0 0
  %13749 = vmatprep.subr.bf16.mxu0 0
  %13750 = vmatpush2.bf16.msra.mxu0 0
  %13751 = vmatprep.subr.bf16.mxu0 0
  %13752 = vmatpush2.bf16.msra.mxu0 0
  %13753 = vmatprep.subr.bf16.mxu0 0
  %13754 = vmatpush2.bf16.msra.mxu0 0
  %13755 = vmatprep.subr.bf16.mxu0 0
  %13756 = vmatpush2.bf16.msra.mxu0 0
  %13757 = vmatprep.mubr.bf16.mxu0 0
  %13758 = vmatmul.mubr.bf16.gmra.mxu0 %v13682
  %v13759 = vpop.f32.mrf.mxu0
  %v13760 = vadd.f32 %v13719, %v13759
  %v13761 = vpop.f32.mrf.mxu0
  %v13762 = vadd.f32 %v13721, %v13761
  %v13763 = vpop.f32.mrf.mxu0
  %v13764 = vpop.f32.mrf.mxu0
  %13765 = vdwg.mxu0
  %v13766 = vadd.f32 %v11640, %v11905
  %v13767 = vadd.f32 %v13766, %v12170
  %v13768 = vadd.f32 %v13767, %v12435
  %v13769 = vadd.f32 %v13768, %v12700
  %v13770 = vadd.f32 %v13769, %v12965
  %v13771 = vadd.f32 %v13770, %v13230
  %v13772 = vadd.f32 %v13771, %v13495
  %v13773 = vadd.f32 %v13772, %v13760
  %v13774 = vadd.f32 %v11642, %v11907
  %v13775 = vadd.f32 %v13774, %v12172
  %v13776 = vadd.f32 %v13775, %v12437
  %v13777 = vadd.f32 %v13776, %v12702
  %v13778 = vadd.f32 %v13777, %v12967
  %v13779 = vadd.f32 %v13778, %v13232
  %v13780 = vadd.f32 %v13779, %v13497
  %v13781 = vadd.f32 %v13780, %v13762
  %v13782 = vld [vmem:[%s6] sm:$0x3]
  %v13784 = vlaneseq
  %v13785 = vshrl.u32 %v13784, 7
  %v13786 = vsub.s32 0, %v13785
  %v13787 = vrot.slane %v13782, %v13786
  %v13788 = vlaneseq
  %v13789 = vshrl.u32 %v13788, 7
  %v13790 = vsub.s32 1, %v13789
  %v13791 = vrot.slane %v13782, %v13790
  %v13794 = vadd.f32 %v13773, %v13787
  %v13795 = vadd.f32 %v13781, %v13791
  %v13796 = vmax.f32 %v13794, 0.0
  %v13797 = vmax.f32 %v13795, 0.0
  %v13798 = vpack.c.bf16 %v13796, %v13796
  %v13799 = vpack.c.bf16 %v13797, %v13797
  %v13800 = vld [vmem:[%s7] sm:$0xf]
  %v13801 = vld [vmem:[%s7 + $0x4] sm:$0xf]
  %v13802 = vld [vmem:[%s7 + $0x8] sm:$0xf]
  %v13803 = vld [vmem:[%s7 + $0xc] sm:$0xf]
  %v13804 = vld [vmem:[%s7 + $0x10] sm:$0xf]
  %v13805 = vld [vmem:[%s7 + $0x14] sm:$0xf]
  %v13806 = vld [vmem:[%s7 + $0x18] sm:$0xf]
  %v13807 = vld [vmem:[%s7 + $0x1c] sm:$0xf]
  %v13808 = vld [vmem:[%s7 + $0x20] sm:$0xf]
  %v13809 = vld [vmem:[%s7 + $0x24] sm:$0xf]
  %v13810 = vld [vmem:[%s7 + $0x28] sm:$0xf]
  %v13811 = vld [vmem:[%s7 + $0x2c] sm:$0xf]
  %v13812 = vld [vmem:[%s7 + $0x30] sm:$0xf]
  %v13813 = vld [vmem:[%s7 + $0x34] sm:$0xf]
  %v13814 = vld [vmem:[%s7 + $0x38] sm:$0xf]
  %v13815 = vld [vmem:[%s7 + $0x3c] sm:$0xf]
  %v13816 = vld [vmem:[%s7 + $0x40] sm:$0xf]
  %v13817 = vld [vmem:[%s7 + $0x44] sm:$0xf]
  %v13818 = vld [vmem:[%s7 + $0x48] sm:$0xf]
  %v13819 = vld [vmem:[%s7 + $0x4c] sm:$0xf]
  %v13820 = vld [vmem:[%s7 + $0x50] sm:$0xf]
  %v13821 = vld [vmem:[%s7 + $0x54] sm:$0xf]
  %v13822 = vld [vmem:[%s7 + $0x58] sm:$0xf]
  %v13823 = vld [vmem:[%s7 + $0x5c] sm:$0xf]
  %v13824 = vld [vmem:[%s7 + $0x60] sm:$0xf]
  %v13825 = vld [vmem:[%s7 + $0x64] sm:$0xf]
  %v13826 = vld [vmem:[%s7 + $0x68] sm:$0xf]
  %v13827 = vld [vmem:[%s7 + $0x6c] sm:$0xf]
  %v13828 = vld [vmem:[%s7 + $0x70] sm:$0xf]
  %v13829 = vld [vmem:[%s7 + $0x74] sm:$0xf]
  %v13830 = vld [vmem:[%s7 + $0x78] sm:$0xf]
  %v13831 = vld [vmem:[%s7 + $0x7c] sm:$0xf]
  %v13832 = vld [vmem:[%s8] sm:$0x1]
  %v13834 = vlaneseq
  %v13835 = vshrl.u32 %v13834, 7
  %v13836 = vsub.s32 0, %v13835
  %v13837 = vrot.slane %v13832, %v13836
  %v13871 = vunpack.c.l.b16 %v13800
  %v13872 = vunpack.c.l.b16 %v13801
  %v13873 = vunpack.c.l.b16 %v13802
  %v13874 = vunpack.c.l.b16 %v13803
  %v13875 = vunpack.c.l.b16 %v13804
  %v13876 = vunpack.c.l.b16 %v13805
  %v13877 = vunpack.c.l.b16 %v13806
  %v13878 = vunpack.c.l.b16 %v13807
  %v13879 = vunpack.c.l.b16 %v13808
  %v13880 = vunpack.c.l.b16 %v13809
  %v13881 = vunpack.c.l.b16 %v13810
  %v13882 = vunpack.c.l.b16 %v13811
  %v13883 = vunpack.c.l.b16 %v13812
  %v13884 = vunpack.c.l.b16 %v13813
  %v13885 = vunpack.c.l.b16 %v13814
  %v13886 = vunpack.c.l.b16 %v13815
  %v13887 = vunpack.c.l.b16 %v13816
  %v13888 = vunpack.c.l.b16 %v13817
  %v13889 = vunpack.c.l.b16 %v13818
  %v13890 = vunpack.c.l.b16 %v13819
  %v13891 = vunpack.c.l.b16 %v13820
  %v13892 = vunpack.c.l.b16 %v13821
  %v13893 = vunpack.c.l.b16 %v13822
  %v13894 = vunpack.c.l.b16 %v13823
  %v13895 = vunpack.c.l.b16 %v13824
  %v13896 = vunpack.c.l.b16 %v13825
  %v13897 = vunpack.c.l.b16 %v13826
  %v13898 = vunpack.c.l.b16 %v13827
  %v13899 = vunpack.c.l.b16 %v13828
  %v13900 = vunpack.c.l.b16 %v13829
  %v13901 = vunpack.c.l.b16 %v13830
  %v13902 = vunpack.c.l.b16 %v13831
  %v13903 = vpack.c.b16 %v13872, %v13871
  %v13904 = vpack.c.b16 %v13874, %v13873
  %v13905 = vpack.c.b16 %v13876, %v13875
  %v13906 = vpack.c.b16 %v13878, %v13877
  %v13907 = vpack.c.b16 %v13880, %v13879
  %v13908 = vpack.c.b16 %v13882, %v13881
  %v13909 = vpack.c.b16 %v13884, %v13883
  %v13910 = vpack.c.b16 %v13886, %v13885
  %v13911 = vpack.c.b16 %v13888, %v13887
  %v13912 = vpack.c.b16 %v13890, %v13889
  %v13913 = vpack.c.b16 %v13892, %v13891
  %v13914 = vpack.c.b16 %v13894, %v13893
  %v13915 = vpack.c.b16 %v13896, %v13895
  %v13916 = vpack.c.b16 %v13898, %v13897
  %v13917 = vpack.c.b16 %v13900, %v13899
  %v13918 = vpack.c.b16 %v13902, %v13901
  %13935 = vmatprep.subr.bf16.mxu0 0
  %13936 = vmatpush1.bf16.msra.mxu0 %v13910
  %13937 = vmatprep.subr.bf16.mxu0 0
  %13938 = vmatpush1.bf16.msra.mxu0 %v13909
  %13939 = vmatprep.subr.bf16.mxu0 0
  %13940 = vmatpush1.bf16.msra.mxu0 %v13908
  %13941 = vmatprep.subr.bf16.mxu0 0
  %13942 = vmatpush1.bf16.msra.mxu0 %v13907
  %13943 = vmatprep.subr.bf16.mxu0 0
  %13944 = vmatpush1.bf16.msra.mxu0 %v13906
  %13945 = vmatprep.subr.bf16.mxu0 0
  %13946 = vmatpush1.bf16.msra.mxu0 %v13905
  %13947 = vmatprep.subr.bf16.mxu0 0
  %13948 = vmatpush1.bf16.msra.mxu0 %v13904
  %13949 = vmatprep.subr.bf16.mxu0 0
  %13950 = vmatpush1.bf16.msra.mxu0 %v13903
  %13951 = vmatprep.subr.bf16.mxu0 0
  %13952 = vmatpush2.bf16.msra.mxu0 %v13918
  %13953 = vmatprep.subr.bf16.mxu0 0
  %13954 = vmatpush2.bf16.msra.mxu0 %v13917
  %13955 = vmatprep.subr.bf16.mxu0 0
  %13956 = vmatpush2.bf16.msra.mxu0 %v13916
  %13957 = vmatprep.subr.bf16.mxu0 0
  %13958 = vmatpush2.bf16.msra.mxu0 %v13915
  %13959 = vmatprep.subr.bf16.mxu0 0
  %13960 = vmatpush2.bf16.msra.mxu0 %v13914
  %13961 = vmatprep.subr.bf16.mxu0 0
  %13962 = vmatpush2.bf16.msra.mxu0 %v13913
  %13963 = vmatprep.subr.bf16.mxu0 0
  %13964 = vmatpush2.bf16.msra.mxu0 %v13912
  %13965 = vmatprep.subr.bf16.mxu0 0
  %13966 = vmatpush2.bf16.msra.mxu0 %v13911
  %13967 = vmatprep.mubr.bf16.mxu0 %v13799
  %13968 = vmatmul.mubr.bf16.gmra.mxu0 %v13798
  %v13969 = vpop.f32.mrf.mxu0
  %v13970 = vadd.f32 %v13837, %v13969
  %v13971 = vpop.f32.mrf.mxu0
  %v13972 = vpop.f32.mrf.mxu0
  %v13973 = vpop.f32.mrf.mxu0
  %13974 = vdwg.mxu0
  %13975 = vst [vmem:[%s9] sm:$0xff] %v13970
  // Predicated region
  $region38: #{qnet_forward.1} parent=0 // pred_check
    _
  $region39: #{qnet_forward.1} parent=0 // pred_check_branch
    %13977 = sbr.rel (0) target = $region41
  $region40: #{qnet_forward.1} parent=0 // pred_region
    _
  $region41: #{qnet_forward.1} parent=0 // pred_fallthru
    _
  // Predicated region
  $region42: #{qnet_forward.1} parent=0 // pred_check
    _
  $region43: #{qnet_forward.1} parent=0 // pred_check_branch
    %13979 = sbr.rel (0) target = $region45
  $region44: #{qnet_forward.1} parent=0 // pred_region
    _
  $region45: #{qnet_forward.1} parent=0 // pred_fallthru
    _

</llo_original>
